<compile_context>
chip_gen: v7x
topology: tpu7x:2x2x1
jax: 0.10.0
libtpu: 0.0.40
codegen_flags: <defaults>
</compile_context>

<pallas_src>
import functools

import jax
import jax.numpy as jnp
from jax.experimental import pallas as pl
from jax.experimental.pallas import tpu as pltpu

EPS = 1e-5
LANE = 128


def _round_up(v, m):
    return (v + m - 1) // m * m


def _pad2d(a, rows, cols):
    return jnp.pad(a, ((0, rows - a.shape[0]), (0, cols - a.shape[1])))


def _pick_tile_m(M, target=1024):
    """Largest multiple-of-8 divisor of M that is <= target so Mp == M and the
    inter-stage pad/slice glue (whole-activation HBM copies) disappears.
    Falls back to padding when no such divisor exists."""
    best = None
    for d in range(8, min(target, M) + 1, 8):
        if M % d == 0:
            best = d
    if best is not None:
        return best, M
    tm = _round_up(min(target, M), 8)
    return tm, _round_up(M, tm)


def _vmem_limit_bytes():
    """Per-generation VMEM cap (~3/4 of physical VMEM, leaving headroom)."""
    cap = 64 * 1024 * 1024
    try:
        cap = int(getattr(pltpu.get_tpu_info(), "vmem_capacity_bytes", cap))
    except Exception:
        pass
    return (cap * 3) // 4


# ---------------------------------------------------------------------------
# Kernels
# ---------------------------------------------------------------------------
def _write_stats(stats_ref, y):
    """Per-tile BN partials, single merged store: row 0 = sum(y), row 1 = sum(y*y)."""
    s = jnp.sum(y, axis=0, keepdims=True)
    ss = jnp.sum(y * y, axis=0, keepdims=True)
    stats_ref[0, :, :] = jnp.concatenate([s, ss], axis=0)


def gemm_stats_kernel(x_ref, w_ref, y_ref, stats_ref):
    """1x1 conv as bf16 GEMM (f32 acc) on one row tile + BN partial sums."""
    y = jnp.dot(x_ref[...], w_ref[...], preferred_element_type=jnp.float32)
    y_ref[...] = y.astype(y_ref.dtype)
    _write_stats(stats_ref, y)


def norm_gemm_stats_kernel(x_ref, scale_ref, shift_ref, w_ref, y_ref, stats_ref,
                           *, valid_rows=None):
    """Fused previous-stage BN scale/shift + ReLU, then bf16 GEMM + BN partials."""
    a = jnp.maximum(x_ref[...].astype(jnp.float32) * scale_ref[...] + shift_ref[...], 0.0)
    if valid_rows is not None:
        # Fallback path (only when Mp != M): zero padded rows so they don't
        # pollute the BN statistics.
        tm = x_ref.shape[0]
        row = pl.program_id(0) * tm + jax.lax.broadcasted_iota(jnp.int32, (tm, 1), 0)
        a = jnp.where(row < valid_rows, a, 0.0)
    y = jnp.dot(a.astype(jnp.bfloat16), w_ref[...], preferred_element_type=jnp.float32)
    y_ref[...] = y.astype(y_ref.dtype)
    _write_stats(stats_ref, y)


def conv3x3_stats_kernel(x_ref, scale_ref, shift_ref, w_ref, y_ref, stats_ref, pad_ref):
    """Per image: fused BN1+ReLU, zero-padded halo built in VMEM scratch, then
    nine accumulated bf16 matmuls (one per 3x3 tap) into an f32 accumulator,
    producing the conv2 output + BN2 partial sums. No taps ever hit HBM and no
    (H*W, 9*C) im2col temp is materialized."""
    _, H, W, C = x_ref.shape
    Cout = w_ref.shape[1]

    # Halo scratch persists across grid steps: zero it once; the interior is
    # fully rewritten every image, the border stays zero (conv padding).
    @pl.when(pl.program_id(0) == 0)
    def _():
        pad_ref[...] = jnp.zeros_like(pad_ref)

    a = jnp.maximum(x_ref[0].astype(jnp.float32) * scale_ref[...] + shift_ref[...], 0.0)
    pad_ref[1:H + 1, 1:W + 1, :] = a
    # TODO(synk): f32 halo scratch + per-tap bf16 cast kept for lowering safety;
    # a bf16 scratch would halve the halo slice traffic.

    acc = jnp.zeros((H * W, Cout), jnp.float32)
    for t, (kh, kw) in enumerate((i, j) for i in range(3) for j in range(3)):
        tap = pad_ref[kh:kh + H, kw:kw + W, :].reshape(H * W, C).astype(jnp.bfloat16)
        acc = acc + jnp.dot(tap, w_ref[t * C:(t + 1) * C, :],
                            preferred_element_type=jnp.float32)

    y_ref[0, :, :] = acc.astype(y_ref.dtype)
    _write_stats(stats_ref, acc)


def norm_add_relu_kernel(y_ref, scale_ref, shift_ref, res_ref, o_ref):
    """Final BN3 scale/shift + residual add + ReLU on one row tile (bf16 I/O)."""
    yn = y_ref[...].astype(jnp.float32) * scale_ref[...] + shift_ref[...]
    o_ref[...] = jnp.maximum(yn + res_ref[...].astype(jnp.float32), 0.0).astype(o_ref.dtype)


# ---------------------------------------------------------------------------
# Wrapper
# ---------------------------------------------------------------------------
def _bn_scale_shift(stats, gamma, beta, count):
    """Combine per-tile partials into BN scale/shift (single-pass E[y^2]-mean^2)."""
    s = jnp.sum(stats, axis=0)                       # (2, C)
    mean = s[0] / count
    var = jnp.maximum(s[1] / count - mean * mean, 0.0)
    scale = gamma * jax.lax.rsqrt(var + EPS)
    shift = beta - mean * scale
    return scale.reshape(1, -1), shift.reshape(1, -1)


def bottleneck_forward(x_nchw, params, tile_m=1024):
    # TODO(synk): stride>1 / downsample branch not implemented (module uses downsample=None).
    w1, g1, b1, w2, g2, b2, w3, g3, b3 = params
    N, Cin, H, W = x_nchw.shape
    planes = w1.shape[0]
    Cexp = w3.shape[0]
    assert Cexp == Cin, "identity residual requires inplanes == planes * expansion"
    M = N * H * W

    Cp = _round_up(Cin, LANE)        # padded in/out channels (Cin == Cexp here)
    Pp = _round_up(planes, LANE)     # padded bottleneck width

    tile_m, Mp = _pick_tile_m(M, tile_m)
    grid_m = Mp // tile_m

    cparams = pltpu.CompilerParams(
        dimension_semantics=("parallel",),           # megacore-shard the row/image axis
        vmem_limit_bytes=_vmem_limit_bytes())        # per-generation VMEM cap

    # ---- layout prep: single bf16 channels-last copy of x in HBM.  It is the
    # K1 GEMM input AND the K4 residual, so there is no separate f32 copy and
    # no standalone cast pass. ----
    x_bf = _pad2d(jnp.transpose(x_nchw, (0, 2, 3, 1)).reshape(M, Cin),
                  Mp, Cp).astype(jnp.bfloat16)

    w1m = _pad2d(jnp.transpose(w1.reshape(planes, Cin), (1, 0)), Cp, Pp).astype(jnp.bfloat16)
    w2m = jnp.transpose(w2, (2, 3, 1, 0))                        # (3,3,Cin2,Cout2)
    w2m = jnp.pad(w2m, ((0, 0), (0, 0), (0, Pp - planes), (0, Pp - planes)))
    w2m = w2m.reshape(9 * Pp, Pp).astype(jnp.bfloat16)
    w3m = _pad2d(jnp.transpose(w3.reshape(Cexp, planes), (1, 0)), Pp, Cp).astype(jnp.bfloat16)

    g1p = jnp.pad(g1, (0, Pp - planes)); b1p = jnp.pad(b1, (0, Pp - planes))
    g2p = jnp.pad(g2, (0, Pp - planes)); b2p = jnp.pad(b2, (0, Pp - planes))
    g3p = jnp.pad(g3, (0, Cp - Cexp));   b3p = jnp.pad(b3, (0, Cp - Cexp))

    # ---- stage 1: conv1 (1x1 GEMM) + BN1 partial stats, tiled over rows ----
    y1, st1 = pl.pallas_call(
        gemm_stats_kernel,
        grid=(grid_m,),
        in_specs=[pl.BlockSpec((tile_m, Cp), lambda i: (i, 0)),
                  pl.BlockSpec((Cp, Pp), lambda i: (0, 0))],
        out_specs=[pl.BlockSpec((tile_m, Pp), lambda i: (i, 0)),
                   pl.BlockSpec((1, 2, Pp), lambda i: (i, 0, 0))],
        out_shape=[jax.ShapeDtypeStruct((Mp, Pp), jnp.bfloat16),
                   jax.ShapeDtypeStruct((grid_m, 2, Pp), jnp.float32)],
        compiler_params=cparams,
    )(x_bf, w1m)
    scale1, shift1 = _bn_scale_shift(st1, g1p, b1p, M)

    # ---- stage 2: fused BN1+ReLU, 3x3 conv via in-VMEM halo + 9 accumulated
    # matmuls, BN2 stats.  TODO(synk): row-block the grid (with a +-1 row halo)
    # for large H/W or tiny batch to deepen the pipeline / megacore sharding. ----
    y1_img = y1[:M].reshape(N, H, W, Pp)
    y2, st2 = pl.pallas_call(
        conv3x3_stats_kernel,
        grid=(N,),
        in_specs=[pl.BlockSpec((1, H, W, Pp), lambda n: (n, 0, 0, 0)),
                  pl.BlockSpec((1, 1, Pp), lambda n: (0, 0, 0)),
                  pl.BlockSpec((1, 1, Pp), lambda n: (0, 0, 0)),
                  pl.BlockSpec((9 * Pp, Pp), lambda n: (0, 0))],
        out_specs=[pl.BlockSpec((1, H * W, Pp), lambda n: (n, 0, 0)),
                   pl.BlockSpec((1, 2, Pp), lambda n: (n, 0, 0))],
        out_shape=[jax.ShapeDtypeStruct((N, H * W, Pp), jnp.bfloat16),
                   jax.ShapeDtypeStruct((N, 2, Pp), jnp.float32)],
        scratch_shapes=[pltpu.VMEM((H + 2, W + 2, Pp), jnp.float32)],
        compiler_params=cparams,
    )(y1_img, scale1.reshape(1, 1, Pp), shift1.reshape(1, 1, Pp), w2m)
    scale2, shift2 = _bn_scale_shift(st2, g2p, b2p, M)

    # ---- stage 3: fused BN2+ReLU, conv3 (1x1 GEMM) + BN3 partial stats ----
    y2_flat = y2.reshape(M, Pp)
    if Mp != M:                      # fallback only; _pick_tile_m keeps Mp == M
        y2_flat = jnp.pad(y2_flat, ((0, Mp - M), (0, 0)))
    kern3 = functools.partial(norm_gemm_stats_kernel,
                              valid_rows=(M if Mp != M else None))
    y3, st3 = pl.pallas_call(
        kern3,
        grid=(grid_m,),
        in_specs=[pl.BlockSpec((tile_m, Pp), lambda i: (i, 0)),
                  pl.BlockSpec((1, Pp), lambda i: (0, 0)),
                  pl.BlockSpec((1, Pp), lambda i: (0, 0)),
                  pl.BlockSpec((Pp, Cp), lambda i: (0, 0))],
        out_specs=[pl.BlockSpec((tile_m, Cp), lambda i: (i, 0)),
                   pl.BlockSpec((1, 2, Cp), lambda i: (i, 0, 0))],
        out_shape=[jax.ShapeDtypeStruct((Mp, Cp), jnp.bfloat16),
                   jax.ShapeDtypeStruct((grid_m, 2, Cp), jnp.float32)],
        compiler_params=cparams,
    )(y2_flat, scale2, shift2, w3m)
    scale3, shift3 = _bn_scale_shift(st3, g3p, b3p, M)

    # ---- stage 4: BN3 + bf16 residual add + ReLU, tiled over rows ----
    out = pl.pallas_call(
        norm_add_relu_kernel,
        grid=(grid_m,),
        in_specs=[pl.BlockSpec((tile_m, Cp), lambda i: (i, 0)),
                  pl.BlockSpec((1, Cp), lambda i: (0, 0)),
                  pl.BlockSpec((1, Cp), lambda i: (0, 0)),
                  pl.BlockSpec((tile_m, Cp), lambda i: (i, 0))],
        out_specs=pl.BlockSpec((tile_m, Cp), lambda i: (i, 0)),
        out_shape=jax.ShapeDtypeStruct((Mp, Cp), jnp.bfloat16),
        compiler_params=cparams,
    )(y3, scale3, shift3, x_bf)

    out = out[:M, :Cexp].reshape(N, H, W, Cexp)
    return jnp.transpose(out, (0, 3, 1, 2)).astype(x_nchw.dtype)


# ---------------------------------------------------------------------------
# Pure-JAX reference (matches PyTorch training-mode forward, f32)
# ---------------------------------------------------------------------------
def bottleneck_ref(x, params):
    w1, g1, b1, w2, g2, b2, w3, g3, b3 = params

    def conv(x, w, pad=0):
        return jax.lax.conv_general_dilated(
            x, w, (1, 1), [(pad, pad), (pad, pad)],
            dimension_numbers=("NCHW", "OIHW", "NCHW"))

    def bn(x, g, b):
        mean = jnp.mean(x, axis=(0, 2, 3), keepdims=True)
        var = jnp.mean(jnp.square(x - mean), axis=(0, 2, 3), keepdims=True)
        return ((x - mean) * jax.lax.rsqrt(var + EPS)
                * g.reshape(1, -1, 1, 1) + b.reshape(1, -1, 1, 1))

    out = jnp.maximum(bn(conv(x, w1), g1, b1), 0.0)
    out = jnp.maximum(bn(conv(out, w2, pad=1), g2, b2), 0.0)
    out = bn(conv(out, w3), g3, b3)
    return jnp.maximum(out + x, 0.0)


# ---------------------------------------------------------------------------
def make_params(key, inplanes, planes):
    expansion = 4
    ks = jax.random.split(key, 9)
    w1 = 0.2 * jax.random.normal(ks[0], (planes, inplanes, 1, 1), jnp.float32)
    w2 = 0.2 * jax.random.normal(ks[1], (planes, planes, 3, 3), jnp.float32)
    w3 = 0.2 * jax.random.normal(ks[2], (planes * expansion, planes, 1, 1), jnp.float32)
    g1 = 1.0 + 0.1 * jax.random.normal(ks[3], (planes,), jnp.float32)
    b1 = 0.1 * jax.random.normal(ks[4], (planes,), jnp.float32)
    g2 = 1.0 + 0.1 * jax.random.normal(ks[5], (planes,), jnp.float32)
    b2 = 0.1 * jax.random.normal(ks[6], (planes,), jnp.float32)
    g3 = 1.0 + 0.1 * jax.random.normal(ks[7], (planes * expansion,), jnp.float32)
    b3 = 0.1 * jax.random.normal(ks[8], (planes * expansion,), jnp.float32)
    return (w1, g1, b1, w2, g2, b2, w3, g3, b3)


if __name__ == "__main__":
    key = jax.random.PRNGKey(0)
    k_x, k_p = jax.random.split(key)

    # inplanes == planes*4 -> downsample=None identity-residual path
    N, inplanes, planes, H, W = 2, 16, 4, 16, 16
    x = jax.random.normal(k_x, (N, inplanes, H, W), jnp.float32)
    params = make_params(k_p, inplanes, planes)

    fwd = jax.jit(bottleneck_forward)
    out = jax.block_until_ready(fwd(x, params))

    ref = bottleneck_ref(x, params)
    assert out.shape == (N, planes * 4, H, W)
    # Tolerance accounts for bf16 GEMM inputs, bf16 intermediates, bf16 residual
    # and bf16 final store (f32 accumulation + f32 BN math throughout).
    assert jnp.allclose(out, ref, rtol=5e-2, atol=6e-2), (
        "mismatch vs reference, max |diff| = %g"
        % float(jnp.max(jnp.abs(out - ref))))

    print("KERNEL_OK")
</pallas_src>

<mosaic_0001>
module attributes {stable_mosaic.version = 11 : i64} {
  func.func @gemm_stats_kernel(%arg0: i32, %arg1: memref<512x128xbf16, #tpu.memory_space<vmem>>, %arg2: memref<128x128xbf16, #tpu.memory_space<vmem>>, %arg3: memref<512x128xbf16, #tpu.memory_space<vmem>>, %arg4: memref<1x2x128xf32, #tpu.memory_space<vmem>>) attributes {dimension_semantics = [#tpu.dimension_semantics<parallel>], iteration_bounds = array<i64: 1>, scalar_prefetch = 0 : i64, scratch_operands = 0 : i64, tpu.core_type = #tpu.core_type<tc>, window_params = [{transform_indices = @transform_0, window_bounds = array<i64: 512, 128>}, {pipeline_mode = #tpu.pipeline_mode<synchronous>, transform_indices = @transform_1, window_bounds = array<i64: 128, 128>}, {transform_indices = @transform_2, window_bounds = array<i64: 512, 128>}, {transform_indices = @transform_3, window_bounds = array<i64: 1, 2, 128>}]} {
    %c0 = arith.constant 0 : index
    %c0_0 = arith.constant 0 : index
    %0 = vector.load %arg1[%c0, %c0_0] : memref<512x128xbf16, #tpu.memory_space<vmem>>, vector<512x128xbf16>
    %c0_1 = arith.constant 0 : index
    %c0_2 = arith.constant 0 : index
    %1 = vector.load %arg2[%c0_1, %c0_2] : memref<128x128xbf16, #tpu.memory_space<vmem>>, vector<128x128xbf16>
    %cst = arith.constant dense<0.000000e+00> : vector<512x128xf32>
    %2 = tpu.matmul %0, %1, %cst {dimension_numbers = #tpu.dot_dimension_numbers<[1], [0], [0], [1], [0, 0, 1, 1], [], []>} : vector<512x128xbf16>, vector<128x128xbf16>, vector<512x128xf32> -> vector<512x128xf32>
    %3 = arith.truncf %2 : vector<512x128xf32> to vector<512x128xbf16>
    %c0_3 = arith.constant 0 : index
    %c0_4 = arith.constant 0 : index
    %4 = vector.load %arg3[%c0_3, %c0_4] : memref<512x128xbf16, #tpu.memory_space<vmem>>, vector<512x128xbf16>
    tpu.vector_store %arg3[%c0_3, %c0_4], %3 {strides = array<i32>} : memref<512x128xbf16, #tpu.memory_space<vmem>>, vector<512x128xbf16>,
    %cst_5 = arith.constant dense<0.000000e+00> : vector<128xf32>
    %5 = vector.multi_reduction <add>, %2, %cst_5 [0] : vector<512x128xf32> to vector<128xf32>
    %6 = vector.shape_cast %5 : vector<128xf32> to vector<1x128xf32>
    %7 = arith.mulf %2, %2 : vector<512x128xf32>
    %cst_6 = arith.constant dense<0.000000e+00> : vector<128xf32>
    %8 = vector.multi_reduction <add>, %7, %cst_6 [0] : vector<512x128xf32> to vector<128xf32>
    %9 = vector.shape_cast %8 : vector<128xf32> to vector<1x128xf32>
    %10 = tpu.concatenate %6, %9 in 0 : vector<1x128xf32>, vector<1x128xf32> -> vector<2x128xf32>
    %c0_7 = arith.constant 0 : index
    %c0_8 = arith.constant 0 : index
    %c0_9 = arith.constant 0 : index
    %11 = vector.load %arg4[%c0_7, %c0_8, %c0_9] : memref<1x2x128xf32, #tpu.memory_space<vmem>>, vector<1x2x128xf32>
    %12 = vector.shape_cast %11 : vector<1x2x128xf32> to vector<2x128xf32>
    %13 = vector.shape_cast %10 : vector<2x128xf32> to vector<1x2x128xf32>
    tpu.vector_store %arg4[%c0_7, %c0_8, %c0_9], %13 {strides = array<i32>} : memref<1x2x128xf32, #tpu.memory_space<vmem>>, vector<1x2x128xf32>,
    return
  }
  func.func @transform_0(%arg0: i32) -> (i32, i32) {
    %c0_i32 = arith.constant 0 : i32
    %c0_i32_0 = arith.constant 0 : i32
    return %arg0, %c0_i32 : i32, i32
  }
  func.func @transform_1(%arg0: i32) -> (i32, i32) {
    %c0_i32 = arith.constant 0 : i32
    %c0_i32_0 = arith.constant 0 : i32
    %c0_i32_1 = arith.constant 0 : i32
    return %c0_i32, %c0_i32_0 : i32, i32
  }
  func.func @transform_2(%arg0: i32) -> (i32, i32) {
    %c0_i32 = arith.constant 0 : i32
    %c0_i32_0 = arith.constant 0 : i32
    return %arg0, %c0_i32 : i32, i32
  }
  func.func @transform_3(%arg0: i32) -> (i32, i32, i32) {
    %c0_i32 = arith.constant 0 : i32
    %c0_i32_0 = arith.constant 0 : i32
    %c0_i32_1 = arith.constant 0 : i32
    return %arg0, %c0_i32, %c0_i32_0 : i32, i32, i32
  }
}

module attributes {stable_mosaic.version = 11 : i64} {
  func.func @conv3x3_stats_kernel(%arg0: i32, %arg1: memref<1x16x16x128xbf16, #tpu.memory_space<vmem>>, %arg2: memref<1x1x128xf32, #tpu.memory_space<vmem>>, %arg3: memref<1x1x128xf32, #tpu.memory_space<vmem>>, %arg4: memref<1152x128xbf16, #tpu.memory_space<vmem>>, %arg5: memref<1x256x128xbf16, #tpu.memory_space<vmem>>, %arg6: memref<1x2x128xf32, #tpu.memory_space<vmem>>, %arg7: memref<18x18x128xf32, #tpu.memory_space<vmem>>) attributes {dimension_semantics = [#tpu.dimension_semantics<parallel>], iteration_bounds = array<i64: 2>, scalar_prefetch = 0 : i64, scratch_operands = 1 : i64, tpu.core_type = #tpu.core_type<tc>, window_params = [{transform_indices = @transform_0, window_bounds = array<i64: 1, 16, 16, 128>}, {pipeline_mode = #tpu.pipeline_mode<synchronous>, transform_indices = @transform_1, window_bounds = array<i64: 1, 1, 128>}, {pipeline_mode = #tpu.pipeline_mode<synchronous>, transform_indices = @transform_2, window_bounds = array<i64: 1, 1, 128>}, {pipeline_mode = #tpu.pipeline_mode<synchronous>, transform_indices = @transform_3, window_bounds = array<i64: 1152, 128>}, {transform_indices = @transform_4, window_bounds = array<i64: 1, 256, 128>}, {transform_indices = @transform_5, window_bounds = array<i64: 1, 2, 128>}]} {
    %c0_i32 = arith.constant 0 : i32
    %0 = arith.cmpi eq, %arg0, %c0_i32 : i32
    %1 = arith.extui %0 : i1 to i32
    %c0_i32_0 = arith.constant 0 : i32
    %2 = arith.cmpi ne, %1, %c0_i32_0 : i32
    scf.if %2 {
      %cst_66 = arith.constant 0.000000e+00 : f32
      %83 = vector.broadcast %cst_66 : f32 to vector<18x18x128xf32>
      %c0_67 = arith.constant 0 : index
      %c0_68 = arith.constant 0 : index
      %c0_69 = arith.constant 0 : index
      %84 = vector.load %arg7[%c0_67, %c0_68, %c0_69] : memref<18x18x128xf32, #tpu.memory_space<vmem>>, vector<18x18x128xf32>
      tpu.vector_store %arg7[%c0_67, %c0_68, %c0_69], %83 {strides = array<i32>} : memref<18x18x128xf32, #tpu.memory_space<vmem>>, vector<18x18x128xf32>,
    } else {
    }
    %c0 = arith.constant 0 : index
    %c0_1 = arith.constant 0 : index
    %c0_2 = arith.constant 0 : index
    %c0_3 = arith.constant 0 : index
    %3 = vector.load %arg1[%c0, %c0_1, %c0_2, %c0_3] : memref<1x16x16x128xbf16, #tpu.memory_space<vmem>>, vector<1x16x16x128xbf16>
    %4 = vector.shape_cast %3 : vector<1x16x16x128xbf16> to vector<16x16x128xbf16>
    %5 = arith.extf %4 : vector<16x16x128xbf16> to vector<16x16x128xf32>
    %c0_4 = arith.constant 0 : index
    %c0_5 = arith.constant 0 : index
    %c0_6 = arith.constant 0 : index
    %6 = vector.load %arg2[%c0_4, %c0_5, %c0_6] : memref<1x1x128xf32, #tpu.memory_space<vmem>>, vector<1x1x128xf32>
    %7 = vector.broadcast %6 : vector<1x1x128xf32> to vector<16x16x128xf32>
    %8 = arith.mulf %5, %7 : vector<16x16x128xf32>
    %c0_7 = arith.constant 0 : index
    %c0_8 = arith.constant 0 : index
    %c0_9 = arith.constant 0 : index
    %9 = vector.load %arg3[%c0_7, %c0_8, %c0_9] : memref<1x1x128xf32, #tpu.memory_space<vmem>>, vector<1x1x128xf32>
    %10 = vector.broadcast %9 : vector<1x1x128xf32> to vector<16x16x128xf32>
    %11 = arith.addf %8, %10 : vector<16x16x128xf32>
    %cst = arith.constant 0.000000e+00 : f32
    %12 = vector.broadcast %cst : f32 to vector<16x16x128xf32>
    %13 = arith.maximumf %11, %12 : vector<16x16x128xf32>
    %c1 = arith.constant 1 : index
    %c1_10 = arith.constant 1 : index
    %c0_11 = arith.constant 0 : index
    %14 = vector.load %arg7[%c1, %c1_10, %c0_11] : memref<18x18x128xf32, #tpu.memory_space<vmem>>, vector<16x16x128xf32>
    tpu.vector_store %arg7[%c1, %c1_10, %c0_11], %13 {strides = array<i32>} : memref<18x18x128xf32, #tpu.memory_space<vmem>>, vector<16x16x128xf32>,
    %cst_12 = arith.constant 0.000000e+00 : f32
    %15 = vector.broadcast %cst_12 : f32 to vector<256x128xf32>
    %c0_13 = arith.constant 0 : index
    %c0_14 = arith.constant 0 : index
    %c0_15 = arith.constant 0 : index
    %16 = vector.load %arg7[%c0_13, %c0_14, %c0_15] : memref<18x18x128xf32, #tpu.memory_space<vmem>>, vector<16x16x128xf32>
    %17 = vector.shape_cast %16 : vector<16x16x128xf32> to vector<256x128xf32>
    %18 = arith.truncf %17 : vector<256x128xf32> to vector<256x128xbf16>
    %c0_16 = arith.constant 0 : index
    %c0_17 = arith.constant 0 : index
    %19 = vector.load %arg4[%c0_16, %c0_17] : memref<1152x128xbf16, #tpu.memory_space<vmem>>, vector<128x128xbf16>
    %cst_18 = arith.constant dense<0.000000e+00> : vector<256x128xf32>
    %20 = tpu.matmul %18, %19, %cst_18 {dimension_numbers = #tpu.dot_dimension_numbers<[1], [0], [0], [1], [0, 0, 1, 1], [], []>} : vector<256x128xbf16>, vector<128x128xbf16>, vector<256x128xf32> -> vector<256x128xf32>
    %21 = arith.addf %15, %20 : vector<256x128xf32>
    %c0_19 = arith.constant 0 : index
    %c1_20 = arith.constant 1 : index
    %c0_21 = arith.constant 0 : index
    %22 = vector.load %arg7[%c0_19, %c1_20, %c0_21] : memref<18x18x128xf32, #tpu.memory_space<vmem>>, vector<16x16x128xf32>
    %23 = vector.shape_cast %22 : vector<16x16x128xf32> to vector<256x128xf32>
    %24 = arith.truncf %23 : vector<256x128xf32> to vector<256x128xbf16>
    %c128 = arith.constant 128 : index
    %c0_22 = arith.constant 0 : index
    %25 = vector.load %arg4[%c128, %c0_22] : memref<1152x128xbf16, #tpu.memory_space<vmem>>, vector<128x128xbf16>
    %cst_23 = arith.constant dense<0.000000e+00> : vector<256x128xf32>
    %26 = tpu.matmul %24, %25, %cst_23 {dimension_numbers = #tpu.dot_dimension_numbers<[1], [0], [0], [1], [0, 0, 1, 1], [], []>} : vector<256x128xbf16>, vector<128x128xbf16>, vector<256x128xf32> -> vector<256x128xf32>
    %27 = arith.addf %21, %26 : vector<256x128xf32>
    %c0_24 = arith.constant 0 : index
    %c2 = arith.constant 2 : index
    %c0_25 = arith.constant 0 : index
    %28 = vector.load %arg7[%c0_24, %c2, %c0_25] : memref<18x18x128xf32, #tpu.memory_space<vmem>>, vector<16x16x128xf32>
    %29 = vector.shape_cast %28 : vector<16x16x128xf32> to vector<256x128xf32>
    %30 = arith.truncf %29 : vector<256x128xf32> to vector<256x128xbf16>
    %c256 = arith.constant 256 : index
    %c0_26 = arith.constant 0 : index
    %31 = vector.load %arg4[%c256, %c0_26] : memref<1152x128xbf16, #tpu.memory_space<vmem>>, vector<128x128xbf16>
    %cst_27 = arith.constant dense<0.000000e+00> : vector<256x128xf32>
    %32 = tpu.matmul %30, %31, %cst_27 {dimension_numbers = #tpu.dot_dimension_numbers<[1], [0], [0], [1], [0, 0, 1, 1], [], []>} : vector<256x128xbf16>, vector<128x128xbf16>, vector<256x128xf32> -> vector<256x128xf32>
    %33 = arith.addf %27, %32 : vector<256x128xf32>
    %c1_28 = arith.constant 1 : index
    %c0_29 = arith.constant 0 : index
    %c0_30 = arith.constant 0 : index
    %34 = vector.load %arg7[%c1_28, %c0_29, %c0_30] : memref<18x18x128xf32, #tpu.memory_space<vmem>>, vector<16x16x128xf32>
    %35 = vector.shape_cast %34 : vector<16x16x128xf32> to vector<256x128xf32>
    %36 = arith.truncf %35 : vector<256x128xf32> to vector<256x128xbf16>
    %c384 = arith.constant 384 : index
    %c0_31 = arith.constant 0 : index
    %37 = vector.load %arg4[%c384, %c0_31] : memref<1152x128xbf16, #tpu.memory_space<vmem>>, vector<128x128xbf16>
    %cst_32 = arith.constant dense<0.000000e+00> : vector<256x128xf32>
    %38 = tpu.matmul %36, %37, %cst_32 {dimension_numbers = #tpu.dot_dimension_numbers<[1], [0], [0], [1], [0, 0, 1, 1], [], []>} : vector<256x128xbf16>, vector<128x128xbf16>, vector<256x128xf32> -> vector<256x128xf32>
    %39 = arith.addf %33, %38 : vector<256x128xf32>
    %c1_33 = arith.constant 1 : index
    %c1_34 = arith.constant 1 : index
    %c0_35 = arith.constant 0 : index
    %40 = vector.load %arg7[%c1_33, %c1_34, %c0_35] : memref<18x18x128xf32, #tpu.memory_space<vmem>>, vector<16x16x128xf32>
    %41 = vector.shape_cast %40 : vector<16x16x128xf32> to vector<256x128xf32>
    %42 = arith.truncf %41 : vector<256x128xf32> to vector<256x128xbf16>
    %c512 = arith.constant 512 : index
    %c0_36 = arith.constant 0 : index
    %43 = vector.load %arg4[%c512, %c0_36] : memref<1152x128xbf16, #tpu.memory_space<vmem>>, vector<128x128xbf16>
    %cst_37 = arith.constant dense<0.000000e+00> : vector<256x128xf32>
    %44 = tpu.matmul %42, %43, %cst_37 {dimension_numbers = #tpu.dot_dimension_numbers<[1], [0], [0], [1], [0, 0, 1, 1], [], []>} : vector<256x128xbf16>, vector<128x128xbf16>, vector<256x128xf32> -> vector<256x128xf32>
    %45 = arith.addf %39, %44 : vector<256x128xf32>
    %c1_38 = arith.constant 1 : index
    %c2_39 = arith.constant 2 : index
    %c0_40 = arith.constant 0 : index
    %46 = vector.load %arg7[%c1_38, %c2_39, %c0_40] : memref<18x18x128xf32, #tpu.memory_space<vmem>>, vector<16x16x128xf32>
    %47 = vector.shape_cast %46 : vector<16x16x128xf32> to vector<256x128xf32>
    %48 = arith.truncf %47 : vector<256x128xf32> to vector<256x128xbf16>
    %c640 = arith.constant 640 : index
    %c0_41 = arith.constant 0 : index
    %49 = vector.load %arg4[%c640, %c0_41] : memref<1152x128xbf16, #tpu.memory_space<vmem>>, vector<128x128xbf16>
    %cst_42 = arith.constant dense<0.000000e+00> : vector<256x128xf32>
    %50 = tpu.matmul %48, %49, %cst_42 {dimension_numbers = #tpu.dot_dimension_numbers<[1], [0], [0], [1], [0, 0, 1, 1], [], []>} : vector<256x128xbf16>, vector<128x128xbf16>, vector<256x128xf32> -> vector<256x128xf32>
    %51 = arith.addf %45, %50 : vector<256x128xf32>
    %c2_43 = arith.constant 2 : index
    %c0_44 = arith.constant 0 : index
    %c0_45 = arith.constant 0 : index
    %52 = vector.load %arg7[%c2_43, %c0_44, %c0_45] : memref<18x18x128xf32, #tpu.memory_space<vmem>>, vector<16x16x128xf32>
    %53 = vector.shape_cast %52 : vector<16x16x128xf32> to vector<256x128xf32>
    %54 = arith.truncf %53 : vector<256x128xf32> to vector<256x128xbf16>
    %c768 = arith.constant 768 : index
    %c0_46 = arith.constant 0 : index
    %55 = vector.load %arg4[%c768, %c0_46] : memref<1152x128xbf16, #tpu.memory_space<vmem>>, vector<128x128xbf16>
    %cst_47 = arith.constant dense<0.000000e+00> : vector<256x128xf32>
    %56 = tpu.matmul %54, %55, %cst_47 {dimension_numbers = #tpu.dot_dimension_numbers<[1], [0], [0], [1], [0, 0, 1, 1], [], []>} : vector<256x128xbf16>, vector<128x128xbf16>, vector<256x128xf32> -> vector<256x128xf32>
    %57 = arith.addf %51, %56 : vector<256x128xf32>
    %c2_48 = arith.constant 2 : index
    %c1_49 = arith.constant 1 : index
    %c0_50 = arith.constant 0 : index
    %58 = vector.load %arg7[%c2_48, %c1_49, %c0_50] : memref<18x18x128xf32, #tpu.memory_space<vmem>>, vector<16x16x128xf32>
    %59 = vector.shape_cast %58 : vector<16x16x128xf32> to vector<256x128xf32>
    %60 = arith.truncf %59 : vector<256x128xf32> to vector<256x128xbf16>
    %c896 = arith.constant 896 : index
    %c0_51 = arith.constant 0 : index
    %61 = vector.load %arg4[%c896, %c0_51] : memref<1152x128xbf16, #tpu.memory_space<vmem>>, vector<128x128xbf16>
    %cst_52 = arith.constant dense<0.000000e+00> : vector<256x128xf32>
    %62 = tpu.matmul %60, %61, %cst_52 {dimension_numbers = #tpu.dot_dimension_numbers<[1], [0], [0], [1], [0, 0, 1, 1], [], []>} : vector<256x128xbf16>, vector<128x128xbf16>, vector<256x128xf32> -> vector<256x128xf32>
    %63 = arith.addf %57, %62 : vector<256x128xf32>
    %c2_53 = arith.constant 2 : index
    %c2_54 = arith.constant 2 : index
    %c0_55 = arith.constant 0 : index
    %64 = vector.load %arg7[%c2_53, %c2_54, %c0_55] : memref<18x18x128xf32, #tpu.memory_space<vmem>>, vector<16x16x128xf32>
    %65 = vector.shape_cast %64 : vector<16x16x128xf32> to vector<256x128xf32>
    %66 = arith.truncf %65 : vector<256x128xf32> to vector<256x128xbf16>
    %c1024 = arith.constant 1024 : index
    %c0_56 = arith.constant 0 : index
    %67 = vector.load %arg4[%c1024, %c0_56] : memref<1152x128xbf16, #tpu.memory_space<vmem>>, vector<128x128xbf16>
    %cst_57 = arith.constant dense<0.000000e+00> : vector<256x128xf32>
    %68 = tpu.matmul %66, %67, %cst_57 {dimension_numbers = #tpu.dot_dimension_numbers<[1], [0], [0], [1], [0, 0, 1, 1], [], []>} : vector<256x128xbf16>, vector<128x128xbf16>, vector<256x128xf32> -> vector<256x128xf32>
    %69 = arith.addf %63, %68 : vector<256x128xf32>
    %70 = arith.truncf %69 : vector<256x128xf32> to vector<256x128xbf16>
    %c0_58 = arith.constant 0 : index
    %c0_59 = arith.constant 0 : index
    %c0_60 = arith.constant 0 : index
    %71 = vector.load %arg5[%c0_58, %c0_59, %c0_60] : memref<1x256x128xbf16, #tpu.memory_space<vmem>>, vector<1x256x128xbf16>
    %72 = vector.shape_cast %71 : vector<1x256x128xbf16> to vector<256x128xbf16>
    %73 = vector.shape_cast %70 : vector<256x128xbf16> to vector<1x256x128xbf16>
    tpu.vector_store %arg5[%c0_58, %c0_59, %c0_60], %73 {strides = array<i32>} : memref<1x256x128xbf16, #tpu.memory_space<vmem>>, vector<1x256x128xbf16>,
    %cst_61 = arith.constant dense<0.000000e+00> : vector<128xf32>
    %74 = vector.multi_reduction <add>, %69, %cst_61 [0] : vector<256x128xf32> to vector<128xf32>
    %75 = vector.shape_cast %74 : vector<128xf32> to vector<1x128xf32>
    %76 = arith.mulf %69, %69 : vector<256x128xf32>
    %cst_62 = arith.constant dense<0.000000e+00> : vector<128xf32>
    %77 = vector.multi_reduction <add>, %76, %cst_62 [0] : vector<256x128xf32> to vector<128xf32>
    %78 = vector.shape_cast %77 : vector<128xf32> to vector<1x128xf32>
    %79 = tpu.concatenate %75, %78 in 0 : vector<1x128xf32>, vector<1x128xf32> -> vector<2x128xf32>
    %c0_63 = arith.constant 0 : index
    %c0_64 = arith.constant 0 : index
    %c0_65 = arith.constant 0 : index
    %80 = vector.load %arg6[%c0_63, %c0_64, %c0_65] : memref<1x2x128xf32, #tpu.memory_space<vmem>>, vector<1x2x128xf32>
    %81 = vector.shape_cast %80 : vector<1x2x128xf32> to vector<2x128xf32>
    %82 = vector.shape_cast %79 : vector<2x128xf32> to vector<1x2x128xf32>
    tpu.vector_store %arg6[%c0_63, %c0_64, %c0_65], %82 {strides = array<i32>} : memref<1x2x128xf32, #tpu.memory_space<vmem>>, vector<1x2x128xf32>,
    return
  }
  func.func @transform_0(%arg0: i32) -> (i32, i32, i32, i32) {
    %c0_i32 = arith.constant 0 : i32
    %c0_i32_0 = arith.constant 0 : i32
    %c0_i32_1 = arith.constant 0 : i32
    %c0_i32_2 = arith.constant 0 : i32
    return %arg0, %c0_i32, %c0_i32_0, %c0_i32_1 : i32, i32, i32, i32
  }
  func.func @transform_1(%arg0: i32) -> (i32, i32, i32) {
    %c0_i32 = arith.constant 0 : i32
    %c0_i32_0 = arith.constant 0 : i32
    %c0_i32_1 = arith.constant 0 : i32
    %c0_i32_2 = arith.constant 0 : i32
    return %c0_i32, %c0_i32_0, %c0_i32_1 : i32, i32, i32
  }
  func.func @transform_2(%arg0: i32) -> (i32, i32, i32) {
    %c0_i32 = arith.constant 0 : i32
    %c0_i32_0 = arith.constant 0 : i32
    %c0_i32_1 = arith.constant 0 : i32
    %c0_i32_2 = arith.constant 0 : i32
    return %c0_i32, %c0_i32_0, %c0_i32_1 : i32, i32, i32
  }
  func.func @transform_3(%arg0: i32) -> (i32, i32) {
    %c0_i32 = arith.constant 0 : i32
    %c0_i32_0 = arith.constant 0 : i32
    %c0_i32_1 = arith.constant 0 : i32
    return %c0_i32, %c0_i32_0 : i32, i32
  }
  func.func @transform_4(%arg0: i32) -> (i32, i32, i32) {
    %c0_i32 = arith.constant 0 : i32
    %c0_i32_0 = arith.constant 0 : i32
    %c0_i32_1 = arith.constant 0 : i32
    return %arg0, %c0_i32, %c0_i32_0 : i32, i32, i32
  }
  func.func @transform_5(%arg0: i32) -> (i32, i32, i32) {
    %c0_i32 = arith.constant 0 : i32
    %c0_i32_0 = arith.constant 0 : i32
    %c0_i32_1 = arith.constant 0 : i32
    return %arg0, %c0_i32, %c0_i32_0 : i32, i32, i32
  }
}

module attributes {stable_mosaic.version = 11 : i64} {
  func.func @norm_add_relu_kernel(%arg0: i32, %arg1: memref<512x128xbf16, #tpu.memory_space<vmem>>, %arg2: memref<1x128xf32, #tpu.memory_space<vmem>>, %arg3: memref<1x128xf32, #tpu.memory_space<vmem>>, %arg4: memref<512x128xbf16, #tpu.memory_space<vmem>>, %arg5: memref<512x128xbf16, #tpu.memory_space<vmem>>) attributes {dimension_semantics = [#tpu.dimension_semantics<parallel>], iteration_bounds = array<i64: 1>, scalar_prefetch = 0 : i64, scratch_operands = 0 : i64, tpu.core_type = #tpu.core_type<tc>, window_params = [{transform_indices = @transform_0, window_bounds = array<i64: 512, 128>}, {pipeline_mode = #tpu.pipeline_mode<synchronous>, transform_indices = @transform_1, window_bounds = array<i64: 1, 128>}, {pipeline_mode = #tpu.pipeline_mode<synchronous>, transform_indices = @transform_2, window_bounds = array<i64: 1, 128>}, {transform_indices = @transform_3, window_bounds = array<i64: 512, 128>}, {transform_indices = @transform_4, window_bounds = array<i64: 512, 128>}]} {
    %c0 = arith.constant 0 : index
    %c0_0 = arith.constant 0 : index
    %0 = vector.load %arg1[%c0, %c0_0] : memref<512x128xbf16, #tpu.memory_space<vmem>>, vector<512x128xbf16>
    %1 = arith.extf %0 : vector<512x128xbf16> to vector<512x128xf32>
    %c0_1 = arith.constant 0 : index
    %c0_2 = arith.constant 0 : index
    %2 = vector.load %arg2[%c0_1, %c0_2] : memref<1x128xf32, #tpu.memory_space<vmem>>, vector<1x128xf32>
    %3 = vector.broadcast %2 : vector<1x128xf32> to vector<512x128xf32>
    %4 = arith.mulf %1, %3 : vector<512x128xf32>
    %c0_3 = arith.constant 0 : index
    %c0_4 = arith.constant 0 : index
    %5 = vector.load %arg3[%c0_3, %c0_4] : memref<1x128xf32, #tpu.memory_space<vmem>>, vector<1x128xf32>
    %6 = vector.broadcast %5 : vector<1x128xf32> to vector<512x128xf32>
    %7 = arith.addf %4, %6 : vector<512x128xf32>
    %c0_5 = arith.constant 0 : index
    %c0_6 = arith.constant 0 : index
    %8 = vector.load %arg4[%c0_5, %c0_6] : memref<512x128xbf16, #tpu.memory_space<vmem>>, vector<512x128xbf16>
    %9 = arith.extf %8 : vector<512x128xbf16> to vector<512x128xf32>
    %10 = arith.addf %7, %9 : vector<512x128xf32>
    %cst = arith.constant 0.000000e+00 : f32
    %11 = vector.broadcast %cst : f32 to vector<512x128xf32>
    %12 = arith.maximumf %10, %11 : vector<512x128xf32>
    %13 = arith.truncf %12 : vector<512x128xf32> to vector<512x128xbf16>
    %c0_7 = arith.constant 0 : index
    %c0_8 = arith.constant 0 : index
    %14 = vector.load %arg5[%c0_7, %c0_8] : memref<512x128xbf16, #tpu.memory_space<vmem>>, vector<512x128xbf16>
    tpu.vector_store %arg5[%c0_7, %c0_8], %13 {strides = array<i32>} : memref<512x128xbf16, #tpu.memory_space<vmem>>, vector<512x128xbf16>,
    return
  }
  func.func @transform_0(%arg0: i32) -> (i32, i32) {
    %c0_i32 = arith.constant 0 : i32
    %c0_i32_0 = arith.constant 0 : i32
    return %arg0, %c0_i32 : i32, i32
  }
  func.func @transform_1(%arg0: i32) -> (i32, i32) {
    %c0_i32 = arith.constant 0 : i32
    %c0_i32_0 = arith.constant 0 : i32
    %c0_i32_1 = arith.constant 0 : i32
    return %c0_i32, %c0_i32_0 : i32, i32
  }
  func.func @transform_2(%arg0: i32) -> (i32, i32) {
    %c0_i32 = arith.constant 0 : i32
    %c0_i32_0 = arith.constant 0 : i32
    %c0_i32_1 = arith.constant 0 : i32
    return %c0_i32, %c0_i32_0 : i32, i32
  }
  func.func @transform_3(%arg0: i32) -> (i32, i32) {
    %c0_i32 = arith.constant 0 : i32
    %c0_i32_0 = arith.constant 0 : i32
    return %arg0, %c0_i32 : i32, i32
  }
  func.func @transform_4(%arg0: i32) -> (i32, i32) {
    %c0_i32 = arith.constant 0 : i32
    %c0_i32_0 = arith.constant 0 : i32
    return %arg0, %c0_i32 : i32, i32
  }
}

module attributes {stable_mosaic.version = 11 : i64} {
  func.func @norm_gemm_stats_kernel(%arg0: i32, %arg1: memref<512x128xbf16, #tpu.memory_space<vmem>>, %arg2: memref<1x128xf32, #tpu.memory_space<vmem>>, %arg3: memref<1x128xf32, #tpu.memory_space<vmem>>, %arg4: memref<128x128xbf16, #tpu.memory_space<vmem>>, %arg5: memref<512x128xbf16, #tpu.memory_space<vmem>>, %arg6: memref<1x2x128xf32, #tpu.memory_space<vmem>>) attributes {dimension_semantics = [#tpu.dimension_semantics<parallel>], iteration_bounds = array<i64: 1>, scalar_prefetch = 0 : i64, scratch_operands = 0 : i64, tpu.core_type = #tpu.core_type<tc>, window_params = [{transform_indices = @transform_0, window_bounds = array<i64: 512, 128>}, {pipeline_mode = #tpu.pipeline_mode<synchronous>, transform_indices = @transform_1, window_bounds = array<i64: 1, 128>}, {pipeline_mode = #tpu.pipeline_mode<synchronous>, transform_indices = @transform_2, window_bounds = array<i64: 1, 128>}, {pipeline_mode = #tpu.pipeline_mode<synchronous>, transform_indices = @transform_3, window_bounds = array<i64: 128, 128>}, {transform_indices = @transform_4, window_bounds = array<i64: 512, 128>}, {transform_indices = @transform_5, window_bounds = array<i64: 1, 2, 128>}]} {
    %c0 = arith.constant 0 : index
    %c0_0 = arith.constant 0 : index
    %0 = vector.load %arg1[%c0, %c0_0] : memref<512x128xbf16, #tpu.memory_space<vmem>>, vector<512x128xbf16>
    %1 = arith.extf %0 : vector<512x128xbf16> to vector<512x128xf32>
    %c0_1 = arith.constant 0 : index
    %c0_2 = arith.constant 0 : index
    %2 = vector.load %arg2[%c0_1, %c0_2] : memref<1x128xf32, #tpu.memory_space<vmem>>, vector<1x128xf32>
    %3 = vector.broadcast %2 : vector<1x128xf32> to vector<512x128xf32>
    %4 = arith.mulf %1, %3 : vector<512x128xf32>
    %c0_3 = arith.constant 0 : index
    %c0_4 = arith.constant 0 : index
    %5 = vector.load %arg3[%c0_3, %c0_4] : memref<1x128xf32, #tpu.memory_space<vmem>>, vector<1x128xf32>
    %6 = vector.broadcast %5 : vector<1x128xf32> to vector<512x128xf32>
    %7 = arith.addf %4, %6 : vector<512x128xf32>
    %cst = arith.constant 0.000000e+00 : f32
    %8 = vector.broadcast %cst : f32 to vector<512x128xf32>
    %9 = arith.maximumf %7, %8 : vector<512x128xf32>
    %10 = arith.truncf %9 : vector<512x128xf32> to vector<512x128xbf16>
    %c0_5 = arith.constant 0 : index
    %c0_6 = arith.constant 0 : index
    %11 = vector.load %arg4[%c0_5, %c0_6] : memref<128x128xbf16, #tpu.memory_space<vmem>>, vector<128x128xbf16>
    %cst_7 = arith.constant dense<0.000000e+00> : vector<512x128xf32>
    %12 = tpu.matmul %10, %11, %cst_7 {dimension_numbers = #tpu.dot_dimension_numbers<[1], [0], [0], [1], [0, 0, 1, 1], [], []>} : vector<512x128xbf16>, vector<128x128xbf16>, vector<512x128xf32> -> vector<512x128xf32>
    %13 = arith.truncf %12 : vector<512x128xf32> to vector<512x128xbf16>
    %c0_8 = arith.constant 0 : index
    %c0_9 = arith.constant 0 : index
    %14 = vector.load %arg5[%c0_8, %c0_9] : memref<512x128xbf16, #tpu.memory_space<vmem>>, vector<512x128xbf16>
    tpu.vector_store %arg5[%c0_8, %c0_9], %13 {strides = array<i32>} : memref<512x128xbf16, #tpu.memory_space<vmem>>, vector<512x128xbf16>,
    %cst_10 = arith.constant dense<0.000000e+00> : vector<128xf32>
    %15 = vector.multi_reduction <add>, %12, %cst_10 [0] : vector<512x128xf32> to vector<128xf32>
    %16 = vector.shape_cast %15 : vector<128xf32> to vector<1x128xf32>
    %17 = arith.mulf %12, %12 : vector<512x128xf32>
    %cst_11 = arith.constant dense<0.000000e+00> : vector<128xf32>
    %18 = vector.multi_reduction <add>, %17, %cst_11 [0] : vector<512x128xf32> to vector<128xf32>
    %19 = vector.shape_cast %18 : vector<128xf32> to vector<1x128xf32>
    %20 = tpu.concatenate %16, %19 in 0 : vector<1x128xf32>, vector<1x128xf32> -> vector<2x128xf32>
    %c0_12 = arith.constant 0 : index
    %c0_13 = arith.constant 0 : index
    %c0_14 = arith.constant 0 : index
    %21 = vector.load %arg6[%c0_12, %c0_13, %c0_14] : memref<1x2x128xf32, #tpu.memory_space<vmem>>, vector<1x2x128xf32>
    %22 = vector.shape_cast %21 : vector<1x2x128xf32> to vector<2x128xf32>
    %23 = vector.shape_cast %20 : vector<2x128xf32> to vector<1x2x128xf32>
    tpu.vector_store %arg6[%c0_12, %c0_13, %c0_14], %23 {strides = array<i32>} : memref<1x2x128xf32, #tpu.memory_space<vmem>>, vector<1x2x128xf32>,
    return
  }
  func.func @transform_0(%arg0: i32) -> (i32, i32) {
    %c0_i32 = arith.constant 0 : i32
    %c0_i32_0 = arith.constant 0 : i32
    return %arg0, %c0_i32 : i32, i32
  }
  func.func @transform_1(%arg0: i32) -> (i32, i32) {
    %c0_i32 = arith.constant 0 : i32
    %c0_i32_0 = arith.constant 0 : i32
    %c0_i32_1 = arith.constant 0 : i32
    return %c0_i32, %c0_i32_0 : i32, i32
  }
  func.func @transform_2(%arg0: i32) -> (i32, i32) {
    %c0_i32 = arith.constant 0 : i32
    %c0_i32_0 = arith.constant 0 : i32
    %c0_i32_1 = arith.constant 0 : i32
    return %c0_i32, %c0_i32_0 : i32, i32
  }
  func.func @transform_3(%arg0: i32) -> (i32, i32) {
    %c0_i32 = arith.constant 0 : i32
    %c0_i32_0 = arith.constant 0 : i32
    %c0_i32_1 = arith.constant 0 : i32
    return %c0_i32, %c0_i32_0 : i32, i32
  }
  func.func @transform_4(%arg0: i32) -> (i32, i32) {
    %c0_i32 = arith.constant 0 : i32
    %c0_i32_0 = arith.constant 0 : i32
    return %arg0, %c0_i32 : i32, i32
  }
  func.func @transform_5(%arg0: i32) -> (i32, i32, i32) {
    %c0_i32 = arith.constant 0 : i32
    %c0_i32_0 = arith.constant 0 : i32
    %c0_i32_1 = arith.constant 0 : i32
    return %arg0, %c0_i32, %c0_i32_0 : i32, i32, i32
  }
}

</mosaic_0001>

<llo_original>
// kernel: bottleneck_forward.4
$region0: #{bottleneck_forward.4}
  #allocation0 [shape = 'u32[]', space=smem, size = 0x4, offset = 0x4, fixed_abs, tag = 'smem constant byte address 0x4 - core index']
  #allocation1 [shape = 'u32[144,128]{1,0:T(1,128)}', space=vmem, size = 0x12000, scoped, tag = 'internal scratch']
  %s0 = inlined_call_operand.vmem [shape: bf16[512,128], index: 0, kind: input, shape index: {}]
  %s1 = inlined_call_operand.vmem [shape: bf16[128,128], index: 1, kind: input, shape index: {}]
  %s2 = inlined_call_operand.vmem [shape: bf16[512,128], index: 2, kind: output, shape index: {0}]
  %s3 = inlined_call_operand.vmem [shape: f32[1,2,128], index: 3, kind: output, shape index: {1}]
  %4 = xla_tuple %s2, %s3
  %s5 = sld [smem:[#allocation0]]
  $region26: #{bottleneck_forward.4} parent=0
    _
  %s7 = ssub.s32 1, %s5
  %s8 = scalar_select 0, %s7, %s5
  // Predicated region
  $region2: #{bottleneck_forward.4} parent=0 // pred_check
    _
  $region3: #{bottleneck_forward.4} parent=0 // pred_check_branch
    %10 = sbr.rel (0) target = $region5
  $region4: #{bottleneck_forward.4} parent=0 // pred_region
    _
  $region5: #{bottleneck_forward.4} parent=0 // pred_fallthru
    _
  // Predicated region
  $region6: #{bottleneck_forward.4} parent=0 // pred_check
    _
  $region7: #{bottleneck_forward.4} parent=0 // pred_check_branch
    %12 = sbr.rel (0) target = $region9
  $region8: #{bottleneck_forward.4} parent=0 // pred_region
    _
  $region9: #{bottleneck_forward.4} parent=0 // pred_fallthru
    _
  %v14 = vld [vmem:[%s0] sm:$0xf]
  %v15 = vld [vmem:[%s0 + $0x4] sm:$0xf]
  %v16 = vld [vmem:[%s0 + $0x8] sm:$0xf]
  %v17 = vld [vmem:[%s0 + $0xc] sm:$0xf]
  %v18 = vld [vmem:[%s0 + $0x10] sm:$0xf]
  %v19 = vld [vmem:[%s0 + $0x14] sm:$0xf]
  %v20 = vld [vmem:[%s0 + $0x18] sm:$0xf]
  %v21 = vld [vmem:[%s0 + $0x1c] sm:$0xf]
  %v22 = vld [vmem:[%s0 + $0x20] sm:$0xf]
  %v23 = vld [vmem:[%s0 + $0x24] sm:$0xf]
  %v24 = vld [vmem:[%s0 + $0x28] sm:$0xf]
  %v25 = vld [vmem:[%s0 + $0x2c] sm:$0xf]
  %v26 = vld [vmem:[%s0 + $0x30] sm:$0xf]
  %v27 = vld [vmem:[%s0 + $0x34] sm:$0xf]
  %v28 = vld [vmem:[%s0 + $0x38] sm:$0xf]
  %v29 = vld [vmem:[%s0 + $0x3c] sm:$0xf]
  %v30 = vld [vmem:[%s0 + $0x40] sm:$0xf]
  %v31 = vld [vmem:[%s0 + $0x44] sm:$0xf]
  %v32 = vld [vmem:[%s0 + $0x48] sm:$0xf]
  %v33 = vld [vmem:[%s0 + $0x4c] sm:$0xf]
  %v34 = vld [vmem:[%s0 + $0x50] sm:$0xf]
  %v35 = vld [vmem:[%s0 + $0x54] sm:$0xf]
  %v36 = vld [vmem:[%s0 + $0x58] sm:$0xf]
  %v37 = vld [vmem:[%s0 + $0x5c] sm:$0xf]
  %v38 = vld [vmem:[%s0 + $0x60] sm:$0xf]
  %v39 = vld [vmem:[%s0 + $0x64] sm:$0xf]
  %v40 = vld [vmem:[%s0 + $0x68] sm:$0xf]
  %v41 = vld [vmem:[%s0 + $0x6c] sm:$0xf]
  %v42 = vld [vmem:[%s0 + $0x70] sm:$0xf]
  %v43 = vld [vmem:[%s0 + $0x74] sm:$0xf]
  %v44 = vld [vmem:[%s0 + $0x78] sm:$0xf]
  %v45 = vld [vmem:[%s0 + $0x7c] sm:$0xf]
  %v46 = vld [vmem:[%s0 + $0x80] sm:$0xf]
  %v47 = vld [vmem:[%s0 + $0x84] sm:$0xf]
  %v48 = vld [vmem:[%s0 + $0x88] sm:$0xf]
  %v49 = vld [vmem:[%s0 + $0x8c] sm:$0xf]
  %v50 = vld [vmem:[%s0 + $0x90] sm:$0xf]
  %v51 = vld [vmem:[%s0 + $0x94] sm:$0xf]
  %v52 = vld [vmem:[%s0 + $0x98] sm:$0xf]
  %v53 = vld [vmem:[%s0 + $0x9c] sm:$0xf]
  %v54 = vld [vmem:[%s0 + $0xa0] sm:$0xf]
  %v55 = vld [vmem:[%s0 + $0xa4] sm:$0xf]
  %v56 = vld [vmem:[%s0 + $0xa8] sm:$0xf]
  %v57 = vld [vmem:[%s0 + $0xac] sm:$0xf]
  %v58 = vld [vmem:[%s0 + $0xb0] sm:$0xf]
  %v59 = vld [vmem:[%s0 + $0xb4] sm:$0xf]
  %v60 = vld [vmem:[%s0 + $0xb8] sm:$0xf]
  %v61 = vld [vmem:[%s0 + $0xbc] sm:$0xf]
  %v62 = vld [vmem:[%s0 + $0xc0] sm:$0xf]
  %v63 = vld [vmem:[%s0 + $0xc4] sm:$0xf]
  %v64 = vld [vmem:[%s0 + $0xc8] sm:$0xf]
  %v65 = vld [vmem:[%s0 + $0xcc] sm:$0xf]
  %v66 = vld [vmem:[%s0 + $0xd0] sm:$0xf]
  %v67 = vld [vmem:[%s0 + $0xd4] sm:$0xf]
  %v68 = vld [vmem:[%s0 + $0xd8] sm:$0xf]
  %v69 = vld [vmem:[%s0 + $0xdc] sm:$0xf]
  %v70 = vld [vmem:[%s0 + $0xe0] sm:$0xf]
  %v71 = vld [vmem:[%s0 + $0xe4] sm:$0xf]
  %v72 = vld [vmem:[%s0 + $0xe8] sm:$0xf]
  %v73 = vld [vmem:[%s0 + $0xec] sm:$0xf]
  %v74 = vld [vmem:[%s0 + $0xf0] sm:$0xf]
  %v75 = vld [vmem:[%s0 + $0xf4] sm:$0xf]
  %v76 = vld [vmem:[%s0 + $0xf8] sm:$0xf]
  %v77 = vld [vmem:[%s0 + $0xfc] sm:$0xf]
  %v78 = vld [vmem:[%s1] sm:$0xf]
  %v79 = vld [vmem:[%s1 + $0x4] sm:$0xf]
  %v80 = vld [vmem:[%s1 + $0x8] sm:$0xf]
  %v81 = vld [vmem:[%s1 + $0xc] sm:$0xf]
  %v82 = vld [vmem:[%s1 + $0x10] sm:$0xf]
  %v83 = vld [vmem:[%s1 + $0x14] sm:$0xf]
  %v84 = vld [vmem:[%s1 + $0x18] sm:$0xf]
  %v85 = vld [vmem:[%s1 + $0x1c] sm:$0xf]
  %v86 = vld [vmem:[%s1 + $0x20] sm:$0xf]
  %v87 = vld [vmem:[%s1 + $0x24] sm:$0xf]
  %v88 = vld [vmem:[%s1 + $0x28] sm:$0xf]
  %v89 = vld [vmem:[%s1 + $0x2c] sm:$0xf]
  %v90 = vld [vmem:[%s1 + $0x30] sm:$0xf]
  %v91 = vld [vmem:[%s1 + $0x34] sm:$0xf]
  %v92 = vld [vmem:[%s1 + $0x38] sm:$0xf]
  %v93 = vld [vmem:[%s1 + $0x3c] sm:$0xf]
  %v158 = vunpack.c.l.b16 %v14
  %v159 = vunpack.c.l.b16 %v15
  %v160 = vunpack.c.l.b16 %v16
  %v161 = vunpack.c.l.b16 %v17
  %v162 = vunpack.c.l.b16 %v18
  %v163 = vunpack.c.l.b16 %v19
  %v164 = vunpack.c.l.b16 %v20
  %v165 = vunpack.c.l.b16 %v21
  %v166 = vunpack.c.l.b16 %v22
  %v167 = vunpack.c.l.b16 %v23
  %v168 = vunpack.c.l.b16 %v24
  %v169 = vunpack.c.l.b16 %v25
  %v170 = vunpack.c.l.b16 %v26
  %v171 = vunpack.c.l.b16 %v27
  %v172 = vunpack.c.l.b16 %v28
  %v173 = vunpack.c.l.b16 %v29
  %v174 = vunpack.c.l.b16 %v30
  %v175 = vunpack.c.l.b16 %v31
  %v176 = vunpack.c.l.b16 %v32
  %v177 = vunpack.c.l.b16 %v33
  %v178 = vunpack.c.l.b16 %v34
  %v179 = vunpack.c.l.b16 %v35
  %v180 = vunpack.c.l.b16 %v36
  %v181 = vunpack.c.l.b16 %v37
  %v182 = vunpack.c.l.b16 %v38
  %v183 = vunpack.c.l.b16 %v39
  %v184 = vunpack.c.l.b16 %v40
  %v185 = vunpack.c.l.b16 %v41
  %v186 = vunpack.c.l.b16 %v42
  %v187 = vunpack.c.l.b16 %v43
  %v188 = vunpack.c.l.b16 %v44
  %v189 = vunpack.c.l.b16 %v45
  %v190 = vunpack.c.l.b16 %v46
  %v191 = vunpack.c.l.b16 %v47
  %v192 = vunpack.c.l.b16 %v48
  %v193 = vunpack.c.l.b16 %v49
  %v194 = vunpack.c.l.b16 %v50
  %v195 = vunpack.c.l.b16 %v51
  %v196 = vunpack.c.l.b16 %v52
  %v197 = vunpack.c.l.b16 %v53
  %v198 = vunpack.c.l.b16 %v54
  %v199 = vunpack.c.l.b16 %v55
  %v200 = vunpack.c.l.b16 %v56
  %v201 = vunpack.c.l.b16 %v57
  %v202 = vunpack.c.l.b16 %v58
  %v203 = vunpack.c.l.b16 %v59
  %v204 = vunpack.c.l.b16 %v60
  %v205 = vunpack.c.l.b16 %v61
  %v206 = vunpack.c.l.b16 %v62
  %v207 = vunpack.c.l.b16 %v63
  %v208 = vunpack.c.l.b16 %v64
  %v209 = vunpack.c.l.b16 %v65
  %v210 = vunpack.c.l.b16 %v66
  %v211 = vunpack.c.l.b16 %v67
  %v212 = vunpack.c.l.b16 %v68
  %v213 = vunpack.c.l.b16 %v69
  %v214 = vunpack.c.l.b16 %v70
  %v215 = vunpack.c.l.b16 %v71
  %v216 = vunpack.c.l.b16 %v72
  %v217 = vunpack.c.l.b16 %v73
  %v218 = vunpack.c.l.b16 %v74
  %v219 = vunpack.c.l.b16 %v75
  %v220 = vunpack.c.l.b16 %v76
  %v221 = vunpack.c.l.b16 %v77
  %v222 = vpack.c.b16 %v159, %v158
  %v223 = vpack.c.b16 %v161, %v160
  %v224 = vpack.c.b16 %v163, %v162
  %v225 = vpack.c.b16 %v165, %v164
  %v226 = vpack.c.b16 %v167, %v166
  %v227 = vpack.c.b16 %v169, %v168
  %v228 = vpack.c.b16 %v171, %v170
  %v229 = vpack.c.b16 %v173, %v172
  %v230 = vpack.c.b16 %v175, %v174
  %v231 = vpack.c.b16 %v177, %v176
  %v232 = vpack.c.b16 %v179, %v178
  %v233 = vpack.c.b16 %v181, %v180
  %v234 = vpack.c.b16 %v183, %v182
  %v235 = vpack.c.b16 %v185, %v184
  %v236 = vpack.c.b16 %v187, %v186
  %v237 = vpack.c.b16 %v189, %v188
  %v238 = vpack.c.b16 %v191, %v190
  %v239 = vpack.c.b16 %v193, %v192
  %v240 = vpack.c.b16 %v195, %v194
  %v241 = vpack.c.b16 %v197, %v196
  %v242 = vpack.c.b16 %v199, %v198
  %v243 = vpack.c.b16 %v201, %v200
  %v244 = vpack.c.b16 %v203, %v202
  %v245 = vpack.c.b16 %v205, %v204
  %v246 = vpack.c.b16 %v207, %v206
  %v247 = vpack.c.b16 %v209, %v208
  %v248 = vpack.c.b16 %v211, %v210
  %v249 = vpack.c.b16 %v213, %v212
  %v250 = vpack.c.b16 %v215, %v214
  %v251 = vpack.c.b16 %v217, %v216
  %v252 = vpack.c.b16 %v219, %v218
  %v253 = vpack.c.b16 %v221, %v220
  %v302 = vunpack.c.l.b16 %v78
  %v303 = vunpack.c.l.b16 %v79
  %v304 = vunpack.c.l.b16 %v80
  %v305 = vunpack.c.l.b16 %v81
  %v306 = vunpack.c.l.b16 %v82
  %v307 = vunpack.c.l.b16 %v83
  %v308 = vunpack.c.l.b16 %v84
  %v309 = vunpack.c.l.b16 %v85
  %v310 = vunpack.c.l.b16 %v86
  %v311 = vunpack.c.l.b16 %v87
  %v312 = vunpack.c.l.b16 %v88
  %v313 = vunpack.c.l.b16 %v89
  %v314 = vunpack.c.l.b16 %v90
  %v315 = vunpack.c.l.b16 %v91
  %v316 = vunpack.c.l.b16 %v92
  %v317 = vunpack.c.l.b16 %v93
  %v318 = vpack.c.b16 %v303, %v302
  %v319 = vpack.c.b16 %v305, %v304
  %v320 = vpack.c.b16 %v307, %v306
  %v321 = vpack.c.b16 %v309, %v308
  %v322 = vpack.c.b16 %v311, %v310
  %v323 = vpack.c.b16 %v313, %v312
  %v324 = vpack.c.b16 %v315, %v314
  %v325 = vpack.c.b16 %v317, %v316
  %334 = vmatprep.subr.bf16.mxu0 0
  %335 = vmatpush1.bf16.msra.mxu0 %v318
  %336 = vmatprep.subr.bf16.mxu0 0
  %337 = vmatpush1.bf16.msra.mxu0 %v319
  %338 = vmatprep.subr.bf16.mxu0 0
  %339 = vmatpush1.bf16.msra.mxu0 %v320
  %340 = vmatprep.subr.bf16.mxu0 0
  %341 = vmatpush1.bf16.msra.mxu0 %v321
  %342 = vmatprep.subr.bf16.mxu0 0
  %343 = vmatpush1.bf16.msra.mxu0 %v322
  %344 = vmatprep.subr.bf16.mxu0 0
  %345 = vmatpush1.bf16.msra.mxu0 %v323
  %346 = vmatprep.subr.bf16.mxu0 0
  %347 = vmatpush1.bf16.msra.mxu0 %v324
  %348 = vmatprep.subr.bf16.mxu0 0
  %349 = vmatpush1.bf16.msra.mxu0 %v325
  %350 = vmatprep.subr.bf16.mxu0 0
  %351 = vmatpush1.bf16.msra.mxu0 0
  %352 = vmatprep.subr.bf16.mxu0 0
  %353 = vmatpush1.bf16.msra.mxu0 0
  %354 = vmatprep.subr.bf16.mxu0 0
  %355 = vmatpush1.bf16.msra.mxu0 0
  %356 = vmatprep.subr.bf16.mxu0 0
  %357 = vmatpush1.bf16.msra.mxu0 0
  %358 = vmatprep.subr.bf16.mxu0 0
  %359 = vmatpush1.bf16.msra.mxu0 0
  %360 = vmatprep.subr.bf16.mxu0 0
  %361 = vmatpush1.bf16.msra.mxu0 0
  %362 = vmatprep.subr.bf16.mxu0 0
  %363 = vmatpush1.bf16.msra.mxu0 0
  %364 = vmatprep.subr.bf16.mxu0 0
  %365 = vmatpush1.bf16.msra.mxu0 0
  %366 = vmatprep.mubr.bf16.mxu0 0
  %367 = vmatmul.mubr.bf16.gmra.mrb[0].mxu0 %v222
  %v368 = vpop.f32.mrb[0].mxu0
  %v369 = vadd.f32 0.0, %v368
  %v370 = vpop.f32.mrb[0].mxu0
  %v371 = vpop.f32.mrb[0].mxu0
  %v372 = vadd.f32 0.0, %v371
  %v373 = vpop.f32.mrb[0].mxu0
  %374 = vmatprep.mubr.bf16.mxu0 0
  %375 = vmatmul.mubr.bf16.gmra.mrb[0].mxu0 %v223
  %v376 = vpop.f32.mrb[0].mxu0
  %v377 = vadd.f32 0.0, %v376
  %v378 = vpop.f32.mrb[0].mxu0
  %v379 = vpop.f32.mrb[0].mxu0
  %v380 = vadd.f32 0.0, %v379
  %v381 = vpop.f32.mrb[0].mxu0
  %382 = vmatprep.mubr.bf16.mxu0 0
  %383 = vmatmul.mubr.bf16.gmra.mrb[0].mxu0 %v224
  %v384 = vpop.f32.mrb[0].mxu0
  %v385 = vadd.f32 0.0, %v384
  %v386 = vpop.f32.mrb[0].mxu0
  %v387 = vpop.f32.mrb[0].mxu0
  %v388 = vadd.f32 0.0, %v387
  %v389 = vpop.f32.mrb[0].mxu0
  %390 = vmatprep.mubr.bf16.mxu0 0
  %391 = vmatmul.mubr.bf16.gmra.mrb[0].mxu0 %v225
  %v392 = vpop.f32.mrb[0].mxu0
  %v393 = vadd.f32 0.0, %v392
  %v394 = vpop.f32.mrb[0].mxu0
  %v395 = vpop.f32.mrb[0].mxu0
  %v396 = vadd.f32 0.0, %v395
  %v397 = vpop.f32.mrb[0].mxu0
  %398 = vmatprep.mubr.bf16.mxu0 0
  %399 = vmatmul.mubr.bf16.gmra.mrb[0].mxu0 %v226
  %v400 = vpop.f32.mrb[0].mxu0
  %v401 = vadd.f32 0.0, %v400
  %v402 = vpop.f32.mrb[0].mxu0
  %v403 = vpop.f32.mrb[0].mxu0
  %v404 = vadd.f32 0.0, %v403
  %v405 = vpop.f32.mrb[0].mxu0
  %406 = vmatprep.mubr.bf16.mxu0 0
  %407 = vmatmul.mubr.bf16.gmra.mrb[0].mxu0 %v227
  %v408 = vpop.f32.mrb[0].mxu0
  %v409 = vadd.f32 0.0, %v408
  %v410 = vpop.f32.mrb[0].mxu0
  %v411 = vpop.f32.mrb[0].mxu0
  %v412 = vadd.f32 0.0, %v411
  %v413 = vpop.f32.mrb[0].mxu0
  %414 = vmatprep.mubr.bf16.mxu0 0
  %415 = vmatmul.mubr.bf16.gmra.mrb[0].mxu0 %v228
  %v416 = vpop.f32.mrb[0].mxu0
  %v417 = vadd.f32 0.0, %v416
  %v418 = vpop.f32.mrb[0].mxu0
  %v419 = vpop.f32.mrb[0].mxu0
  %v420 = vadd.f32 0.0, %v419
  %v421 = vpop.f32.mrb[0].mxu0
  %422 = vmatprep.mubr.bf16.mxu0 0
  %423 = vmatmul.mubr.bf16.gmra.mrb[0].mxu0 %v229
  %v424 = vpop.f32.mrb[0].mxu0
  %v425 = vadd.f32 0.0, %v424
  %v426 = vpop.f32.mrb[0].mxu0
  %v427 = vpop.f32.mrb[0].mxu0
  %v428 = vadd.f32 0.0, %v427
  %v429 = vpop.f32.mrb[0].mxu0
  %430 = vmatprep.mubr.bf16.mxu0 0
  %431 = vmatmul.mubr.bf16.gmra.mrb[0].mxu0 %v230
  %v432 = vpop.f32.mrb[0].mxu0
  %v433 = vadd.f32 0.0, %v432
  %v434 = vpop.f32.mrb[0].mxu0
  %v435 = vpop.f32.mrb[0].mxu0
  %v436 = vadd.f32 0.0, %v435
  %v437 = vpop.f32.mrb[0].mxu0
  %438 = vmatprep.mubr.bf16.mxu0 0
  %439 = vmatmul.mubr.bf16.gmra.mrb[0].mxu0 %v231
  %v440 = vpop.f32.mrb[0].mxu0
  %v441 = vadd.f32 0.0, %v440
  %v442 = vpop.f32.mrb[0].mxu0
  %v443 = vpop.f32.mrb[0].mxu0
  %v444 = vadd.f32 0.0, %v443
  %v445 = vpop.f32.mrb[0].mxu0
  %446 = vmatprep.mubr.bf16.mxu0 0
  %447 = vmatmul.mubr.bf16.gmra.mrb[0].mxu0 %v232
  %v448 = vpop.f32.mrb[0].mxu0
  %v449 = vadd.f32 0.0, %v448
  %v450 = vpop.f32.mrb[0].mxu0
  %v451 = vpop.f32.mrb[0].mxu0
  %v452 = vadd.f32 0.0, %v451
  %v453 = vpop.f32.mrb[0].mxu0
  %454 = vmatprep.mubr.bf16.mxu0 0
  %455 = vmatmul.mubr.bf16.gmra.mrb[0].mxu0 %v233
  %v456 = vpop.f32.mrb[0].mxu0
  %v457 = vadd.f32 0.0, %v456
  %v458 = vpop.f32.mrb[0].mxu0
  %v459 = vpop.f32.mrb[0].mxu0
  %v460 = vadd.f32 0.0, %v459
  %v461 = vpop.f32.mrb[0].mxu0
  %462 = vmatprep.mubr.bf16.mxu0 0
  %463 = vmatmul.mubr.bf16.gmra.mrb[0].mxu0 %v234
  %v464 = vpop.f32.mrb[0].mxu0
  %v465 = vadd.f32 0.0, %v464
  %v466 = vpop.f32.mrb[0].mxu0
  %v467 = vpop.f32.mrb[0].mxu0
  %v468 = vadd.f32 0.0, %v467
  %v469 = vpop.f32.mrb[0].mxu0
  %470 = vmatprep.mubr.bf16.mxu0 0
  %471 = vmatmul.mubr.bf16.gmra.mrb[0].mxu0 %v235
  %v472 = vpop.f32.mrb[0].mxu0
  %v473 = vadd.f32 0.0, %v472
  %v474 = vpop.f32.mrb[0].mxu0
  %v475 = vpop.f32.mrb[0].mxu0
  %v476 = vadd.f32 0.0, %v475
  %v477 = vpop.f32.mrb[0].mxu0
  %478 = vmatprep.mubr.bf16.mxu0 0
  %479 = vmatmul.mubr.bf16.gmra.mrb[0].mxu0 %v236
  %v480 = vpop.f32.mrb[0].mxu0
  %v481 = vadd.f32 0.0, %v480
  %v482 = vpop.f32.mrb[0].mxu0
  %v483 = vpop.f32.mrb[0].mxu0
  %v484 = vadd.f32 0.0, %v483
  %v485 = vpop.f32.mrb[0].mxu0
  %486 = vmatprep.mubr.bf16.mxu0 0
  %487 = vmatmul.mubr.bf16.gmra.mrb[0].mxu0 %v237
  %v488 = vpop.f32.mrb[0].mxu0
  %v489 = vadd.f32 0.0, %v488
  %v490 = vpop.f32.mrb[0].mxu0
  %v491 = vpop.f32.mrb[0].mxu0
  %v492 = vadd.f32 0.0, %v491
  %v493 = vpop.f32.mrb[0].mxu0
  %494 = vmatprep.mubr.bf16.mxu0 0
  %495 = vmatmul.mubr.bf16.gmra.mrb[0].mxu0 %v238
  %v496 = vpop.f32.mrb[0].mxu0
  %v497 = vadd.f32 0.0, %v496
  %v498 = vpop.f32.mrb[0].mxu0
  %v499 = vpop.f32.mrb[0].mxu0
  %v500 = vadd.f32 0.0, %v499
  %v501 = vpop.f32.mrb[0].mxu0
  %502 = vmatprep.mubr.bf16.mxu0 0
  %503 = vmatmul.mubr.bf16.gmra.mrb[0].mxu0 %v239
  %v504 = vpop.f32.mrb[0].mxu0
  %v505 = vadd.f32 0.0, %v504
  %v506 = vpop.f32.mrb[0].mxu0
  %v507 = vpop.f32.mrb[0].mxu0
  %v508 = vadd.f32 0.0, %v507
  %v509 = vpop.f32.mrb[0].mxu0
  %510 = vmatprep.mubr.bf16.mxu0 0
  %511 = vmatmul.mubr.bf16.gmra.mrb[0].mxu0 %v240
  %v512 = vpop.f32.mrb[0].mxu0
  %v513 = vadd.f32 0.0, %v512
  %v514 = vpop.f32.mrb[0].mxu0
  %v515 = vpop.f32.mrb[0].mxu0
  %v516 = vadd.f32 0.0, %v515
  %v517 = vpop.f32.mrb[0].mxu0
  %518 = vmatprep.mubr.bf16.mxu0 0
  %519 = vmatmul.mubr.bf16.gmra.mrb[0].mxu0 %v241
  %v520 = vpop.f32.mrb[0].mxu0
  %v521 = vadd.f32 0.0, %v520
  %v522 = vpop.f32.mrb[0].mxu0
  %v523 = vpop.f32.mrb[0].mxu0
  %v524 = vadd.f32 0.0, %v523
  %v525 = vpop.f32.mrb[0].mxu0
  %526 = vmatprep.mubr.bf16.mxu0 0
  %527 = vmatmul.mubr.bf16.gmra.mrb[0].mxu0 %v242
  %v528 = vpop.f32.mrb[0].mxu0
  %v529 = vadd.f32 0.0, %v528
  %v530 = vpop.f32.mrb[0].mxu0
  %v531 = vpop.f32.mrb[0].mxu0
  %v532 = vadd.f32 0.0, %v531
  %v533 = vpop.f32.mrb[0].mxu0
  %534 = vmatprep.mubr.bf16.mxu0 0
  %535 = vmatmul.mubr.bf16.gmra.mrb[0].mxu0 %v243
  %v536 = vpop.f32.mrb[0].mxu0
  %v537 = vadd.f32 0.0, %v536
  %v538 = vpop.f32.mrb[0].mxu0
  %v539 = vpop.f32.mrb[0].mxu0
  %v540 = vadd.f32 0.0, %v539
  %v541 = vpop.f32.mrb[0].mxu0
  %542 = vmatprep.mubr.bf16.mxu0 0
  %543 = vmatmul.mubr.bf16.gmra.mrb[0].mxu0 %v244
  %v544 = vpop.f32.mrb[0].mxu0
  %v545 = vadd.f32 0.0, %v544
  %v546 = vpop.f32.mrb[0].mxu0
  %v547 = vpop.f32.mrb[0].mxu0
  %v548 = vadd.f32 0.0, %v547
  %v549 = vpop.f32.mrb[0].mxu0
  %550 = vmatprep.mubr.bf16.mxu0 0
  %551 = vmatmul.mubr.bf16.gmra.mrb[0].mxu0 %v245
  %v552 = vpop.f32.mrb[0].mxu0
  %v553 = vadd.f32 0.0, %v552
  %v554 = vpop.f32.mrb[0].mxu0
  %v555 = vpop.f32.mrb[0].mxu0
  %v556 = vadd.f32 0.0, %v555
  %v557 = vpop.f32.mrb[0].mxu0
  %558 = vmatprep.mubr.bf16.mxu0 0
  %559 = vmatmul.mubr.bf16.gmra.mrb[0].mxu0 %v246
  %v560 = vpop.f32.mrb[0].mxu0
  %v561 = vadd.f32 0.0, %v560
  %v562 = vpop.f32.mrb[0].mxu0
  %v563 = vpop.f32.mrb[0].mxu0
  %v564 = vadd.f32 0.0, %v563
  %v565 = vpop.f32.mrb[0].mxu0
  %566 = vmatprep.mubr.bf16.mxu0 0
  %567 = vmatmul.mubr.bf16.gmra.mrb[0].mxu0 %v247
  %v568 = vpop.f32.mrb[0].mxu0
  %v569 = vadd.f32 0.0, %v568
  %v570 = vpop.f32.mrb[0].mxu0
  %v571 = vpop.f32.mrb[0].mxu0
  %v572 = vadd.f32 0.0, %v571
  %v573 = vpop.f32.mrb[0].mxu0
  %574 = vmatprep.mubr.bf16.mxu0 0
  %575 = vmatmul.mubr.bf16.gmra.mrb[0].mxu0 %v248
  %v576 = vpop.f32.mrb[0].mxu0
  %v577 = vadd.f32 0.0, %v576
  %v578 = vpop.f32.mrb[0].mxu0
  %v579 = vpop.f32.mrb[0].mxu0
  %v580 = vadd.f32 0.0, %v579
  %v581 = vpop.f32.mrb[0].mxu0
  %582 = vmatprep.mubr.bf16.mxu0 0
  %583 = vmatmul.mubr.bf16.gmra.mrb[0].mxu0 %v249
  %v584 = vpop.f32.mrb[0].mxu0
  %v585 = vadd.f32 0.0, %v584
  %v586 = vpop.f32.mrb[0].mxu0
  %v587 = vpop.f32.mrb[0].mxu0
  %v588 = vadd.f32 0.0, %v587
  %v589 = vpop.f32.mrb[0].mxu0
  %590 = vmatprep.mubr.bf16.mxu0 0
  %591 = vmatmul.mubr.bf16.gmra.mrb[0].mxu0 %v250
  %v592 = vpop.f32.mrb[0].mxu0
  %v593 = vadd.f32 0.0, %v592
  %v594 = vpop.f32.mrb[0].mxu0
  %v595 = vpop.f32.mrb[0].mxu0
  %v596 = vadd.f32 0.0, %v595
  %v597 = vpop.f32.mrb[0].mxu0
  %598 = vmatprep.mubr.bf16.mxu0 0
  %599 = vmatmul.mubr.bf16.gmra.mrb[0].mxu0 %v251
  %v600 = vpop.f32.mrb[0].mxu0
  %v601 = vadd.f32 0.0, %v600
  %v602 = vpop.f32.mrb[0].mxu0
  %v603 = vpop.f32.mrb[0].mxu0
  %v604 = vadd.f32 0.0, %v603
  %v605 = vpop.f32.mrb[0].mxu0
  %606 = vmatprep.mubr.bf16.mxu0 0
  %607 = vmatmul.mubr.bf16.gmra.mrb[0].mxu0 %v252
  %v608 = vpop.f32.mrb[0].mxu0
  %v609 = vadd.f32 0.0, %v608
  %v610 = vpop.f32.mrb[0].mxu0
  %v611 = vpop.f32.mrb[0].mxu0
  %v612 = vadd.f32 0.0, %v611
  %v613 = vpop.f32.mrb[0].mxu0
  %614 = vmatprep.mubr.bf16.mxu0 0
  %615 = vmatmul.mubr.bf16.gmra.mrb[0].mxu0 %v253
  %v616 = vpop.f32.mrb[0].mxu0
  %v617 = vadd.f32 0.0, %v616
  %v618 = vpop.f32.mrb[0].mxu0
  %v619 = vpop.f32.mrb[0].mxu0
  %v620 = vadd.f32 0.0, %v619
  %v621 = vpop.f32.mrb[0].mxu0
  %622 = vdwg.mxu0
  %v623 = vpack.c.bf16 %v372, %v369
  %v624 = vpack.c.bf16 %v380, %v377
  %v625 = vpack.c.bf16 %v388, %v385
  %v626 = vpack.c.bf16 %v396, %v393
  %v627 = vpack.c.bf16 %v404, %v401
  %v628 = vpack.c.bf16 %v412, %v409
  %v629 = vpack.c.bf16 %v420, %v417
  %v630 = vpack.c.bf16 %v428, %v425
  %v631 = vpack.c.bf16 %v436, %v433
  %v632 = vpack.c.bf16 %v444, %v441
  %v633 = vpack.c.bf16 %v452, %v449
  %v634 = vpack.c.bf16 %v460, %v457
  %v635 = vpack.c.bf16 %v468, %v465
  %v636 = vpack.c.bf16 %v476, %v473
  %v637 = vpack.c.bf16 %v484, %v481
  %v638 = vpack.c.bf16 %v492, %v489
  %v639 = vpack.c.bf16 %v500, %v497
  %v640 = vpack.c.bf16 %v508, %v505
  %v641 = vpack.c.bf16 %v516, %v513
  %v642 = vpack.c.bf16 %v524, %v521
  %v643 = vpack.c.bf16 %v532, %v529
  %v644 = vpack.c.bf16 %v540, %v537
  %v645 = vpack.c.bf16 %v548, %v545
  %v646 = vpack.c.bf16 %v556, %v553
  %v647 = vpack.c.bf16 %v564, %v561
  %v648 = vpack.c.bf16 %v572, %v569
  %v649 = vpack.c.bf16 %v580, %v577
  %v650 = vpack.c.bf16 %v588, %v585
  %v651 = vpack.c.bf16 %v596, %v593
  %v652 = vpack.c.bf16 %v604, %v601
  %v653 = vpack.c.bf16 %v612, %v609
  %v654 = vpack.c.bf16 %v620, %v617
  %v687 = vunpack.c.l.b16 %v623
  %v688 = vunpack.c.h.b16 %v623
  %v689 = vunpack.c.l.b16 %v624
  %v690 = vunpack.c.h.b16 %v624
  %v691 = vunpack.c.l.b16 %v625
  %v692 = vunpack.c.h.b16 %v625
  %v693 = vunpack.c.l.b16 %v626
  %v694 = vunpack.c.h.b16 %v626
  %v695 = vunpack.c.l.b16 %v627
  %v696 = vunpack.c.h.b16 %v627
  %v697 = vunpack.c.l.b16 %v628
  %v698 = vunpack.c.h.b16 %v628
  %v699 = vunpack.c.l.b16 %v629
  %v700 = vunpack.c.h.b16 %v629
  %v701 = vunpack.c.l.b16 %v630
  %v702 = vunpack.c.h.b16 %v630
  %v703 = vunpack.c.l.b16 %v631
  %v704 = vunpack.c.h.b16 %v631
  %v705 = vunpack.c.l.b16 %v632
  %v706 = vunpack.c.h.b16 %v632
  %v707 = vunpack.c.l.b16 %v633
  %v708 = vunpack.c.h.b16 %v633
  %v709 = vunpack.c.l.b16 %v634
  %v710 = vunpack.c.h.b16 %v634
  %v711 = vunpack.c.l.b16 %v635
  %v712 = vunpack.c.h.b16 %v635
  %v713 = vunpack.c.l.b16 %v636
  %v714 = vunpack.c.h.b16 %v636
  %v715 = vunpack.c.l.b16 %v637
  %v716 = vunpack.c.h.b16 %v637
  %v717 = vunpack.c.l.b16 %v638
  %v718 = vunpack.c.h.b16 %v638
  %v719 = vunpack.c.l.b16 %v639
  %v720 = vunpack.c.h.b16 %v639
  %v721 = vunpack.c.l.b16 %v640
  %v722 = vunpack.c.h.b16 %v640
  %v723 = vunpack.c.l.b16 %v641
  %v724 = vunpack.c.h.b16 %v641
  %v725 = vunpack.c.l.b16 %v642
  %v726 = vunpack.c.h.b16 %v642
  %v727 = vunpack.c.l.b16 %v643
  %v728 = vunpack.c.h.b16 %v643
  %v729 = vunpack.c.l.b16 %v644
  %v730 = vunpack.c.h.b16 %v644
  %v731 = vunpack.c.l.b16 %v645
  %v732 = vunpack.c.h.b16 %v645
  %v733 = vunpack.c.l.b16 %v646
  %v734 = vunpack.c.h.b16 %v646
  %v735 = vunpack.c.l.b16 %v647
  %v736 = vunpack.c.h.b16 %v647
  %v737 = vunpack.c.l.b16 %v648
  %v738 = vunpack.c.h.b16 %v648
  %v739 = vunpack.c.l.b16 %v649
  %v740 = vunpack.c.h.b16 %v649
  %v741 = vunpack.c.l.b16 %v650
  %v742 = vunpack.c.h.b16 %v650
  %v743 = vunpack.c.l.b16 %v651
  %v744 = vunpack.c.h.b16 %v651
  %v745 = vunpack.c.l.b16 %v652
  %v746 = vunpack.c.h.b16 %v652
  %v747 = vunpack.c.l.b16 %v653
  %v748 = vunpack.c.h.b16 %v653
  %v749 = vunpack.c.l.b16 %v654
  %v750 = vunpack.c.h.b16 %v654
  %v751 = vpack.c.b16 %v687, %v687
  %v752 = vpack.c.b16 %v688, %v688
  %v753 = vpack.c.b16 %v689, %v689
  %v754 = vpack.c.b16 %v690, %v690
  %v755 = vpack.c.b16 %v691, %v691
  %v756 = vpack.c.b16 %v692, %v692
  %v757 = vpack.c.b16 %v693, %v693
  %v758 = vpack.c.b16 %v694, %v694
  %v759 = vpack.c.b16 %v695, %v695
  %v760 = vpack.c.b16 %v696, %v696
  %v761 = vpack.c.b16 %v697, %v697
  %v762 = vpack.c.b16 %v698, %v698
  %v763 = vpack.c.b16 %v699, %v699
  %v764 = vpack.c.b16 %v700, %v700
  %v765 = vpack.c.b16 %v701, %v701
  %v766 = vpack.c.b16 %v702, %v702
  %v767 = vpack.c.b16 %v703, %v703
  %v768 = vpack.c.b16 %v704, %v704
  %v769 = vpack.c.b16 %v705, %v705
  %v770 = vpack.c.b16 %v706, %v706
  %v771 = vpack.c.b16 %v707, %v707
  %v772 = vpack.c.b16 %v708, %v708
  %v773 = vpack.c.b16 %v709, %v709
  %v774 = vpack.c.b16 %v710, %v710
  %v775 = vpack.c.b16 %v711, %v711
  %v776 = vpack.c.b16 %v712, %v712
  %v777 = vpack.c.b16 %v713, %v713
  %v778 = vpack.c.b16 %v714, %v714
  %v779 = vpack.c.b16 %v715, %v715
  %v780 = vpack.c.b16 %v716, %v716
  %v781 = vpack.c.b16 %v717, %v717
  %v782 = vpack.c.b16 %v718, %v718
  %v783 = vpack.c.b16 %v719, %v719
  %v784 = vpack.c.b16 %v720, %v720
  %v785 = vpack.c.b16 %v721, %v721
  %v786 = vpack.c.b16 %v722, %v722
  %v787 = vpack.c.b16 %v723, %v723
  %v788 = vpack.c.b16 %v724, %v724
  %v789 = vpack.c.b16 %v725, %v725
  %v790 = vpack.c.b16 %v726, %v726
  %v791 = vpack.c.b16 %v727, %v727
  %v792 = vpack.c.b16 %v728, %v728
  %v793 = vpack.c.b16 %v729, %v729
  %v794 = vpack.c.b16 %v730, %v730
  %v795 = vpack.c.b16 %v731, %v731
  %v796 = vpack.c.b16 %v732, %v732
  %v797 = vpack.c.b16 %v733, %v733
  %v798 = vpack.c.b16 %v734, %v734
  %v799 = vpack.c.b16 %v735, %v735
  %v800 = vpack.c.b16 %v736, %v736
  %v801 = vpack.c.b16 %v737, %v737
  %v802 = vpack.c.b16 %v738, %v738
  %v803 = vpack.c.b16 %v739, %v739
  %v804 = vpack.c.b16 %v740, %v740
  %v805 = vpack.c.b16 %v741, %v741
  %v806 = vpack.c.b16 %v742, %v742
  %v807 = vpack.c.b16 %v743, %v743
  %v808 = vpack.c.b16 %v744, %v744
  %v809 = vpack.c.b16 %v745, %v745
  %v810 = vpack.c.b16 %v746, %v746
  %v811 = vpack.c.b16 %v747, %v747
  %v812 = vpack.c.b16 %v748, %v748
  %v813 = vpack.c.b16 %v749, %v749
  %v814 = vpack.c.b16 %v750, %v750
  %879 = vst [vmem:[%s2] sm:$0xf] %v751
  %880 = vst [vmem:[%s2 + $0x4] sm:$0xf] %v752
  %881 = vst [vmem:[%s2 + $0x8] sm:$0xf] %v753
  %882 = vst [vmem:[%s2 + $0xc] sm:$0xf] %v754
  %883 = vst [vmem:[%s2 + $0x10] sm:$0xf] %v755
  %884 = vst [vmem:[%s2 + $0x14] sm:$0xf] %v756
  %885 = vst [vmem:[%s2 + $0x18] sm:$0xf] %v757
  %886 = vst [vmem:[%s2 + $0x1c] sm:$0xf] %v758
  %887 = vst [vmem:[%s2 + $0x20] sm:$0xf] %v759
  %888 = vst [vmem:[%s2 + $0x24] sm:$0xf] %v760
  %889 = vst [vmem:[%s2 + $0x28] sm:$0xf] %v761
  %890 = vst [vmem:[%s2 + $0x2c] sm:$0xf] %v762
  %891 = vst [vmem:[%s2 + $0x30] sm:$0xf] %v763
  %892 = vst [vmem:[%s2 + $0x34] sm:$0xf] %v764
  %893 = vst [vmem:[%s2 + $0x38] sm:$0xf] %v765
  %894 = vst [vmem:[%s2 + $0x3c] sm:$0xf] %v766
  %895 = vst [vmem:[%s2 + $0x40] sm:$0xf] %v767
  %896 = vst [vmem:[%s2 + $0x44] sm:$0xf] %v768
  %897 = vst [vmem:[%s2 + $0x48] sm:$0xf] %v769
  %898 = vst [vmem:[%s2 + $0x4c] sm:$0xf] %v770
  %899 = vst [vmem:[%s2 + $0x50] sm:$0xf] %v771
  %900 = vst [vmem:[%s2 + $0x54] sm:$0xf] %v772
  %901 = vst [vmem:[%s2 + $0x58] sm:$0xf] %v773
  %902 = vst [vmem:[%s2 + $0x5c] sm:$0xf] %v774
  %903 = vst [vmem:[%s2 + $0x60] sm:$0xf] %v775
  %904 = vst [vmem:[%s2 + $0x64] sm:$0xf] %v776
  %905 = vst [vmem:[%s2 + $0x68] sm:$0xf] %v777
  %906 = vst [vmem:[%s2 + $0x6c] sm:$0xf] %v778
  %907 = vst [vmem:[%s2 + $0x70] sm:$0xf] %v779
  %908 = vst [vmem:[%s2 + $0x74] sm:$0xf] %v780
  %909 = vst [vmem:[%s2 + $0x78] sm:$0xf] %v781
  %910 = vst [vmem:[%s2 + $0x7c] sm:$0xf] %v782
  %911 = vst [vmem:[%s2 + $0x80] sm:$0xf] %v783
  %912 = vst [vmem:[%s2 + $0x84] sm:$0xf] %v784
  %913 = vst [vmem:[%s2 + $0x88] sm:$0xf] %v785
  %914 = vst [vmem:[%s2 + $0x8c] sm:$0xf] %v786
  %915 = vst [vmem:[%s2 + $0x90] sm:$0xf] %v787
  %916 = vst [vmem:[%s2 + $0x94] sm:$0xf] %v788
  %917 = vst [vmem:[%s2 + $0x98] sm:$0xf] %v789
  %918 = vst [vmem:[%s2 + $0x9c] sm:$0xf] %v790
  %919 = vst [vmem:[%s2 + $0xa0] sm:$0xf] %v791
  %920 = vst [vmem:[%s2 + $0xa4] sm:$0xf] %v792
  %921 = vst [vmem:[%s2 + $0xa8] sm:$0xf] %v793
  %922 = vst [vmem:[%s2 + $0xac] sm:$0xf] %v794
  %923 = vst [vmem:[%s2 + $0xb0] sm:$0xf] %v795
  %924 = vst [vmem:[%s2 + $0xb4] sm:$0xf] %v796
  %925 = vst [vmem:[%s2 + $0xb8] sm:$0xf] %v797
  %926 = vst [vmem:[%s2 + $0xbc] sm:$0xf] %v798
  %927 = vst [vmem:[%s2 + $0xc0] sm:$0xf] %v799
  %928 = vst [vmem:[%s2 + $0xc4] sm:$0xf] %v800
  %929 = vst [vmem:[%s2 + $0xc8] sm:$0xf] %v801
  %930 = vst [vmem:[%s2 + $0xcc] sm:$0xf] %v802
  %931 = vst [vmem:[%s2 + $0xd0] sm:$0xf] %v803
  %932 = vst [vmem:[%s2 + $0xd4] sm:$0xf] %v804
  %933 = vst [vmem:[%s2 + $0xd8] sm:$0xf] %v805
  %934 = vst [vmem:[%s2 + $0xdc] sm:$0xf] %v806
  %935 = vst [vmem:[%s2 + $0xe0] sm:$0xf] %v807
  %936 = vst [vmem:[%s2 + $0xe4] sm:$0xf] %v808
  %937 = vst [vmem:[%s2 + $0xe8] sm:$0xf] %v809
  %938 = vst [vmem:[%s2 + $0xec] sm:$0xf] %v810
  %939 = vst [vmem:[%s2 + $0xf0] sm:$0xf] %v811
  %940 = vst [vmem:[%s2 + $0xf4] sm:$0xf] %v812
  %941 = vst [vmem:[%s2 + $0xf8] sm:$0xf] %v813
  %942 = vst [vmem:[%s2 + $0xfc] sm:$0xf] %v814
  %v943 = vadd.f32 %v369, %v372
  %v944 = vadd.f32 %v943, %v377
  %v945 = vadd.f32 %v944, %v380
  %v946 = vadd.f32 %v945, %v385
  %v947 = vadd.f32 %v946, %v388
  %v948 = vadd.f32 %v947, %v393
  %v949 = vadd.f32 %v948, %v396
  %v950 = vadd.f32 %v949, %v401
  %v951 = vadd.f32 %v950, %v404
  %v952 = vadd.f32 %v951, %v409
  %v953 = vadd.f32 %v952, %v412
  %v954 = vadd.f32 %v953, %v417
  %v955 = vadd.f32 %v954, %v420
  %v956 = vadd.f32 %v955, %v425
  %v957 = vadd.f32 %v956, %v428
  %v958 = vadd.f32 %v957, %v433
  %v959 = vadd.f32 %v958, %v436
  %v960 = vadd.f32 %v959, %v441
  %v961 = vadd.f32 %v960, %v444
  %v962 = vadd.f32 %v961, %v449
  %v963 = vadd.f32 %v962, %v452
  %v964 = vadd.f32 %v963, %v457
  %v965 = vadd.f32 %v964, %v460
  %v966 = vadd.f32 %v965, %v465
  %v967 = vadd.f32 %v966, %v468
  %v968 = vadd.f32 %v967, %v473
  %v969 = vadd.f32 %v968, %v476
  %v970 = vadd.f32 %v969, %v481
  %v971 = vadd.f32 %v970, %v484
  %v972 = vadd.f32 %v971, %v489
  %v973 = vadd.f32 %v972, %v492
  %v974 = vadd.f32 %v973, %v497
  %v975 = vadd.f32 %v974, %v500
  %v976 = vadd.f32 %v975, %v505
  %v977 = vadd.f32 %v976, %v508
  %v978 = vadd.f32 %v977, %v513
  %v979 = vadd.f32 %v978, %v516
  %v980 = vadd.f32 %v979, %v521
  %v981 = vadd.f32 %v980, %v524
  %v982 = vadd.f32 %v981, %v529
  %v983 = vadd.f32 %v982, %v532
  %v984 = vadd.f32 %v983, %v537
  %v985 = vadd.f32 %v984, %v540
  %v986 = vadd.f32 %v985, %v545
  %v987 = vadd.f32 %v986, %v548
  %v988 = vadd.f32 %v987, %v553
  %v989 = vadd.f32 %v988, %v556
  %v990 = vadd.f32 %v989, %v561
  %v991 = vadd.f32 %v990, %v564
  %v992 = vadd.f32 %v991, %v569
  %v993 = vadd.f32 %v992, %v572
  %v994 = vadd.f32 %v993, %v577
  %v995 = vadd.f32 %v994, %v580
  %v996 = vadd.f32 %v995, %v585
  %v997 = vadd.f32 %v996, %v588
  %v998 = vadd.f32 %v997, %v593
  %v999 = vadd.f32 %v998, %v596
  %v1000 = vadd.f32 %v999, %v601
  %v1001 = vadd.f32 %v1000, %v604
  %v1002 = vadd.f32 %v1001, %v609
  %v1003 = vadd.f32 %v1002, %v612
  %v1004 = vadd.f32 %v1003, %v617
  %v1005 = vadd.f32 %v1004, %v620
  %v1006 = vrot.slane %v1005, 4
  %v1007 = vadd.f32 %v1005, %v1006
  %v1008 = vrot.slane %v1007, 2
  %v1009 = vadd.f32 %v1007, %v1008
  %v1010 = vrot.slane %v1009, 1
  %v1011 = vadd.f32 %v1009, %v1010
  %v1012 = vmul.f32 %v369, %v369
  %v1013 = vmul.f32 %v372, %v372
  %v1014 = vmul.f32 %v377, %v377
  %v1015 = vmul.f32 %v380, %v380
  %v1016 = vmul.f32 %v385, %v385
  %v1017 = vmul.f32 %v388, %v388
  %v1018 = vmul.f32 %v393, %v393
  %v1019 = vmul.f32 %v396, %v396
  %v1020 = vmul.f32 %v401, %v401
  %v1021 = vmul.f32 %v404, %v404
  %v1022 = vmul.f32 %v409, %v409
  %v1023 = vmul.f32 %v412, %v412
  %v1024 = vmul.f32 %v417, %v417
  %v1025 = vmul.f32 %v420, %v420
  %v1026 = vmul.f32 %v425, %v425
  %v1027 = vmul.f32 %v428, %v428
  %v1028 = vmul.f32 %v433, %v433
  %v1029 = vmul.f32 %v436, %v436
  %v1030 = vmul.f32 %v441, %v441
  %v1031 = vmul.f32 %v444, %v444
  %v1032 = vmul.f32 %v449, %v449
  %v1033 = vmul.f32 %v452, %v452
  %v1034 = vmul.f32 %v457, %v457
  %v1035 = vmul.f32 %v460, %v460
  %v1036 = vmul.f32 %v465, %v465
  %v1037 = vmul.f32 %v468, %v468
  %v1038 = vmul.f32 %v473, %v473
  %v1039 = vmul.f32 %v476, %v476
  %v1040 = vmul.f32 %v481, %v481
  %v1041 = vmul.f32 %v484, %v484
  %v1042 = vmul.f32 %v489, %v489
  %v1043 = vmul.f32 %v492, %v492
  %v1044 = vmul.f32 %v497, %v497
  %v1045 = vmul.f32 %v500, %v500
  %v1046 = vmul.f32 %v505, %v505
  %v1047 = vmul.f32 %v508, %v508
  %v1048 = vmul.f32 %v513, %v513
  %v1049 = vmul.f32 %v516, %v516
  %v1050 = vmul.f32 %v521, %v521
  %v1051 = vmul.f32 %v524, %v524
  %v1052 = vmul.f32 %v529, %v529
  %v1053 = vmul.f32 %v532, %v532
  %v1054 = vmul.f32 %v537, %v537
  %v1055 = vmul.f32 %v540, %v540
  %v1056 = vmul.f32 %v545, %v545
  %v1057 = vmul.f32 %v548, %v548
  %v1058 = vmul.f32 %v553, %v553
  %v1059 = vmul.f32 %v556, %v556
  %v1060 = vmul.f32 %v561, %v561
  %v1061 = vmul.f32 %v564, %v564
  %v1062 = vmul.f32 %v569, %v569
  %v1063 = vmul.f32 %v572, %v572
  %v1064 = vmul.f32 %v577, %v577
  %v1065 = vmul.f32 %v580, %v580
  %v1066 = vmul.f32 %v585, %v585
  %v1067 = vmul.f32 %v588, %v588
  %v1068 = vmul.f32 %v593, %v593
  %v1069 = vmul.f32 %v596, %v596
  %v1070 = vmul.f32 %v601, %v601
  %v1071 = vmul.f32 %v604, %v604
  %v1072 = vmul.f32 %v609, %v609
  %v1073 = vmul.f32 %v612, %v612
  %v1074 = vmul.f32 %v617, %v617
  %v1075 = vmul.f32 %v620, %v620
  %v1076 = vadd.f32 %v1012, %v1013
  %v1077 = vadd.f32 %v1076, %v1014
  %v1078 = vadd.f32 %v1077, %v1015
  %v1079 = vadd.f32 %v1078, %v1016
  %v1080 = vadd.f32 %v1079, %v1017
  %v1081 = vadd.f32 %v1080, %v1018
  %v1082 = vadd.f32 %v1081, %v1019
  %v1083 = vadd.f32 %v1082, %v1020
  %v1084 = vadd.f32 %v1083, %v1021
  %v1085 = vadd.f32 %v1084, %v1022
  %v1086 = vadd.f32 %v1085, %v1023
  %v1087 = vadd.f32 %v1086, %v1024
  %v1088 = vadd.f32 %v1087, %v1025
  %v1089 = vadd.f32 %v1088, %v1026
  %v1090 = vadd.f32 %v1089, %v1027
  %v1091 = vadd.f32 %v1090, %v1028
  %v1092 = vadd.f32 %v1091, %v1029
  %v1093 = vadd.f32 %v1092, %v1030
  %v1094 = vadd.f32 %v1093, %v1031
  %v1095 = vadd.f32 %v1094, %v1032
  %v1096 = vadd.f32 %v1095, %v1033
  %v1097 = vadd.f32 %v1096, %v1034
  %v1098 = vadd.f32 %v1097, %v1035
  %v1099 = vadd.f32 %v1098, %v1036
  %v1100 = vadd.f32 %v1099, %v1037
  %v1101 = vadd.f32 %v1100, %v1038
  %v1102 = vadd.f32 %v1101, %v1039
  %v1103 = vadd.f32 %v1102, %v1040
  %v1104 = vadd.f32 %v1103, %v1041
  %v1105 = vadd.f32 %v1104, %v1042
  %v1106 = vadd.f32 %v1105, %v1043
  %v1107 = vadd.f32 %v1106, %v1044
  %v1108 = vadd.f32 %v1107, %v1045
  %v1109 = vadd.f32 %v1108, %v1046
  %v1110 = vadd.f32 %v1109, %v1047
  %v1111 = vadd.f32 %v1110, %v1048
  %v1112 = vadd.f32 %v1111, %v1049
  %v1113 = vadd.f32 %v1112, %v1050
  %v1114 = vadd.f32 %v1113, %v1051
  %v1115 = vadd.f32 %v1114, %v1052
  %v1116 = vadd.f32 %v1115, %v1053
  %v1117 = vadd.f32 %v1116, %v1054
  %v1118 = vadd.f32 %v1117, %v1055
  %v1119 = vadd.f32 %v1118, %v1056
  %v1120 = vadd.f32 %v1119, %v1057
  %v1121 = vadd.f32 %v1120, %v1058
  %v1122 = vadd.f32 %v1121, %v1059
  %v1123 = vadd.f32 %v1122, %v1060
  %v1124 = vadd.f32 %v1123, %v1061
  %v1125 = vadd.f32 %v1124, %v1062
  %v1126 = vadd.f32 %v1125, %v1063
  %v1127 = vadd.f32 %v1126, %v1064
  %v1128 = vadd.f32 %v1127, %v1065
  %v1129 = vadd.f32 %v1128, %v1066
  %v1130 = vadd.f32 %v1129, %v1067
  %v1131 = vadd.f32 %v1130, %v1068
  %v1132 = vadd.f32 %v1131, %v1069
  %v1133 = vadd.f32 %v1132, %v1070
  %v1134 = vadd.f32 %v1133, %v1071
  %v1135 = vadd.f32 %v1134, %v1072
  %v1136 = vadd.f32 %v1135, %v1073
  %v1137 = vadd.f32 %v1136, %v1074
  %v1138 = vadd.f32 %v1137, %v1075
  %v1139 = vrot.slane %v1138, 4
  %v1140 = vadd.f32 %v1138, %v1139
  %v1141 = vrot.slane %v1140, 2
  %v1142 = vadd.f32 %v1140, %v1141
  %v1143 = vrot.slane %v1142, 1
  %v1144 = vadd.f32 %v1142, %v1143
  %vm1145 = vcmask 1040384
  %v1146 = vsel %vm1145, %v1011, %v1144
  %1147 = vst [vmem:[%s3] sm:$0x3] %v1146
  // Predicated region
  $region10: #{bottleneck_forward.4} parent=0 // pred_check
    _
  $region11: #{bottleneck_forward.4} parent=0 // pred_check_branch
    %1149 = sbr.rel (0) target = $region13
  $region12: #{bottleneck_forward.4} parent=0 // pred_region
    _
  $region13: #{bottleneck_forward.4} parent=0 // pred_fallthru
    _
  // Predicated region
  $region14: #{bottleneck_forward.4} parent=0 // pred_check
    _
  $region15: #{bottleneck_forward.4} parent=0 // pred_check_branch
    %1151 = sbr.rel (0) target = $region17
  $region16: #{bottleneck_forward.4} parent=0 // pred_region
    _
  $region17: #{bottleneck_forward.4} parent=0 // pred_fallthru
    _
  // Predicated region
  $region18: #{bottleneck_forward.4} parent=0 // pred_check
    _
  $region19: #{bottleneck_forward.4} parent=0 // pred_check_branch
    %1153 = sbr.rel (0) target = $region21
  $region20: #{bottleneck_forward.4} parent=0 // pred_region
    _
  $region21: #{bottleneck_forward.4} parent=0 // pred_fallthru
    _
  // Predicated region
  $region22: #{bottleneck_forward.4} parent=0 // pred_check
    _
  $region23: #{bottleneck_forward.4} parent=0 // pred_check_branch
    %1155 = sbr.rel (0) target = $region25
  $region24: #{bottleneck_forward.4} parent=0 // pred_region
    _
  $region25: #{bottleneck_forward.4} parent=0 // pred_fallthru
    _

// kernel: bottleneck_forward.7
$region0: #{bottleneck_forward.7}
  #allocation0 [shape = 'u32[]', space=smem, size = 0x4, offset = 0x4, fixed_abs, tag = 'smem constant byte address 0x4 - core index']
  #allocation1 [shape = 'u32[144,128]{1,0:T(1,128)}', space=vmem, size = 0x12000, scoped, tag = 'internal scratch']
  %s0 = inlined_call_operand.vmem [shape: bf16[512,128], index: 0, kind: input, shape index: {}]
  %s1 = inlined_call_operand.vmem [shape: f32[1,128], index: 1, kind: input, shape index: {}]
  %s2 = inlined_call_operand.vmem [shape: f32[1,128], index: 2, kind: input, shape index: {}]
  %s3 = inlined_call_operand.vmem [shape: bf16[512,128], index: 3, kind: input, shape index: {}]
  %s4 = inlined_call_operand.vmem [shape: bf16[512,128], index: 4, kind: output, shape index: {}]
  %s5 = sld [smem:[#allocation0]]
  $region26: #{bottleneck_forward.7} parent=0
    _
  %s7 = ssub.s32 1, %s5
  %s8 = scalar_select 0, %s7, %s5
  // Predicated region
  $region2: #{bottleneck_forward.7} parent=0 // pred_check
    _
  $region3: #{bottleneck_forward.7} parent=0 // pred_check_branch
    %10 = sbr.rel (0) target = $region5
  $region4: #{bottleneck_forward.7} parent=0 // pred_region
    _
  $region5: #{bottleneck_forward.7} parent=0 // pred_fallthru
    _
  // Predicated region
  $region6: #{bottleneck_forward.7} parent=0 // pred_check
    _
  $region7: #{bottleneck_forward.7} parent=0 // pred_check_branch
    %12 = sbr.rel (0) target = $region9
  $region8: #{bottleneck_forward.7} parent=0 // pred_region
    _
  $region9: #{bottleneck_forward.7} parent=0 // pred_fallthru
    _
  // Predicated region
  $region10: #{bottleneck_forward.7} parent=0 // pred_check
    _
  $region11: #{bottleneck_forward.7} parent=0 // pred_check_branch
    %14 = sbr.rel (0) target = $region13
  $region12: #{bottleneck_forward.7} parent=0 // pred_region
    _
  $region13: #{bottleneck_forward.7} parent=0 // pred_fallthru
    _
  // Predicated region
  $region14: #{bottleneck_forward.7} parent=0 // pred_check
    _
  $region15: #{bottleneck_forward.7} parent=0 // pred_check_branch
    %16 = sbr.rel (0) target = $region17
  $region16: #{bottleneck_forward.7} parent=0 // pred_region
    _
  $region17: #{bottleneck_forward.7} parent=0 // pred_fallthru
    _
  %v17 = vld [vmem:[%s0] sm:$0xf]
  %v18 = vld [vmem:[%s0 + $0x4] sm:$0xf]
  %v19 = vld [vmem:[%s0 + $0x8] sm:$0xf]
  %v20 = vld [vmem:[%s0 + $0xc] sm:$0xf]
  %v21 = vld [vmem:[%s0 + $0x10] sm:$0xf]
  %v22 = vld [vmem:[%s0 + $0x14] sm:$0xf]
  %v23 = vld [vmem:[%s0 + $0x18] sm:$0xf]
  %v24 = vld [vmem:[%s0 + $0x1c] sm:$0xf]
  %v25 = vld [vmem:[%s0 + $0x20] sm:$0xf]
  %v26 = vld [vmem:[%s0 + $0x24] sm:$0xf]
  %v27 = vld [vmem:[%s0 + $0x28] sm:$0xf]
  %v28 = vld [vmem:[%s0 + $0x2c] sm:$0xf]
  %v29 = vld [vmem:[%s0 + $0x30] sm:$0xf]
  %v30 = vld [vmem:[%s0 + $0x34] sm:$0xf]
  %v31 = vld [vmem:[%s0 + $0x38] sm:$0xf]
  %v32 = vld [vmem:[%s0 + $0x3c] sm:$0xf]
  %v33 = vld [vmem:[%s0 + $0x40] sm:$0xf]
  %v34 = vld [vmem:[%s0 + $0x44] sm:$0xf]
  %v35 = vld [vmem:[%s0 + $0x48] sm:$0xf]
  %v36 = vld [vmem:[%s0 + $0x4c] sm:$0xf]
  %v37 = vld [vmem:[%s0 + $0x50] sm:$0xf]
  %v38 = vld [vmem:[%s0 + $0x54] sm:$0xf]
  %v39 = vld [vmem:[%s0 + $0x58] sm:$0xf]
  %v40 = vld [vmem:[%s0 + $0x5c] sm:$0xf]
  %v41 = vld [vmem:[%s0 + $0x60] sm:$0xf]
  %v42 = vld [vmem:[%s0 + $0x64] sm:$0xf]
  %v43 = vld [vmem:[%s0 + $0x68] sm:$0xf]
  %v44 = vld [vmem:[%s0 + $0x6c] sm:$0xf]
  %v45 = vld [vmem:[%s0 + $0x70] sm:$0xf]
  %v46 = vld [vmem:[%s0 + $0x74] sm:$0xf]
  %v47 = vld [vmem:[%s0 + $0x78] sm:$0xf]
  %v48 = vld [vmem:[%s0 + $0x7c] sm:$0xf]
  %v49 = vld [vmem:[%s0 + $0x80] sm:$0xf]
  %v50 = vld [vmem:[%s0 + $0x84] sm:$0xf]
  %v51 = vld [vmem:[%s0 + $0x88] sm:$0xf]
  %v52 = vld [vmem:[%s0 + $0x8c] sm:$0xf]
  %v53 = vld [vmem:[%s0 + $0x90] sm:$0xf]
  %v54 = vld [vmem:[%s0 + $0x94] sm:$0xf]
  %v55 = vld [vmem:[%s0 + $0x98] sm:$0xf]
  %v56 = vld [vmem:[%s0 + $0x9c] sm:$0xf]
  %v57 = vld [vmem:[%s0 + $0xa0] sm:$0xf]
  %v58 = vld [vmem:[%s0 + $0xa4] sm:$0xf]
  %v59 = vld [vmem:[%s0 + $0xa8] sm:$0xf]
  %v60 = vld [vmem:[%s0 + $0xac] sm:$0xf]
  %v61 = vld [vmem:[%s0 + $0xb0] sm:$0xf]
  %v62 = vld [vmem:[%s0 + $0xb4] sm:$0xf]
  %v63 = vld [vmem:[%s0 + $0xb8] sm:$0xf]
  %v64 = vld [vmem:[%s0 + $0xbc] sm:$0xf]
  %v65 = vld [vmem:[%s0 + $0xc0] sm:$0xf]
  %v66 = vld [vmem:[%s0 + $0xc4] sm:$0xf]
  %v67 = vld [vmem:[%s0 + $0xc8] sm:$0xf]
  %v68 = vld [vmem:[%s0 + $0xcc] sm:$0xf]
  %v69 = vld [vmem:[%s0 + $0xd0] sm:$0xf]
  %v70 = vld [vmem:[%s0 + $0xd4] sm:$0xf]
  %v71 = vld [vmem:[%s0 + $0xd8] sm:$0xf]
  %v72 = vld [vmem:[%s0 + $0xdc] sm:$0xf]
  %v73 = vld [vmem:[%s0 + $0xe0] sm:$0xf]
  %v74 = vld [vmem:[%s0 + $0xe4] sm:$0xf]
  %v75 = vld [vmem:[%s0 + $0xe8] sm:$0xf]
  %v76 = vld [vmem:[%s0 + $0xec] sm:$0xf]
  %v77 = vld [vmem:[%s0 + $0xf0] sm:$0xf]
  %v78 = vld [vmem:[%s0 + $0xf4] sm:$0xf]
  %v79 = vld [vmem:[%s0 + $0xf8] sm:$0xf]
  %v80 = vld [vmem:[%s0 + $0xfc] sm:$0xf]
  %v81 = vunpack.c.l.bf16 %v17
  %v82 = vunpack.c.l.bf16 %v18
  %v83 = vunpack.c.l.bf16 %v19
  %v84 = vunpack.c.l.bf16 %v20
  %v85 = vunpack.c.l.bf16 %v21
  %v86 = vunpack.c.l.bf16 %v22
  %v87 = vunpack.c.l.bf16 %v23
  %v88 = vunpack.c.l.bf16 %v24
  %v89 = vunpack.c.l.bf16 %v25
  %v90 = vunpack.c.l.bf16 %v26
  %v91 = vunpack.c.l.bf16 %v27
  %v92 = vunpack.c.l.bf16 %v28
  %v93 = vunpack.c.l.bf16 %v29
  %v94 = vunpack.c.l.bf16 %v30
  %v95 = vunpack.c.l.bf16 %v31
  %v96 = vunpack.c.l.bf16 %v32
  %v97 = vunpack.c.l.bf16 %v33
  %v98 = vunpack.c.l.bf16 %v34
  %v99 = vunpack.c.l.bf16 %v35
  %v100 = vunpack.c.l.bf16 %v36
  %v101 = vunpack.c.l.bf16 %v37
  %v102 = vunpack.c.l.bf16 %v38
  %v103 = vunpack.c.l.bf16 %v39
  %v104 = vunpack.c.l.bf16 %v40
  %v105 = vunpack.c.l.bf16 %v41
  %v106 = vunpack.c.l.bf16 %v42
  %v107 = vunpack.c.l.bf16 %v43
  %v108 = vunpack.c.l.bf16 %v44
  %v109 = vunpack.c.l.bf16 %v45
  %v110 = vunpack.c.l.bf16 %v46
  %v111 = vunpack.c.l.bf16 %v47
  %v112 = vunpack.c.l.bf16 %v48
  %v113 = vunpack.c.l.bf16 %v49
  %v114 = vunpack.c.l.bf16 %v50
  %v115 = vunpack.c.l.bf16 %v51
  %v116 = vunpack.c.l.bf16 %v52
  %v117 = vunpack.c.l.bf16 %v53
  %v118 = vunpack.c.l.bf16 %v54
  %v119 = vunpack.c.l.bf16 %v55
  %v120 = vunpack.c.l.bf16 %v56
  %v121 = vunpack.c.l.bf16 %v57
  %v122 = vunpack.c.l.bf16 %v58
  %v123 = vunpack.c.l.bf16 %v59
  %v124 = vunpack.c.l.bf16 %v60
  %v125 = vunpack.c.l.bf16 %v61
  %v126 = vunpack.c.l.bf16 %v62
  %v127 = vunpack.c.l.bf16 %v63
  %v128 = vunpack.c.l.bf16 %v64
  %v129 = vunpack.c.l.bf16 %v65
  %v130 = vunpack.c.l.bf16 %v66
  %v131 = vunpack.c.l.bf16 %v67
  %v132 = vunpack.c.l.bf16 %v68
  %v133 = vunpack.c.l.bf16 %v69
  %v134 = vunpack.c.l.bf16 %v70
  %v135 = vunpack.c.l.bf16 %v71
  %v136 = vunpack.c.l.bf16 %v72
  %v137 = vunpack.c.l.bf16 %v73
  %v138 = vunpack.c.l.bf16 %v74
  %v139 = vunpack.c.l.bf16 %v75
  %v140 = vunpack.c.l.bf16 %v76
  %v141 = vunpack.c.l.bf16 %v77
  %v142 = vunpack.c.l.bf16 %v78
  %v143 = vunpack.c.l.bf16 %v79
  %v144 = vunpack.c.l.bf16 %v80
  %v145 = vld [vmem:[%s1] sm:$0x1]
  %v147 = vlaneseq
  %v148 = vshrl.u32 %v147, 7
  %v149 = vsub.s32 0, %v148
  %v150 = vrot.slane %v145, %v149
  %v152 = vmul.f32 %v81, %v150
  %v153 = vmul.f32 %v82, %v150
  %v154 = vmul.f32 %v83, %v150
  %v155 = vmul.f32 %v84, %v150
  %v156 = vmul.f32 %v85, %v150
  %v157 = vmul.f32 %v86, %v150
  %v158 = vmul.f32 %v87, %v150
  %v159 = vmul.f32 %v88, %v150
  %v160 = vmul.f32 %v89, %v150
  %v161 = vmul.f32 %v90, %v150
  %v162 = vmul.f32 %v91, %v150
  %v163 = vmul.f32 %v92, %v150
  %v164 = vmul.f32 %v93, %v150
  %v165 = vmul.f32 %v94, %v150
  %v166 = vmul.f32 %v95, %v150
  %v167 = vmul.f32 %v96, %v150
  %v168 = vmul.f32 %v97, %v150
  %v169 = vmul.f32 %v98, %v150
  %v170 = vmul.f32 %v99, %v150
  %v171 = vmul.f32 %v100, %v150
  %v172 = vmul.f32 %v101, %v150
  %v173 = vmul.f32 %v102, %v150
  %v174 = vmul.f32 %v103, %v150
  %v175 = vmul.f32 %v104, %v150
  %v176 = vmul.f32 %v105, %v150
  %v177 = vmul.f32 %v106, %v150
  %v178 = vmul.f32 %v107, %v150
  %v179 = vmul.f32 %v108, %v150
  %v180 = vmul.f32 %v109, %v150
  %v181 = vmul.f32 %v110, %v150
  %v182 = vmul.f32 %v111, %v150
  %v183 = vmul.f32 %v112, %v150
  %v184 = vmul.f32 %v113, %v150
  %v185 = vmul.f32 %v114, %v150
  %v186 = vmul.f32 %v115, %v150
  %v187 = vmul.f32 %v116, %v150
  %v188 = vmul.f32 %v117, %v150
  %v189 = vmul.f32 %v118, %v150
  %v190 = vmul.f32 %v119, %v150
  %v191 = vmul.f32 %v120, %v150
  %v192 = vmul.f32 %v121, %v150
  %v193 = vmul.f32 %v122, %v150
  %v194 = vmul.f32 %v123, %v150
  %v195 = vmul.f32 %v124, %v150
  %v196 = vmul.f32 %v125, %v150
  %v197 = vmul.f32 %v126, %v150
  %v198 = vmul.f32 %v127, %v150
  %v199 = vmul.f32 %v128, %v150
  %v200 = vmul.f32 %v129, %v150
  %v201 = vmul.f32 %v130, %v150
  %v202 = vmul.f32 %v131, %v150
  %v203 = vmul.f32 %v132, %v150
  %v204 = vmul.f32 %v133, %v150
  %v205 = vmul.f32 %v134, %v150
  %v206 = vmul.f32 %v135, %v150
  %v207 = vmul.f32 %v136, %v150
  %v208 = vmul.f32 %v137, %v150
  %v209 = vmul.f32 %v138, %v150
  %v210 = vmul.f32 %v139, %v150
  %v211 = vmul.f32 %v140, %v150
  %v212 = vmul.f32 %v141, %v150
  %v213 = vmul.f32 %v142, %v150
  %v214 = vmul.f32 %v143, %v150
  %v215 = vmul.f32 %v144, %v150
  %v216 = vld [vmem:[%s2] sm:$0x1]
  %v218 = vlaneseq
  %v219 = vshrl.u32 %v218, 7
  %v220 = vsub.s32 0, %v219
  %v221 = vrot.slane %v216, %v220
  %v223 = vadd.f32 %v152, %v221
  %v224 = vadd.f32 %v153, %v221
  %v225 = vadd.f32 %v154, %v221
  %v226 = vadd.f32 %v155, %v221
  %v227 = vadd.f32 %v156, %v221
  %v228 = vadd.f32 %v157, %v221
  %v229 = vadd.f32 %v158, %v221
  %v230 = vadd.f32 %v159, %v221
  %v231 = vadd.f32 %v160, %v221
  %v232 = vadd.f32 %v161, %v221
  %v233 = vadd.f32 %v162, %v221
  %v234 = vadd.f32 %v163, %v221
  %v235 = vadd.f32 %v164, %v221
  %v236 = vadd.f32 %v165, %v221
  %v237 = vadd.f32 %v166, %v221
  %v238 = vadd.f32 %v167, %v221
  %v239 = vadd.f32 %v168, %v221
  %v240 = vadd.f32 %v169, %v221
  %v241 = vadd.f32 %v170, %v221
  %v242 = vadd.f32 %v171, %v221
  %v243 = vadd.f32 %v172, %v221
  %v244 = vadd.f32 %v173, %v221
  %v245 = vadd.f32 %v174, %v221
  %v246 = vadd.f32 %v175, %v221
  %v247 = vadd.f32 %v176, %v221
  %v248 = vadd.f32 %v177, %v221
  %v249 = vadd.f32 %v178, %v221
  %v250 = vadd.f32 %v179, %v221
  %v251 = vadd.f32 %v180, %v221
  %v252 = vadd.f32 %v181, %v221
  %v253 = vadd.f32 %v182, %v221
  %v254 = vadd.f32 %v183, %v221
  %v255 = vadd.f32 %v184, %v221
  %v256 = vadd.f32 %v185, %v221
  %v257 = vadd.f32 %v186, %v221
  %v258 = vadd.f32 %v187, %v221
  %v259 = vadd.f32 %v188, %v221
  %v260 = vadd.f32 %v189, %v221
  %v261 = vadd.f32 %v190, %v221
  %v262 = vadd.f32 %v191, %v221
  %v263 = vadd.f32 %v192, %v221
  %v264 = vadd.f32 %v193, %v221
  %v265 = vadd.f32 %v194, %v221
  %v266 = vadd.f32 %v195, %v221
  %v267 = vadd.f32 %v196, %v221
  %v268 = vadd.f32 %v197, %v221
  %v269 = vadd.f32 %v198, %v221
  %v270 = vadd.f32 %v199, %v221
  %v271 = vadd.f32 %v200, %v221
  %v272 = vadd.f32 %v201, %v221
  %v273 = vadd.f32 %v202, %v221
  %v274 = vadd.f32 %v203, %v221
  %v275 = vadd.f32 %v204, %v221
  %v276 = vadd.f32 %v205, %v221
  %v277 = vadd.f32 %v206, %v221
  %v278 = vadd.f32 %v207, %v221
  %v279 = vadd.f32 %v208, %v221
  %v280 = vadd.f32 %v209, %v221
  %v281 = vadd.f32 %v210, %v221
  %v282 = vadd.f32 %v211, %v221
  %v283 = vadd.f32 %v212, %v221
  %v284 = vadd.f32 %v213, %v221
  %v285 = vadd.f32 %v214, %v221
  %v286 = vadd.f32 %v215, %v221
  %v287 = vld [vmem:[%s3] sm:$0xf]
  %v288 = vld [vmem:[%s3 + $0x4] sm:$0xf]
  %v289 = vld [vmem:[%s3 + $0x8] sm:$0xf]
  %v290 = vld [vmem:[%s3 + $0xc] sm:$0xf]
  %v291 = vld [vmem:[%s3 + $0x10] sm:$0xf]
  %v292 = vld [vmem:[%s3 + $0x14] sm:$0xf]
  %v293 = vld [vmem:[%s3 + $0x18] sm:$0xf]
  %v294 = vld [vmem:[%s3 + $0x1c] sm:$0xf]
  %v295 = vld [vmem:[%s3 + $0x20] sm:$0xf]
  %v296 = vld [vmem:[%s3 + $0x24] sm:$0xf]
  %v297 = vld [vmem:[%s3 + $0x28] sm:$0xf]
  %v298 = vld [vmem:[%s3 + $0x2c] sm:$0xf]
  %v299 = vld [vmem:[%s3 + $0x30] sm:$0xf]
  %v300 = vld [vmem:[%s3 + $0x34] sm:$0xf]
  %v301 = vld [vmem:[%s3 + $0x38] sm:$0xf]
  %v302 = vld [vmem:[%s3 + $0x3c] sm:$0xf]
  %v303 = vld [vmem:[%s3 + $0x40] sm:$0xf]
  %v304 = vld [vmem:[%s3 + $0x44] sm:$0xf]
  %v305 = vld [vmem:[%s3 + $0x48] sm:$0xf]
  %v306 = vld [vmem:[%s3 + $0x4c] sm:$0xf]
  %v307 = vld [vmem:[%s3 + $0x50] sm:$0xf]
  %v308 = vld [vmem:[%s3 + $0x54] sm:$0xf]
  %v309 = vld [vmem:[%s3 + $0x58] sm:$0xf]
  %v310 = vld [vmem:[%s3 + $0x5c] sm:$0xf]
  %v311 = vld [vmem:[%s3 + $0x60] sm:$0xf]
  %v312 = vld [vmem:[%s3 + $0x64] sm:$0xf]
  %v313 = vld [vmem:[%s3 + $0x68] sm:$0xf]
  %v314 = vld [vmem:[%s3 + $0x6c] sm:$0xf]
  %v315 = vld [vmem:[%s3 + $0x70] sm:$0xf]
  %v316 = vld [vmem:[%s3 + $0x74] sm:$0xf]
  %v317 = vld [vmem:[%s3 + $0x78] sm:$0xf]
  %v318 = vld [vmem:[%s3 + $0x7c] sm:$0xf]
  %v319 = vld [vmem:[%s3 + $0x80] sm:$0xf]
  %v320 = vld [vmem:[%s3 + $0x84] sm:$0xf]
  %v321 = vld [vmem:[%s3 + $0x88] sm:$0xf]
  %v322 = vld [vmem:[%s3 + $0x8c] sm:$0xf]
  %v323 = vld [vmem:[%s3 + $0x90] sm:$0xf]
  %v324 = vld [vmem:[%s3 + $0x94] sm:$0xf]
  %v325 = vld [vmem:[%s3 + $0x98] sm:$0xf]
  %v326 = vld [vmem:[%s3 + $0x9c] sm:$0xf]
  %v327 = vld [vmem:[%s3 + $0xa0] sm:$0xf]
  %v328 = vld [vmem:[%s3 + $0xa4] sm:$0xf]
  %v329 = vld [vmem:[%s3 + $0xa8] sm:$0xf]
  %v330 = vld [vmem:[%s3 + $0xac] sm:$0xf]
  %v331 = vld [vmem:[%s3 + $0xb0] sm:$0xf]
  %v332 = vld [vmem:[%s3 + $0xb4] sm:$0xf]
  %v333 = vld [vmem:[%s3 + $0xb8] sm:$0xf]
  %v334 = vld [vmem:[%s3 + $0xbc] sm:$0xf]
  %v335 = vld [vmem:[%s3 + $0xc0] sm:$0xf]
  %v336 = vld [vmem:[%s3 + $0xc4] sm:$0xf]
  %v337 = vld [vmem:[%s3 + $0xc8] sm:$0xf]
  %v338 = vld [vmem:[%s3 + $0xcc] sm:$0xf]
  %v339 = vld [vmem:[%s3 + $0xd0] sm:$0xf]
  %v340 = vld [vmem:[%s3 + $0xd4] sm:$0xf]
  %v341 = vld [vmem:[%s3 + $0xd8] sm:$0xf]
  %v342 = vld [vmem:[%s3 + $0xdc] sm:$0xf]
  %v343 = vld [vmem:[%s3 + $0xe0] sm:$0xf]
  %v344 = vld [vmem:[%s3 + $0xe4] sm:$0xf]
  %v345 = vld [vmem:[%s3 + $0xe8] sm:$0xf]
  %v346 = vld [vmem:[%s3 + $0xec] sm:$0xf]
  %v347 = vld [vmem:[%s3 + $0xf0] sm:$0xf]
  %v348 = vld [vmem:[%s3 + $0xf4] sm:$0xf]
  %v349 = vld [vmem:[%s3 + $0xf8] sm:$0xf]
  %v350 = vld [vmem:[%s3 + $0xfc] sm:$0xf]
  %v351 = vunpack.c.l.bf16 %v287
  %v352 = vunpack.c.l.bf16 %v288
  %v353 = vunpack.c.l.bf16 %v289
  %v354 = vunpack.c.l.bf16 %v290
  %v355 = vunpack.c.l.bf16 %v291
  %v356 = vunpack.c.l.bf16 %v292
  %v357 = vunpack.c.l.bf16 %v293
  %v358 = vunpack.c.l.bf16 %v294
  %v359 = vunpack.c.l.bf16 %v295
  %v360 = vunpack.c.l.bf16 %v296
  %v361 = vunpack.c.l.bf16 %v297
  %v362 = vunpack.c.l.bf16 %v298
  %v363 = vunpack.c.l.bf16 %v299
  %v364 = vunpack.c.l.bf16 %v300
  %v365 = vunpack.c.l.bf16 %v301
  %v366 = vunpack.c.l.bf16 %v302
  %v367 = vunpack.c.l.bf16 %v303
  %v368 = vunpack.c.l.bf16 %v304
  %v369 = vunpack.c.l.bf16 %v305
  %v370 = vunpack.c.l.bf16 %v306
  %v371 = vunpack.c.l.bf16 %v307
  %v372 = vunpack.c.l.bf16 %v308
  %v373 = vunpack.c.l.bf16 %v309
  %v374 = vunpack.c.l.bf16 %v310
  %v375 = vunpack.c.l.bf16 %v311
  %v376 = vunpack.c.l.bf16 %v312
  %v377 = vunpack.c.l.bf16 %v313
  %v378 = vunpack.c.l.bf16 %v314
  %v379 = vunpack.c.l.bf16 %v315
  %v380 = vunpack.c.l.bf16 %v316
  %v381 = vunpack.c.l.bf16 %v317
  %v382 = vunpack.c.l.bf16 %v318
  %v383 = vunpack.c.l.bf16 %v319
  %v384 = vunpack.c.l.bf16 %v320
  %v385 = vunpack.c.l.bf16 %v321
  %v386 = vunpack.c.l.bf16 %v322
  %v387 = vunpack.c.l.bf16 %v323
  %v388 = vunpack.c.l.bf16 %v324
  %v389 = vunpack.c.l.bf16 %v325
  %v390 = vunpack.c.l.bf16 %v326
  %v391 = vunpack.c.l.bf16 %v327
  %v392 = vunpack.c.l.bf16 %v328
  %v393 = vunpack.c.l.bf16 %v329
  %v394 = vunpack.c.l.bf16 %v330
  %v395 = vunpack.c.l.bf16 %v331
  %v396 = vunpack.c.l.bf16 %v332
  %v397 = vunpack.c.l.bf16 %v333
  %v398 = vunpack.c.l.bf16 %v334
  %v399 = vunpack.c.l.bf16 %v335
  %v400 = vunpack.c.l.bf16 %v336
  %v401 = vunpack.c.l.bf16 %v337
  %v402 = vunpack.c.l.bf16 %v338
  %v403 = vunpack.c.l.bf16 %v339
  %v404 = vunpack.c.l.bf16 %v340
  %v405 = vunpack.c.l.bf16 %v341
  %v406 = vunpack.c.l.bf16 %v342
  %v407 = vunpack.c.l.bf16 %v343
  %v408 = vunpack.c.l.bf16 %v344
  %v409 = vunpack.c.l.bf16 %v345
  %v410 = vunpack.c.l.bf16 %v346
  %v411 = vunpack.c.l.bf16 %v347
  %v412 = vunpack.c.l.bf16 %v348
  %v413 = vunpack.c.l.bf16 %v349
  %v414 = vunpack.c.l.bf16 %v350
  %v415 = vadd.f32 %v223, %v351
  %v416 = vadd.f32 %v224, %v352
  %v417 = vadd.f32 %v225, %v353
  %v418 = vadd.f32 %v226, %v354
  %v419 = vadd.f32 %v227, %v355
  %v420 = vadd.f32 %v228, %v356
  %v421 = vadd.f32 %v229, %v357
  %v422 = vadd.f32 %v230, %v358
  %v423 = vadd.f32 %v231, %v359
  %v424 = vadd.f32 %v232, %v360
  %v425 = vadd.f32 %v233, %v361
  %v426 = vadd.f32 %v234, %v362
  %v427 = vadd.f32 %v235, %v363
  %v428 = vadd.f32 %v236, %v364
  %v429 = vadd.f32 %v237, %v365
  %v430 = vadd.f32 %v238, %v366
  %v431 = vadd.f32 %v239, %v367
  %v432 = vadd.f32 %v240, %v368
  %v433 = vadd.f32 %v241, %v369
  %v434 = vadd.f32 %v242, %v370
  %v435 = vadd.f32 %v243, %v371
  %v436 = vadd.f32 %v244, %v372
  %v437 = vadd.f32 %v245, %v373
  %v438 = vadd.f32 %v246, %v374
  %v439 = vadd.f32 %v247, %v375
  %v440 = vadd.f32 %v248, %v376
  %v441 = vadd.f32 %v249, %v377
  %v442 = vadd.f32 %v250, %v378
  %v443 = vadd.f32 %v251, %v379
  %v444 = vadd.f32 %v252, %v380
  %v445 = vadd.f32 %v253, %v381
  %v446 = vadd.f32 %v254, %v382
  %v447 = vadd.f32 %v255, %v383
  %v448 = vadd.f32 %v256, %v384
  %v449 = vadd.f32 %v257, %v385
  %v450 = vadd.f32 %v258, %v386
  %v451 = vadd.f32 %v259, %v387
  %v452 = vadd.f32 %v260, %v388
  %v453 = vadd.f32 %v261, %v389
  %v454 = vadd.f32 %v262, %v390
  %v455 = vadd.f32 %v263, %v391
  %v456 = vadd.f32 %v264, %v392
  %v457 = vadd.f32 %v265, %v393
  %v458 = vadd.f32 %v266, %v394
  %v459 = vadd.f32 %v267, %v395
  %v460 = vadd.f32 %v268, %v396
  %v461 = vadd.f32 %v269, %v397
  %v462 = vadd.f32 %v270, %v398
  %v463 = vadd.f32 %v271, %v399
  %v464 = vadd.f32 %v272, %v400
  %v465 = vadd.f32 %v273, %v401
  %v466 = vadd.f32 %v274, %v402
  %v467 = vadd.f32 %v275, %v403
  %v468 = vadd.f32 %v276, %v404
  %v469 = vadd.f32 %v277, %v405
  %v470 = vadd.f32 %v278, %v406
  %v471 = vadd.f32 %v279, %v407
  %v472 = vadd.f32 %v280, %v408
  %v473 = vadd.f32 %v281, %v409
  %v474 = vadd.f32 %v282, %v410
  %v475 = vadd.f32 %v283, %v411
  %v476 = vadd.f32 %v284, %v412
  %v477 = vadd.f32 %v285, %v413
  %v478 = vadd.f32 %v286, %v414
  %v479 = vmax.f32 %v415, 0.0
  %v480 = vmax.f32 %v416, 0.0
  %v481 = vmax.f32 %v417, 0.0
  %v482 = vmax.f32 %v418, 0.0
  %v483 = vmax.f32 %v419, 0.0
  %v484 = vmax.f32 %v420, 0.0
  %v485 = vmax.f32 %v421, 0.0
  %v486 = vmax.f32 %v422, 0.0
  %v487 = vmax.f32 %v423, 0.0
  %v488 = vmax.f32 %v424, 0.0
  %v489 = vmax.f32 %v425, 0.0
  %v490 = vmax.f32 %v426, 0.0
  %v491 = vmax.f32 %v427, 0.0
  %v492 = vmax.f32 %v428, 0.0
  %v493 = vmax.f32 %v429, 0.0
  %v494 = vmax.f32 %v430, 0.0
  %v495 = vmax.f32 %v431, 0.0
  %v496 = vmax.f32 %v432, 0.0
  %v497 = vmax.f32 %v433, 0.0
  %v498 = vmax.f32 %v434, 0.0
  %v499 = vmax.f32 %v435, 0.0
  %v500 = vmax.f32 %v436, 0.0
  %v501 = vmax.f32 %v437, 0.0
  %v502 = vmax.f32 %v438, 0.0
  %v503 = vmax.f32 %v439, 0.0
  %v504 = vmax.f32 %v440, 0.0
  %v505 = vmax.f32 %v441, 0.0
  %v506 = vmax.f32 %v442, 0.0
  %v507 = vmax.f32 %v443, 0.0
  %v508 = vmax.f32 %v444, 0.0
  %v509 = vmax.f32 %v445, 0.0
  %v510 = vmax.f32 %v446, 0.0
  %v511 = vmax.f32 %v447, 0.0
  %v512 = vmax.f32 %v448, 0.0
  %v513 = vmax.f32 %v449, 0.0
  %v514 = vmax.f32 %v450, 0.0
  %v515 = vmax.f32 %v451, 0.0
  %v516 = vmax.f32 %v452, 0.0
  %v517 = vmax.f32 %v453, 0.0
  %v518 = vmax.f32 %v454, 0.0
  %v519 = vmax.f32 %v455, 0.0
  %v520 = vmax.f32 %v456, 0.0
  %v521 = vmax.f32 %v457, 0.0
  %v522 = vmax.f32 %v458, 0.0
  %v523 = vmax.f32 %v459, 0.0
  %v524 = vmax.f32 %v460, 0.0
  %v525 = vmax.f32 %v461, 0.0
  %v526 = vmax.f32 %v462, 0.0
  %v527 = vmax.f32 %v463, 0.0
  %v528 = vmax.f32 %v464, 0.0
  %v529 = vmax.f32 %v465, 0.0
  %v530 = vmax.f32 %v466, 0.0
  %v531 = vmax.f32 %v467, 0.0
  %v532 = vmax.f32 %v468, 0.0
  %v533 = vmax.f32 %v469, 0.0
  %v534 = vmax.f32 %v470, 0.0
  %v535 = vmax.f32 %v471, 0.0
  %v536 = vmax.f32 %v472, 0.0
  %v537 = vmax.f32 %v473, 0.0
  %v538 = vmax.f32 %v474, 0.0
  %v539 = vmax.f32 %v475, 0.0
  %v540 = vmax.f32 %v476, 0.0
  %v541 = vmax.f32 %v477, 0.0
  %v542 = vmax.f32 %v478, 0.0
  %v543 = vpack.c.bf16 %v480, %v479
  %v544 = vpack.c.bf16 %v482, %v481
  %v545 = vpack.c.bf16 %v484, %v483
  %v546 = vpack.c.bf16 %v486, %v485
  %v547 = vpack.c.bf16 %v488, %v487
  %v548 = vpack.c.bf16 %v490, %v489
  %v549 = vpack.c.bf16 %v492, %v491
  %v550 = vpack.c.bf16 %v494, %v493
  %v551 = vpack.c.bf16 %v496, %v495
  %v552 = vpack.c.bf16 %v498, %v497
  %v553 = vpack.c.bf16 %v500, %v499
  %v554 = vpack.c.bf16 %v502, %v501
  %v555 = vpack.c.bf16 %v504, %v503
  %v556 = vpack.c.bf16 %v506, %v505
  %v557 = vpack.c.bf16 %v508, %v507
  %v558 = vpack.c.bf16 %v510, %v509
  %v559 = vpack.c.bf16 %v512, %v511
  %v560 = vpack.c.bf16 %v514, %v513
  %v561 = vpack.c.bf16 %v516, %v515
  %v562 = vpack.c.bf16 %v518, %v517
  %v563 = vpack.c.bf16 %v520, %v519
  %v564 = vpack.c.bf16 %v522, %v521
  %v565 = vpack.c.bf16 %v524, %v523
  %v566 = vpack.c.bf16 %v526, %v525
  %v567 = vpack.c.bf16 %v528, %v527
  %v568 = vpack.c.bf16 %v530, %v529
  %v569 = vpack.c.bf16 %v532, %v531
  %v570 = vpack.c.bf16 %v534, %v533
  %v571 = vpack.c.bf16 %v536, %v535
  %v572 = vpack.c.bf16 %v538, %v537
  %v573 = vpack.c.bf16 %v540, %v539
  %v574 = vpack.c.bf16 %v542, %v541
  %v607 = vunpack.c.l.b16 %v543
  %v608 = vunpack.c.h.b16 %v543
  %v609 = vunpack.c.l.b16 %v544
  %v610 = vunpack.c.h.b16 %v544
  %v611 = vunpack.c.l.b16 %v545
  %v612 = vunpack.c.h.b16 %v545
  %v613 = vunpack.c.l.b16 %v546
  %v614 = vunpack.c.h.b16 %v546
  %v615 = vunpack.c.l.b16 %v547
  %v616 = vunpack.c.h.b16 %v547
  %v617 = vunpack.c.l.b16 %v548
  %v618 = vunpack.c.h.b16 %v548
  %v619 = vunpack.c.l.b16 %v549
  %v620 = vunpack.c.h.b16 %v549
  %v621 = vunpack.c.l.b16 %v550
  %v622 = vunpack.c.h.b16 %v550
  %v623 = vunpack.c.l.b16 %v551
  %v624 = vunpack.c.h.b16 %v551
  %v625 = vunpack.c.l.b16 %v552
  %v626 = vunpack.c.h.b16 %v552
  %v627 = vunpack.c.l.b16 %v553
  %v628 = vunpack.c.h.b16 %v553
  %v629 = vunpack.c.l.b16 %v554
  %v630 = vunpack.c.h.b16 %v554
  %v631 = vunpack.c.l.b16 %v555
  %v632 = vunpack.c.h.b16 %v555
  %v633 = vunpack.c.l.b16 %v556
  %v634 = vunpack.c.h.b16 %v556
  %v635 = vunpack.c.l.b16 %v557
  %v636 = vunpack.c.h.b16 %v557
  %v637 = vunpack.c.l.b16 %v558
  %v638 = vunpack.c.h.b16 %v558
  %v639 = vunpack.c.l.b16 %v559
  %v640 = vunpack.c.h.b16 %v559
  %v641 = vunpack.c.l.b16 %v560
  %v642 = vunpack.c.h.b16 %v560
  %v643 = vunpack.c.l.b16 %v561
  %v644 = vunpack.c.h.b16 %v561
  %v645 = vunpack.c.l.b16 %v562
  %v646 = vunpack.c.h.b16 %v562
  %v647 = vunpack.c.l.b16 %v563
  %v648 = vunpack.c.h.b16 %v563
  %v649 = vunpack.c.l.b16 %v564
  %v650 = vunpack.c.h.b16 %v564
  %v651 = vunpack.c.l.b16 %v565
  %v652 = vunpack.c.h.b16 %v565
  %v653 = vunpack.c.l.b16 %v566
  %v654 = vunpack.c.h.b16 %v566
  %v655 = vunpack.c.l.b16 %v567
  %v656 = vunpack.c.h.b16 %v567
  %v657 = vunpack.c.l.b16 %v568
  %v658 = vunpack.c.h.b16 %v568
  %v659 = vunpack.c.l.b16 %v569
  %v660 = vunpack.c.h.b16 %v569
  %v661 = vunpack.c.l.b16 %v570
  %v662 = vunpack.c.h.b16 %v570
  %v663 = vunpack.c.l.b16 %v571
  %v664 = vunpack.c.h.b16 %v571
  %v665 = vunpack.c.l.b16 %v572
  %v666 = vunpack.c.h.b16 %v572
  %v667 = vunpack.c.l.b16 %v573
  %v668 = vunpack.c.h.b16 %v573
  %v669 = vunpack.c.l.b16 %v574
  %v670 = vunpack.c.h.b16 %v574
  %v671 = vpack.c.b16 %v607, %v607
  %v672 = vpack.c.b16 %v608, %v608
  %v673 = vpack.c.b16 %v609, %v609
  %v674 = vpack.c.b16 %v610, %v610
  %v675 = vpack.c.b16 %v611, %v611
  %v676 = vpack.c.b16 %v612, %v612
  %v677 = vpack.c.b16 %v613, %v613
  %v678 = vpack.c.b16 %v614, %v614
  %v679 = vpack.c.b16 %v615, %v615
  %v680 = vpack.c.b16 %v616, %v616
  %v681 = vpack.c.b16 %v617, %v617
  %v682 = vpack.c.b16 %v618, %v618
  %v683 = vpack.c.b16 %v619, %v619
  %v684 = vpack.c.b16 %v620, %v620
  %v685 = vpack.c.b16 %v621, %v621
  %v686 = vpack.c.b16 %v622, %v622
  %v687 = vpack.c.b16 %v623, %v623
  %v688 = vpack.c.b16 %v624, %v624
  %v689 = vpack.c.b16 %v625, %v625
  %v690 = vpack.c.b16 %v626, %v626
  %v691 = vpack.c.b16 %v627, %v627
  %v692 = vpack.c.b16 %v628, %v628
  %v693 = vpack.c.b16 %v629, %v629
  %v694 = vpack.c.b16 %v630, %v630
  %v695 = vpack.c.b16 %v631, %v631
  %v696 = vpack.c.b16 %v632, %v632
  %v697 = vpack.c.b16 %v633, %v633
  %v698 = vpack.c.b16 %v634, %v634
  %v699 = vpack.c.b16 %v635, %v635
  %v700 = vpack.c.b16 %v636, %v636
  %v701 = vpack.c.b16 %v637, %v637
  %v702 = vpack.c.b16 %v638, %v638
  %v703 = vpack.c.b16 %v639, %v639
  %v704 = vpack.c.b16 %v640, %v640
  %v705 = vpack.c.b16 %v641, %v641
  %v706 = vpack.c.b16 %v642, %v642
  %v707 = vpack.c.b16 %v643, %v643
  %v708 = vpack.c.b16 %v644, %v644
  %v709 = vpack.c.b16 %v645, %v645
  %v710 = vpack.c.b16 %v646, %v646
  %v711 = vpack.c.b16 %v647, %v647
  %v712 = vpack.c.b16 %v648, %v648
  %v713 = vpack.c.b16 %v649, %v649
  %v714 = vpack.c.b16 %v650, %v650
  %v715 = vpack.c.b16 %v651, %v651
  %v716 = vpack.c.b16 %v652, %v652
  %v717 = vpack.c.b16 %v653, %v653
  %v718 = vpack.c.b16 %v654, %v654
  %v719 = vpack.c.b16 %v655, %v655
  %v720 = vpack.c.b16 %v656, %v656
  %v721 = vpack.c.b16 %v657, %v657
  %v722 = vpack.c.b16 %v658, %v658
  %v723 = vpack.c.b16 %v659, %v659
  %v724 = vpack.c.b16 %v660, %v660
  %v725 = vpack.c.b16 %v661, %v661
  %v726 = vpack.c.b16 %v662, %v662
  %v727 = vpack.c.b16 %v663, %v663
  %v728 = vpack.c.b16 %v664, %v664
  %v729 = vpack.c.b16 %v665, %v665
  %v730 = vpack.c.b16 %v666, %v666
  %v731 = vpack.c.b16 %v667, %v667
  %v732 = vpack.c.b16 %v668, %v668
  %v733 = vpack.c.b16 %v669, %v669
  %v734 = vpack.c.b16 %v670, %v670
  %799 = vst [vmem:[%s4] sm:$0xf] %v671
  %800 = vst [vmem:[%s4 + $0x4] sm:$0xf] %v672
  %801 = vst [vmem:[%s4 + $0x8] sm:$0xf] %v673
  %802 = vst [vmem:[%s4 + $0xc] sm:$0xf] %v674
  %803 = vst [vmem:[%s4 + $0x10] sm:$0xf] %v675
  %804 = vst [vmem:[%s4 + $0x14] sm:$0xf] %v676
  %805 = vst [vmem:[%s4 + $0x18] sm:$0xf] %v677
  %806 = vst [vmem:[%s4 + $0x1c] sm:$0xf] %v678
  %807 = vst [vmem:[%s4 + $0x20] sm:$0xf] %v679
  %808 = vst [vmem:[%s4 + $0x24] sm:$0xf] %v680
  %809 = vst [vmem:[%s4 + $0x28] sm:$0xf] %v681
  %810 = vst [vmem:[%s4 + $0x2c] sm:$0xf] %v682
  %811 = vst [vmem:[%s4 + $0x30] sm:$0xf] %v683
  %812 = vst [vmem:[%s4 + $0x34] sm:$0xf] %v684
  %813 = vst [vmem:[%s4 + $0x38] sm:$0xf] %v685
  %814 = vst [vmem:[%s4 + $0x3c] sm:$0xf] %v686
  %815 = vst [vmem:[%s4 + $0x40] sm:$0xf] %v687
  %816 = vst [vmem:[%s4 + $0x44] sm:$0xf] %v688
  %817 = vst [vmem:[%s4 + $0x48] sm:$0xf] %v689
  %818 = vst [vmem:[%s4 + $0x4c] sm:$0xf] %v690
  %819 = vst [vmem:[%s4 + $0x50] sm:$0xf] %v691
  %820 = vst [vmem:[%s4 + $0x54] sm:$0xf] %v692
  %821 = vst [vmem:[%s4 + $0x58] sm:$0xf] %v693
  %822 = vst [vmem:[%s4 + $0x5c] sm:$0xf] %v694
  %823 = vst [vmem:[%s4 + $0x60] sm:$0xf] %v695
  %824 = vst [vmem:[%s4 + $0x64] sm:$0xf] %v696
  %825 = vst [vmem:[%s4 + $0x68] sm:$0xf] %v697
  %826 = vst [vmem:[%s4 + $0x6c] sm:$0xf] %v698
  %827 = vst [vmem:[%s4 + $0x70] sm:$0xf] %v699
  %828 = vst [vmem:[%s4 + $0x74] sm:$0xf] %v700
  %829 = vst [vmem:[%s4 + $0x78] sm:$0xf] %v701
  %830 = vst [vmem:[%s4 + $0x7c] sm:$0xf] %v702
  %831 = vst [vmem:[%s4 + $0x80] sm:$0xf] %v703
  %832 = vst [vmem:[%s4 + $0x84] sm:$0xf] %v704
  %833 = vst [vmem:[%s4 + $0x88] sm:$0xf] %v705
  %834 = vst [vmem:[%s4 + $0x8c] sm:$0xf] %v706
  %835 = vst [vmem:[%s4 + $0x90] sm:$0xf] %v707
  %836 = vst [vmem:[%s4 + $0x94] sm:$0xf] %v708
  %837 = vst [vmem:[%s4 + $0x98] sm:$0xf] %v709
  %838 = vst [vmem:[%s4 + $0x9c] sm:$0xf] %v710
  %839 = vst [vmem:[%s4 + $0xa0] sm:$0xf] %v711
  %840 = vst [vmem:[%s4 + $0xa4] sm:$0xf] %v712
  %841 = vst [vmem:[%s4 + $0xa8] sm:$0xf] %v713
  %842 = vst [vmem:[%s4 + $0xac] sm:$0xf] %v714
  %843 = vst [vmem:[%s4 + $0xb0] sm:$0xf] %v715
  %844 = vst [vmem:[%s4 + $0xb4] sm:$0xf] %v716
  %845 = vst [vmem:[%s4 + $0xb8] sm:$0xf] %v717
  %846 = vst [vmem:[%s4 + $0xbc] sm:$0xf] %v718
  %847 = vst [vmem:[%s4 + $0xc0] sm:$0xf] %v719
  %848 = vst [vmem:[%s4 + $0xc4] sm:$0xf] %v720
  %849 = vst [vmem:[%s4 + $0xc8] sm:$0xf] %v721
  %850 = vst [vmem:[%s4 + $0xcc] sm:$0xf] %v722
  %851 = vst [vmem:[%s4 + $0xd0] sm:$0xf] %v723
  %852 = vst [vmem:[%s4 + $0xd4] sm:$0xf] %v724
  %853 = vst [vmem:[%s4 + $0xd8] sm:$0xf] %v725
  %854 = vst [vmem:[%s4 + $0xdc] sm:$0xf] %v726
  %855 = vst [vmem:[%s4 + $0xe0] sm:$0xf] %v727
  %856 = vst [vmem:[%s4 + $0xe4] sm:$0xf] %v728
  %857 = vst [vmem:[%s4 + $0xe8] sm:$0xf] %v729
  %858 = vst [vmem:[%s4 + $0xec] sm:$0xf] %v730
  %859 = vst [vmem:[%s4 + $0xf0] sm:$0xf] %v731
  %860 = vst [vmem:[%s4 + $0xf4] sm:$0xf] %v732
  %861 = vst [vmem:[%s4 + $0xf8] sm:$0xf] %v733
  %862 = vst [vmem:[%s4 + $0xfc] sm:$0xf] %v734
  // Predicated region
  $region18: #{bottleneck_forward.7} parent=0 // pred_check
    _
  $region19: #{bottleneck_forward.7} parent=0 // pred_check_branch
    %864 = sbr.rel (0) target = $region21
  $region20: #{bottleneck_forward.7} parent=0 // pred_region
    _
  $region21: #{bottleneck_forward.7} parent=0 // pred_fallthru
    _
  // Predicated region
  $region22: #{bottleneck_forward.7} parent=0 // pred_check
    _
  $region23: #{bottleneck_forward.7} parent=0 // pred_check_branch
    %866 = sbr.rel (0) target = $region25
  $region24: #{bottleneck_forward.7} parent=0 // pred_region
    _
  $region25: #{bottleneck_forward.7} parent=0 // pred_fallthru
    _

// kernel: bottleneck_forward.6
$region0: #{bottleneck_forward.6}
  #allocation0 [shape = 'u32[]', space=smem, size = 0x4, offset = 0x4, fixed_abs, tag = 'smem constant byte address 0x4 - core index']
  #allocation1 [shape = 'u32[144,128]{1,0:T(1,128)}', space=vmem, size = 0x12000, scoped, tag = 'internal scratch']
  %s0 = inlined_call_operand.vmem [shape: bf16[512,128], index: 0, kind: input, shape index: {}]
  %s1 = inlined_call_operand.vmem [shape: f32[1,128], index: 1, kind: input, shape index: {}]
  %s2 = inlined_call_operand.vmem [shape: f32[1,128], index: 2, kind: input, shape index: {}]
  %s3 = inlined_call_operand.vmem [shape: bf16[128,128], index: 3, kind: input, shape index: {}]
  %s4 = inlined_call_operand.vmem [shape: bf16[512,128], index: 4, kind: output, shape index: {0}]
  %s5 = inlined_call_operand.vmem [shape: f32[1,2,128], index: 5, kind: output, shape index: {1}]
  %6 = xla_tuple %s4, %s5
  %s7 = sld [smem:[#allocation0]]
  $region34: #{bottleneck_forward.6} parent=0
    _
  %s9 = ssub.s32 1, %s7
  %s10 = scalar_select 0, %s9, %s7
  // Predicated region
  $region2: #{bottleneck_forward.6} parent=0 // pred_check
    _
  $region3: #{bottleneck_forward.6} parent=0 // pred_check_branch
    %12 = sbr.rel (0) target = $region5
  $region4: #{bottleneck_forward.6} parent=0 // pred_region
    _
  $region5: #{bottleneck_forward.6} parent=0 // pred_fallthru
    _
  // Predicated region
  $region6: #{bottleneck_forward.6} parent=0 // pred_check
    _
  $region7: #{bottleneck_forward.6} parent=0 // pred_check_branch
    %14 = sbr.rel (0) target = $region9
  $region8: #{bottleneck_forward.6} parent=0 // pred_region
    _
  $region9: #{bottleneck_forward.6} parent=0 // pred_fallthru
    _
  // Predicated region
  $region10: #{bottleneck_forward.6} parent=0 // pred_check
    _
  $region11: #{bottleneck_forward.6} parent=0 // pred_check_branch
    %16 = sbr.rel (0) target = $region13
  $region12: #{bottleneck_forward.6} parent=0 // pred_region
    _
  $region13: #{bottleneck_forward.6} parent=0 // pred_fallthru
    _
  // Predicated region
  $region14: #{bottleneck_forward.6} parent=0 // pred_check
    _
  $region15: #{bottleneck_forward.6} parent=0 // pred_check_branch
    %18 = sbr.rel (0) target = $region17
  $region16: #{bottleneck_forward.6} parent=0 // pred_region
    _
  $region17: #{bottleneck_forward.6} parent=0 // pred_fallthru
    _
  %v20 = vld [vmem:[%s0] sm:$0xf]
  %v21 = vld [vmem:[%s0 + $0x4] sm:$0xf]
  %v22 = vld [vmem:[%s0 + $0x8] sm:$0xf]
  %v23 = vld [vmem:[%s0 + $0xc] sm:$0xf]
  %v24 = vld [vmem:[%s0 + $0x10] sm:$0xf]
  %v25 = vld [vmem:[%s0 + $0x14] sm:$0xf]
  %v26 = vld [vmem:[%s0 + $0x18] sm:$0xf]
  %v27 = vld [vmem:[%s0 + $0x1c] sm:$0xf]
  %v28 = vld [vmem:[%s0 + $0x20] sm:$0xf]
  %v29 = vld [vmem:[%s0 + $0x24] sm:$0xf]
  %v30 = vld [vmem:[%s0 + $0x28] sm:$0xf]
  %v31 = vld [vmem:[%s0 + $0x2c] sm:$0xf]
  %v32 = vld [vmem:[%s0 + $0x30] sm:$0xf]
  %v33 = vld [vmem:[%s0 + $0x34] sm:$0xf]
  %v34 = vld [vmem:[%s0 + $0x38] sm:$0xf]
  %v35 = vld [vmem:[%s0 + $0x3c] sm:$0xf]
  %v36 = vld [vmem:[%s0 + $0x40] sm:$0xf]
  %v37 = vld [vmem:[%s0 + $0x44] sm:$0xf]
  %v38 = vld [vmem:[%s0 + $0x48] sm:$0xf]
  %v39 = vld [vmem:[%s0 + $0x4c] sm:$0xf]
  %v40 = vld [vmem:[%s0 + $0x50] sm:$0xf]
  %v41 = vld [vmem:[%s0 + $0x54] sm:$0xf]
  %v42 = vld [vmem:[%s0 + $0x58] sm:$0xf]
  %v43 = vld [vmem:[%s0 + $0x5c] sm:$0xf]
  %v44 = vld [vmem:[%s0 + $0x60] sm:$0xf]
  %v45 = vld [vmem:[%s0 + $0x64] sm:$0xf]
  %v46 = vld [vmem:[%s0 + $0x68] sm:$0xf]
  %v47 = vld [vmem:[%s0 + $0x6c] sm:$0xf]
  %v48 = vld [vmem:[%s0 + $0x70] sm:$0xf]
  %v49 = vld [vmem:[%s0 + $0x74] sm:$0xf]
  %v50 = vld [vmem:[%s0 + $0x78] sm:$0xf]
  %v51 = vld [vmem:[%s0 + $0x7c] sm:$0xf]
  %v52 = vld [vmem:[%s0 + $0x80] sm:$0xf]
  %v53 = vld [vmem:[%s0 + $0x84] sm:$0xf]
  %v54 = vld [vmem:[%s0 + $0x88] sm:$0xf]
  %v55 = vld [vmem:[%s0 + $0x8c] sm:$0xf]
  %v56 = vld [vmem:[%s0 + $0x90] sm:$0xf]
  %v57 = vld [vmem:[%s0 + $0x94] sm:$0xf]
  %v58 = vld [vmem:[%s0 + $0x98] sm:$0xf]
  %v59 = vld [vmem:[%s0 + $0x9c] sm:$0xf]
  %v60 = vld [vmem:[%s0 + $0xa0] sm:$0xf]
  %v61 = vld [vmem:[%s0 + $0xa4] sm:$0xf]
  %v62 = vld [vmem:[%s0 + $0xa8] sm:$0xf]
  %v63 = vld [vmem:[%s0 + $0xac] sm:$0xf]
  %v64 = vld [vmem:[%s0 + $0xb0] sm:$0xf]
  %v65 = vld [vmem:[%s0 + $0xb4] sm:$0xf]
  %v66 = vld [vmem:[%s0 + $0xb8] sm:$0xf]
  %v67 = vld [vmem:[%s0 + $0xbc] sm:$0xf]
  %v68 = vld [vmem:[%s0 + $0xc0] sm:$0xf]
  %v69 = vld [vmem:[%s0 + $0xc4] sm:$0xf]
  %v70 = vld [vmem:[%s0 + $0xc8] sm:$0xf]
  %v71 = vld [vmem:[%s0 + $0xcc] sm:$0xf]
  %v72 = vld [vmem:[%s0 + $0xd0] sm:$0xf]
  %v73 = vld [vmem:[%s0 + $0xd4] sm:$0xf]
  %v74 = vld [vmem:[%s0 + $0xd8] sm:$0xf]
  %v75 = vld [vmem:[%s0 + $0xdc] sm:$0xf]
  %v76 = vld [vmem:[%s0 + $0xe0] sm:$0xf]
  %v77 = vld [vmem:[%s0 + $0xe4] sm:$0xf]
  %v78 = vld [vmem:[%s0 + $0xe8] sm:$0xf]
  %v79 = vld [vmem:[%s0 + $0xec] sm:$0xf]
  %v80 = vld [vmem:[%s0 + $0xf0] sm:$0xf]
  %v81 = vld [vmem:[%s0 + $0xf4] sm:$0xf]
  %v82 = vld [vmem:[%s0 + $0xf8] sm:$0xf]
  %v83 = vld [vmem:[%s0 + $0xfc] sm:$0xf]
  %v84 = vunpack.c.l.bf16 %v20
  %v85 = vunpack.c.l.bf16 %v21
  %v86 = vunpack.c.l.bf16 %v22
  %v87 = vunpack.c.l.bf16 %v23
  %v88 = vunpack.c.l.bf16 %v24
  %v89 = vunpack.c.l.bf16 %v25
  %v90 = vunpack.c.l.bf16 %v26
  %v91 = vunpack.c.l.bf16 %v27
  %v92 = vunpack.c.l.bf16 %v28
  %v93 = vunpack.c.l.bf16 %v29
  %v94 = vunpack.c.l.bf16 %v30
  %v95 = vunpack.c.l.bf16 %v31
  %v96 = vunpack.c.l.bf16 %v32
  %v97 = vunpack.c.l.bf16 %v33
  %v98 = vunpack.c.l.bf16 %v34
  %v99 = vunpack.c.l.bf16 %v35
  %v100 = vunpack.c.l.bf16 %v36
  %v101 = vunpack.c.l.bf16 %v37
  %v102 = vunpack.c.l.bf16 %v38
  %v103 = vunpack.c.l.bf16 %v39
  %v104 = vunpack.c.l.bf16 %v40
  %v105 = vunpack.c.l.bf16 %v41
  %v106 = vunpack.c.l.bf16 %v42
  %v107 = vunpack.c.l.bf16 %v43
  %v108 = vunpack.c.l.bf16 %v44
  %v109 = vunpack.c.l.bf16 %v45
  %v110 = vunpack.c.l.bf16 %v46
  %v111 = vunpack.c.l.bf16 %v47
  %v112 = vunpack.c.l.bf16 %v48
  %v113 = vunpack.c.l.bf16 %v49
  %v114 = vunpack.c.l.bf16 %v50
  %v115 = vunpack.c.l.bf16 %v51
  %v116 = vunpack.c.l.bf16 %v52
  %v117 = vunpack.c.l.bf16 %v53
  %v118 = vunpack.c.l.bf16 %v54
  %v119 = vunpack.c.l.bf16 %v55
  %v120 = vunpack.c.l.bf16 %v56
  %v121 = vunpack.c.l.bf16 %v57
  %v122 = vunpack.c.l.bf16 %v58
  %v123 = vunpack.c.l.bf16 %v59
  %v124 = vunpack.c.l.bf16 %v60
  %v125 = vunpack.c.l.bf16 %v61
  %v126 = vunpack.c.l.bf16 %v62
  %v127 = vunpack.c.l.bf16 %v63
  %v128 = vunpack.c.l.bf16 %v64
  %v129 = vunpack.c.l.bf16 %v65
  %v130 = vunpack.c.l.bf16 %v66
  %v131 = vunpack.c.l.bf16 %v67
  %v132 = vunpack.c.l.bf16 %v68
  %v133 = vunpack.c.l.bf16 %v69
  %v134 = vunpack.c.l.bf16 %v70
  %v135 = vunpack.c.l.bf16 %v71
  %v136 = vunpack.c.l.bf16 %v72
  %v137 = vunpack.c.l.bf16 %v73
  %v138 = vunpack.c.l.bf16 %v74
  %v139 = vunpack.c.l.bf16 %v75
  %v140 = vunpack.c.l.bf16 %v76
  %v141 = vunpack.c.l.bf16 %v77
  %v142 = vunpack.c.l.bf16 %v78
  %v143 = vunpack.c.l.bf16 %v79
  %v144 = vunpack.c.l.bf16 %v80
  %v145 = vunpack.c.l.bf16 %v81
  %v146 = vunpack.c.l.bf16 %v82
  %v147 = vunpack.c.l.bf16 %v83
  %v148 = vld [vmem:[%s1] sm:$0x1]
  %v150 = vlaneseq
  %v151 = vshrl.u32 %v150, 7
  %v152 = vsub.s32 0, %v151
  %v153 = vrot.slane %v148, %v152
  %v155 = vmul.f32 %v84, %v153
  %v156 = vmul.f32 %v85, %v153
  %v157 = vmul.f32 %v86, %v153
  %v158 = vmul.f32 %v87, %v153
  %v159 = vmul.f32 %v88, %v153
  %v160 = vmul.f32 %v89, %v153
  %v161 = vmul.f32 %v90, %v153
  %v162 = vmul.f32 %v91, %v153
  %v163 = vmul.f32 %v92, %v153
  %v164 = vmul.f32 %v93, %v153
  %v165 = vmul.f32 %v94, %v153
  %v166 = vmul.f32 %v95, %v153
  %v167 = vmul.f32 %v96, %v153
  %v168 = vmul.f32 %v97, %v153
  %v169 = vmul.f32 %v98, %v153
  %v170 = vmul.f32 %v99, %v153
  %v171 = vmul.f32 %v100, %v153
  %v172 = vmul.f32 %v101, %v153
  %v173 = vmul.f32 %v102, %v153
  %v174 = vmul.f32 %v103, %v153
  %v175 = vmul.f32 %v104, %v153
  %v176 = vmul.f32 %v105, %v153
  %v177 = vmul.f32 %v106, %v153
  %v178 = vmul.f32 %v107, %v153
  %v179 = vmul.f32 %v108, %v153
  %v180 = vmul.f32 %v109, %v153
  %v181 = vmul.f32 %v110, %v153
  %v182 = vmul.f32 %v111, %v153
  %v183 = vmul.f32 %v112, %v153
  %v184 = vmul.f32 %v113, %v153
  %v185 = vmul.f32 %v114, %v153
  %v186 = vmul.f32 %v115, %v153
  %v187 = vmul.f32 %v116, %v153
  %v188 = vmul.f32 %v117, %v153
  %v189 = vmul.f32 %v118, %v153
  %v190 = vmul.f32 %v119, %v153
  %v191 = vmul.f32 %v120, %v153
  %v192 = vmul.f32 %v121, %v153
  %v193 = vmul.f32 %v122, %v153
  %v194 = vmul.f32 %v123, %v153
  %v195 = vmul.f32 %v124, %v153
  %v196 = vmul.f32 %v125, %v153
  %v197 = vmul.f32 %v126, %v153
  %v198 = vmul.f32 %v127, %v153
  %v199 = vmul.f32 %v128, %v153
  %v200 = vmul.f32 %v129, %v153
  %v201 = vmul.f32 %v130, %v153
  %v202 = vmul.f32 %v131, %v153
  %v203 = vmul.f32 %v132, %v153
  %v204 = vmul.f32 %v133, %v153
  %v205 = vmul.f32 %v134, %v153
  %v206 = vmul.f32 %v135, %v153
  %v207 = vmul.f32 %v136, %v153
  %v208 = vmul.f32 %v137, %v153
  %v209 = vmul.f32 %v138, %v153
  %v210 = vmul.f32 %v139, %v153
  %v211 = vmul.f32 %v140, %v153
  %v212 = vmul.f32 %v141, %v153
  %v213 = vmul.f32 %v142, %v153
  %v214 = vmul.f32 %v143, %v153
  %v215 = vmul.f32 %v144, %v153
  %v216 = vmul.f32 %v145, %v153
  %v217 = vmul.f32 %v146, %v153
  %v218 = vmul.f32 %v147, %v153
  %v219 = vld [vmem:[%s2] sm:$0x1]
  %v221 = vlaneseq
  %v222 = vshrl.u32 %v221, 7
  %v223 = vsub.s32 0, %v222
  %v224 = vrot.slane %v219, %v223
  %v226 = vadd.f32 %v155, %v224
  %v227 = vadd.f32 %v156, %v224
  %v228 = vadd.f32 %v157, %v224
  %v229 = vadd.f32 %v158, %v224
  %v230 = vadd.f32 %v159, %v224
  %v231 = vadd.f32 %v160, %v224
  %v232 = vadd.f32 %v161, %v224
  %v233 = vadd.f32 %v162, %v224
  %v234 = vadd.f32 %v163, %v224
  %v235 = vadd.f32 %v164, %v224
  %v236 = vadd.f32 %v165, %v224
  %v237 = vadd.f32 %v166, %v224
  %v238 = vadd.f32 %v167, %v224
  %v239 = vadd.f32 %v168, %v224
  %v240 = vadd.f32 %v169, %v224
  %v241 = vadd.f32 %v170, %v224
  %v242 = vadd.f32 %v171, %v224
  %v243 = vadd.f32 %v172, %v224
  %v244 = vadd.f32 %v173, %v224
  %v245 = vadd.f32 %v174, %v224
  %v246 = vadd.f32 %v175, %v224
  %v247 = vadd.f32 %v176, %v224
  %v248 = vadd.f32 %v177, %v224
  %v249 = vadd.f32 %v178, %v224
  %v250 = vadd.f32 %v179, %v224
  %v251 = vadd.f32 %v180, %v224
  %v252 = vadd.f32 %v181, %v224
  %v253 = vadd.f32 %v182, %v224
  %v254 = vadd.f32 %v183, %v224
  %v255 = vadd.f32 %v184, %v224
  %v256 = vadd.f32 %v185, %v224
  %v257 = vadd.f32 %v186, %v224
  %v258 = vadd.f32 %v187, %v224
  %v259 = vadd.f32 %v188, %v224
  %v260 = vadd.f32 %v189, %v224
  %v261 = vadd.f32 %v190, %v224
  %v262 = vadd.f32 %v191, %v224
  %v263 = vadd.f32 %v192, %v224
  %v264 = vadd.f32 %v193, %v224
  %v265 = vadd.f32 %v194, %v224
  %v266 = vadd.f32 %v195, %v224
  %v267 = vadd.f32 %v196, %v224
  %v268 = vadd.f32 %v197, %v224
  %v269 = vadd.f32 %v198, %v224
  %v270 = vadd.f32 %v199, %v224
  %v271 = vadd.f32 %v200, %v224
  %v272 = vadd.f32 %v201, %v224
  %v273 = vadd.f32 %v202, %v224
  %v274 = vadd.f32 %v203, %v224
  %v275 = vadd.f32 %v204, %v224
  %v276 = vadd.f32 %v205, %v224
  %v277 = vadd.f32 %v206, %v224
  %v278 = vadd.f32 %v207, %v224
  %v279 = vadd.f32 %v208, %v224
  %v280 = vadd.f32 %v209, %v224
  %v281 = vadd.f32 %v210, %v224
  %v282 = vadd.f32 %v211, %v224
  %v283 = vadd.f32 %v212, %v224
  %v284 = vadd.f32 %v213, %v224
  %v285 = vadd.f32 %v214, %v224
  %v286 = vadd.f32 %v215, %v224
  %v287 = vadd.f32 %v216, %v224
  %v288 = vadd.f32 %v217, %v224
  %v289 = vadd.f32 %v218, %v224
  %v290 = vmax.f32 %v226, 0.0
  %v291 = vmax.f32 %v227, 0.0
  %v292 = vmax.f32 %v228, 0.0
  %v293 = vmax.f32 %v229, 0.0
  %v294 = vmax.f32 %v230, 0.0
  %v295 = vmax.f32 %v231, 0.0
  %v296 = vmax.f32 %v232, 0.0
  %v297 = vmax.f32 %v233, 0.0
  %v298 = vmax.f32 %v234, 0.0
  %v299 = vmax.f32 %v235, 0.0
  %v300 = vmax.f32 %v236, 0.0
  %v301 = vmax.f32 %v237, 0.0
  %v302 = vmax.f32 %v238, 0.0
  %v303 = vmax.f32 %v239, 0.0
  %v304 = vmax.f32 %v240, 0.0
  %v305 = vmax.f32 %v241, 0.0
  %v306 = vmax.f32 %v242, 0.0
  %v307 = vmax.f32 %v243, 0.0
  %v308 = vmax.f32 %v244, 0.0
  %v309 = vmax.f32 %v245, 0.0
  %v310 = vmax.f32 %v246, 0.0
  %v311 = vmax.f32 %v247, 0.0
  %v312 = vmax.f32 %v248, 0.0
  %v313 = vmax.f32 %v249, 0.0
  %v314 = vmax.f32 %v250, 0.0
  %v315 = vmax.f32 %v251, 0.0
  %v316 = vmax.f32 %v252, 0.0
  %v317 = vmax.f32 %v253, 0.0
  %v318 = vmax.f32 %v254, 0.0
  %v319 = vmax.f32 %v255, 0.0
  %v320 = vmax.f32 %v256, 0.0
  %v321 = vmax.f32 %v257, 0.0
  %v322 = vmax.f32 %v258, 0.0
  %v323 = vmax.f32 %v259, 0.0
  %v324 = vmax.f32 %v260, 0.0
  %v325 = vmax.f32 %v261, 0.0
  %v326 = vmax.f32 %v262, 0.0
  %v327 = vmax.f32 %v263, 0.0
  %v328 = vmax.f32 %v264, 0.0
  %v329 = vmax.f32 %v265, 0.0
  %v330 = vmax.f32 %v266, 0.0
  %v331 = vmax.f32 %v267, 0.0
  %v332 = vmax.f32 %v268, 0.0
  %v333 = vmax.f32 %v269, 0.0
  %v334 = vmax.f32 %v270, 0.0
  %v335 = vmax.f32 %v271, 0.0
  %v336 = vmax.f32 %v272, 0.0
  %v337 = vmax.f32 %v273, 0.0
  %v338 = vmax.f32 %v274, 0.0
  %v339 = vmax.f32 %v275, 0.0
  %v340 = vmax.f32 %v276, 0.0
  %v341 = vmax.f32 %v277, 0.0
  %v342 = vmax.f32 %v278, 0.0
  %v343 = vmax.f32 %v279, 0.0
  %v344 = vmax.f32 %v280, 0.0
  %v345 = vmax.f32 %v281, 0.0
  %v346 = vmax.f32 %v282, 0.0
  %v347 = vmax.f32 %v283, 0.0
  %v348 = vmax.f32 %v284, 0.0
  %v349 = vmax.f32 %v285, 0.0
  %v350 = vmax.f32 %v286, 0.0
  %v351 = vmax.f32 %v287, 0.0
  %v352 = vmax.f32 %v288, 0.0
  %v353 = vmax.f32 %v289, 0.0
  %v354 = vpack.c.bf16 %v291, %v290
  %v355 = vpack.c.bf16 %v293, %v292
  %v356 = vpack.c.bf16 %v295, %v294
  %v357 = vpack.c.bf16 %v297, %v296
  %v358 = vpack.c.bf16 %v299, %v298
  %v359 = vpack.c.bf16 %v301, %v300
  %v360 = vpack.c.bf16 %v303, %v302
  %v361 = vpack.c.bf16 %v305, %v304
  %v362 = vpack.c.bf16 %v307, %v306
  %v363 = vpack.c.bf16 %v309, %v308
  %v364 = vpack.c.bf16 %v311, %v310
  %v365 = vpack.c.bf16 %v313, %v312
  %v366 = vpack.c.bf16 %v315, %v314
  %v367 = vpack.c.bf16 %v317, %v316
  %v368 = vpack.c.bf16 %v319, %v318
  %v369 = vpack.c.bf16 %v321, %v320
  %v370 = vpack.c.bf16 %v323, %v322
  %v371 = vpack.c.bf16 %v325, %v324
  %v372 = vpack.c.bf16 %v327, %v326
  %v373 = vpack.c.bf16 %v329, %v328
  %v374 = vpack.c.bf16 %v331, %v330
  %v375 = vpack.c.bf16 %v333, %v332
  %v376 = vpack.c.bf16 %v335, %v334
  %v377 = vpack.c.bf16 %v337, %v336
  %v378 = vpack.c.bf16 %v339, %v338
  %v379 = vpack.c.bf16 %v341, %v340
  %v380 = vpack.c.bf16 %v343, %v342
  %v381 = vpack.c.bf16 %v345, %v344
  %v382 = vpack.c.bf16 %v347, %v346
  %v383 = vpack.c.bf16 %v349, %v348
  %v384 = vpack.c.bf16 %v351, %v350
  %v385 = vpack.c.bf16 %v353, %v352
  %v386 = vld [vmem:[%s3] sm:$0xf]
  %v387 = vld [vmem:[%s3 + $0x4] sm:$0xf]
  %v388 = vld [vmem:[%s3 + $0x8] sm:$0xf]
  %v389 = vld [vmem:[%s3 + $0xc] sm:$0xf]
  %v390 = vld [vmem:[%s3 + $0x10] sm:$0xf]
  %v391 = vld [vmem:[%s3 + $0x14] sm:$0xf]
  %v392 = vld [vmem:[%s3 + $0x18] sm:$0xf]
  %v393 = vld [vmem:[%s3 + $0x1c] sm:$0xf]
  %v394 = vld [vmem:[%s3 + $0x20] sm:$0xf]
  %v395 = vld [vmem:[%s3 + $0x24] sm:$0xf]
  %v396 = vld [vmem:[%s3 + $0x28] sm:$0xf]
  %v397 = vld [vmem:[%s3 + $0x2c] sm:$0xf]
  %v398 = vld [vmem:[%s3 + $0x30] sm:$0xf]
  %v399 = vld [vmem:[%s3 + $0x34] sm:$0xf]
  %v400 = vld [vmem:[%s3 + $0x38] sm:$0xf]
  %v401 = vld [vmem:[%s3 + $0x3c] sm:$0xf]
  %v418 = vunpack.c.l.b16 %v386
  %v419 = vunpack.c.l.b16 %v387
  %v420 = vunpack.c.l.b16 %v388
  %v421 = vunpack.c.l.b16 %v389
  %v422 = vunpack.c.l.b16 %v390
  %v423 = vunpack.c.l.b16 %v391
  %v424 = vunpack.c.l.b16 %v392
  %v425 = vunpack.c.l.b16 %v393
  %v426 = vunpack.c.l.b16 %v394
  %v427 = vunpack.c.l.b16 %v395
  %v428 = vunpack.c.l.b16 %v396
  %v429 = vunpack.c.l.b16 %v397
  %v430 = vunpack.c.l.b16 %v398
  %v431 = vunpack.c.l.b16 %v399
  %v432 = vunpack.c.l.b16 %v400
  %v433 = vunpack.c.l.b16 %v401
  %v434 = vpack.c.b16 %v419, %v418
  %v435 = vpack.c.b16 %v421, %v420
  %v436 = vpack.c.b16 %v423, %v422
  %v437 = vpack.c.b16 %v425, %v424
  %v438 = vpack.c.b16 %v427, %v426
  %v439 = vpack.c.b16 %v429, %v428
  %v440 = vpack.c.b16 %v431, %v430
  %v441 = vpack.c.b16 %v433, %v432
  %450 = vmatprep.subr.bf16.mxu0 0
  %451 = vmatpush1.bf16.msra.mxu0 %v434
  %452 = vmatprep.subr.bf16.mxu0 0
  %453 = vmatpush1.bf16.msra.mxu0 %v435
  %454 = vmatprep.subr.bf16.mxu0 0
  %455 = vmatpush1.bf16.msra.mxu0 %v436
  %456 = vmatprep.subr.bf16.mxu0 0
  %457 = vmatpush1.bf16.msra.mxu0 %v437
  %458 = vmatprep.subr.bf16.mxu0 0
  %459 = vmatpush1.bf16.msra.mxu0 %v438
  %460 = vmatprep.subr.bf16.mxu0 0
  %461 = vmatpush1.bf16.msra.mxu0 %v439
  %462 = vmatprep.subr.bf16.mxu0 0
  %463 = vmatpush1.bf16.msra.mxu0 %v440
  %464 = vmatprep.subr.bf16.mxu0 0
  %465 = vmatpush1.bf16.msra.mxu0 %v441
  %466 = vmatprep.subr.bf16.mxu0 0
  %467 = vmatpush1.bf16.msra.mxu0 0
  %468 = vmatprep.subr.bf16.mxu0 0
  %469 = vmatpush1.bf16.msra.mxu0 0
  %470 = vmatprep.subr.bf16.mxu0 0
  %471 = vmatpush1.bf16.msra.mxu0 0
  %472 = vmatprep.subr.bf16.mxu0 0
  %473 = vmatpush1.bf16.msra.mxu0 0
  %474 = vmatprep.subr.bf16.mxu0 0
  %475 = vmatpush1.bf16.msra.mxu0 0
  %476 = vmatprep.subr.bf16.mxu0 0
  %477 = vmatpush1.bf16.msra.mxu0 0
  %478 = vmatprep.subr.bf16.mxu0 0
  %479 = vmatpush1.bf16.msra.mxu0 0
  %480 = vmatprep.subr.bf16.mxu0 0
  %481 = vmatpush1.bf16.msra.mxu0 0
  %482 = vmatprep.mubr.bf16.mxu0 0
  %483 = vmatmul.mubr.bf16.gmra.mrb[0].mxu0 %v354
  %v484 = vpop.f32.mrb[0].mxu0
  %v485 = vadd.f32 0.0, %v484
  %v486 = vpop.f32.mrb[0].mxu0
  %v487 = vpop.f32.mrb[0].mxu0
  %v488 = vadd.f32 0.0, %v487
  %v489 = vpop.f32.mrb[0].mxu0
  %490 = vmatprep.mubr.bf16.mxu0 0
  %491 = vmatmul.mubr.bf16.gmra.mrb[0].mxu0 %v355
  %v492 = vpop.f32.mrb[0].mxu0
  %v493 = vadd.f32 0.0, %v492
  %v494 = vpop.f32.mrb[0].mxu0
  %v495 = vpop.f32.mrb[0].mxu0
  %v496 = vadd.f32 0.0, %v495
  %v497 = vpop.f32.mrb[0].mxu0
  %498 = vmatprep.mubr.bf16.mxu0 0
  %499 = vmatmul.mubr.bf16.gmra.mrb[0].mxu0 %v356
  %v500 = vpop.f32.mrb[0].mxu0
  %v501 = vadd.f32 0.0, %v500
  %v502 = vpop.f32.mrb[0].mxu0
  %v503 = vpop.f32.mrb[0].mxu0
  %v504 = vadd.f32 0.0, %v503
  %v505 = vpop.f32.mrb[0].mxu0
  %506 = vmatprep.mubr.bf16.mxu0 0
  %507 = vmatmul.mubr.bf16.gmra.mrb[0].mxu0 %v357
  %v508 = vpop.f32.mrb[0].mxu0
  %v509 = vadd.f32 0.0, %v508
  %v510 = vpop.f32.mrb[0].mxu0
  %v511 = vpop.f32.mrb[0].mxu0
  %v512 = vadd.f32 0.0, %v511
  %v513 = vpop.f32.mrb[0].mxu0
  %514 = vmatprep.mubr.bf16.mxu0 0
  %515 = vmatmul.mubr.bf16.gmra.mrb[0].mxu0 %v358
  %v516 = vpop.f32.mrb[0].mxu0
  %v517 = vadd.f32 0.0, %v516
  %v518 = vpop.f32.mrb[0].mxu0
  %v519 = vpop.f32.mrb[0].mxu0
  %v520 = vadd.f32 0.0, %v519
  %v521 = vpop.f32.mrb[0].mxu0
  %522 = vmatprep.mubr.bf16.mxu0 0
  %523 = vmatmul.mubr.bf16.gmra.mrb[0].mxu0 %v359
  %v524 = vpop.f32.mrb[0].mxu0
  %v525 = vadd.f32 0.0, %v524
  %v526 = vpop.f32.mrb[0].mxu0
  %v527 = vpop.f32.mrb[0].mxu0
  %v528 = vadd.f32 0.0, %v527
  %v529 = vpop.f32.mrb[0].mxu0
  %530 = vmatprep.mubr.bf16.mxu0 0
  %531 = vmatmul.mubr.bf16.gmra.mrb[0].mxu0 %v360
  %v532 = vpop.f32.mrb[0].mxu0
  %v533 = vadd.f32 0.0, %v532
  %v534 = vpop.f32.mrb[0].mxu0
  %v535 = vpop.f32.mrb[0].mxu0
  %v536 = vadd.f32 0.0, %v535
  %v537 = vpop.f32.mrb[0].mxu0
  %538 = vmatprep.mubr.bf16.mxu0 0
  %539 = vmatmul.mubr.bf16.gmra.mrb[0].mxu0 %v361
  %v540 = vpop.f32.mrb[0].mxu0
  %v541 = vadd.f32 0.0, %v540
  %v542 = vpop.f32.mrb[0].mxu0
  %v543 = vpop.f32.mrb[0].mxu0
  %v544 = vadd.f32 0.0, %v543
  %v545 = vpop.f32.mrb[0].mxu0
  %546 = vmatprep.mubr.bf16.mxu0 0
  %547 = vmatmul.mubr.bf16.gmra.mrb[0].mxu0 %v362
  %v548 = vpop.f32.mrb[0].mxu0
  %v549 = vadd.f32 0.0, %v548
  %v550 = vpop.f32.mrb[0].mxu0
  %v551 = vpop.f32.mrb[0].mxu0
  %v552 = vadd.f32 0.0, %v551
  %v553 = vpop.f32.mrb[0].mxu0
  %554 = vmatprep.mubr.bf16.mxu0 0
  %555 = vmatmul.mubr.bf16.gmra.mrb[0].mxu0 %v363
  %v556 = vpop.f32.mrb[0].mxu0
  %v557 = vadd.f32 0.0, %v556
  %v558 = vpop.f32.mrb[0].mxu0
  %v559 = vpop.f32.mrb[0].mxu0
  %v560 = vadd.f32 0.0, %v559
  %v561 = vpop.f32.mrb[0].mxu0
  %562 = vmatprep.mubr.bf16.mxu0 0
  %563 = vmatmul.mubr.bf16.gmra.mrb[0].mxu0 %v364
  %v564 = vpop.f32.mrb[0].mxu0
  %v565 = vadd.f32 0.0, %v564
  %v566 = vpop.f32.mrb[0].mxu0
  %v567 = vpop.f32.mrb[0].mxu0
  %v568 = vadd.f32 0.0, %v567
  %v569 = vpop.f32.mrb[0].mxu0
  %570 = vmatprep.mubr.bf16.mxu0 0
  %571 = vmatmul.mubr.bf16.gmra.mrb[0].mxu0 %v365
  %v572 = vpop.f32.mrb[0].mxu0
  %v573 = vadd.f32 0.0, %v572
  %v574 = vpop.f32.mrb[0].mxu0
  %v575 = vpop.f32.mrb[0].mxu0
  %v576 = vadd.f32 0.0, %v575
  %v577 = vpop.f32.mrb[0].mxu0
  %578 = vmatprep.mubr.bf16.mxu0 0
  %579 = vmatmul.mubr.bf16.gmra.mrb[0].mxu0 %v366
  %v580 = vpop.f32.mrb[0].mxu0
  %v581 = vadd.f32 0.0, %v580
  %v582 = vpop.f32.mrb[0].mxu0
  %v583 = vpop.f32.mrb[0].mxu0
  %v584 = vadd.f32 0.0, %v583
  %v585 = vpop.f32.mrb[0].mxu0
  %586 = vmatprep.mubr.bf16.mxu0 0
  %587 = vmatmul.mubr.bf16.gmra.mrb[0].mxu0 %v367
  %v588 = vpop.f32.mrb[0].mxu0
  %v589 = vadd.f32 0.0, %v588
  %v590 = vpop.f32.mrb[0].mxu0
  %v591 = vpop.f32.mrb[0].mxu0
  %v592 = vadd.f32 0.0, %v591
  %v593 = vpop.f32.mrb[0].mxu0
  %594 = vmatprep.mubr.bf16.mxu0 0
  %595 = vmatmul.mubr.bf16.gmra.mrb[0].mxu0 %v368
  %v596 = vpop.f32.mrb[0].mxu0
  %v597 = vadd.f32 0.0, %v596
  %v598 = vpop.f32.mrb[0].mxu0
  %v599 = vpop.f32.mrb[0].mxu0
  %v600 = vadd.f32 0.0, %v599
  %v601 = vpop.f32.mrb[0].mxu0
  %602 = vmatprep.mubr.bf16.mxu0 0
  %603 = vmatmul.mubr.bf16.gmra.mrb[0].mxu0 %v369
  %v604 = vpop.f32.mrb[0].mxu0
  %v605 = vadd.f32 0.0, %v604
  %v606 = vpop.f32.mrb[0].mxu0
  %v607 = vpop.f32.mrb[0].mxu0
  %v608 = vadd.f32 0.0, %v607
  %v609 = vpop.f32.mrb[0].mxu0
  %610 = vmatprep.mubr.bf16.mxu0 0
  %611 = vmatmul.mubr.bf16.gmra.mrb[0].mxu0 %v370
  %v612 = vpop.f32.mrb[0].mxu0
  %v613 = vadd.f32 0.0, %v612
  %v614 = vpop.f32.mrb[0].mxu0
  %v615 = vpop.f32.mrb[0].mxu0
  %v616 = vadd.f32 0.0, %v615
  %v617 = vpop.f32.mrb[0].mxu0
  %618 = vmatprep.mubr.bf16.mxu0 0
  %619 = vmatmul.mubr.bf16.gmra.mrb[0].mxu0 %v371
  %v620 = vpop.f32.mrb[0].mxu0
  %v621 = vadd.f32 0.0, %v620
  %v622 = vpop.f32.mrb[0].mxu0
  %v623 = vpop.f32.mrb[0].mxu0
  %v624 = vadd.f32 0.0, %v623
  %v625 = vpop.f32.mrb[0].mxu0
  %626 = vmatprep.mubr.bf16.mxu0 0
  %627 = vmatmul.mubr.bf16.gmra.mrb[0].mxu0 %v372
  %v628 = vpop.f32.mrb[0].mxu0
  %v629 = vadd.f32 0.0, %v628
  %v630 = vpop.f32.mrb[0].mxu0
  %v631 = vpop.f32.mrb[0].mxu0
  %v632 = vadd.f32 0.0, %v631
  %v633 = vpop.f32.mrb[0].mxu0
  %634 = vmatprep.mubr.bf16.mxu0 0
  %635 = vmatmul.mubr.bf16.gmra.mrb[0].mxu0 %v373
  %v636 = vpop.f32.mrb[0].mxu0
  %v637 = vadd.f32 0.0, %v636
  %v638 = vpop.f32.mrb[0].mxu0
  %v639 = vpop.f32.mrb[0].mxu0
  %v640 = vadd.f32 0.0, %v639
  %v641 = vpop.f32.mrb[0].mxu0
  %642 = vmatprep.mubr.bf16.mxu0 0
  %643 = vmatmul.mubr.bf16.gmra.mrb[0].mxu0 %v374
  %v644 = vpop.f32.mrb[0].mxu0
  %v645 = vadd.f32 0.0, %v644
  %v646 = vpop.f32.mrb[0].mxu0
  %v647 = vpop.f32.mrb[0].mxu0
  %v648 = vadd.f32 0.0, %v647
  %v649 = vpop.f32.mrb[0].mxu0
  %650 = vmatprep.mubr.bf16.mxu0 0
  %651 = vmatmul.mubr.bf16.gmra.mrb[0].mxu0 %v375
  %v652 = vpop.f32.mrb[0].mxu0
  %v653 = vadd.f32 0.0, %v652
  %v654 = vpop.f32.mrb[0].mxu0
  %v655 = vpop.f32.mrb[0].mxu0
  %v656 = vadd.f32 0.0, %v655
  %v657 = vpop.f32.mrb[0].mxu0
  %658 = vmatprep.mubr.bf16.mxu0 0
  %659 = vmatmul.mubr.bf16.gmra.mrb[0].mxu0 %v376
  %v660 = vpop.f32.mrb[0].mxu0
  %v661 = vadd.f32 0.0, %v660
  %v662 = vpop.f32.mrb[0].mxu0
  %v663 = vpop.f32.mrb[0].mxu0
  %v664 = vadd.f32 0.0, %v663
  %v665 = vpop.f32.mrb[0].mxu0
  %666 = vmatprep.mubr.bf16.mxu0 0
  %667 = vmatmul.mubr.bf16.gmra.mrb[0].mxu0 %v377
  %v668 = vpop.f32.mrb[0].mxu0
  %v669 = vadd.f32 0.0, %v668
  %v670 = vpop.f32.mrb[0].mxu0
  %v671 = vpop.f32.mrb[0].mxu0
  %v672 = vadd.f32 0.0, %v671
  %v673 = vpop.f32.mrb[0].mxu0
  %674 = vmatprep.mubr.bf16.mxu0 0
  %675 = vmatmul.mubr.bf16.gmra.mrb[0].mxu0 %v378
  %v676 = vpop.f32.mrb[0].mxu0
  %v677 = vadd.f32 0.0, %v676
  %v678 = vpop.f32.mrb[0].mxu0
  %v679 = vpop.f32.mrb[0].mxu0
  %v680 = vadd.f32 0.0, %v679
  %v681 = vpop.f32.mrb[0].mxu0
  %682 = vmatprep.mubr.bf16.mxu0 0
  %683 = vmatmul.mubr.bf16.gmra.mrb[0].mxu0 %v379
  %v684 = vpop.f32.mrb[0].mxu0
  %v685 = vadd.f32 0.0, %v684
  %v686 = vpop.f32.mrb[0].mxu0
  %v687 = vpop.f32.mrb[0].mxu0
  %v688 = vadd.f32 0.0, %v687
  %v689 = vpop.f32.mrb[0].mxu0
  %690 = vmatprep.mubr.bf16.mxu0 0
  %691 = vmatmul.mubr.bf16.gmra.mrb[0].mxu0 %v380
  %v692 = vpop.f32.mrb[0].mxu0
  %v693 = vadd.f32 0.0, %v692
  %v694 = vpop.f32.mrb[0].mxu0
  %v695 = vpop.f32.mrb[0].mxu0
  %v696 = vadd.f32 0.0, %v695
  %v697 = vpop.f32.mrb[0].mxu0
  %698 = vmatprep.mubr.bf16.mxu0 0
  %699 = vmatmul.mubr.bf16.gmra.mrb[0].mxu0 %v381
  %v700 = vpop.f32.mrb[0].mxu0
  %v701 = vadd.f32 0.0, %v700
  %v702 = vpop.f32.mrb[0].mxu0
  %v703 = vpop.f32.mrb[0].mxu0
  %v704 = vadd.f32 0.0, %v703
  %v705 = vpop.f32.mrb[0].mxu0
  %706 = vmatprep.mubr.bf16.mxu0 0
  %707 = vmatmul.mubr.bf16.gmra.mrb[0].mxu0 %v382
  %v708 = vpop.f32.mrb[0].mxu0
  %v709 = vadd.f32 0.0, %v708
  %v710 = vpop.f32.mrb[0].mxu0
  %v711 = vpop.f32.mrb[0].mxu0
  %v712 = vadd.f32 0.0, %v711
  %v713 = vpop.f32.mrb[0].mxu0
  %714 = vmatprep.mubr.bf16.mxu0 0
  %715 = vmatmul.mubr.bf16.gmra.mrb[0].mxu0 %v383
  %v716 = vpop.f32.mrb[0].mxu0
  %v717 = vadd.f32 0.0, %v716
  %v718 = vpop.f32.mrb[0].mxu0
  %v719 = vpop.f32.mrb[0].mxu0
  %v720 = vadd.f32 0.0, %v719
  %v721 = vpop.f32.mrb[0].mxu0
  %722 = vmatprep.mubr.bf16.mxu0 0
  %723 = vmatmul.mubr.bf16.gmra.mrb[0].mxu0 %v384
  %v724 = vpop.f32.mrb[0].mxu0
  %v725 = vadd.f32 0.0, %v724
  %v726 = vpop.f32.mrb[0].mxu0
  %v727 = vpop.f32.mrb[0].mxu0
  %v728 = vadd.f32 0.0, %v727
  %v729 = vpop.f32.mrb[0].mxu0
  %730 = vmatprep.mubr.bf16.mxu0 0
  %731 = vmatmul.mubr.bf16.gmra.mrb[0].mxu0 %v385
  %v732 = vpop.f32.mrb[0].mxu0
  %v733 = vadd.f32 0.0, %v732
  %v734 = vpop.f32.mrb[0].mxu0
  %v735 = vpop.f32.mrb[0].mxu0
  %v736 = vadd.f32 0.0, %v735
  %v737 = vpop.f32.mrb[0].mxu0
  %738 = vdwg.mxu0
  %v739 = vpack.c.bf16 %v488, %v485
  %v740 = vpack.c.bf16 %v496, %v493
  %v741 = vpack.c.bf16 %v504, %v501
  %v742 = vpack.c.bf16 %v512, %v509
  %v743 = vpack.c.bf16 %v520, %v517
  %v744 = vpack.c.bf16 %v528, %v525
  %v745 = vpack.c.bf16 %v536, %v533
  %v746 = vpack.c.bf16 %v544, %v541
  %v747 = vpack.c.bf16 %v552, %v549
  %v748 = vpack.c.bf16 %v560, %v557
  %v749 = vpack.c.bf16 %v568, %v565
  %v750 = vpack.c.bf16 %v576, %v573
  %v751 = vpack.c.bf16 %v584, %v581
  %v752 = vpack.c.bf16 %v592, %v589
  %v753 = vpack.c.bf16 %v600, %v597
  %v754 = vpack.c.bf16 %v608, %v605
  %v755 = vpack.c.bf16 %v616, %v613
  %v756 = vpack.c.bf16 %v624, %v621
  %v757 = vpack.c.bf16 %v632, %v629
  %v758 = vpack.c.bf16 %v640, %v637
  %v759 = vpack.c.bf16 %v648, %v645
  %v760 = vpack.c.bf16 %v656, %v653
  %v761 = vpack.c.bf16 %v664, %v661
  %v762 = vpack.c.bf16 %v672, %v669
  %v763 = vpack.c.bf16 %v680, %v677
  %v764 = vpack.c.bf16 %v688, %v685
  %v765 = vpack.c.bf16 %v696, %v693
  %v766 = vpack.c.bf16 %v704, %v701
  %v767 = vpack.c.bf16 %v712, %v709
  %v768 = vpack.c.bf16 %v720, %v717
  %v769 = vpack.c.bf16 %v728, %v725
  %v770 = vpack.c.bf16 %v736, %v733
  %v803 = vunpack.c.l.b16 %v739
  %v804 = vunpack.c.h.b16 %v739
  %v805 = vunpack.c.l.b16 %v740
  %v806 = vunpack.c.h.b16 %v740
  %v807 = vunpack.c.l.b16 %v741
  %v808 = vunpack.c.h.b16 %v741
  %v809 = vunpack.c.l.b16 %v742
  %v810 = vunpack.c.h.b16 %v742
  %v811 = vunpack.c.l.b16 %v743
  %v812 = vunpack.c.h.b16 %v743
  %v813 = vunpack.c.l.b16 %v744
  %v814 = vunpack.c.h.b16 %v744
  %v815 = vunpack.c.l.b16 %v745
  %v816 = vunpack.c.h.b16 %v745
  %v817 = vunpack.c.l.b16 %v746
  %v818 = vunpack.c.h.b16 %v746
  %v819 = vunpack.c.l.b16 %v747
  %v820 = vunpack.c.h.b16 %v747
  %v821 = vunpack.c.l.b16 %v748
  %v822 = vunpack.c.h.b16 %v748
  %v823 = vunpack.c.l.b16 %v749
  %v824 = vunpack.c.h.b16 %v749
  %v825 = vunpack.c.l.b16 %v750
  %v826 = vunpack.c.h.b16 %v750
  %v827 = vunpack.c.l.b16 %v751
  %v828 = vunpack.c.h.b16 %v751
  %v829 = vunpack.c.l.b16 %v752
  %v830 = vunpack.c.h.b16 %v752
  %v831 = vunpack.c.l.b16 %v753
  %v832 = vunpack.c.h.b16 %v753
  %v833 = vunpack.c.l.b16 %v754
  %v834 = vunpack.c.h.b16 %v754
  %v835 = vunpack.c.l.b16 %v755
  %v836 = vunpack.c.h.b16 %v755
  %v837 = vunpack.c.l.b16 %v756
  %v838 = vunpack.c.h.b16 %v756
  %v839 = vunpack.c.l.b16 %v757
  %v840 = vunpack.c.h.b16 %v757
  %v841 = vunpack.c.l.b16 %v758
  %v842 = vunpack.c.h.b16 %v758
  %v843 = vunpack.c.l.b16 %v759
  %v844 = vunpack.c.h.b16 %v759
  %v845 = vunpack.c.l.b16 %v760
  %v846 = vunpack.c.h.b16 %v760
  %v847 = vunpack.c.l.b16 %v761
  %v848 = vunpack.c.h.b16 %v761
  %v849 = vunpack.c.l.b16 %v762
  %v850 = vunpack.c.h.b16 %v762
  %v851 = vunpack.c.l.b16 %v763
  %v852 = vunpack.c.h.b16 %v763
  %v853 = vunpack.c.l.b16 %v764
  %v854 = vunpack.c.h.b16 %v764
  %v855 = vunpack.c.l.b16 %v765
  %v856 = vunpack.c.h.b16 %v765
  %v857 = vunpack.c.l.b16 %v766
  %v858 = vunpack.c.h.b16 %v766
  %v859 = vunpack.c.l.b16 %v767
  %v860 = vunpack.c.h.b16 %v767
  %v861 = vunpack.c.l.b16 %v768
  %v862 = vunpack.c.h.b16 %v768
  %v863 = vunpack.c.l.b16 %v769
  %v864 = vunpack.c.h.b16 %v769
  %v865 = vunpack.c.l.b16 %v770
  %v866 = vunpack.c.h.b16 %v770
  %v867 = vpack.c.b16 %v803, %v803
  %v868 = vpack.c.b16 %v804, %v804
  %v869 = vpack.c.b16 %v805, %v805
  %v870 = vpack.c.b16 %v806, %v806
  %v871 = vpack.c.b16 %v807, %v807
  %v872 = vpack.c.b16 %v808, %v808
  %v873 = vpack.c.b16 %v809, %v809
  %v874 = vpack.c.b16 %v810, %v810
  %v875 = vpack.c.b16 %v811, %v811
  %v876 = vpack.c.b16 %v812, %v812
  %v877 = vpack.c.b16 %v813, %v813
  %v878 = vpack.c.b16 %v814, %v814
  %v879 = vpack.c.b16 %v815, %v815
  %v880 = vpack.c.b16 %v816, %v816
  %v881 = vpack.c.b16 %v817, %v817
  %v882 = vpack.c.b16 %v818, %v818
  %v883 = vpack.c.b16 %v819, %v819
  %v884 = vpack.c.b16 %v820, %v820
  %v885 = vpack.c.b16 %v821, %v821
  %v886 = vpack.c.b16 %v822, %v822
  %v887 = vpack.c.b16 %v823, %v823
  %v888 = vpack.c.b16 %v824, %v824
  %v889 = vpack.c.b16 %v825, %v825
  %v890 = vpack.c.b16 %v826, %v826
  %v891 = vpack.c.b16 %v827, %v827
  %v892 = vpack.c.b16 %v828, %v828
  %v893 = vpack.c.b16 %v829, %v829
  %v894 = vpack.c.b16 %v830, %v830
  %v895 = vpack.c.b16 %v831, %v831
  %v896 = vpack.c.b16 %v832, %v832
  %v897 = vpack.c.b16 %v833, %v833
  %v898 = vpack.c.b16 %v834, %v834
  %v899 = vpack.c.b16 %v835, %v835
  %v900 = vpack.c.b16 %v836, %v836
  %v901 = vpack.c.b16 %v837, %v837
  %v902 = vpack.c.b16 %v838, %v838
  %v903 = vpack.c.b16 %v839, %v839
  %v904 = vpack.c.b16 %v840, %v840
  %v905 = vpack.c.b16 %v841, %v841
  %v906 = vpack.c.b16 %v842, %v842
  %v907 = vpack.c.b16 %v843, %v843
  %v908 = vpack.c.b16 %v844, %v844
  %v909 = vpack.c.b16 %v845, %v845
  %v910 = vpack.c.b16 %v846, %v846
  %v911 = vpack.c.b16 %v847, %v847
  %v912 = vpack.c.b16 %v848, %v848
  %v913 = vpack.c.b16 %v849, %v849
  %v914 = vpack.c.b16 %v850, %v850
  %v915 = vpack.c.b16 %v851, %v851
  %v916 = vpack.c.b16 %v852, %v852
  %v917 = vpack.c.b16 %v853, %v853
  %v918 = vpack.c.b16 %v854, %v854
  %v919 = vpack.c.b16 %v855, %v855
  %v920 = vpack.c.b16 %v856, %v856
  %v921 = vpack.c.b16 %v857, %v857
  %v922 = vpack.c.b16 %v858, %v858
  %v923 = vpack.c.b16 %v859, %v859
  %v924 = vpack.c.b16 %v860, %v860
  %v925 = vpack.c.b16 %v861, %v861
  %v926 = vpack.c.b16 %v862, %v862
  %v927 = vpack.c.b16 %v863, %v863
  %v928 = vpack.c.b16 %v864, %v864
  %v929 = vpack.c.b16 %v865, %v865
  %v930 = vpack.c.b16 %v866, %v866
  %995 = vst [vmem:[%s4] sm:$0xf] %v867
  %996 = vst [vmem:[%s4 + $0x4] sm:$0xf] %v868
  %997 = vst [vmem:[%s4 + $0x8] sm:$0xf] %v869
  %998 = vst [vmem:[%s4 + $0xc] sm:$0xf] %v870
  %999 = vst [vmem:[%s4 + $0x10] sm:$0xf] %v871
  %1000 = vst [vmem:[%s4 + $0x14] sm:$0xf] %v872
  %1001 = vst [vmem:[%s4 + $0x18] sm:$0xf] %v873
  %1002 = vst [vmem:[%s4 + $0x1c] sm:$0xf] %v874
  %1003 = vst [vmem:[%s4 + $0x20] sm:$0xf] %v875
  %1004 = vst [vmem:[%s4 + $0x24] sm:$0xf] %v876
  %1005 = vst [vmem:[%s4 + $0x28] sm:$0xf] %v877
  %1006 = vst [vmem:[%s4 + $0x2c] sm:$0xf] %v878
  %1007 = vst [vmem:[%s4 + $0x30] sm:$0xf] %v879
  %1008 = vst [vmem:[%s4 + $0x34] sm:$0xf] %v880
  %1009 = vst [vmem:[%s4 + $0x38] sm:$0xf] %v881
  %1010 = vst [vmem:[%s4 + $0x3c] sm:$0xf] %v882
  %1011 = vst [vmem:[%s4 + $0x40] sm:$0xf] %v883
  %1012 = vst [vmem:[%s4 + $0x44] sm:$0xf] %v884
  %1013 = vst [vmem:[%s4 + $0x48] sm:$0xf] %v885
  %1014 = vst [vmem:[%s4 + $0x4c] sm:$0xf] %v886
  %1015 = vst [vmem:[%s4 + $0x50] sm:$0xf] %v887
  %1016 = vst [vmem:[%s4 + $0x54] sm:$0xf] %v888
  %1017 = vst [vmem:[%s4 + $0x58] sm:$0xf] %v889
  %1018 = vst [vmem:[%s4 + $0x5c] sm:$0xf] %v890
  %1019 = vst [vmem:[%s4 + $0x60] sm:$0xf] %v891
  %1020 = vst [vmem:[%s4 + $0x64] sm:$0xf] %v892
  %1021 = vst [vmem:[%s4 + $0x68] sm:$0xf] %v893
  %1022 = vst [vmem:[%s4 + $0x6c] sm:$0xf] %v894
  %1023 = vst [vmem:[%s4 + $0x70] sm:$0xf] %v895
  %1024 = vst [vmem:[%s4 + $0x74] sm:$0xf] %v896
  %1025 = vst [vmem:[%s4 + $0x78] sm:$0xf] %v897
  %1026 = vst [vmem:[%s4 + $0x7c] sm:$0xf] %v898
  %1027 = vst [vmem:[%s4 + $0x80] sm:$0xf] %v899
  %1028 = vst [vmem:[%s4 + $0x84] sm:$0xf] %v900
  %1029 = vst [vmem:[%s4 + $0x88] sm:$0xf] %v901
  %1030 = vst [vmem:[%s4 + $0x8c] sm:$0xf] %v902
  %1031 = vst [vmem:[%s4 + $0x90] sm:$0xf] %v903
  %1032 = vst [vmem:[%s4 + $0x94] sm:$0xf] %v904
  %1033 = vst [vmem:[%s4 + $0x98] sm:$0xf] %v905
  %1034 = vst [vmem:[%s4 + $0x9c] sm:$0xf] %v906
  %1035 = vst [vmem:[%s4 + $0xa0] sm:$0xf] %v907
  %1036 = vst [vmem:[%s4 + $0xa4] sm:$0xf] %v908
  %1037 = vst [vmem:[%s4 + $0xa8] sm:$0xf] %v909
  %1038 = vst [vmem:[%s4 + $0xac] sm:$0xf] %v910
  %1039 = vst [vmem:[%s4 + $0xb0] sm:$0xf] %v911
  %1040 = vst [vmem:[%s4 + $0xb4] sm:$0xf] %v912
  %1041 = vst [vmem:[%s4 + $0xb8] sm:$0xf] %v913
  %1042 = vst [vmem:[%s4 + $0xbc] sm:$0xf] %v914
  %1043 = vst [vmem:[%s4 + $0xc0] sm:$0xf] %v915
  %1044 = vst [vmem:[%s4 + $0xc4] sm:$0xf] %v916
  %1045 = vst [vmem:[%s4 + $0xc8] sm:$0xf] %v917
  %1046 = vst [vmem:[%s4 + $0xcc] sm:$0xf] %v918
  %1047 = vst [vmem:[%s4 + $0xd0] sm:$0xf] %v919
  %1048 = vst [vmem:[%s4 + $0xd4] sm:$0xf] %v920
  %1049 = vst [vmem:[%s4 + $0xd8] sm:$0xf] %v921
  %1050 = vst [vmem:[%s4 + $0xdc] sm:$0xf] %v922
  %1051 = vst [vmem:[%s4 + $0xe0] sm:$0xf] %v923
  %1052 = vst [vmem:[%s4 + $0xe4] sm:$0xf] %v924
  %1053 = vst [vmem:[%s4 + $0xe8] sm:$0xf] %v925
  %1054 = vst [vmem:[%s4 + $0xec] sm:$0xf] %v926
  %1055 = vst [vmem:[%s4 + $0xf0] sm:$0xf] %v927
  %1056 = vst [vmem:[%s4 + $0xf4] sm:$0xf] %v928
  %1057 = vst [vmem:[%s4 + $0xf8] sm:$0xf] %v929
  %1058 = vst [vmem:[%s4 + $0xfc] sm:$0xf] %v930
  %v1059 = vadd.f32 %v485, %v488
  %v1060 = vadd.f32 %v1059, %v493
  %v1061 = vadd.f32 %v1060, %v496
  %v1062 = vadd.f32 %v1061, %v501
  %v1063 = vadd.f32 %v1062, %v504
  %v1064 = vadd.f32 %v1063, %v509
  %v1065 = vadd.f32 %v1064, %v512
  %v1066 = vadd.f32 %v1065, %v517
  %v1067 = vadd.f32 %v1066, %v520
  %v1068 = vadd.f32 %v1067, %v525
  %v1069 = vadd.f32 %v1068, %v528
  %v1070 = vadd.f32 %v1069, %v533
  %v1071 = vadd.f32 %v1070, %v536
  %v1072 = vadd.f32 %v1071, %v541
  %v1073 = vadd.f32 %v1072, %v544
  %v1074 = vadd.f32 %v1073, %v549
  %v1075 = vadd.f32 %v1074, %v552
  %v1076 = vadd.f32 %v1075, %v557
  %v1077 = vadd.f32 %v1076, %v560
  %v1078 = vadd.f32 %v1077, %v565
  %v1079 = vadd.f32 %v1078, %v568
  %v1080 = vadd.f32 %v1079, %v573
  %v1081 = vadd.f32 %v1080, %v576
  %v1082 = vadd.f32 %v1081, %v581
  %v1083 = vadd.f32 %v1082, %v584
  %v1084 = vadd.f32 %v1083, %v589
  %v1085 = vadd.f32 %v1084, %v592
  %v1086 = vadd.f32 %v1085, %v597
  %v1087 = vadd.f32 %v1086, %v600
  %v1088 = vadd.f32 %v1087, %v605
  %v1089 = vadd.f32 %v1088, %v608
  %v1090 = vadd.f32 %v1089, %v613
  %v1091 = vadd.f32 %v1090, %v616
  %v1092 = vadd.f32 %v1091, %v621
  %v1093 = vadd.f32 %v1092, %v624
  %v1094 = vadd.f32 %v1093, %v629
  %v1095 = vadd.f32 %v1094, %v632
  %v1096 = vadd.f32 %v1095, %v637
  %v1097 = vadd.f32 %v1096, %v640
  %v1098 = vadd.f32 %v1097, %v645
  %v1099 = vadd.f32 %v1098, %v648
  %v1100 = vadd.f32 %v1099, %v653
  %v1101 = vadd.f32 %v1100, %v656
  %v1102 = vadd.f32 %v1101, %v661
  %v1103 = vadd.f32 %v1102, %v664
  %v1104 = vadd.f32 %v1103, %v669
  %v1105 = vadd.f32 %v1104, %v672
  %v1106 = vadd.f32 %v1105, %v677
  %v1107 = vadd.f32 %v1106, %v680
  %v1108 = vadd.f32 %v1107, %v685
  %v1109 = vadd.f32 %v1108, %v688
  %v1110 = vadd.f32 %v1109, %v693
  %v1111 = vadd.f32 %v1110, %v696
  %v1112 = vadd.f32 %v1111, %v701
  %v1113 = vadd.f32 %v1112, %v704
  %v1114 = vadd.f32 %v1113, %v709
  %v1115 = vadd.f32 %v1114, %v712
  %v1116 = vadd.f32 %v1115, %v717
  %v1117 = vadd.f32 %v1116, %v720
  %v1118 = vadd.f32 %v1117, %v725
  %v1119 = vadd.f32 %v1118, %v728
  %v1120 = vadd.f32 %v1119, %v733
  %v1121 = vadd.f32 %v1120, %v736
  %v1122 = vrot.slane %v1121, 4
  %v1123 = vadd.f32 %v1121, %v1122
  %v1124 = vrot.slane %v1123, 2
  %v1125 = vadd.f32 %v1123, %v1124
  %v1126 = vrot.slane %v1125, 1
  %v1127 = vadd.f32 %v1125, %v1126
  %v1128 = vmul.f32 %v485, %v485
  %v1129 = vmul.f32 %v488, %v488
  %v1130 = vmul.f32 %v493, %v493
  %v1131 = vmul.f32 %v496, %v496
  %v1132 = vmul.f32 %v501, %v501
  %v1133 = vmul.f32 %v504, %v504
  %v1134 = vmul.f32 %v509, %v509
  %v1135 = vmul.f32 %v512, %v512
  %v1136 = vmul.f32 %v517, %v517
  %v1137 = vmul.f32 %v520, %v520
  %v1138 = vmul.f32 %v525, %v525
  %v1139 = vmul.f32 %v528, %v528
  %v1140 = vmul.f32 %v533, %v533
  %v1141 = vmul.f32 %v536, %v536
  %v1142 = vmul.f32 %v541, %v541
  %v1143 = vmul.f32 %v544, %v544
  %v1144 = vmul.f32 %v549, %v549
  %v1145 = vmul.f32 %v552, %v552
  %v1146 = vmul.f32 %v557, %v557
  %v1147 = vmul.f32 %v560, %v560
  %v1148 = vmul.f32 %v565, %v565
  %v1149 = vmul.f32 %v568, %v568
  %v1150 = vmul.f32 %v573, %v573
  %v1151 = vmul.f32 %v576, %v576
  %v1152 = vmul.f32 %v581, %v581
  %v1153 = vmul.f32 %v584, %v584
  %v1154 = vmul.f32 %v589, %v589
  %v1155 = vmul.f32 %v592, %v592
  %v1156 = vmul.f32 %v597, %v597
  %v1157 = vmul.f32 %v600, %v600
  %v1158 = vmul.f32 %v605, %v605
  %v1159 = vmul.f32 %v608, %v608
  %v1160 = vmul.f32 %v613, %v613
  %v1161 = vmul.f32 %v616, %v616
  %v1162 = vmul.f32 %v621, %v621
  %v1163 = vmul.f32 %v624, %v624
  %v1164 = vmul.f32 %v629, %v629
  %v1165 = vmul.f32 %v632, %v632
  %v1166 = vmul.f32 %v637, %v637
  %v1167 = vmul.f32 %v640, %v640
  %v1168 = vmul.f32 %v645, %v645
  %v1169 = vmul.f32 %v648, %v648
  %v1170 = vmul.f32 %v653, %v653
  %v1171 = vmul.f32 %v656, %v656
  %v1172 = vmul.f32 %v661, %v661
  %v1173 = vmul.f32 %v664, %v664
  %v1174 = vmul.f32 %v669, %v669
  %v1175 = vmul.f32 %v672, %v672
  %v1176 = vmul.f32 %v677, %v677
  %v1177 = vmul.f32 %v680, %v680
  %v1178 = vmul.f32 %v685, %v685
  %v1179 = vmul.f32 %v688, %v688
  %v1180 = vmul.f32 %v693, %v693
  %v1181 = vmul.f32 %v696, %v696
  %v1182 = vmul.f32 %v701, %v701
  %v1183 = vmul.f32 %v704, %v704
  %v1184 = vmul.f32 %v709, %v709
  %v1185 = vmul.f32 %v712, %v712
  %v1186 = vmul.f32 %v717, %v717
  %v1187 = vmul.f32 %v720, %v720
  %v1188 = vmul.f32 %v725, %v725
  %v1189 = vmul.f32 %v728, %v728
  %v1190 = vmul.f32 %v733, %v733
  %v1191 = vmul.f32 %v736, %v736
  %v1192 = vadd.f32 %v1128, %v1129
  %v1193 = vadd.f32 %v1192, %v1130
  %v1194 = vadd.f32 %v1193, %v1131
  %v1195 = vadd.f32 %v1194, %v1132
  %v1196 = vadd.f32 %v1195, %v1133
  %v1197 = vadd.f32 %v1196, %v1134
  %v1198 = vadd.f32 %v1197, %v1135
  %v1199 = vadd.f32 %v1198, %v1136
  %v1200 = vadd.f32 %v1199, %v1137
  %v1201 = vadd.f32 %v1200, %v1138
  %v1202 = vadd.f32 %v1201, %v1139
  %v1203 = vadd.f32 %v1202, %v1140
  %v1204 = vadd.f32 %v1203, %v1141
  %v1205 = vadd.f32 %v1204, %v1142
  %v1206 = vadd.f32 %v1205, %v1143
  %v1207 = vadd.f32 %v1206, %v1144
  %v1208 = vadd.f32 %v1207, %v1145
  %v1209 = vadd.f32 %v1208, %v1146
  %v1210 = vadd.f32 %v1209, %v1147
  %v1211 = vadd.f32 %v1210, %v1148
  %v1212 = vadd.f32 %v1211, %v1149
  %v1213 = vadd.f32 %v1212, %v1150
  %v1214 = vadd.f32 %v1213, %v1151
  %v1215 = vadd.f32 %v1214, %v1152
  %v1216 = vadd.f32 %v1215, %v1153
  %v1217 = vadd.f32 %v1216, %v1154
  %v1218 = vadd.f32 %v1217, %v1155
  %v1219 = vadd.f32 %v1218, %v1156
  %v1220 = vadd.f32 %v1219, %v1157
  %v1221 = vadd.f32 %v1220, %v1158
  %v1222 = vadd.f32 %v1221, %v1159
  %v1223 = vadd.f32 %v1222, %v1160
  %v1224 = vadd.f32 %v1223, %v1161
  %v1225 = vadd.f32 %v1224, %v1162
  %v1226 = vadd.f32 %v1225, %v1163
  %v1227 = vadd.f32 %v1226, %v1164
  %v1228 = vadd.f32 %v1227, %v1165
  %v1229 = vadd.f32 %v1228, %v1166
  %v1230 = vadd.f32 %v1229, %v1167
  %v1231 = vadd.f32 %v1230, %v1168
  %v1232 = vadd.f32 %v1231, %v1169
  %v1233 = vadd.f32 %v1232, %v1170
  %v1234 = vadd.f32 %v1233, %v1171
  %v1235 = vadd.f32 %v1234, %v1172
  %v1236 = vadd.f32 %v1235, %v1173
  %v1237 = vadd.f32 %v1236, %v1174
  %v1238 = vadd.f32 %v1237, %v1175
  %v1239 = vadd.f32 %v1238, %v1176
  %v1240 = vadd.f32 %v1239, %v1177
  %v1241 = vadd.f32 %v1240, %v1178
  %v1242 = vadd.f32 %v1241, %v1179
  %v1243 = vadd.f32 %v1242, %v1180
  %v1244 = vadd.f32 %v1243, %v1181
  %v1245 = vadd.f32 %v1244, %v1182
  %v1246 = vadd.f32 %v1245, %v1183
  %v1247 = vadd.f32 %v1246, %v1184
  %v1248 = vadd.f32 %v1247, %v1185
  %v1249 = vadd.f32 %v1248, %v1186
  %v1250 = vadd.f32 %v1249, %v1187
  %v1251 = vadd.f32 %v1250, %v1188
  %v1252 = vadd.f32 %v1251, %v1189
  %v1253 = vadd.f32 %v1252, %v1190
  %v1254 = vadd.f32 %v1253, %v1191
  %v1255 = vrot.slane %v1254, 4
  %v1256 = vadd.f32 %v1254, %v1255
  %v1257 = vrot.slane %v1256, 2
  %v1258 = vadd.f32 %v1256, %v1257
  %v1259 = vrot.slane %v1258, 1
  %v1260 = vadd.f32 %v1258, %v1259
  %vm1261 = vcmask 1040384
  %v1262 = vsel %vm1261, %v1127, %v1260
  %1263 = vst [vmem:[%s5] sm:$0x3] %v1262
  // Predicated region
  $region18: #{bottleneck_forward.6} parent=0 // pred_check
    _
  $region19: #{bottleneck_forward.6} parent=0 // pred_check_branch
    %1265 = sbr.rel (0) target = $region21
  $region20: #{bottleneck_forward.6} parent=0 // pred_region
    _
  $region21: #{bottleneck_forward.6} parent=0 // pred_fallthru
    _
  // Predicated region
  $region22: #{bottleneck_forward.6} parent=0 // pred_check
    _
  $region23: #{bottleneck_forward.6} parent=0 // pred_check_branch
    %1267 = sbr.rel (0) target = $region25
  $region24: #{bottleneck_forward.6} parent=0 // pred_region
    _
  $region25: #{bottleneck_forward.6} parent=0 // pred_fallthru
    _
  // Predicated region
  $region26: #{bottleneck_forward.6} parent=0 // pred_check
    _
  $region27: #{bottleneck_forward.6} parent=0 // pred_check_branch
    %1269 = sbr.rel (0) target = $region29
  $region28: #{bottleneck_forward.6} parent=0 // pred_region
    _
  $region29: #{bottleneck_forward.6} parent=0 // pred_fallthru
    _
  // Predicated region
  $region30: #{bottleneck_forward.6} parent=0 // pred_check
    _
  $region31: #{bottleneck_forward.6} parent=0 // pred_check_branch
    %1271 = sbr.rel (0) target = $region33
  $region32: #{bottleneck_forward.6} parent=0 // pred_region
    _
  $region33: #{bottleneck_forward.6} parent=0 // pred_fallthru
    _

// kernel: bottleneck_forward.5
$region0: #{bottleneck_forward.5}
  #allocation0 [shape = 'u32[]', space=smem, size = 0x4, offset = 0x4, fixed_abs, tag = 'smem constant byte address 0x4 - core index']
  #allocation1 [shape = 'u32[144,128]{1,0:T(1,128)}', space=vmem, size = 0x12000, scoped, tag = 'internal scratch']
  #allocation2 [shape = 'f32[18,18,128]{2,1,0:T(8,128)}', space=vmem, size = 0x36000, scoped, tag = 'scratch operand']
  %s0 = inlined_call_operand.vmem [shape: bf16[2,16,16,128], index: 0, kind: input, shape index: {}]
  %s1 = inlined_call_operand.vmem [shape: f32[1,1,128], index: 1, kind: input, shape index: {}]
  %s2 = inlined_call_operand.vmem [shape: f32[1,1,128], index: 2, kind: input, shape index: {}]
  %s3 = inlined_call_operand.vmem [shape: bf16[1152,128], index: 3, kind: input, shape index: {}]
  %s4 = inlined_call_operand.vmem [shape: bf16[2,256,128], index: 4, kind: output, shape index: {0}]
  %s5 = inlined_call_operand.vmem [shape: f32[2,2,128], index: 5, kind: output, shape index: {1}]
  %6 = xla_tuple %s4, %s5
  %s7 = sld [smem:[#allocation0]]
  $region61: #{bottleneck_forward.5} parent=0
    _
  %s9 = ssub.s32 1, %s7
  %s10 = scalar_select 0, %s9, %s7
  loop: start=0, step=1, limit=4
  $region2: #{bottleneck_forward.5} parent=0 // loop_pre_header
    _
  $region3: #{bottleneck_forward.5} parent=0 // loop_header
    %s12 = sphi 0, %s16
    %p13 = scmp.ge.s32.totalorder %s12, 4
    %s22 = sphi 0, %s24
    %s25 = sphi 0, %s22
    %s26 = sphi 0, %s25
    %s42 = sphi 0, %s26
    %s46 = sphi 0, %s46
    %s48 = sphi 0, %s46
    %s49 = sphi 0, %s48
    %s63 = sphi 0, %s49
    %s67 = sphi 0, %s67
    %s69 = sphi 0, %s67
    %s70 = sphi 0, %s69
    %s84 = sphi 0, %s70
    %s88 = sphi 0, %s88
    %s90 = sphi 0, %s88
    %s91 = sphi 0, %s90
    %s105 = sphi 0, %s91
    %s111 = sphi 0, %s113
    %s114 = sphi 0, %s111
    %s115 = sphi 0, %s114
    %s131 = sphi 0, %s115
    %s137 = sphi 0, %s139
    %s140 = sphi 0, %s137
    %s141 = sphi 0, %s140
    %s157 = sphi 0, %s141
  $region4: #{bottleneck_forward.5} parent=0 // loop_header_branch
    %15 = sbr.rel (%p13) target = $region8
  $region5: #{bottleneck_forward.5} parent=0 // loop_body
    %s17 = ssub.s32 %s12, 1
    %s18 = ssub.s32 %s12, 2
    %s19 = sadd.s32 %s12, 1
    %s20 = ssub.s32 %s12, %s19
    %p21 = scmp.eq.s32.totalorder %s20, 0
    %s23 = sadd.s32 %s22, 1
    %s24 = scalar_select %p21, %s22, %s23
    %p27 = pneg %p21
    %p28 = scmp.eq.s32.totalorder %s12, 1
    %p29 = por %p27, %p28
    %p30 = scmp.ne.s32.totalorder %s22, %s25
    %p31 = scmp.eq.s32.totalorder %s12, 0
    %p32 = por %p30, %p31
    %p33 = scmp.ne.s32.totalorder %s22, %s25
    %p34 = scmp.eq.s32.totalorder %s17, 1
    %p35 = por %p33, %p34
    %p36 = scmp.ne.s32.totalorder %s25, %s26
    %p37 = scmp.eq.s32.totalorder %s17, 0
    %p38 = por %p36, %p37
    %p39 = scmp.ne.s32.totalorder %s25, %s26
    %p40 = scmp.eq.s32.totalorder %s18, 1
    %p41 = por %p39, %p40
    %p43 = scmp.ne.s32.totalorder %s26, %s42
    %p44 = scmp.eq.s32.totalorder %s18, 0
    %p45 = por %p43, %p44
    %s47 = sadd.s32 %s46, 1
    %p50 = scmp.eq.s32.totalorder %s12, 1
    %p51 = scmp.ne.s32.totalorder %s46, %s48
    %p52 = scmp.eq.s32.totalorder %s12, 0
    %p53 = por %p51, %p52
    %p54 = scmp.ne.s32.totalorder %s46, %s48
    %p55 = scmp.eq.s32.totalorder %s17, 1
    %p56 = por %p54, %p55
    %p57 = scmp.ne.s32.totalorder %s48, %s49
    %p58 = scmp.eq.s32.totalorder %s17, 0
    %p59 = por %p57, %p58
    %p60 = scmp.ne.s32.totalorder %s48, %s49
    %p61 = scmp.eq.s32.totalorder %s18, 1
    %p62 = por %p60, %p61
    %p64 = scmp.ne.s32.totalorder %s49, %s63
    %p65 = scmp.eq.s32.totalorder %s18, 0
    %p66 = por %p64, %p65
    %s68 = sadd.s32 %s67, 1
    %p71 = scmp.eq.s32.totalorder %s12, 1
    %p72 = scmp.ne.s32.totalorder %s67, %s69
    %p73 = scmp.eq.s32.totalorder %s12, 0
    %p74 = por %p72, %p73
    %p75 = scmp.ne.s32.totalorder %s67, %s69
    %p76 = scmp.eq.s32.totalorder %s17, 1
    %p77 = por %p75, %p76
    %p78 = scmp.ne.s32.totalorder %s69, %s70
    %p79 = scmp.eq.s32.totalorder %s17, 0
    %p80 = por %p78, %p79
    %p81 = scmp.ne.s32.totalorder %s69, %s70
    %p82 = scmp.eq.s32.totalorder %s18, 1
    %p83 = por %p81, %p82
    %p85 = scmp.ne.s32.totalorder %s70, %s84
    %p86 = scmp.eq.s32.totalorder %s18, 0
    %p87 = por %p85, %p86
    %s89 = sadd.s32 %s88, 1
    %p92 = scmp.eq.s32.totalorder %s12, 1
    %p93 = scmp.ne.s32.totalorder %s88, %s90
    %p94 = scmp.eq.s32.totalorder %s12, 0
    %p95 = por %p93, %p94
    %p96 = scmp.ne.s32.totalorder %s88, %s90
    %p97 = scmp.eq.s32.totalorder %s17, 1
    %p98 = por %p96, %p97
    %p99 = scmp.ne.s32.totalorder %s90, %s91
    %p100 = scmp.eq.s32.totalorder %s17, 0
    %p101 = por %p99, %p100
    %p102 = scmp.ne.s32.totalorder %s90, %s91
    %p103 = scmp.eq.s32.totalorder %s18, 1
    %p104 = por %p102, %p103
    %p106 = scmp.ne.s32.totalorder %s91, %s105
    %p107 = scmp.eq.s32.totalorder %s18, 0
    %p108 = por %p106, %p107
    %s109 = ssub.s32 %s12, %s19
    %p110 = scmp.eq.s32.totalorder %s109, 0
    %s112 = sadd.s32 %s111, 1
    %s113 = scalar_select %p110, %s111, %s112
    %p116 = pneg %p110
    %p117 = scmp.eq.s32.totalorder %s12, 1
    %p118 = por %p116, %p117
    %p119 = scmp.ne.s32.totalorder %s111, %s114
    %p120 = scmp.eq.s32.totalorder %s12, 0
    %p121 = por %p119, %p120
    %p122 = scmp.ne.s32.totalorder %s111, %s114
    %p123 = scmp.eq.s32.totalorder %s17, 1
    %p124 = por %p122, %p123
    %p125 = scmp.ne.s32.totalorder %s114, %s115
    %p126 = scmp.eq.s32.totalorder %s17, 0
    %p127 = por %p125, %p126
    %p128 = scmp.ne.s32.totalorder %s114, %s115
    %p129 = scmp.eq.s32.totalorder %s18, 1
    %p130 = por %p128, %p129
    %p132 = scmp.ne.s32.totalorder %s115, %s131
    %p133 = scmp.eq.s32.totalorder %s18, 0
    %p134 = por %p132, %p133
    %s135 = ssub.s32 %s12, %s19
    %p136 = scmp.eq.s32.totalorder %s135, 0
    %s138 = sadd.s32 %s137, 1
    %s139 = scalar_select %p136, %s137, %s138
    %p142 = pneg %p136
    %p143 = scmp.eq.s32.totalorder %s12, 1
    %p144 = por %p142, %p143
    %p145 = scmp.ne.s32.totalorder %s137, %s140
    %p146 = scmp.eq.s32.totalorder %s12, 0
    %p147 = por %p145, %p146
    %p148 = scmp.ne.s32.totalorder %s137, %s140
    %p149 = scmp.eq.s32.totalorder %s17, 1
    %p150 = por %p148, %p149
    %p151 = scmp.ne.s32.totalorder %s140, %s141
    %p152 = scmp.eq.s32.totalorder %s17, 0
    %p153 = por %p151, %p152
    %p154 = scmp.ne.s32.totalorder %s140, %s141
    %p155 = scmp.eq.s32.totalorder %s18, 1
    %p156 = por %p154, %p155
    %p158 = scmp.ne.s32.totalorder %s141, %s157
    %p159 = scmp.eq.s32.totalorder %s18, 0
    %p160 = por %p158, %p159
    %p161 = scmp.le.s32.totalorder 1, %s12
    %p162 = scmp.lt.s32.totalorder %s12, 3
    %p163 = pnand %p161, %p162
    %p164 = pneg %p163
    // Predicated region
    $region9: #{bottleneck_forward.5} parent=5 // pred_check
      _
    $region10: #{bottleneck_forward.5} parent=5 // pred_check_branch
      %166 = sbr.rel (%p163) target = $region12
    $region11: #{bottleneck_forward.5} parent=5 // pred_region
      %s167 = ssub.s32 %s12, 1
      // Predicated region
      $region13: #{bottleneck_forward.5} parent=11 // pred_check
        %p168 = pneg %p59
      $region14: #{bottleneck_forward.5} parent=11 // pred_check_branch
        %170 = sbr.rel (%p168) target = $region16
      $region15: #{bottleneck_forward.5} parent=11 // pred_region
        _
      $region16: #{bottleneck_forward.5} parent=11 // pred_fallthru
        _
      // Predicated region
      $region17: #{bottleneck_forward.5} parent=11 // pred_check
        %p171 = pneg %p80
      $region18: #{bottleneck_forward.5} parent=11 // pred_check_branch
        %173 = sbr.rel (%p171) target = $region20
      $region19: #{bottleneck_forward.5} parent=11 // pred_region
        _
      $region20: #{bottleneck_forward.5} parent=11 // pred_fallthru
        _
      // Predicated region
      $region21: #{bottleneck_forward.5} parent=11 // pred_check
        %p174 = pneg %p101
      $region22: #{bottleneck_forward.5} parent=11 // pred_check_branch
        %176 = sbr.rel (%p174) target = $region24
      $region23: #{bottleneck_forward.5} parent=11 // pred_region
        _
      $region24: #{bottleneck_forward.5} parent=11 // pred_fallthru
        _
    $region12: #{bottleneck_forward.5} parent=5 // pred_fallthru
      _
    %p177 = scmp.lt.s32.totalorder %s12, 2
    // Predicated region
    $region25: #{bottleneck_forward.5} parent=5 // pred_check
      %p178 = pneg %p177
    $region26: #{bottleneck_forward.5} parent=5 // pred_check_branch
      %180 = sbr.rel (%p178) target = $region28
    $region27: #{bottleneck_forward.5} parent=5 // pred_region
      // Predicated region
      $region29: #{bottleneck_forward.5} parent=27 // pred_check
        %p181 = pneg %p32
      $region30: #{bottleneck_forward.5} parent=27 // pred_check_branch
        %183 = sbr.rel (%p181) target = $region32
      $region31: #{bottleneck_forward.5} parent=27 // pred_region
        %p184 = scmp.lt.s32.totalorder %s12, 1
        %s185 = scalar_select %p184, %s12, 1
        %s186 = smul.addr %s185, 32
        %s187 = smul.addr %s186, 4
        %s188 = scalar_lea.vmem %s0, %s187
      $region32: #{bottleneck_forward.5} parent=27 // pred_fallthru
        _
    $region28: #{bottleneck_forward.5} parent=5 // pred_fallthru
      _
    %p189 = scmp.le.s32.totalorder 1, %s12
    %p190 = scmp.lt.s32.totalorder %s12, 3
    %p191 = pnand %p189, %p190
    %p192 = pneg %p191
    // Predicated region
    $region33: #{bottleneck_forward.5} parent=5 // pred_check
      _
    $region34: #{bottleneck_forward.5} parent=5 // pred_check_branch
      %194 = sbr.rel (%p191) target = $region36
    $region35: #{bottleneck_forward.5} parent=5 // pred_region
      %s195 = ssub.s32 %s12, 1
      %p196 = scmp.lt.s32.totalorder %s17, 1
      %s197 = scalar_select %p196, %s17, 1
      %s198 = smul.addr %s197, 32
      %s199 = smul.addr %s198, 4
      %s200 = scalar_lea.vmem %s0, %s199
      %p201 = pneg %p38
      %p202 = pneg %p35
      %p203 = pneg %p59
      %p204 = pneg %p56
      %p205 = pneg %p80
      %p206 = pneg %p77
      %p207 = pneg %p101
      %p208 = pneg %p98
      %p209 = pneg %p127
      %p210 = pneg %p124
      %p211 = scmp.lt.s32.totalorder %s17, 1
      %s212 = scalar_select %p211, %s17, 1
      %s213 = smul.addr %s212, 32
      %s214 = smul.addr %s213, 4
      %s215 = scalar_lea.vmem %s4, %s214
      %p216 = pneg %p153
      %p217 = pneg %p150
      %p218 = scmp.lt.s32.totalorder %s17, 1
      %s219 = scalar_select %p218, %s17, 1
      %s220 = smul.addr %s219, 2
      %s221 = scalar_lea.vmem %s5, %s220
      %p222 = scmp.lt.s32.totalorder %s17, 1
      %s223 = scalar_select %p222, %s17, 1
      %s224 = smul.addr %s223, 32
      %s225 = smul.addr %s224, 4
      %s226 = scalar_lea.vmem %s0, %s225
      %p227 = scmp.lt.s32.totalorder %s17, 1
      %s228 = scalar_select %p227, %s17, 1
      %s229 = smul.addr %s228, 32
      %s230 = smul.addr %s229, 4
      %s231 = scalar_lea.vmem %s4, %s230
      %p232 = scmp.lt.s32.totalorder %s17, 1
      %s233 = scalar_select %p232, %s17, 1
      %s234 = smul.addr %s233, 2
      %s235 = scalar_lea.vmem %s5, %s234
      %p237 = scmp.eq.s32.totalorder %s17, 0
      // Predicated region
      $region37: #{bottleneck_forward.5} parent=35 // pred_check
        %p238 = pneg %p237
      $region38: #{bottleneck_forward.5} parent=35 // pred_check_branch
        %240 = sbr.rel (%p238) target = $region40
      $region39: #{bottleneck_forward.5} parent=35 // pred_region
        %241 = vst [vmem:[#allocation2] sm:$0xff] 0.0
        %242 = vst [vmem:[#allocation2 + $0x8] sm:$0xff] 0.0
        %243 = vst [vmem:[#allocation2 + $0x10] sm:$0x3] 0.0
        %244 = vst [vmem:[#allocation2 + $0x18] sm:$0xff] 0.0
        %245 = vst [vmem:[#allocation2 + $0x20] sm:$0xff] 0.0
        %246 = vst [vmem:[#allocation2 + $0x28] sm:$0x3] 0.0
        %247 = vst [vmem:[#allocation2 + $0x30] sm:$0xff] 0.0
        %248 = vst [vmem:[#allocation2 + $0x38] sm:$0xff] 0.0
        %249 = vst [vmem:[#allocation2 + $0x40] sm:$0x3] 0.0
        %250 = vst [vmem:[#allocation2 + $0x48] sm:$0xff] 0.0
        %251 = vst [vmem:[#allocation2 + $0x50] sm:$0xff] 0.0
        %252 = vst [vmem:[#allocation2 + $0x58] sm:$0x3] 0.0
        %253 = vst [vmem:[#allocation2 + $0x60] sm:$0xff] 0.0
        %254 = vst [vmem:[#allocation2 + $0x68] sm:$0xff] 0.0
        %255 = vst [vmem:[#allocation2 + $0x70] sm:$0x3] 0.0
        %256 = vst [vmem:[#allocation2 + $0x78] sm:$0xff] 0.0
        %257 = vst [vmem:[#allocation2 + $0x80] sm:$0xff] 0.0
        %258 = vst [vmem:[#allocation2 + $0x88] sm:$0x3] 0.0
        %259 = vst [vmem:[#allocation2 + $0x90] sm:$0xff] 0.0
        %260 = vst [vmem:[#allocation2 + $0x98] sm:$0xff] 0.0
        %261 = vst [vmem:[#allocation2 + $0xa0] sm:$0x3] 0.0
        %262 = vst [vmem:[#allocation2 + $0xa8] sm:$0xff] 0.0
        %263 = vst [vmem:[#allocation2 + $0xb0] sm:$0xff] 0.0
        %264 = vst [vmem:[#allocation2 + $0xb8] sm:$0x3] 0.0
        %265 = vst [vmem:[#allocation2 + $0xc0] sm:$0xff] 0.0
        %266 = vst [vmem:[#allocation2 + $0xc8] sm:$0xff] 0.0
        %267 = vst [vmem:[#allocation2 + $0xd0] sm:$0x3] 0.0
        %268 = vst [vmem:[#allocation2 + $0xd8] sm:$0xff] 0.0
        %269 = vst [vmem:[#allocation2 + $0xe0] sm:$0xff] 0.0
        %270 = vst [vmem:[#allocation2 + $0xe8] sm:$0x3] 0.0
        %271 = vst [vmem:[#allocation2 + $0xf0] sm:$0xff] 0.0
        %272 = vst [vmem:[#allocation2 + $0xf8] sm:$0xff] 0.0
        %273 = vst [vmem:[#allocation2 + $0x100] sm:$0x3] 0.0
        %274 = vst [vmem:[#allocation2 + $0x108] sm:$0xff] 0.0
        %275 = vst [vmem:[#allocation2 + $0x110] sm:$0xff] 0.0
        %276 = vst [vmem:[#allocation2 + $0x118] sm:$0x3] 0.0
        %277 = vst [vmem:[#allocation2 + $0x120] sm:$0xff] 0.0
        %278 = vst [vmem:[#allocation2 + $0x128] sm:$0xff] 0.0
        %279 = vst [vmem:[#allocation2 + $0x130] sm:$0x3] 0.0
        %280 = vst [vmem:[#allocation2 + $0x138] sm:$0xff] 0.0
        %281 = vst [vmem:[#allocation2 + $0x140] sm:$0xff] 0.0
        %282 = vst [vmem:[#allocation2 + $0x148] sm:$0x3] 0.0
        %283 = vst [vmem:[#allocation2 + $0x150] sm:$0xff] 0.0
        %284 = vst [vmem:[#allocation2 + $0x158] sm:$0xff] 0.0
        %285 = vst [vmem:[#allocation2 + $0x160] sm:$0x3] 0.0
        %286 = vst [vmem:[#allocation2 + $0x168] sm:$0xff] 0.0
        %287 = vst [vmem:[#allocation2 + $0x170] sm:$0xff] 0.0
        %288 = vst [vmem:[#allocation2 + $0x178] sm:$0x3] 0.0
        %289 = vst [vmem:[#allocation2 + $0x180] sm:$0xff] 0.0
        %290 = vst [vmem:[#allocation2 + $0x188] sm:$0xff] 0.0
        %291 = vst [vmem:[#allocation2 + $0x190] sm:$0x3] 0.0
        %292 = vst [vmem:[#allocation2 + $0x198] sm:$0xff] 0.0
        %293 = vst [vmem:[#allocation2 + $0x1a0] sm:$0xff] 0.0
        %294 = vst [vmem:[#allocation2 + $0x1a8] sm:$0x3] 0.0
      $region40: #{bottleneck_forward.5} parent=35 // pred_fallthru
        _
      %v295 = vld [vmem:[%s226] sm:$0xf]
      %v296 = vld [vmem:[%s226 + $0x4] sm:$0xf]
      %v297 = vld [vmem:[%s226 + $0x8] sm:$0xf]
      %v298 = vld [vmem:[%s226 + $0xc] sm:$0xf]
      %v299 = vld [vmem:[%s226 + $0x10] sm:$0xf]
      %v300 = vld [vmem:[%s226 + $0x14] sm:$0xf]
      %v301 = vld [vmem:[%s226 + $0x18] sm:$0xf]
      %v302 = vld [vmem:[%s226 + $0x1c] sm:$0xf]
      %v303 = vld [vmem:[%s226 + $0x20] sm:$0xf]
      %v304 = vld [vmem:[%s226 + $0x24] sm:$0xf]
      %v305 = vld [vmem:[%s226 + $0x28] sm:$0xf]
      %v306 = vld [vmem:[%s226 + $0x2c] sm:$0xf]
      %v307 = vld [vmem:[%s226 + $0x30] sm:$0xf]
      %v308 = vld [vmem:[%s226 + $0x34] sm:$0xf]
      %v309 = vld [vmem:[%s226 + $0x38] sm:$0xf]
      %v310 = vld [vmem:[%s226 + $0x3c] sm:$0xf]
      %v311 = vld [vmem:[%s226 + $0x40] sm:$0xf]
      %v312 = vld [vmem:[%s226 + $0x44] sm:$0xf]
      %v313 = vld [vmem:[%s226 + $0x48] sm:$0xf]
      %v314 = vld [vmem:[%s226 + $0x4c] sm:$0xf]
      %v315 = vld [vmem:[%s226 + $0x50] sm:$0xf]
      %v316 = vld [vmem:[%s226 + $0x54] sm:$0xf]
      %v317 = vld [vmem:[%s226 + $0x58] sm:$0xf]
      %v318 = vld [vmem:[%s226 + $0x5c] sm:$0xf]
      %v319 = vld [vmem:[%s226 + $0x60] sm:$0xf]
      %v320 = vld [vmem:[%s226 + $0x64] sm:$0xf]
      %v321 = vld [vmem:[%s226 + $0x68] sm:$0xf]
      %v322 = vld [vmem:[%s226 + $0x6c] sm:$0xf]
      %v323 = vld [vmem:[%s226 + $0x70] sm:$0xf]
      %v324 = vld [vmem:[%s226 + $0x74] sm:$0xf]
      %v325 = vld [vmem:[%s226 + $0x78] sm:$0xf]
      %v326 = vld [vmem:[%s226 + $0x7c] sm:$0xf]
      %v327 = vunpack.c.l.bf16 %v295
      %v328 = vunpack.c.l.bf16 %v296
      %v329 = vunpack.c.l.bf16 %v297
      %v330 = vunpack.c.l.bf16 %v298
      %v331 = vunpack.c.l.bf16 %v299
      %v332 = vunpack.c.l.bf16 %v300
      %v333 = vunpack.c.l.bf16 %v301
      %v334 = vunpack.c.l.bf16 %v302
      %v335 = vunpack.c.l.bf16 %v303
      %v336 = vunpack.c.l.bf16 %v304
      %v337 = vunpack.c.l.bf16 %v305
      %v338 = vunpack.c.l.bf16 %v306
      %v339 = vunpack.c.l.bf16 %v307
      %v340 = vunpack.c.l.bf16 %v308
      %v341 = vunpack.c.l.bf16 %v309
      %v342 = vunpack.c.l.bf16 %v310
      %v343 = vunpack.c.l.bf16 %v311
      %v344 = vunpack.c.l.bf16 %v312
      %v345 = vunpack.c.l.bf16 %v313
      %v346 = vunpack.c.l.bf16 %v314
      %v347 = vunpack.c.l.bf16 %v315
      %v348 = vunpack.c.l.bf16 %v316
      %v349 = vunpack.c.l.bf16 %v317
      %v350 = vunpack.c.l.bf16 %v318
      %v351 = vunpack.c.l.bf16 %v319
      %v352 = vunpack.c.l.bf16 %v320
      %v353 = vunpack.c.l.bf16 %v321
      %v354 = vunpack.c.l.bf16 %v322
      %v355 = vunpack.c.l.bf16 %v323
      %v356 = vunpack.c.l.bf16 %v324
      %v357 = vunpack.c.l.bf16 %v325
      %v358 = vunpack.c.l.bf16 %v326
      %v359 = vld [vmem:[%s1] sm:$0x1]
      %v361 = vlaneseq
      %v362 = vshrl.u32 %v361, 7
      %v363 = vsub.s32 0, %v362
      %v364 = vrot.slane %v359, %v363
      %v366 = vmul.f32 %v327, %v364
      %v367 = vmul.f32 %v328, %v364
      %v368 = vmul.f32 %v329, %v364
      %v369 = vmul.f32 %v330, %v364
      %v370 = vmul.f32 %v331, %v364
      %v371 = vmul.f32 %v332, %v364
      %v372 = vmul.f32 %v333, %v364
      %v373 = vmul.f32 %v334, %v364
      %v374 = vmul.f32 %v335, %v364
      %v375 = vmul.f32 %v336, %v364
      %v376 = vmul.f32 %v337, %v364
      %v377 = vmul.f32 %v338, %v364
      %v378 = vmul.f32 %v339, %v364
      %v379 = vmul.f32 %v340, %v364
      %v380 = vmul.f32 %v341, %v364
      %v381 = vmul.f32 %v342, %v364
      %v382 = vmul.f32 %v343, %v364
      %v383 = vmul.f32 %v344, %v364
      %v384 = vmul.f32 %v345, %v364
      %v385 = vmul.f32 %v346, %v364
      %v386 = vmul.f32 %v347, %v364
      %v387 = vmul.f32 %v348, %v364
      %v388 = vmul.f32 %v349, %v364
      %v389 = vmul.f32 %v350, %v364
      %v390 = vmul.f32 %v351, %v364
      %v391 = vmul.f32 %v352, %v364
      %v392 = vmul.f32 %v353, %v364
      %v393 = vmul.f32 %v354, %v364
      %v394 = vmul.f32 %v355, %v364
      %v395 = vmul.f32 %v356, %v364
      %v396 = vmul.f32 %v357, %v364
      %v397 = vmul.f32 %v358, %v364
      %v398 = vld [vmem:[%s2] sm:$0x1]
      %v400 = vlaneseq
      %v401 = vshrl.u32 %v400, 7
      %v402 = vsub.s32 0, %v401
      %v403 = vrot.slane %v398, %v402
      %v405 = vadd.f32 %v366, %v403
      %v406 = vadd.f32 %v367, %v403
      %v407 = vadd.f32 %v368, %v403
      %v408 = vadd.f32 %v369, %v403
      %v409 = vadd.f32 %v370, %v403
      %v410 = vadd.f32 %v371, %v403
      %v411 = vadd.f32 %v372, %v403
      %v412 = vadd.f32 %v373, %v403
      %v413 = vadd.f32 %v374, %v403
      %v414 = vadd.f32 %v375, %v403
      %v415 = vadd.f32 %v376, %v403
      %v416 = vadd.f32 %v377, %v403
      %v417 = vadd.f32 %v378, %v403
      %v418 = vadd.f32 %v379, %v403
      %v419 = vadd.f32 %v380, %v403
      %v420 = vadd.f32 %v381, %v403
      %v421 = vadd.f32 %v382, %v403
      %v422 = vadd.f32 %v383, %v403
      %v423 = vadd.f32 %v384, %v403
      %v424 = vadd.f32 %v385, %v403
      %v425 = vadd.f32 %v386, %v403
      %v426 = vadd.f32 %v387, %v403
      %v427 = vadd.f32 %v388, %v403
      %v428 = vadd.f32 %v389, %v403
      %v429 = vadd.f32 %v390, %v403
      %v430 = vadd.f32 %v391, %v403
      %v431 = vadd.f32 %v392, %v403
      %v432 = vadd.f32 %v393, %v403
      %v433 = vadd.f32 %v394, %v403
      %v434 = vadd.f32 %v395, %v403
      %v435 = vadd.f32 %v396, %v403
      %v436 = vadd.f32 %v397, %v403
      %v437 = vmax.f32 %v405, 0.0
      %v438 = vmax.f32 %v406, 0.0
      %v439 = vmax.f32 %v407, 0.0
      %v440 = vmax.f32 %v408, 0.0
      %v441 = vmax.f32 %v409, 0.0
      %v442 = vmax.f32 %v410, 0.0
      %v443 = vmax.f32 %v411, 0.0
      %v444 = vmax.f32 %v412, 0.0
      %v445 = vmax.f32 %v413, 0.0
      %v446 = vmax.f32 %v414, 0.0
      %v447 = vmax.f32 %v415, 0.0
      %v448 = vmax.f32 %v416, 0.0
      %v449 = vmax.f32 %v417, 0.0
      %v450 = vmax.f32 %v418, 0.0
      %v451 = vmax.f32 %v419, 0.0
      %v452 = vmax.f32 %v420, 0.0
      %v453 = vmax.f32 %v421, 0.0
      %v454 = vmax.f32 %v422, 0.0
      %v455 = vmax.f32 %v423, 0.0
      %v456 = vmax.f32 %v424, 0.0
      %v457 = vmax.f32 %v425, 0.0
      %v458 = vmax.f32 %v426, 0.0
      %v459 = vmax.f32 %v427, 0.0
      %v460 = vmax.f32 %v428, 0.0
      %v461 = vmax.f32 %v429, 0.0
      %v462 = vmax.f32 %v430, 0.0
      %v463 = vmax.f32 %v431, 0.0
      %v464 = vmax.f32 %v432, 0.0
      %v465 = vmax.f32 %v433, 0.0
      %v466 = vmax.f32 %v434, 0.0
      %v467 = vmax.f32 %v435, 0.0
      %v468 = vmax.f32 %v436, 0.0
      %s469 = scalar_lea.vmem [#allocation2], 24
      %470 = vst [vmem:[%s469 + $0x1] sm:$0xff] %v437
      %471 = vst [vmem:[%s469 + $0x9] sm:$0xff] %v438
      %472 = vst [vmem:[%s469 + $0x19] sm:$0xff] %v439
      %473 = vst [vmem:[%s469 + $0x21] sm:$0xff] %v440
      %474 = vst [vmem:[%s469 + $0x31] sm:$0xff] %v441
      %475 = vst [vmem:[%s469 + $0x39] sm:$0xff] %v442
      %476 = vst [vmem:[%s469 + $0x49] sm:$0xff] %v443
      %477 = vst [vmem:[%s469 + $0x51] sm:$0xff] %v444
      %478 = vst [vmem:[%s469 + $0x61] sm:$0xff] %v445
      %479 = vst [vmem:[%s469 + $0x69] sm:$0xff] %v446
      %480 = vst [vmem:[%s469 + $0x79] sm:$0xff] %v447
      %481 = vst [vmem:[%s469 + $0x81] sm:$0xff] %v448
      %482 = vst [vmem:[%s469 + $0x91] sm:$0xff] %v449
      %483 = vst [vmem:[%s469 + $0x99] sm:$0xff] %v450
      %484 = vst [vmem:[%s469 + $0xa9] sm:$0xff] %v451
      %485 = vst [vmem:[%s469 + $0xb1] sm:$0xff] %v452
      %486 = vst [vmem:[%s469 + $0xc1] sm:$0xff] %v453
      %487 = vst [vmem:[%s469 + $0xc9] sm:$0xff] %v454
      %488 = vst [vmem:[%s469 + $0xd9] sm:$0xff] %v455
      %489 = vst [vmem:[%s469 + $0xe1] sm:$0xff] %v456
      %490 = vst [vmem:[%s469 + $0xf1] sm:$0xff] %v457
      %491 = vst [vmem:[%s469 + $0xf9] sm:$0xff] %v458
      %492 = vst [vmem:[%s469 + $0x109] sm:$0xff] %v459
      %493 = vst [vmem:[%s469 + $0x111] sm:$0xff] %v460
      %494 = vst [vmem:[%s469 + $0x121] sm:$0xff] %v461
      %495 = vst [vmem:[%s469 + $0x129] sm:$0xff] %v462
      %496 = vst [vmem:[%s469 + $0x139] sm:$0xff] %v463
      %497 = vst [vmem:[%s469 + $0x141] sm:$0xff] %v464
      %498 = vst [vmem:[%s469 + $0x151] sm:$0xff] %v465
      %499 = vst [vmem:[%s469 + $0x159] sm:$0xff] %v466
      %500 = vst [vmem:[%s469 + $0x169] sm:$0xff] %v467
      %501 = vst [vmem:[%s469 + $0x171] sm:$0xff] %v468
      %v502 = vld [vmem:[#allocation2] sm:$0xff]
      %v503 = vld [vmem:[#allocation2 + $0x8] sm:$0xff]
      %v504 = vld [vmem:[#allocation2 + $0x18] sm:$0xff]
      %v505 = vld [vmem:[#allocation2 + $0x20] sm:$0xff]
      %v506 = vld [vmem:[#allocation2 + $0x30] sm:$0xff]
      %v507 = vld [vmem:[#allocation2 + $0x38] sm:$0xff]
      %v508 = vld [vmem:[#allocation2 + $0x48] sm:$0xff]
      %v509 = vld [vmem:[#allocation2 + $0x50] sm:$0xff]
      %v510 = vld [vmem:[#allocation2 + $0x60] sm:$0xff]
      %v511 = vld [vmem:[#allocation2 + $0x68] sm:$0xff]
      %v512 = vld [vmem:[#allocation2 + $0x78] sm:$0xff]
      %v513 = vld [vmem:[#allocation2 + $0x80] sm:$0xff]
      %v514 = vld [vmem:[#allocation2 + $0x90] sm:$0xff]
      %v515 = vld [vmem:[#allocation2 + $0x98] sm:$0xff]
      %v516 = vld [vmem:[#allocation2 + $0xa8] sm:$0xff]
      %v517 = vld [vmem:[#allocation2 + $0xb0] sm:$0xff]
      %v518 = vld [vmem:[#allocation2 + $0xc0] sm:$0xff]
      %v519 = vld [vmem:[#allocation2 + $0xc8] sm:$0xff]
      %v520 = vld [vmem:[#allocation2 + $0xd8] sm:$0xff]
      %v521 = vld [vmem:[#allocation2 + $0xe0] sm:$0xff]
      %v522 = vld [vmem:[#allocation2 + $0xf0] sm:$0xff]
      %v523 = vld [vmem:[#allocation2 + $0xf8] sm:$0xff]
      %v524 = vld [vmem:[#allocation2 + $0x108] sm:$0xff]
      %v525 = vld [vmem:[#allocation2 + $0x110] sm:$0xff]
      %v526 = vld [vmem:[#allocation2 + $0x120] sm:$0xff]
      %v527 = vld [vmem:[#allocation2 + $0x128] sm:$0xff]
      %v528 = vld [vmem:[#allocation2 + $0x138] sm:$0xff]
      %v529 = vld [vmem:[#allocation2 + $0x140] sm:$0xff]
      %v530 = vld [vmem:[#allocation2 + $0x150] sm:$0xff]
      %v531 = vld [vmem:[#allocation2 + $0x158] sm:$0xff]
      %v532 = vld [vmem:[#allocation2 + $0x168] sm:$0xff]
      %v533 = vld [vmem:[#allocation2 + $0x170] sm:$0xff]
      %v534 = vpack.c.bf16 %v503, %v502
      %v535 = vpack.c.bf16 %v505, %v504
      %v536 = vpack.c.bf16 %v507, %v506
      %v537 = vpack.c.bf16 %v509, %v508
      %v538 = vpack.c.bf16 %v511, %v510
      %v539 = vpack.c.bf16 %v513, %v512
      %v540 = vpack.c.bf16 %v515, %v514
      %v541 = vpack.c.bf16 %v517, %v516
      %v542 = vpack.c.bf16 %v519, %v518
      %v543 = vpack.c.bf16 %v521, %v520
      %v544 = vpack.c.bf16 %v523, %v522
      %v545 = vpack.c.bf16 %v525, %v524
      %v546 = vpack.c.bf16 %v527, %v526
      %v547 = vpack.c.bf16 %v529, %v528
      %v548 = vpack.c.bf16 %v531, %v530
      %v549 = vpack.c.bf16 %v533, %v532
      %v550 = vld [vmem:[%s3] sm:$0xf]
      %v551 = vld [vmem:[%s3 + $0x4] sm:$0xf]
      %v552 = vld [vmem:[%s3 + $0x8] sm:$0xf]
      %v553 = vld [vmem:[%s3 + $0xc] sm:$0xf]
      %v554 = vld [vmem:[%s3 + $0x10] sm:$0xf]
      %v555 = vld [vmem:[%s3 + $0x14] sm:$0xf]
      %v556 = vld [vmem:[%s3 + $0x18] sm:$0xf]
      %v557 = vld [vmem:[%s3 + $0x1c] sm:$0xf]
      %v558 = vld [vmem:[%s3 + $0x20] sm:$0xf]
      %v559 = vld [vmem:[%s3 + $0x24] sm:$0xf]
      %v560 = vld [vmem:[%s3 + $0x28] sm:$0xf]
      %v561 = vld [vmem:[%s3 + $0x2c] sm:$0xf]
      %v562 = vld [vmem:[%s3 + $0x30] sm:$0xf]
      %v563 = vld [vmem:[%s3 + $0x34] sm:$0xf]
      %v564 = vld [vmem:[%s3 + $0x38] sm:$0xf]
      %v565 = vld [vmem:[%s3 + $0x3c] sm:$0xf]
      %v566 = vld [vmem:[#allocation2 + $0x1] sm:$0xff]
      %v567 = vld [vmem:[#allocation2 + $0x9] sm:$0xff]
      %v568 = vld [vmem:[#allocation2 + $0x19] sm:$0xff]
      %v569 = vld [vmem:[#allocation2 + $0x21] sm:$0xff]
      %v570 = vld [vmem:[#allocation2 + $0x31] sm:$0xff]
      %v571 = vld [vmem:[#allocation2 + $0x39] sm:$0xff]
      %v572 = vld [vmem:[#allocation2 + $0x49] sm:$0xff]
      %v573 = vld [vmem:[#allocation2 + $0x51] sm:$0xff]
      %v574 = vld [vmem:[#allocation2 + $0x61] sm:$0xff]
      %v575 = vld [vmem:[#allocation2 + $0x69] sm:$0xff]
      %v576 = vld [vmem:[#allocation2 + $0x79] sm:$0xff]
      %v577 = vld [vmem:[#allocation2 + $0x81] sm:$0xff]
      %v578 = vld [vmem:[#allocation2 + $0x91] sm:$0xff]
      %v579 = vld [vmem:[#allocation2 + $0x99] sm:$0xff]
      %v580 = vld [vmem:[#allocation2 + $0xa9] sm:$0xff]
      %v581 = vld [vmem:[#allocation2 + $0xb1] sm:$0xff]
      %v582 = vld [vmem:[#allocation2 + $0xc1] sm:$0xff]
      %v583 = vld [vmem:[#allocation2 + $0xc9] sm:$0xff]
      %v584 = vld [vmem:[#allocation2 + $0xd9] sm:$0xff]
      %v585 = vld [vmem:[#allocation2 + $0xe1] sm:$0xff]
      %v586 = vld [vmem:[#allocation2 + $0xf1] sm:$0xff]
      %v587 = vld [vmem:[#allocation2 + $0xf9] sm:$0xff]
      %v588 = vld [vmem:[#allocation2 + $0x109] sm:$0xff]
      %v589 = vld [vmem:[#allocation2 + $0x111] sm:$0xff]
      %v590 = vld [vmem:[#allocation2 + $0x121] sm:$0xff]
      %v591 = vld [vmem:[#allocation2 + $0x129] sm:$0xff]
      %v592 = vld [vmem:[#allocation2 + $0x139] sm:$0xff]
      %v593 = vld [vmem:[#allocation2 + $0x141] sm:$0xff]
      %v594 = vld [vmem:[#allocation2 + $0x151] sm:$0xff]
      %v595 = vld [vmem:[#allocation2 + $0x159] sm:$0xff]
      %v596 = vld [vmem:[#allocation2 + $0x169] sm:$0xff]
      %v597 = vld [vmem:[#allocation2 + $0x171] sm:$0xff]
      %v598 = vpack.c.bf16 %v567, %v566
      %v599 = vpack.c.bf16 %v569, %v568
      %v600 = vpack.c.bf16 %v571, %v570
      %v601 = vpack.c.bf16 %v573, %v572
      %v602 = vpack.c.bf16 %v575, %v574
      %v603 = vpack.c.bf16 %v577, %v576
      %v604 = vpack.c.bf16 %v579, %v578
      %v605 = vpack.c.bf16 %v581, %v580
      %v606 = vpack.c.bf16 %v583, %v582
      %v607 = vpack.c.bf16 %v585, %v584
      %v608 = vpack.c.bf16 %v587, %v586
      %v609 = vpack.c.bf16 %v589, %v588
      %v610 = vpack.c.bf16 %v591, %v590
      %v611 = vpack.c.bf16 %v593, %v592
      %v612 = vpack.c.bf16 %v595, %v594
      %v613 = vpack.c.bf16 %v597, %v596
      %v614 = vld [vmem:[%s3 + $0x40] sm:$0xf]
      %v615 = vld [vmem:[%s3 + $0x44] sm:$0xf]
      %v616 = vld [vmem:[%s3 + $0x48] sm:$0xf]
      %v617 = vld [vmem:[%s3 + $0x4c] sm:$0xf]
      %v618 = vld [vmem:[%s3 + $0x50] sm:$0xf]
      %v619 = vld [vmem:[%s3 + $0x54] sm:$0xf]
      %v620 = vld [vmem:[%s3 + $0x58] sm:$0xf]
      %v621 = vld [vmem:[%s3 + $0x5c] sm:$0xf]
      %v622 = vld [vmem:[%s3 + $0x60] sm:$0xf]
      %v623 = vld [vmem:[%s3 + $0x64] sm:$0xf]
      %v624 = vld [vmem:[%s3 + $0x68] sm:$0xf]
      %v625 = vld [vmem:[%s3 + $0x6c] sm:$0xf]
      %v626 = vld [vmem:[%s3 + $0x70] sm:$0xf]
      %v627 = vld [vmem:[%s3 + $0x74] sm:$0xf]
      %v628 = vld [vmem:[%s3 + $0x78] sm:$0xf]
      %v629 = vld [vmem:[%s3 + $0x7c] sm:$0xf]
      %v646 = vunpack.c.l.b16 %v614
      %v647 = vunpack.c.l.b16 %v615
      %v648 = vunpack.c.l.b16 %v616
      %v649 = vunpack.c.l.b16 %v617
      %v650 = vunpack.c.l.b16 %v618
      %v651 = vunpack.c.l.b16 %v619
      %v652 = vunpack.c.l.b16 %v620
      %v653 = vunpack.c.l.b16 %v621
      %v654 = vunpack.c.l.b16 %v622
      %v655 = vunpack.c.l.b16 %v623
      %v656 = vunpack.c.l.b16 %v624
      %v657 = vunpack.c.l.b16 %v625
      %v658 = vunpack.c.l.b16 %v626
      %v659 = vunpack.c.l.b16 %v627
      %v660 = vunpack.c.l.b16 %v628
      %v661 = vunpack.c.l.b16 %v629
      %v662 = vpack.c.b16 %v647, %v646
      %v663 = vpack.c.b16 %v649, %v648
      %v664 = vpack.c.b16 %v651, %v650
      %v665 = vpack.c.b16 %v653, %v652
      %v666 = vpack.c.b16 %v655, %v654
      %v667 = vpack.c.b16 %v657, %v656
      %v668 = vpack.c.b16 %v659, %v658
      %v669 = vpack.c.b16 %v661, %v660
      %678 = vmatprep.subr.bf16.mxu0 0
      %679 = vmatpush1.bf16.msra.mxu0 %v662
      %680 = vmatprep.subr.bf16.mxu0 0
      %681 = vmatpush1.bf16.msra.mxu0 %v663
      %682 = vmatprep.subr.bf16.mxu0 0
      %683 = vmatpush1.bf16.msra.mxu0 %v664
      %684 = vmatprep.subr.bf16.mxu0 0
      %685 = vmatpush1.bf16.msra.mxu0 %v665
      %686 = vmatprep.subr.bf16.mxu0 0
      %687 = vmatpush1.bf16.msra.mxu0 %v666
      %688 = vmatprep.subr.bf16.mxu0 0
      %689 = vmatpush1.bf16.msra.mxu0 %v667
      %690 = vmatprep.subr.bf16.mxu0 0
      %691 = vmatpush1.bf16.msra.mxu0 %v668
      %692 = vmatprep.subr.bf16.mxu0 0
      %693 = vmatpush1.bf16.msra.mxu0 %v669
      %694 = vmatprep.subr.bf16.mxu0 0
      %695 = vmatpush1.bf16.msra.mxu0 0
      %696 = vmatprep.subr.bf16.mxu0 0
      %697 = vmatpush1.bf16.msra.mxu0 0
      %698 = vmatprep.subr.bf16.mxu0 0
      %699 = vmatpush1.bf16.msra.mxu0 0
      %700 = vmatprep.subr.bf16.mxu0 0
      %701 = vmatpush1.bf16.msra.mxu0 0
      %702 = vmatprep.subr.bf16.mxu0 0
      %703 = vmatpush1.bf16.msra.mxu0 0
      %704 = vmatprep.subr.bf16.mxu0 0
      %705 = vmatpush1.bf16.msra.mxu0 0
      %706 = vmatprep.subr.bf16.mxu0 0
      %707 = vmatpush1.bf16.msra.mxu0 0
      %708 = vmatprep.subr.bf16.mxu0 0
      %709 = vmatpush1.bf16.msra.mxu0 0
      %710 = vmatprep.mubr.bf16.mxu0 0
      %711 = vmatmul.mubr.bf16.gmra.mrb[0].mxu0 %v598
      %v712 = vpop.f32.mrb[0].mxu0
      %v713 = vadd.f32 0.0, %v712
      %v714 = vpop.f32.mrb[0].mxu0
      %v715 = vpop.f32.mrb[0].mxu0
      %v716 = vadd.f32 0.0, %v715
      %v717 = vpop.f32.mrb[0].mxu0
      %718 = vmatprep.mubr.bf16.mxu0 0
      %719 = vmatmul.mubr.bf16.gmra.mrb[0].mxu0 %v599
      %v720 = vpop.f32.mrb[0].mxu0
      %v721 = vadd.f32 0.0, %v720
      %v722 = vpop.f32.mrb[0].mxu0
      %v723 = vpop.f32.mrb[0].mxu0
      %v724 = vadd.f32 0.0, %v723
      %v725 = vpop.f32.mrb[0].mxu0
      %726 = vmatprep.mubr.bf16.mxu0 0
      %727 = vmatmul.mubr.bf16.gmra.mrb[0].mxu0 %v600
      %v728 = vpop.f32.mrb[0].mxu0
      %v729 = vadd.f32 0.0, %v728
      %v730 = vpop.f32.mrb[0].mxu0
      %v731 = vpop.f32.mrb[0].mxu0
      %v732 = vadd.f32 0.0, %v731
      %v733 = vpop.f32.mrb[0].mxu0
      %734 = vmatprep.mubr.bf16.mxu0 0
      %735 = vmatmul.mubr.bf16.gmra.mrb[0].mxu0 %v601
      %v736 = vpop.f32.mrb[0].mxu0
      %v737 = vadd.f32 0.0, %v736
      %v738 = vpop.f32.mrb[0].mxu0
      %v739 = vpop.f32.mrb[0].mxu0
      %v740 = vadd.f32 0.0, %v739
      %v741 = vpop.f32.mrb[0].mxu0
      %742 = vmatprep.mubr.bf16.mxu0 0
      %743 = vmatmul.mubr.bf16.gmra.mrb[0].mxu0 %v602
      %v744 = vpop.f32.mrb[0].mxu0
      %v745 = vadd.f32 0.0, %v744
      %v746 = vpop.f32.mrb[0].mxu0
      %v747 = vpop.f32.mrb[0].mxu0
      %v748 = vadd.f32 0.0, %v747
      %v749 = vpop.f32.mrb[0].mxu0
      %750 = vmatprep.mubr.bf16.mxu0 0
      %751 = vmatmul.mubr.bf16.gmra.mrb[0].mxu0 %v603
      %v752 = vpop.f32.mrb[0].mxu0
      %v753 = vadd.f32 0.0, %v752
      %v754 = vpop.f32.mrb[0].mxu0
      %v755 = vpop.f32.mrb[0].mxu0
      %v756 = vadd.f32 0.0, %v755
      %v757 = vpop.f32.mrb[0].mxu0
      %758 = vmatprep.mubr.bf16.mxu0 0
      %759 = vmatmul.mubr.bf16.gmra.mrb[0].mxu0 %v604
      %v760 = vpop.f32.mrb[0].mxu0
      %v761 = vadd.f32 0.0, %v760
      %v762 = vpop.f32.mrb[0].mxu0
      %v763 = vpop.f32.mrb[0].mxu0
      %v764 = vadd.f32 0.0, %v763
      %v765 = vpop.f32.mrb[0].mxu0
      %766 = vmatprep.mubr.bf16.mxu0 0
      %767 = vmatmul.mubr.bf16.gmra.mrb[0].mxu0 %v605
      %v768 = vpop.f32.mrb[0].mxu0
      %v769 = vadd.f32 0.0, %v768
      %v770 = vpop.f32.mrb[0].mxu0
      %v771 = vpop.f32.mrb[0].mxu0
      %v772 = vadd.f32 0.0, %v771
      %v773 = vpop.f32.mrb[0].mxu0
      %774 = vmatprep.mubr.bf16.mxu0 0
      %775 = vmatmul.mubr.bf16.gmra.mrb[0].mxu0 %v606
      %v776 = vpop.f32.mrb[0].mxu0
      %v777 = vadd.f32 0.0, %v776
      %v778 = vpop.f32.mrb[0].mxu0
      %v779 = vpop.f32.mrb[0].mxu0
      %v780 = vadd.f32 0.0, %v779
      %v781 = vpop.f32.mrb[0].mxu0
      %782 = vmatprep.mubr.bf16.mxu0 0
      %783 = vmatmul.mubr.bf16.gmra.mrb[0].mxu0 %v607
      %v784 = vpop.f32.mrb[0].mxu0
      %v785 = vadd.f32 0.0, %v784
      %v786 = vpop.f32.mrb[0].mxu0
      %v787 = vpop.f32.mrb[0].mxu0
      %v788 = vadd.f32 0.0, %v787
      %v789 = vpop.f32.mrb[0].mxu0
      %790 = vmatprep.mubr.bf16.mxu0 0
      %791 = vmatmul.mubr.bf16.gmra.mrb[0].mxu0 %v608
      %v792 = vpop.f32.mrb[0].mxu0
      %v793 = vadd.f32 0.0, %v792
      %v794 = vpop.f32.mrb[0].mxu0
      %v795 = vpop.f32.mrb[0].mxu0
      %v796 = vadd.f32 0.0, %v795
      %v797 = vpop.f32.mrb[0].mxu0
      %798 = vmatprep.mubr.bf16.mxu0 0
      %799 = vmatmul.mubr.bf16.gmra.mrb[0].mxu0 %v609
      %v800 = vpop.f32.mrb[0].mxu0
      %v801 = vadd.f32 0.0, %v800
      %v802 = vpop.f32.mrb[0].mxu0
      %v803 = vpop.f32.mrb[0].mxu0
      %v804 = vadd.f32 0.0, %v803
      %v805 = vpop.f32.mrb[0].mxu0
      %806 = vmatprep.mubr.bf16.mxu0 0
      %807 = vmatmul.mubr.bf16.gmra.mrb[0].mxu0 %v610
      %v808 = vpop.f32.mrb[0].mxu0
      %v809 = vadd.f32 0.0, %v808
      %v810 = vpop.f32.mrb[0].mxu0
      %v811 = vpop.f32.mrb[0].mxu0
      %v812 = vadd.f32 0.0, %v811
      %v813 = vpop.f32.mrb[0].mxu0
      %814 = vmatprep.mubr.bf16.mxu0 0
      %815 = vmatmul.mubr.bf16.gmra.mrb[0].mxu0 %v611
      %v816 = vpop.f32.mrb[0].mxu0
      %v817 = vadd.f32 0.0, %v816
      %v818 = vpop.f32.mrb[0].mxu0
      %v819 = vpop.f32.mrb[0].mxu0
      %v820 = vadd.f32 0.0, %v819
      %v821 = vpop.f32.mrb[0].mxu0
      %822 = vmatprep.mubr.bf16.mxu0 0
      %823 = vmatmul.mubr.bf16.gmra.mrb[0].mxu0 %v612
      %v824 = vpop.f32.mrb[0].mxu0
      %v825 = vadd.f32 0.0, %v824
      %v826 = vpop.f32.mrb[0].mxu0
      %v827 = vpop.f32.mrb[0].mxu0
      %v828 = vadd.f32 0.0, %v827
      %v829 = vpop.f32.mrb[0].mxu0
      %830 = vmatprep.mubr.bf16.mxu0 0
      %831 = vmatmul.mubr.bf16.gmra.mrb[0].mxu0 %v613
      %v832 = vpop.f32.mrb[0].mxu0
      %v833 = vadd.f32 0.0, %v832
      %v834 = vpop.f32.mrb[0].mxu0
      %v835 = vpop.f32.mrb[0].mxu0
      %v836 = vadd.f32 0.0, %v835
      %v837 = vpop.f32.mrb[0].mxu0
      %838 = vdwg.mxu0
      %v855 = vunpack.c.l.b16 %v550
      %v856 = vunpack.c.l.b16 %v551
      %v857 = vunpack.c.l.b16 %v552
      %v858 = vunpack.c.l.b16 %v553
      %v859 = vunpack.c.l.b16 %v554
      %v860 = vunpack.c.l.b16 %v555
      %v861 = vunpack.c.l.b16 %v556
      %v862 = vunpack.c.l.b16 %v557
      %v863 = vunpack.c.l.b16 %v558
      %v864 = vunpack.c.l.b16 %v559
      %v865 = vunpack.c.l.b16 %v560
      %v866 = vunpack.c.l.b16 %v561
      %v867 = vunpack.c.l.b16 %v562
      %v868 = vunpack.c.l.b16 %v563
      %v869 = vunpack.c.l.b16 %v564
      %v870 = vunpack.c.l.b16 %v565
      %v871 = vpack.c.b16 %v856, %v855
      %v872 = vpack.c.b16 %v858, %v857
      %v873 = vpack.c.b16 %v860, %v859
      %v874 = vpack.c.b16 %v862, %v861
      %v875 = vpack.c.b16 %v864, %v863
      %v876 = vpack.c.b16 %v866, %v865
      %v877 = vpack.c.b16 %v868, %v867
      %v878 = vpack.c.b16 %v870, %v869
      %887 = vmatprep.subr.bf16.mxu0 0
      %888 = vmatpush1.bf16.msra.mxu0 %v871
      %889 = vmatprep.subr.bf16.mxu0 0
      %890 = vmatpush1.bf16.msra.mxu0 %v872
      %891 = vmatprep.subr.bf16.mxu0 0
      %892 = vmatpush1.bf16.msra.mxu0 %v873
      %893 = vmatprep.subr.bf16.mxu0 0
      %894 = vmatpush1.bf16.msra.mxu0 %v874
      %895 = vmatprep.subr.bf16.mxu0 0
      %896 = vmatpush1.bf16.msra.mxu0 %v875
      %897 = vmatprep.subr.bf16.mxu0 0
      %898 = vmatpush1.bf16.msra.mxu0 %v876
      %899 = vmatprep.subr.bf16.mxu0 0
      %900 = vmatpush1.bf16.msra.mxu0 %v877
      %901 = vmatprep.subr.bf16.mxu0 0
      %902 = vmatpush1.bf16.msra.mxu0 %v878
      %903 = vmatprep.subr.bf16.mxu0 0
      %904 = vmatpush1.bf16.msra.mxu0 0
      %905 = vmatprep.subr.bf16.mxu0 0
      %906 = vmatpush1.bf16.msra.mxu0 0
      %907 = vmatprep.subr.bf16.mxu0 0
      %908 = vmatpush1.bf16.msra.mxu0 0
      %909 = vmatprep.subr.bf16.mxu0 0
      %910 = vmatpush1.bf16.msra.mxu0 0
      %911 = vmatprep.subr.bf16.mxu0 0
      %912 = vmatpush1.bf16.msra.mxu0 0
      %913 = vmatprep.subr.bf16.mxu0 0
      %914 = vmatpush1.bf16.msra.mxu0 0
      %915 = vmatprep.subr.bf16.mxu0 0
      %916 = vmatpush1.bf16.msra.mxu0 0
      %917 = vmatprep.subr.bf16.mxu0 0
      %918 = vmatpush1.bf16.msra.mxu0 0
      %919 = vmatprep.mubr.bf16.mxu0 0
      %920 = vmatmul.mubr.bf16.gmra.mrb[0].mxu0 %v534
      %v921 = vpop.f32.mrb[0].mxu0
      %v922 = vadd.f32 %v713, %v921
      %v923 = vpop.f32.mrb[0].mxu0
      %v924 = vpop.f32.mrb[0].mxu0
      %v925 = vadd.f32 %v716, %v924
      %v926 = vpop.f32.mrb[0].mxu0
      %927 = vmatprep.mubr.bf16.mxu0 0
      %928 = vmatmul.mubr.bf16.gmra.mrb[0].mxu0 %v535
      %v929 = vpop.f32.mrb[0].mxu0
      %v930 = vadd.f32 %v721, %v929
      %v931 = vpop.f32.mrb[0].mxu0
      %v932 = vpop.f32.mrb[0].mxu0
      %v933 = vadd.f32 %v724, %v932
      %v934 = vpop.f32.mrb[0].mxu0
      %935 = vmatprep.mubr.bf16.mxu0 0
      %936 = vmatmul.mubr.bf16.gmra.mrb[0].mxu0 %v536
      %v937 = vpop.f32.mrb[0].mxu0
      %v938 = vadd.f32 %v729, %v937
      %v939 = vpop.f32.mrb[0].mxu0
      %v940 = vpop.f32.mrb[0].mxu0
      %v941 = vadd.f32 %v732, %v940
      %v942 = vpop.f32.mrb[0].mxu0
      %943 = vmatprep.mubr.bf16.mxu0 0
      %944 = vmatmul.mubr.bf16.gmra.mrb[0].mxu0 %v537
      %v945 = vpop.f32.mrb[0].mxu0
      %v946 = vadd.f32 %v737, %v945
      %v947 = vpop.f32.mrb[0].mxu0
      %v948 = vpop.f32.mrb[0].mxu0
      %v949 = vadd.f32 %v740, %v948
      %v950 = vpop.f32.mrb[0].mxu0
      %951 = vmatprep.mubr.bf16.mxu0 0
      %952 = vmatmul.mubr.bf16.gmra.mrb[0].mxu0 %v538
      %v953 = vpop.f32.mrb[0].mxu0
      %v954 = vadd.f32 %v745, %v953
      %v955 = vpop.f32.mrb[0].mxu0
      %v956 = vpop.f32.mrb[0].mxu0
      %v957 = vadd.f32 %v748, %v956
      %v958 = vpop.f32.mrb[0].mxu0
      %959 = vmatprep.mubr.bf16.mxu0 0
      %960 = vmatmul.mubr.bf16.gmra.mrb[0].mxu0 %v539
      %v961 = vpop.f32.mrb[0].mxu0
      %v962 = vadd.f32 %v753, %v961
      %v963 = vpop.f32.mrb[0].mxu0
      %v964 = vpop.f32.mrb[0].mxu0
      %v965 = vadd.f32 %v756, %v964
      %v966 = vpop.f32.mrb[0].mxu0
      %967 = vmatprep.mubr.bf16.mxu0 0
      %968 = vmatmul.mubr.bf16.gmra.mrb[0].mxu0 %v540
      %v969 = vpop.f32.mrb[0].mxu0
      %v970 = vadd.f32 %v761, %v969
      %v971 = vpop.f32.mrb[0].mxu0
      %v972 = vpop.f32.mrb[0].mxu0
      %v973 = vadd.f32 %v764, %v972
      %v974 = vpop.f32.mrb[0].mxu0
      %975 = vmatprep.mubr.bf16.mxu0 0
      %976 = vmatmul.mubr.bf16.gmra.mrb[0].mxu0 %v541
      %v977 = vpop.f32.mrb[0].mxu0
      %v978 = vadd.f32 %v769, %v977
      %v979 = vpop.f32.mrb[0].mxu0
      %v980 = vpop.f32.mrb[0].mxu0
      %v981 = vadd.f32 %v772, %v980
      %v982 = vpop.f32.mrb[0].mxu0
      %983 = vmatprep.mubr.bf16.mxu0 0
      %984 = vmatmul.mubr.bf16.gmra.mrb[0].mxu0 %v542
      %v985 = vpop.f32.mrb[0].mxu0
      %v986 = vadd.f32 %v777, %v985
      %v987 = vpop.f32.mrb[0].mxu0
      %v988 = vpop.f32.mrb[0].mxu0
      %v989 = vadd.f32 %v780, %v988
      %v990 = vpop.f32.mrb[0].mxu0
      %991 = vmatprep.mubr.bf16.mxu0 0
      %992 = vmatmul.mubr.bf16.gmra.mrb[0].mxu0 %v543
      %v993 = vpop.f32.mrb[0].mxu0
      %v994 = vadd.f32 %v785, %v993
      %v995 = vpop.f32.mrb[0].mxu0
      %v996 = vpop.f32.mrb[0].mxu0
      %v997 = vadd.f32 %v788, %v996
      %v998 = vpop.f32.mrb[0].mxu0
      %999 = vmatprep.mubr.bf16.mxu0 0
      %1000 = vmatmul.mubr.bf16.gmra.mrb[0].mxu0 %v544
      %v1001 = vpop.f32.mrb[0].mxu0
      %v1002 = vadd.f32 %v793, %v1001
      %v1003 = vpop.f32.mrb[0].mxu0
      %v1004 = vpop.f32.mrb[0].mxu0
      %v1005 = vadd.f32 %v796, %v1004
      %v1006 = vpop.f32.mrb[0].mxu0
      %1007 = vmatprep.mubr.bf16.mxu0 0
      %1008 = vmatmul.mubr.bf16.gmra.mrb[0].mxu0 %v545
      %v1009 = vpop.f32.mrb[0].mxu0
      %v1010 = vadd.f32 %v801, %v1009
      %v1011 = vpop.f32.mrb[0].mxu0
      %v1012 = vpop.f32.mrb[0].mxu0
      %v1013 = vadd.f32 %v804, %v1012
      %v1014 = vpop.f32.mrb[0].mxu0
      %1015 = vmatprep.mubr.bf16.mxu0 0
      %1016 = vmatmul.mubr.bf16.gmra.mrb[0].mxu0 %v546
      %v1017 = vpop.f32.mrb[0].mxu0
      %v1018 = vadd.f32 %v809, %v1017
      %v1019 = vpop.f32.mrb[0].mxu0
      %v1020 = vpop.f32.mrb[0].mxu0
      %v1021 = vadd.f32 %v812, %v1020
      %v1022 = vpop.f32.mrb[0].mxu0
      %1023 = vmatprep.mubr.bf16.mxu0 0
      %1024 = vmatmul.mubr.bf16.gmra.mrb[0].mxu0 %v547
      %v1025 = vpop.f32.mrb[0].mxu0
      %v1026 = vadd.f32 %v817, %v1025
      %v1027 = vpop.f32.mrb[0].mxu0
      %v1028 = vpop.f32.mrb[0].mxu0
      %v1029 = vadd.f32 %v820, %v1028
      %v1030 = vpop.f32.mrb[0].mxu0
      %1031 = vmatprep.mubr.bf16.mxu0 0
      %1032 = vmatmul.mubr.bf16.gmra.mrb[0].mxu0 %v548
      %v1033 = vpop.f32.mrb[0].mxu0
      %v1034 = vadd.f32 %v825, %v1033
      %v1035 = vpop.f32.mrb[0].mxu0
      %v1036 = vpop.f32.mrb[0].mxu0
      %v1037 = vadd.f32 %v828, %v1036
      %v1038 = vpop.f32.mrb[0].mxu0
      %1039 = vmatprep.mubr.bf16.mxu0 0
      %1040 = vmatmul.mubr.bf16.gmra.mrb[0].mxu0 %v549
      %v1041 = vpop.f32.mrb[0].mxu0
      %v1042 = vadd.f32 %v833, %v1041
      %v1043 = vpop.f32.mrb[0].mxu0
      %v1044 = vpop.f32.mrb[0].mxu0
      %v1045 = vadd.f32 %v836, %v1044
      %v1046 = vpop.f32.mrb[0].mxu0
      %1047 = vdwg.mxu0
      %v1048 = vld [vmem:[#allocation2 + $0x2] sm:$0xff]
      %v1049 = vld [vmem:[#allocation2 + $0xa] sm:$0xff]
      %v1050 = vld [vmem:[#allocation2 + $0x1a] sm:$0xff]
      %v1051 = vld [vmem:[#allocation2 + $0x22] sm:$0xff]
      %v1052 = vld [vmem:[#allocation2 + $0x32] sm:$0xff]
      %v1053 = vld [vmem:[#allocation2 + $0x3a] sm:$0xff]
      %v1054 = vld [vmem:[#allocation2 + $0x4a] sm:$0xff]
      %v1055 = vld [vmem:[#allocation2 + $0x52] sm:$0xff]
      %v1056 = vld [vmem:[#allocation2 + $0x62] sm:$0xff]
      %v1057 = vld [vmem:[#allocation2 + $0x6a] sm:$0xff]
      %v1058 = vld [vmem:[#allocation2 + $0x7a] sm:$0xff]
      %v1059 = vld [vmem:[#allocation2 + $0x82] sm:$0xff]
      %v1060 = vld [vmem:[#allocation2 + $0x92] sm:$0xff]
      %v1061 = vld [vmem:[#allocation2 + $0x9a] sm:$0xff]
      %v1062 = vld [vmem:[#allocation2 + $0xaa] sm:$0xff]
      %v1063 = vld [vmem:[#allocation2 + $0xb2] sm:$0xff]
      %v1064 = vld [vmem:[#allocation2 + $0xc2] sm:$0xff]
      %v1065 = vld [vmem:[#allocation2 + $0xca] sm:$0xff]
      %v1066 = vld [vmem:[#allocation2 + $0xda] sm:$0xff]
      %v1067 = vld [vmem:[#allocation2 + $0xe2] sm:$0xff]
      %v1068 = vld [vmem:[#allocation2 + $0xf2] sm:$0xff]
      %v1069 = vld [vmem:[#allocation2 + $0xfa] sm:$0xff]
      %v1070 = vld [vmem:[#allocation2 + $0x10a] sm:$0xff]
      %v1071 = vld [vmem:[#allocation2 + $0x112] sm:$0xff]
      %v1072 = vld [vmem:[#allocation2 + $0x122] sm:$0xff]
      %v1073 = vld [vmem:[#allocation2 + $0x12a] sm:$0xff]
      %v1074 = vld [vmem:[#allocation2 + $0x13a] sm:$0xff]
      %v1075 = vld [vmem:[#allocation2 + $0x142] sm:$0xff]
      %v1076 = vld [vmem:[#allocation2 + $0x152] sm:$0xff]
      %v1077 = vld [vmem:[#allocation2 + $0x15a] sm:$0xff]
      %v1078 = vld [vmem:[#allocation2 + $0x16a] sm:$0xff]
      %v1079 = vld [vmem:[#allocation2 + $0x172] sm:$0xff]
      %v1080 = vpack.c.bf16 %v1049, %v1048
      %v1081 = vpack.c.bf16 %v1051, %v1050
      %v1082 = vpack.c.bf16 %v1053, %v1052
      %v1083 = vpack.c.bf16 %v1055, %v1054
      %v1084 = vpack.c.bf16 %v1057, %v1056
      %v1085 = vpack.c.bf16 %v1059, %v1058
      %v1086 = vpack.c.bf16 %v1061, %v1060
      %v1087 = vpack.c.bf16 %v1063, %v1062
      %v1088 = vpack.c.bf16 %v1065, %v1064
      %v1089 = vpack.c.bf16 %v1067, %v1066
      %v1090 = vpack.c.bf16 %v1069, %v1068
      %v1091 = vpack.c.bf16 %v1071, %v1070
      %v1092 = vpack.c.bf16 %v1073, %v1072
      %v1093 = vpack.c.bf16 %v1075, %v1074
      %v1094 = vpack.c.bf16 %v1077, %v1076
      %v1095 = vpack.c.bf16 %v1079, %v1078
      %v1096 = vld [vmem:[%s3 + $0x80] sm:$0xf]
      %v1097 = vld [vmem:[%s3 + $0x84] sm:$0xf]
      %v1098 = vld [vmem:[%s3 + $0x88] sm:$0xf]
      %v1099 = vld [vmem:[%s3 + $0x8c] sm:$0xf]
      %v1100 = vld [vmem:[%s3 + $0x90] sm:$0xf]
      %v1101 = vld [vmem:[%s3 + $0x94] sm:$0xf]
      %v1102 = vld [vmem:[%s3 + $0x98] sm:$0xf]
      %v1103 = vld [vmem:[%s3 + $0x9c] sm:$0xf]
      %v1104 = vld [vmem:[%s3 + $0xa0] sm:$0xf]
      %v1105 = vld [vmem:[%s3 + $0xa4] sm:$0xf]
      %v1106 = vld [vmem:[%s3 + $0xa8] sm:$0xf]
      %v1107 = vld [vmem:[%s3 + $0xac] sm:$0xf]
      %v1108 = vld [vmem:[%s3 + $0xb0] sm:$0xf]
      %v1109 = vld [vmem:[%s3 + $0xb4] sm:$0xf]
      %v1110 = vld [vmem:[%s3 + $0xb8] sm:$0xf]
      %v1111 = vld [vmem:[%s3 + $0xbc] sm:$0xf]
      %v1128 = vunpack.c.l.b16 %v1096
      %v1129 = vunpack.c.l.b16 %v1097
      %v1130 = vunpack.c.l.b16 %v1098
      %v1131 = vunpack.c.l.b16 %v1099
      %v1132 = vunpack.c.l.b16 %v1100
      %v1133 = vunpack.c.l.b16 %v1101
      %v1134 = vunpack.c.l.b16 %v1102
      %v1135 = vunpack.c.l.b16 %v1103
      %v1136 = vunpack.c.l.b16 %v1104
      %v1137 = vunpack.c.l.b16 %v1105
      %v1138 = vunpack.c.l.b16 %v1106
      %v1139 = vunpack.c.l.b16 %v1107
      %v1140 = vunpack.c.l.b16 %v1108
      %v1141 = vunpack.c.l.b16 %v1109
      %v1142 = vunpack.c.l.b16 %v1110
      %v1143 = vunpack.c.l.b16 %v1111
      %v1144 = vpack.c.b16 %v1129, %v1128
      %v1145 = vpack.c.b16 %v1131, %v1130
      %v1146 = vpack.c.b16 %v1133, %v1132
      %v1147 = vpack.c.b16 %v1135, %v1134
      %v1148 = vpack.c.b16 %v1137, %v1136
      %v1149 = vpack.c.b16 %v1139, %v1138
      %v1150 = vpack.c.b16 %v1141, %v1140
      %v1151 = vpack.c.b16 %v1143, %v1142
      %1160 = vmatprep.subr.bf16.mxu0 0
      %1161 = vmatpush1.bf16.msra.mxu0 %v1144
      %1162 = vmatprep.subr.bf16.mxu0 0
      %1163 = vmatpush1.bf16.msra.mxu0 %v1145
      %1164 = vmatprep.subr.bf16.mxu0 0
      %1165 = vmatpush1.bf16.msra.mxu0 %v1146
      %1166 = vmatprep.subr.bf16.mxu0 0
      %1167 = vmatpush1.bf16.msra.mxu0 %v1147
      %1168 = vmatprep.subr.bf16.mxu0 0
      %1169 = vmatpush1.bf16.msra.mxu0 %v1148
      %1170 = vmatprep.subr.bf16.mxu0 0
      %1171 = vmatpush1.bf16.msra.mxu0 %v1149
      %1172 = vmatprep.subr.bf16.mxu0 0
      %1173 = vmatpush1.bf16.msra.mxu0 %v1150
      %1174 = vmatprep.subr.bf16.mxu0 0
      %1175 = vmatpush1.bf16.msra.mxu0 %v1151
      %1176 = vmatprep.subr.bf16.mxu0 0
      %1177 = vmatpush1.bf16.msra.mxu0 0
      %1178 = vmatprep.subr.bf16.mxu0 0
      %1179 = vmatpush1.bf16.msra.mxu0 0
      %1180 = vmatprep.subr.bf16.mxu0 0
      %1181 = vmatpush1.bf16.msra.mxu0 0
      %1182 = vmatprep.subr.bf16.mxu0 0
      %1183 = vmatpush1.bf16.msra.mxu0 0
      %1184 = vmatprep.subr.bf16.mxu0 0
      %1185 = vmatpush1.bf16.msra.mxu0 0
      %1186 = vmatprep.subr.bf16.mxu0 0
      %1187 = vmatpush1.bf16.msra.mxu0 0
      %1188 = vmatprep.subr.bf16.mxu0 0
      %1189 = vmatpush1.bf16.msra.mxu0 0
      %1190 = vmatprep.subr.bf16.mxu0 0
      %1191 = vmatpush1.bf16.msra.mxu0 0
      %1192 = vmatprep.mubr.bf16.mxu0 0
      %1193 = vmatmul.mubr.bf16.gmra.mrb[0].mxu0 %v1080
      %v1194 = vpop.f32.mrb[0].mxu0
      %v1195 = vadd.f32 0.0, %v1194
      %v1196 = vpop.f32.mrb[0].mxu0
      %v1197 = vpop.f32.mrb[0].mxu0
      %v1198 = vadd.f32 0.0, %v1197
      %v1199 = vpop.f32.mrb[0].mxu0
      %1200 = vmatprep.mubr.bf16.mxu0 0
      %1201 = vmatmul.mubr.bf16.gmra.mrb[0].mxu0 %v1081
      %v1202 = vpop.f32.mrb[0].mxu0
      %v1203 = vadd.f32 0.0, %v1202
      %v1204 = vpop.f32.mrb[0].mxu0
      %v1205 = vpop.f32.mrb[0].mxu0
      %v1206 = vadd.f32 0.0, %v1205
      %v1207 = vpop.f32.mrb[0].mxu0
      %1208 = vmatprep.mubr.bf16.mxu0 0
      %1209 = vmatmul.mubr.bf16.gmra.mrb[0].mxu0 %v1082
      %v1210 = vpop.f32.mrb[0].mxu0
      %v1211 = vadd.f32 0.0, %v1210
      %v1212 = vpop.f32.mrb[0].mxu0
      %v1213 = vpop.f32.mrb[0].mxu0
      %v1214 = vadd.f32 0.0, %v1213
      %v1215 = vpop.f32.mrb[0].mxu0
      %1216 = vmatprep.mubr.bf16.mxu0 0
      %1217 = vmatmul.mubr.bf16.gmra.mrb[0].mxu0 %v1083
      %v1218 = vpop.f32.mrb[0].mxu0
      %v1219 = vadd.f32 0.0, %v1218
      %v1220 = vpop.f32.mrb[0].mxu0
      %v1221 = vpop.f32.mrb[0].mxu0
      %v1222 = vadd.f32 0.0, %v1221
      %v1223 = vpop.f32.mrb[0].mxu0
      %1224 = vmatprep.mubr.bf16.mxu0 0
      %1225 = vmatmul.mubr.bf16.gmra.mrb[0].mxu0 %v1084
      %v1226 = vpop.f32.mrb[0].mxu0
      %v1227 = vadd.f32 0.0, %v1226
      %v1228 = vpop.f32.mrb[0].mxu0
      %v1229 = vpop.f32.mrb[0].mxu0
      %v1230 = vadd.f32 0.0, %v1229
      %v1231 = vpop.f32.mrb[0].mxu0
      %1232 = vmatprep.mubr.bf16.mxu0 0
      %1233 = vmatmul.mubr.bf16.gmra.mrb[0].mxu0 %v1085
      %v1234 = vpop.f32.mrb[0].mxu0
      %v1235 = vadd.f32 0.0, %v1234
      %v1236 = vpop.f32.mrb[0].mxu0
      %v1237 = vpop.f32.mrb[0].mxu0
      %v1238 = vadd.f32 0.0, %v1237
      %v1239 = vpop.f32.mrb[0].mxu0
      %1240 = vmatprep.mubr.bf16.mxu0 0
      %1241 = vmatmul.mubr.bf16.gmra.mrb[0].mxu0 %v1086
      %v1242 = vpop.f32.mrb[0].mxu0
      %v1243 = vadd.f32 0.0, %v1242
      %v1244 = vpop.f32.mrb[0].mxu0
      %v1245 = vpop.f32.mrb[0].mxu0
      %v1246 = vadd.f32 0.0, %v1245
      %v1247 = vpop.f32.mrb[0].mxu0
      %1248 = vmatprep.mubr.bf16.mxu0 0
      %1249 = vmatmul.mubr.bf16.gmra.mrb[0].mxu0 %v1087
      %v1250 = vpop.f32.mrb[0].mxu0
      %v1251 = vadd.f32 0.0, %v1250
      %v1252 = vpop.f32.mrb[0].mxu0
      %v1253 = vpop.f32.mrb[0].mxu0
      %v1254 = vadd.f32 0.0, %v1253
      %v1255 = vpop.f32.mrb[0].mxu0
      %1256 = vmatprep.mubr.bf16.mxu0 0
      %1257 = vmatmul.mubr.bf16.gmra.mrb[0].mxu0 %v1088
      %v1258 = vpop.f32.mrb[0].mxu0
      %v1259 = vadd.f32 0.0, %v1258
      %v1260 = vpop.f32.mrb[0].mxu0
      %v1261 = vpop.f32.mrb[0].mxu0
      %v1262 = vadd.f32 0.0, %v1261
      %v1263 = vpop.f32.mrb[0].mxu0
      %1264 = vmatprep.mubr.bf16.mxu0 0
      %1265 = vmatmul.mubr.bf16.gmra.mrb[0].mxu0 %v1089
      %v1266 = vpop.f32.mrb[0].mxu0
      %v1267 = vadd.f32 0.0, %v1266
      %v1268 = vpop.f32.mrb[0].mxu0
      %v1269 = vpop.f32.mrb[0].mxu0
      %v1270 = vadd.f32 0.0, %v1269
      %v1271 = vpop.f32.mrb[0].mxu0
      %1272 = vmatprep.mubr.bf16.mxu0 0
      %1273 = vmatmul.mubr.bf16.gmra.mrb[0].mxu0 %v1090
      %v1274 = vpop.f32.mrb[0].mxu0
      %v1275 = vadd.f32 0.0, %v1274
      %v1276 = vpop.f32.mrb[0].mxu0
      %v1277 = vpop.f32.mrb[0].mxu0
      %v1278 = vadd.f32 0.0, %v1277
      %v1279 = vpop.f32.mrb[0].mxu0
      %1280 = vmatprep.mubr.bf16.mxu0 0
      %1281 = vmatmul.mubr.bf16.gmra.mrb[0].mxu0 %v1091
      %v1282 = vpop.f32.mrb[0].mxu0
      %v1283 = vadd.f32 0.0, %v1282
      %v1284 = vpop.f32.mrb[0].mxu0
      %v1285 = vpop.f32.mrb[0].mxu0
      %v1286 = vadd.f32 0.0, %v1285
      %v1287 = vpop.f32.mrb[0].mxu0
      %1288 = vmatprep.mubr.bf16.mxu0 0
      %1289 = vmatmul.mubr.bf16.gmra.mrb[0].mxu0 %v1092
      %v1290 = vpop.f32.mrb[0].mxu0
      %v1291 = vadd.f32 0.0, %v1290
      %v1292 = vpop.f32.mrb[0].mxu0
      %v1293 = vpop.f32.mrb[0].mxu0
      %v1294 = vadd.f32 0.0, %v1293
      %v1295 = vpop.f32.mrb[0].mxu0
      %1296 = vmatprep.mubr.bf16.mxu0 0
      %1297 = vmatmul.mubr.bf16.gmra.mrb[0].mxu0 %v1093
      %v1298 = vpop.f32.mrb[0].mxu0
      %v1299 = vadd.f32 0.0, %v1298
      %v1300 = vpop.f32.mrb[0].mxu0
      %v1301 = vpop.f32.mrb[0].mxu0
      %v1302 = vadd.f32 0.0, %v1301
      %v1303 = vpop.f32.mrb[0].mxu0
      %1304 = vmatprep.mubr.bf16.mxu0 0
      %1305 = vmatmul.mubr.bf16.gmra.mrb[0].mxu0 %v1094
      %v1306 = vpop.f32.mrb[0].mxu0
      %v1307 = vadd.f32 0.0, %v1306
      %v1308 = vpop.f32.mrb[0].mxu0
      %v1309 = vpop.f32.mrb[0].mxu0
      %v1310 = vadd.f32 0.0, %v1309
      %v1311 = vpop.f32.mrb[0].mxu0
      %1312 = vmatprep.mubr.bf16.mxu0 0
      %1313 = vmatmul.mubr.bf16.gmra.mrb[0].mxu0 %v1095
      %v1314 = vpop.f32.mrb[0].mxu0
      %v1315 = vadd.f32 0.0, %v1314
      %v1316 = vpop.f32.mrb[0].mxu0
      %v1317 = vpop.f32.mrb[0].mxu0
      %v1318 = vadd.f32 0.0, %v1317
      %v1319 = vpop.f32.mrb[0].mxu0
      %1320 = vdwg.mxu0
      %v1321 = vadd.f32 %v922, %v1195
      %v1322 = vadd.f32 %v925, %v1198
      %v1323 = vadd.f32 %v930, %v1203
      %v1324 = vadd.f32 %v933, %v1206
      %v1325 = vadd.f32 %v938, %v1211
      %v1326 = vadd.f32 %v941, %v1214
      %v1327 = vadd.f32 %v946, %v1219
      %v1328 = vadd.f32 %v949, %v1222
      %v1329 = vadd.f32 %v954, %v1227
      %v1330 = vadd.f32 %v957, %v1230
      %v1331 = vadd.f32 %v962, %v1235
      %v1332 = vadd.f32 %v965, %v1238
      %v1333 = vadd.f32 %v970, %v1243
      %v1334 = vadd.f32 %v973, %v1246
      %v1335 = vadd.f32 %v978, %v1251
      %v1336 = vadd.f32 %v981, %v1254
      %v1337 = vadd.f32 %v986, %v1259
      %v1338 = vadd.f32 %v989, %v1262
      %v1339 = vadd.f32 %v994, %v1267
      %v1340 = vadd.f32 %v997, %v1270
      %v1341 = vadd.f32 %v1002, %v1275
      %v1342 = vadd.f32 %v1005, %v1278
      %v1343 = vadd.f32 %v1010, %v1283
      %v1344 = vadd.f32 %v1013, %v1286
      %v1345 = vadd.f32 %v1018, %v1291
      %v1346 = vadd.f32 %v1021, %v1294
      %v1347 = vadd.f32 %v1026, %v1299
      %v1348 = vadd.f32 %v1029, %v1302
      %v1349 = vadd.f32 %v1034, %v1307
      %v1350 = vadd.f32 %v1037, %v1310
      %v1351 = vadd.f32 %v1042, %v1315
      %v1352 = vadd.f32 %v1045, %v1318
      %v1353 = vld [vmem:[%s469] sm:$0xff]
      %v1354 = vld [vmem:[%s469 + $0x8] sm:$0xff]
      %v1355 = vld [vmem:[%s469 + $0x18] sm:$0xff]
      %v1356 = vld [vmem:[%s469 + $0x20] sm:$0xff]
      %v1357 = vld [vmem:[%s469 + $0x30] sm:$0xff]
      %v1358 = vld [vmem:[%s469 + $0x38] sm:$0xff]
      %v1359 = vld [vmem:[%s469 + $0x48] sm:$0xff]
      %v1360 = vld [vmem:[%s469 + $0x50] sm:$0xff]
      %v1361 = vld [vmem:[%s469 + $0x60] sm:$0xff]
      %v1362 = vld [vmem:[%s469 + $0x68] sm:$0xff]
      %v1363 = vld [vmem:[%s469 + $0x78] sm:$0xff]
      %v1364 = vld [vmem:[%s469 + $0x80] sm:$0xff]
      %v1365 = vld [vmem:[%s469 + $0x90] sm:$0xff]
      %v1366 = vld [vmem:[%s469 + $0x98] sm:$0xff]
      %v1367 = vld [vmem:[%s469 + $0xa8] sm:$0xff]
      %v1368 = vld [vmem:[%s469 + $0xb0] sm:$0xff]
      %v1369 = vld [vmem:[%s469 + $0xc0] sm:$0xff]
      %v1370 = vld [vmem:[%s469 + $0xc8] sm:$0xff]
      %v1371 = vld [vmem:[%s469 + $0xd8] sm:$0xff]
      %v1372 = vld [vmem:[%s469 + $0xe0] sm:$0xff]
      %v1373 = vld [vmem:[%s469 + $0xf0] sm:$0xff]
      %v1374 = vld [vmem:[%s469 + $0xf8] sm:$0xff]
      %v1375 = vld [vmem:[%s469 + $0x108] sm:$0xff]
      %v1376 = vld [vmem:[%s469 + $0x110] sm:$0xff]
      %v1377 = vld [vmem:[%s469 + $0x120] sm:$0xff]
      %v1378 = vld [vmem:[%s469 + $0x128] sm:$0xff]
      %v1379 = vld [vmem:[%s469 + $0x138] sm:$0xff]
      %v1380 = vld [vmem:[%s469 + $0x140] sm:$0xff]
      %v1381 = vld [vmem:[%s469 + $0x150] sm:$0xff]
      %v1382 = vld [vmem:[%s469 + $0x158] sm:$0xff]
      %v1383 = vld [vmem:[%s469 + $0x168] sm:$0xff]
      %v1384 = vld [vmem:[%s469 + $0x170] sm:$0xff]
      %v1385 = vpack.c.bf16 %v1354, %v1353
      %v1386 = vpack.c.bf16 %v1356, %v1355
      %v1387 = vpack.c.bf16 %v1358, %v1357
      %v1388 = vpack.c.bf16 %v1360, %v1359
      %v1389 = vpack.c.bf16 %v1362, %v1361
      %v1390 = vpack.c.bf16 %v1364, %v1363
      %v1391 = vpack.c.bf16 %v1366, %v1365
      %v1392 = vpack.c.bf16 %v1368, %v1367
      %v1393 = vpack.c.bf16 %v1370, %v1369
      %v1394 = vpack.c.bf16 %v1372, %v1371
      %v1395 = vpack.c.bf16 %v1374, %v1373
      %v1396 = vpack.c.bf16 %v1376, %v1375
      %v1397 = vpack.c.bf16 %v1378, %v1377
      %v1398 = vpack.c.bf16 %v1380, %v1379
      %v1399 = vpack.c.bf16 %v1382, %v1381
      %v1400 = vpack.c.bf16 %v1384, %v1383
      %v1401 = vld [vmem:[%s3 + $0xc0] sm:$0xf]
      %v1402 = vld [vmem:[%s3 + $0xc4] sm:$0xf]
      %v1403 = vld [vmem:[%s3 + $0xc8] sm:$0xf]
      %v1404 = vld [vmem:[%s3 + $0xcc] sm:$0xf]
      %v1405 = vld [vmem:[%s3 + $0xd0] sm:$0xf]
      %v1406 = vld [vmem:[%s3 + $0xd4] sm:$0xf]
      %v1407 = vld [vmem:[%s3 + $0xd8] sm:$0xf]
      %v1408 = vld [vmem:[%s3 + $0xdc] sm:$0xf]
      %v1409 = vld [vmem:[%s3 + $0xe0] sm:$0xf]
      %v1410 = vld [vmem:[%s3 + $0xe4] sm:$0xf]
      %v1411 = vld [vmem:[%s3 + $0xe8] sm:$0xf]
      %v1412 = vld [vmem:[%s3 + $0xec] sm:$0xf]
      %v1413 = vld [vmem:[%s3 + $0xf0] sm:$0xf]
      %v1414 = vld [vmem:[%s3 + $0xf4] sm:$0xf]
      %v1415 = vld [vmem:[%s3 + $0xf8] sm:$0xf]
      %v1416 = vld [vmem:[%s3 + $0xfc] sm:$0xf]
      %v1433 = vunpack.c.l.b16 %v1401
      %v1434 = vunpack.c.l.b16 %v1402
      %v1435 = vunpack.c.l.b16 %v1403
      %v1436 = vunpack.c.l.b16 %v1404
      %v1437 = vunpack.c.l.b16 %v1405
      %v1438 = vunpack.c.l.b16 %v1406
      %v1439 = vunpack.c.l.b16 %v1407
      %v1440 = vunpack.c.l.b16 %v1408
      %v1441 = vunpack.c.l.b16 %v1409
      %v1442 = vunpack.c.l.b16 %v1410
      %v1443 = vunpack.c.l.b16 %v1411
      %v1444 = vunpack.c.l.b16 %v1412
      %v1445 = vunpack.c.l.b16 %v1413
      %v1446 = vunpack.c.l.b16 %v1414
      %v1447 = vunpack.c.l.b16 %v1415
      %v1448 = vunpack.c.l.b16 %v1416
      %v1449 = vpack.c.b16 %v1434, %v1433
      %v1450 = vpack.c.b16 %v1436, %v1435
      %v1451 = vpack.c.b16 %v1438, %v1437
      %v1452 = vpack.c.b16 %v1440, %v1439
      %v1453 = vpack.c.b16 %v1442, %v1441
      %v1454 = vpack.c.b16 %v1444, %v1443
      %v1455 = vpack.c.b16 %v1446, %v1445
      %v1456 = vpack.c.b16 %v1448, %v1447
      %1465 = vmatprep.subr.bf16.mxu0 0
      %1466 = vmatpush1.bf16.msra.mxu0 %v1449
      %1467 = vmatprep.subr.bf16.mxu0 0
      %1468 = vmatpush1.bf16.msra.mxu0 %v1450
      %1469 = vmatprep.subr.bf16.mxu0 0
      %1470 = vmatpush1.bf16.msra.mxu0 %v1451
      %1471 = vmatprep.subr.bf16.mxu0 0
      %1472 = vmatpush1.bf16.msra.mxu0 %v1452
      %1473 = vmatprep.subr.bf16.mxu0 0
      %1474 = vmatpush1.bf16.msra.mxu0 %v1453
      %1475 = vmatprep.subr.bf16.mxu0 0
      %1476 = vmatpush1.bf16.msra.mxu0 %v1454
      %1477 = vmatprep.subr.bf16.mxu0 0
      %1478 = vmatpush1.bf16.msra.mxu0 %v1455
      %1479 = vmatprep.subr.bf16.mxu0 0
      %1480 = vmatpush1.bf16.msra.mxu0 %v1456
      %1481 = vmatprep.subr.bf16.mxu0 0
      %1482 = vmatpush1.bf16.msra.mxu0 0
      %1483 = vmatprep.subr.bf16.mxu0 0
      %1484 = vmatpush1.bf16.msra.mxu0 0
      %1485 = vmatprep.subr.bf16.mxu0 0
      %1486 = vmatpush1.bf16.msra.mxu0 0
      %1487 = vmatprep.subr.bf16.mxu0 0
      %1488 = vmatpush1.bf16.msra.mxu0 0
      %1489 = vmatprep.subr.bf16.mxu0 0
      %1490 = vmatpush1.bf16.msra.mxu0 0
      %1491 = vmatprep.subr.bf16.mxu0 0
      %1492 = vmatpush1.bf16.msra.mxu0 0
      %1493 = vmatprep.subr.bf16.mxu0 0
      %1494 = vmatpush1.bf16.msra.mxu0 0
      %1495 = vmatprep.subr.bf16.mxu0 0
      %1496 = vmatpush1.bf16.msra.mxu0 0
      %1497 = vmatprep.mubr.bf16.mxu0 0
      %1498 = vmatmul.mubr.bf16.gmra.mrb[0].mxu0 %v1385
      %v1499 = vpop.f32.mrb[0].mxu0
      %v1500 = vadd.f32 0.0, %v1499
      %v1501 = vpop.f32.mrb[0].mxu0
      %v1502 = vpop.f32.mrb[0].mxu0
      %v1503 = vadd.f32 0.0, %v1502
      %v1504 = vpop.f32.mrb[0].mxu0
      %1505 = vmatprep.mubr.bf16.mxu0 0
      %1506 = vmatmul.mubr.bf16.gmra.mrb[0].mxu0 %v1386
      %v1507 = vpop.f32.mrb[0].mxu0
      %v1508 = vadd.f32 0.0, %v1507
      %v1509 = vpop.f32.mrb[0].mxu0
      %v1510 = vpop.f32.mrb[0].mxu0
      %v1511 = vadd.f32 0.0, %v1510
      %v1512 = vpop.f32.mrb[0].mxu0
      %1513 = vmatprep.mubr.bf16.mxu0 0
      %1514 = vmatmul.mubr.bf16.gmra.mrb[0].mxu0 %v1387
      %v1515 = vpop.f32.mrb[0].mxu0
      %v1516 = vadd.f32 0.0, %v1515
      %v1517 = vpop.f32.mrb[0].mxu0
      %v1518 = vpop.f32.mrb[0].mxu0
      %v1519 = vadd.f32 0.0, %v1518
      %v1520 = vpop.f32.mrb[0].mxu0
      %1521 = vmatprep.mubr.bf16.mxu0 0
      %1522 = vmatmul.mubr.bf16.gmra.mrb[0].mxu0 %v1388
      %v1523 = vpop.f32.mrb[0].mxu0
      %v1524 = vadd.f32 0.0, %v1523
      %v1525 = vpop.f32.mrb[0].mxu0
      %v1526 = vpop.f32.mrb[0].mxu0
      %v1527 = vadd.f32 0.0, %v1526
      %v1528 = vpop.f32.mrb[0].mxu0
      %1529 = vmatprep.mubr.bf16.mxu0 0
      %1530 = vmatmul.mubr.bf16.gmra.mrb[0].mxu0 %v1389
      %v1531 = vpop.f32.mrb[0].mxu0
      %v1532 = vadd.f32 0.0, %v1531
      %v1533 = vpop.f32.mrb[0].mxu0
      %v1534 = vpop.f32.mrb[0].mxu0
      %v1535 = vadd.f32 0.0, %v1534
      %v1536 = vpop.f32.mrb[0].mxu0
      %1537 = vmatprep.mubr.bf16.mxu0 0
      %1538 = vmatmul.mubr.bf16.gmra.mrb[0].mxu0 %v1390
      %v1539 = vpop.f32.mrb[0].mxu0
      %v1540 = vadd.f32 0.0, %v1539
      %v1541 = vpop.f32.mrb[0].mxu0
      %v1542 = vpop.f32.mrb[0].mxu0
      %v1543 = vadd.f32 0.0, %v1542
      %v1544 = vpop.f32.mrb[0].mxu0
      %1545 = vmatprep.mubr.bf16.mxu0 0
      %1546 = vmatmul.mubr.bf16.gmra.mrb[0].mxu0 %v1391
      %v1547 = vpop.f32.mrb[0].mxu0
      %v1548 = vadd.f32 0.0, %v1547
      %v1549 = vpop.f32.mrb[0].mxu0
      %v1550 = vpop.f32.mrb[0].mxu0
      %v1551 = vadd.f32 0.0, %v1550
      %v1552 = vpop.f32.mrb[0].mxu0
      %1553 = vmatprep.mubr.bf16.mxu0 0
      %1554 = vmatmul.mubr.bf16.gmra.mrb[0].mxu0 %v1392
      %v1555 = vpop.f32.mrb[0].mxu0
      %v1556 = vadd.f32 0.0, %v1555
      %v1557 = vpop.f32.mrb[0].mxu0
      %v1558 = vpop.f32.mrb[0].mxu0
      %v1559 = vadd.f32 0.0, %v1558
      %v1560 = vpop.f32.mrb[0].mxu0
      %1561 = vmatprep.mubr.bf16.mxu0 0
      %1562 = vmatmul.mubr.bf16.gmra.mrb[0].mxu0 %v1393
      %v1563 = vpop.f32.mrb[0].mxu0
      %v1564 = vadd.f32 0.0, %v1563
      %v1565 = vpop.f32.mrb[0].mxu0
      %v1566 = vpop.f32.mrb[0].mxu0
      %v1567 = vadd.f32 0.0, %v1566
      %v1568 = vpop.f32.mrb[0].mxu0
      %1569 = vmatprep.mubr.bf16.mxu0 0
      %1570 = vmatmul.mubr.bf16.gmra.mrb[0].mxu0 %v1394
      %v1571 = vpop.f32.mrb[0].mxu0
      %v1572 = vadd.f32 0.0, %v1571
      %v1573 = vpop.f32.mrb[0].mxu0
      %v1574 = vpop.f32.mrb[0].mxu0
      %v1575 = vadd.f32 0.0, %v1574
      %v1576 = vpop.f32.mrb[0].mxu0
      %1577 = vmatprep.mubr.bf16.mxu0 0
      %1578 = vmatmul.mubr.bf16.gmra.mrb[0].mxu0 %v1395
      %v1579 = vpop.f32.mrb[0].mxu0
      %v1580 = vadd.f32 0.0, %v1579
      %v1581 = vpop.f32.mrb[0].mxu0
      %v1582 = vpop.f32.mrb[0].mxu0
      %v1583 = vadd.f32 0.0, %v1582
      %v1584 = vpop.f32.mrb[0].mxu0
      %1585 = vmatprep.mubr.bf16.mxu0 0
      %1586 = vmatmul.mubr.bf16.gmra.mrb[0].mxu0 %v1396
      %v1587 = vpop.f32.mrb[0].mxu0
      %v1588 = vadd.f32 0.0, %v1587
      %v1589 = vpop.f32.mrb[0].mxu0
      %v1590 = vpop.f32.mrb[0].mxu0
      %v1591 = vadd.f32 0.0, %v1590
      %v1592 = vpop.f32.mrb[0].mxu0
      %1593 = vmatprep.mubr.bf16.mxu0 0
      %1594 = vmatmul.mubr.bf16.gmra.mrb[0].mxu0 %v1397
      %v1595 = vpop.f32.mrb[0].mxu0
      %v1596 = vadd.f32 0.0, %v1595
      %v1597 = vpop.f32.mrb[0].mxu0
      %v1598 = vpop.f32.mrb[0].mxu0
      %v1599 = vadd.f32 0.0, %v1598
      %v1600 = vpop.f32.mrb[0].mxu0
      %1601 = vmatprep.mubr.bf16.mxu0 0
      %1602 = vmatmul.mubr.bf16.gmra.mrb[0].mxu0 %v1398
      %v1603 = vpop.f32.mrb[0].mxu0
      %v1604 = vadd.f32 0.0, %v1603
      %v1605 = vpop.f32.mrb[0].mxu0
      %v1606 = vpop.f32.mrb[0].mxu0
      %v1607 = vadd.f32 0.0, %v1606
      %v1608 = vpop.f32.mrb[0].mxu0
      %1609 = vmatprep.mubr.bf16.mxu0 0
      %1610 = vmatmul.mubr.bf16.gmra.mrb[0].mxu0 %v1399
      %v1611 = vpop.f32.mrb[0].mxu0
      %v1612 = vadd.f32 0.0, %v1611
      %v1613 = vpop.f32.mrb[0].mxu0
      %v1614 = vpop.f32.mrb[0].mxu0
      %v1615 = vadd.f32 0.0, %v1614
      %v1616 = vpop.f32.mrb[0].mxu0
      %1617 = vmatprep.mubr.bf16.mxu0 0
      %1618 = vmatmul.mubr.bf16.gmra.mrb[0].mxu0 %v1400
      %v1619 = vpop.f32.mrb[0].mxu0
      %v1620 = vadd.f32 0.0, %v1619
      %v1621 = vpop.f32.mrb[0].mxu0
      %v1622 = vpop.f32.mrb[0].mxu0
      %v1623 = vadd.f32 0.0, %v1622
      %v1624 = vpop.f32.mrb[0].mxu0
      %1625 = vdwg.mxu0
      %v1626 = vadd.f32 %v1321, %v1500
      %v1627 = vadd.f32 %v1322, %v1503
      %v1628 = vadd.f32 %v1323, %v1508
      %v1629 = vadd.f32 %v1324, %v1511
      %v1630 = vadd.f32 %v1325, %v1516
      %v1631 = vadd.f32 %v1326, %v1519
      %v1632 = vadd.f32 %v1327, %v1524
      %v1633 = vadd.f32 %v1328, %v1527
      %v1634 = vadd.f32 %v1329, %v1532
      %v1635 = vadd.f32 %v1330, %v1535
      %v1636 = vadd.f32 %v1331, %v1540
      %v1637 = vadd.f32 %v1332, %v1543
      %v1638 = vadd.f32 %v1333, %v1548
      %v1639 = vadd.f32 %v1334, %v1551
      %v1640 = vadd.f32 %v1335, %v1556
      %v1641 = vadd.f32 %v1336, %v1559
      %v1642 = vadd.f32 %v1337, %v1564
      %v1643 = vadd.f32 %v1338, %v1567
      %v1644 = vadd.f32 %v1339, %v1572
      %v1645 = vadd.f32 %v1340, %v1575
      %v1646 = vadd.f32 %v1341, %v1580
      %v1647 = vadd.f32 %v1342, %v1583
      %v1648 = vadd.f32 %v1343, %v1588
      %v1649 = vadd.f32 %v1344, %v1591
      %v1650 = vadd.f32 %v1345, %v1596
      %v1651 = vadd.f32 %v1346, %v1599
      %v1652 = vadd.f32 %v1347, %v1604
      %v1653 = vadd.f32 %v1348, %v1607
      %v1654 = vadd.f32 %v1349, %v1612
      %v1655 = vadd.f32 %v1350, %v1615
      %v1656 = vadd.f32 %v1351, %v1620
      %v1657 = vadd.f32 %v1352, %v1623
      %v1658 = vld [vmem:[%s469 + $0x1] sm:$0xff]
      %v1659 = vld [vmem:[%s469 + $0x9] sm:$0xff]
      %v1660 = vld [vmem:[%s469 + $0x19] sm:$0xff]
      %v1661 = vld [vmem:[%s469 + $0x21] sm:$0xff]
      %v1662 = vld [vmem:[%s469 + $0x31] sm:$0xff]
      %v1663 = vld [vmem:[%s469 + $0x39] sm:$0xff]
      %v1664 = vld [vmem:[%s469 + $0x49] sm:$0xff]
      %v1665 = vld [vmem:[%s469 + $0x51] sm:$0xff]
      %v1666 = vld [vmem:[%s469 + $0x61] sm:$0xff]
      %v1667 = vld [vmem:[%s469 + $0x69] sm:$0xff]
      %v1668 = vld [vmem:[%s469 + $0x79] sm:$0xff]
      %v1669 = vld [vmem:[%s469 + $0x81] sm:$0xff]
      %v1670 = vld [vmem:[%s469 + $0x91] sm:$0xff]
      %v1671 = vld [vmem:[%s469 + $0x99] sm:$0xff]
      %v1672 = vld [vmem:[%s469 + $0xa9] sm:$0xff]
      %v1673 = vld [vmem:[%s469 + $0xb1] sm:$0xff]
      %v1674 = vld [vmem:[%s469 + $0xc1] sm:$0xff]
      %v1675 = vld [vmem:[%s469 + $0xc9] sm:$0xff]
      %v1676 = vld [vmem:[%s469 + $0xd9] sm:$0xff]
      %v1677 = vld [vmem:[%s469 + $0xe1] sm:$0xff]
      %v1678 = vld [vmem:[%s469 + $0xf1] sm:$0xff]
      %v1679 = vld [vmem:[%s469 + $0xf9] sm:$0xff]
      %v1680 = vld [vmem:[%s469 + $0x109] sm:$0xff]
      %v1681 = vld [vmem:[%s469 + $0x111] sm:$0xff]
      %v1682 = vld [vmem:[%s469 + $0x121] sm:$0xff]
      %v1683 = vld [vmem:[%s469 + $0x129] sm:$0xff]
      %v1684 = vld [vmem:[%s469 + $0x139] sm:$0xff]
      %v1685 = vld [vmem:[%s469 + $0x141] sm:$0xff]
      %v1686 = vld [vmem:[%s469 + $0x151] sm:$0xff]
      %v1687 = vld [vmem:[%s469 + $0x159] sm:$0xff]
      %v1688 = vld [vmem:[%s469 + $0x169] sm:$0xff]
      %v1689 = vld [vmem:[%s469 + $0x171] sm:$0xff]
      %v1690 = vpack.c.bf16 %v1659, %v1658
      %v1691 = vpack.c.bf16 %v1661, %v1660
      %v1692 = vpack.c.bf16 %v1663, %v1662
      %v1693 = vpack.c.bf16 %v1665, %v1664
      %v1694 = vpack.c.bf16 %v1667, %v1666
      %v1695 = vpack.c.bf16 %v1669, %v1668
      %v1696 = vpack.c.bf16 %v1671, %v1670
      %v1697 = vpack.c.bf16 %v1673, %v1672
      %v1698 = vpack.c.bf16 %v1675, %v1674
      %v1699 = vpack.c.bf16 %v1677, %v1676
      %v1700 = vpack.c.bf16 %v1679, %v1678
      %v1701 = vpack.c.bf16 %v1681, %v1680
      %v1702 = vpack.c.bf16 %v1683, %v1682
      %v1703 = vpack.c.bf16 %v1685, %v1684
      %v1704 = vpack.c.bf16 %v1687, %v1686
      %v1705 = vpack.c.bf16 %v1689, %v1688
      %v1706 = vld [vmem:[%s3 + $0x100] sm:$0xf]
      %v1707 = vld [vmem:[%s3 + $0x104] sm:$0xf]
      %v1708 = vld [vmem:[%s3 + $0x108] sm:$0xf]
      %v1709 = vld [vmem:[%s3 + $0x10c] sm:$0xf]
      %v1710 = vld [vmem:[%s3 + $0x110] sm:$0xf]
      %v1711 = vld [vmem:[%s3 + $0x114] sm:$0xf]
      %v1712 = vld [vmem:[%s3 + $0x118] sm:$0xf]
      %v1713 = vld [vmem:[%s3 + $0x11c] sm:$0xf]
      %v1714 = vld [vmem:[%s3 + $0x120] sm:$0xf]
      %v1715 = vld [vmem:[%s3 + $0x124] sm:$0xf]
      %v1716 = vld [vmem:[%s3 + $0x128] sm:$0xf]
      %v1717 = vld [vmem:[%s3 + $0x12c] sm:$0xf]
      %v1718 = vld [vmem:[%s3 + $0x130] sm:$0xf]
      %v1719 = vld [vmem:[%s3 + $0x134] sm:$0xf]
      %v1720 = vld [vmem:[%s3 + $0x138] sm:$0xf]
      %v1721 = vld [vmem:[%s3 + $0x13c] sm:$0xf]
      %v1738 = vunpack.c.l.b16 %v1706
      %v1739 = vunpack.c.l.b16 %v1707
      %v1740 = vunpack.c.l.b16 %v1708
      %v1741 = vunpack.c.l.b16 %v1709
      %v1742 = vunpack.c.l.b16 %v1710
      %v1743 = vunpack.c.l.b16 %v1711
      %v1744 = vunpack.c.l.b16 %v1712
      %v1745 = vunpack.c.l.b16 %v1713
      %v1746 = vunpack.c.l.b16 %v1714
      %v1747 = vunpack.c.l.b16 %v1715
      %v1748 = vunpack.c.l.b16 %v1716
      %v1749 = vunpack.c.l.b16 %v1717
      %v1750 = vunpack.c.l.b16 %v1718
      %v1751 = vunpack.c.l.b16 %v1719
      %v1752 = vunpack.c.l.b16 %v1720
      %v1753 = vunpack.c.l.b16 %v1721
      %v1754 = vpack.c.b16 %v1739, %v1738
      %v1755 = vpack.c.b16 %v1741, %v1740
      %v1756 = vpack.c.b16 %v1743, %v1742
      %v1757 = vpack.c.b16 %v1745, %v1744
      %v1758 = vpack.c.b16 %v1747, %v1746
      %v1759 = vpack.c.b16 %v1749, %v1748
      %v1760 = vpack.c.b16 %v1751, %v1750
      %v1761 = vpack.c.b16 %v1753, %v1752
      %1770 = vmatprep.subr.bf16.mxu0 0
      %1771 = vmatpush1.bf16.msra.mxu0 %v1754
      %1772 = vmatprep.subr.bf16.mxu0 0
      %1773 = vmatpush1.bf16.msra.mxu0 %v1755
      %1774 = vmatprep.subr.bf16.mxu0 0
      %1775 = vmatpush1.bf16.msra.mxu0 %v1756
      %1776 = vmatprep.subr.bf16.mxu0 0
      %1777 = vmatpush1.bf16.msra.mxu0 %v1757
      %1778 = vmatprep.subr.bf16.mxu0 0
      %1779 = vmatpush1.bf16.msra.mxu0 %v1758
      %1780 = vmatprep.subr.bf16.mxu0 0
      %1781 = vmatpush1.bf16.msra.mxu0 %v1759
      %1782 = vmatprep.subr.bf16.mxu0 0
      %1783 = vmatpush1.bf16.msra.mxu0 %v1760
      %1784 = vmatprep.subr.bf16.mxu0 0
      %1785 = vmatpush1.bf16.msra.mxu0 %v1761
      %1786 = vmatprep.subr.bf16.mxu0 0
      %1787 = vmatpush1.bf16.msra.mxu0 0
      %1788 = vmatprep.subr.bf16.mxu0 0
      %1789 = vmatpush1.bf16.msra.mxu0 0
      %1790 = vmatprep.subr.bf16.mxu0 0
      %1791 = vmatpush1.bf16.msra.mxu0 0
      %1792 = vmatprep.subr.bf16.mxu0 0
      %1793 = vmatpush1.bf16.msra.mxu0 0
      %1794 = vmatprep.subr.bf16.mxu0 0
      %1795 = vmatpush1.bf16.msra.mxu0 0
      %1796 = vmatprep.subr.bf16.mxu0 0
      %1797 = vmatpush1.bf16.msra.mxu0 0
      %1798 = vmatprep.subr.bf16.mxu0 0
      %1799 = vmatpush1.bf16.msra.mxu0 0
      %1800 = vmatprep.subr.bf16.mxu0 0
      %1801 = vmatpush1.bf16.msra.mxu0 0
      %1802 = vmatprep.mubr.bf16.mxu0 0
      %1803 = vmatmul.mubr.bf16.gmra.mrb[0].mxu0 %v1690
      %v1804 = vpop.f32.mrb[0].mxu0
      %v1805 = vadd.f32 0.0, %v1804
      %v1806 = vpop.f32.mrb[0].mxu0
      %v1807 = vpop.f32.mrb[0].mxu0
      %v1808 = vadd.f32 0.0, %v1807
      %v1809 = vpop.f32.mrb[0].mxu0
      %1810 = vmatprep.mubr.bf16.mxu0 0
      %1811 = vmatmul.mubr.bf16.gmra.mrb[0].mxu0 %v1691
      %v1812 = vpop.f32.mrb[0].mxu0
      %v1813 = vadd.f32 0.0, %v1812
      %v1814 = vpop.f32.mrb[0].mxu0
      %v1815 = vpop.f32.mrb[0].mxu0
      %v1816 = vadd.f32 0.0, %v1815
      %v1817 = vpop.f32.mrb[0].mxu0
      %1818 = vmatprep.mubr.bf16.mxu0 0
      %1819 = vmatmul.mubr.bf16.gmra.mrb[0].mxu0 %v1692
      %v1820 = vpop.f32.mrb[0].mxu0
      %v1821 = vadd.f32 0.0, %v1820
      %v1822 = vpop.f32.mrb[0].mxu0
      %v1823 = vpop.f32.mrb[0].mxu0
      %v1824 = vadd.f32 0.0, %v1823
      %v1825 = vpop.f32.mrb[0].mxu0
      %1826 = vmatprep.mubr.bf16.mxu0 0
      %1827 = vmatmul.mubr.bf16.gmra.mrb[0].mxu0 %v1693
      %v1828 = vpop.f32.mrb[0].mxu0
      %v1829 = vadd.f32 0.0, %v1828
      %v1830 = vpop.f32.mrb[0].mxu0
      %v1831 = vpop.f32.mrb[0].mxu0
      %v1832 = vadd.f32 0.0, %v1831
      %v1833 = vpop.f32.mrb[0].mxu0
      %1834 = vmatprep.mubr.bf16.mxu0 0
      %1835 = vmatmul.mubr.bf16.gmra.mrb[0].mxu0 %v1694
      %v1836 = vpop.f32.mrb[0].mxu0
      %v1837 = vadd.f32 0.0, %v1836
      %v1838 = vpop.f32.mrb[0].mxu0
      %v1839 = vpop.f32.mrb[0].mxu0
      %v1840 = vadd.f32 0.0, %v1839
      %v1841 = vpop.f32.mrb[0].mxu0
      %1842 = vmatprep.mubr.bf16.mxu0 0
      %1843 = vmatmul.mubr.bf16.gmra.mrb[0].mxu0 %v1695
      %v1844 = vpop.f32.mrb[0].mxu0
      %v1845 = vadd.f32 0.0, %v1844
      %v1846 = vpop.f32.mrb[0].mxu0
      %v1847 = vpop.f32.mrb[0].mxu0
      %v1848 = vadd.f32 0.0, %v1847
      %v1849 = vpop.f32.mrb[0].mxu0
      %1850 = vmatprep.mubr.bf16.mxu0 0
      %1851 = vmatmul.mubr.bf16.gmra.mrb[0].mxu0 %v1696
      %v1852 = vpop.f32.mrb[0].mxu0
      %v1853 = vadd.f32 0.0, %v1852
      %v1854 = vpop.f32.mrb[0].mxu0
      %v1855 = vpop.f32.mrb[0].mxu0
      %v1856 = vadd.f32 0.0, %v1855
      %v1857 = vpop.f32.mrb[0].mxu0
      %1858 = vmatprep.mubr.bf16.mxu0 0
      %1859 = vmatmul.mubr.bf16.gmra.mrb[0].mxu0 %v1697
      %v1860 = vpop.f32.mrb[0].mxu0
      %v1861 = vadd.f32 0.0, %v1860
      %v1862 = vpop.f32.mrb[0].mxu0
      %v1863 = vpop.f32.mrb[0].mxu0
      %v1864 = vadd.f32 0.0, %v1863
      %v1865 = vpop.f32.mrb[0].mxu0
      %1866 = vmatprep.mubr.bf16.mxu0 0
      %1867 = vmatmul.mubr.bf16.gmra.mrb[0].mxu0 %v1698
      %v1868 = vpop.f32.mrb[0].mxu0
      %v1869 = vadd.f32 0.0, %v1868
      %v1870 = vpop.f32.mrb[0].mxu0
      %v1871 = vpop.f32.mrb[0].mxu0
      %v1872 = vadd.f32 0.0, %v1871
      %v1873 = vpop.f32.mrb[0].mxu0
      %1874 = vmatprep.mubr.bf16.mxu0 0
      %1875 = vmatmul.mubr.bf16.gmra.mrb[0].mxu0 %v1699
      %v1876 = vpop.f32.mrb[0].mxu0
      %v1877 = vadd.f32 0.0, %v1876
      %v1878 = vpop.f32.mrb[0].mxu0
      %v1879 = vpop.f32.mrb[0].mxu0
      %v1880 = vadd.f32 0.0, %v1879
      %v1881 = vpop.f32.mrb[0].mxu0
      %1882 = vmatprep.mubr.bf16.mxu0 0
      %1883 = vmatmul.mubr.bf16.gmra.mrb[0].mxu0 %v1700
      %v1884 = vpop.f32.mrb[0].mxu0
      %v1885 = vadd.f32 0.0, %v1884
      %v1886 = vpop.f32.mrb[0].mxu0
      %v1887 = vpop.f32.mrb[0].mxu0
      %v1888 = vadd.f32 0.0, %v1887
      %v1889 = vpop.f32.mrb[0].mxu0
      %1890 = vmatprep.mubr.bf16.mxu0 0
      %1891 = vmatmul.mubr.bf16.gmra.mrb[0].mxu0 %v1701
      %v1892 = vpop.f32.mrb[0].mxu0
      %v1893 = vadd.f32 0.0, %v1892
      %v1894 = vpop.f32.mrb[0].mxu0
      %v1895 = vpop.f32.mrb[0].mxu0
      %v1896 = vadd.f32 0.0, %v1895
      %v1897 = vpop.f32.mrb[0].mxu0
      %1898 = vmatprep.mubr.bf16.mxu0 0
      %1899 = vmatmul.mubr.bf16.gmra.mrb[0].mxu0 %v1702
      %v1900 = vpop.f32.mrb[0].mxu0
      %v1901 = vadd.f32 0.0, %v1900
      %v1902 = vpop.f32.mrb[0].mxu0
      %v1903 = vpop.f32.mrb[0].mxu0
      %v1904 = vadd.f32 0.0, %v1903
      %v1905 = vpop.f32.mrb[0].mxu0
      %1906 = vmatprep.mubr.bf16.mxu0 0
      %1907 = vmatmul.mubr.bf16.gmra.mrb[0].mxu0 %v1703
      %v1908 = vpop.f32.mrb[0].mxu0
      %v1909 = vadd.f32 0.0, %v1908
      %v1910 = vpop.f32.mrb[0].mxu0
      %v1911 = vpop.f32.mrb[0].mxu0
      %v1912 = vadd.f32 0.0, %v1911
      %v1913 = vpop.f32.mrb[0].mxu0
      %1914 = vmatprep.mubr.bf16.mxu0 0
      %1915 = vmatmul.mubr.bf16.gmra.mrb[0].mxu0 %v1704
      %v1916 = vpop.f32.mrb[0].mxu0
      %v1917 = vadd.f32 0.0, %v1916
      %v1918 = vpop.f32.mrb[0].mxu0
      %v1919 = vpop.f32.mrb[0].mxu0
      %v1920 = vadd.f32 0.0, %v1919
      %v1921 = vpop.f32.mrb[0].mxu0
      %1922 = vmatprep.mubr.bf16.mxu0 0
      %1923 = vmatmul.mubr.bf16.gmra.mrb[0].mxu0 %v1705
      %v1924 = vpop.f32.mrb[0].mxu0
      %v1925 = vadd.f32 0.0, %v1924
      %v1926 = vpop.f32.mrb[0].mxu0
      %v1927 = vpop.f32.mrb[0].mxu0
      %v1928 = vadd.f32 0.0, %v1927
      %v1929 = vpop.f32.mrb[0].mxu0
      %1930 = vdwg.mxu0
      %v1931 = vadd.f32 %v1626, %v1805
      %v1932 = vadd.f32 %v1627, %v1808
      %v1933 = vadd.f32 %v1628, %v1813
      %v1934 = vadd.f32 %v1629, %v1816
      %v1935 = vadd.f32 %v1630, %v1821
      %v1936 = vadd.f32 %v1631, %v1824
      %v1937 = vadd.f32 %v1632, %v1829
      %v1938 = vadd.f32 %v1633, %v1832
      %v1939 = vadd.f32 %v1634, %v1837
      %v1940 = vadd.f32 %v1635, %v1840
      %v1941 = vadd.f32 %v1636, %v1845
      %v1942 = vadd.f32 %v1637, %v1848
      %v1943 = vadd.f32 %v1638, %v1853
      %v1944 = vadd.f32 %v1639, %v1856
      %v1945 = vadd.f32 %v1640, %v1861
      %v1946 = vadd.f32 %v1641, %v1864
      %v1947 = vadd.f32 %v1642, %v1869
      %v1948 = vadd.f32 %v1643, %v1872
      %v1949 = vadd.f32 %v1644, %v1877
      %v1950 = vadd.f32 %v1645, %v1880
      %v1951 = vadd.f32 %v1646, %v1885
      %v1952 = vadd.f32 %v1647, %v1888
      %v1953 = vadd.f32 %v1648, %v1893
      %v1954 = vadd.f32 %v1649, %v1896
      %v1955 = vadd.f32 %v1650, %v1901
      %v1956 = vadd.f32 %v1651, %v1904
      %v1957 = vadd.f32 %v1652, %v1909
      %v1958 = vadd.f32 %v1653, %v1912
      %v1959 = vadd.f32 %v1654, %v1917
      %v1960 = vadd.f32 %v1655, %v1920
      %v1961 = vadd.f32 %v1656, %v1925
      %v1962 = vadd.f32 %v1657, %v1928
      %v1963 = vld [vmem:[%s469 + $0x2] sm:$0xff]
      %v1964 = vld [vmem:[%s469 + $0xa] sm:$0xff]
      %v1965 = vld [vmem:[%s469 + $0x1a] sm:$0xff]
      %v1966 = vld [vmem:[%s469 + $0x22] sm:$0xff]
      %v1967 = vld [vmem:[%s469 + $0x32] sm:$0xff]
      %v1968 = vld [vmem:[%s469 + $0x3a] sm:$0xff]
      %v1969 = vld [vmem:[%s469 + $0x4a] sm:$0xff]
      %v1970 = vld [vmem:[%s469 + $0x52] sm:$0xff]
      %v1971 = vld [vmem:[%s469 + $0x62] sm:$0xff]
      %v1972 = vld [vmem:[%s469 + $0x6a] sm:$0xff]
      %v1973 = vld [vmem:[%s469 + $0x7a] sm:$0xff]
      %v1974 = vld [vmem:[%s469 + $0x82] sm:$0xff]
      %v1975 = vld [vmem:[%s469 + $0x92] sm:$0xff]
      %v1976 = vld [vmem:[%s469 + $0x9a] sm:$0xff]
      %v1977 = vld [vmem:[%s469 + $0xaa] sm:$0xff]
      %v1978 = vld [vmem:[%s469 + $0xb2] sm:$0xff]
      %v1979 = vld [vmem:[%s469 + $0xc2] sm:$0xff]
      %v1980 = vld [vmem:[%s469 + $0xca] sm:$0xff]
      %v1981 = vld [vmem:[%s469 + $0xda] sm:$0xff]
      %v1982 = vld [vmem:[%s469 + $0xe2] sm:$0xff]
      %v1983 = vld [vmem:[%s469 + $0xf2] sm:$0xff]
      %v1984 = vld [vmem:[%s469 + $0xfa] sm:$0xff]
      %v1985 = vld [vmem:[%s469 + $0x10a] sm:$0xff]
      %v1986 = vld [vmem:[%s469 + $0x112] sm:$0xff]
      %v1987 = vld [vmem:[%s469 + $0x122] sm:$0xff]
      %v1988 = vld [vmem:[%s469 + $0x12a] sm:$0xff]
      %v1989 = vld [vmem:[%s469 + $0x13a] sm:$0xff]
      %v1990 = vld [vmem:[%s469 + $0x142] sm:$0xff]
      %v1991 = vld [vmem:[%s469 + $0x152] sm:$0xff]
      %v1992 = vld [vmem:[%s469 + $0x15a] sm:$0xff]
      %v1993 = vld [vmem:[%s469 + $0x16a] sm:$0xff]
      %v1994 = vld [vmem:[%s469 + $0x172] sm:$0xff]
      %v1995 = vpack.c.bf16 %v1964, %v1963
      %v1996 = vpack.c.bf16 %v1966, %v1965
      %v1997 = vpack.c.bf16 %v1968, %v1967
      %v1998 = vpack.c.bf16 %v1970, %v1969
      %v1999 = vpack.c.bf16 %v1972, %v1971
      %v2000 = vpack.c.bf16 %v1974, %v1973
      %v2001 = vpack.c.bf16 %v1976, %v1975
      %v2002 = vpack.c.bf16 %v1978, %v1977
      %v2003 = vpack.c.bf16 %v1980, %v1979
      %v2004 = vpack.c.bf16 %v1982, %v1981
      %v2005 = vpack.c.bf16 %v1984, %v1983
      %v2006 = vpack.c.bf16 %v1986, %v1985
      %v2007 = vpack.c.bf16 %v1988, %v1987
      %v2008 = vpack.c.bf16 %v1990, %v1989
      %v2009 = vpack.c.bf16 %v1992, %v1991
      %v2010 = vpack.c.bf16 %v1994, %v1993
      %v2011 = vld [vmem:[%s3 + $0x140] sm:$0xf]
      %v2012 = vld [vmem:[%s3 + $0x144] sm:$0xf]
      %v2013 = vld [vmem:[%s3 + $0x148] sm:$0xf]
      %v2014 = vld [vmem:[%s3 + $0x14c] sm:$0xf]
      %v2015 = vld [vmem:[%s3 + $0x150] sm:$0xf]
      %v2016 = vld [vmem:[%s3 + $0x154] sm:$0xf]
      %v2017 = vld [vmem:[%s3 + $0x158] sm:$0xf]
      %v2018 = vld [vmem:[%s3 + $0x15c] sm:$0xf]
      %v2019 = vld [vmem:[%s3 + $0x160] sm:$0xf]
      %v2020 = vld [vmem:[%s3 + $0x164] sm:$0xf]
      %v2021 = vld [vmem:[%s3 + $0x168] sm:$0xf]
      %v2022 = vld [vmem:[%s3 + $0x16c] sm:$0xf]
      %v2023 = vld [vmem:[%s3 + $0x170] sm:$0xf]
      %v2024 = vld [vmem:[%s3 + $0x174] sm:$0xf]
      %v2025 = vld [vmem:[%s3 + $0x178] sm:$0xf]
      %v2026 = vld [vmem:[%s3 + $0x17c] sm:$0xf]
      %v2043 = vunpack.c.l.b16 %v2011
      %v2044 = vunpack.c.l.b16 %v2012
      %v2045 = vunpack.c.l.b16 %v2013
      %v2046 = vunpack.c.l.b16 %v2014
      %v2047 = vunpack.c.l.b16 %v2015
      %v2048 = vunpack.c.l.b16 %v2016
      %v2049 = vunpack.c.l.b16 %v2017
      %v2050 = vunpack.c.l.b16 %v2018
      %v2051 = vunpack.c.l.b16 %v2019
      %v2052 = vunpack.c.l.b16 %v2020
      %v2053 = vunpack.c.l.b16 %v2021
      %v2054 = vunpack.c.l.b16 %v2022
      %v2055 = vunpack.c.l.b16 %v2023
      %v2056 = vunpack.c.l.b16 %v2024
      %v2057 = vunpack.c.l.b16 %v2025
      %v2058 = vunpack.c.l.b16 %v2026
      %v2059 = vpack.c.b16 %v2044, %v2043
      %v2060 = vpack.c.b16 %v2046, %v2045
      %v2061 = vpack.c.b16 %v2048, %v2047
      %v2062 = vpack.c.b16 %v2050, %v2049
      %v2063 = vpack.c.b16 %v2052, %v2051
      %v2064 = vpack.c.b16 %v2054, %v2053
      %v2065 = vpack.c.b16 %v2056, %v2055
      %v2066 = vpack.c.b16 %v2058, %v2057
      %2075 = vmatprep.subr.bf16.mxu0 0
      %2076 = vmatpush1.bf16.msra.mxu0 %v2059
      %2077 = vmatprep.subr.bf16.mxu0 0
      %2078 = vmatpush1.bf16.msra.mxu0 %v2060
      %2079 = vmatprep.subr.bf16.mxu0 0
      %2080 = vmatpush1.bf16.msra.mxu0 %v2061
      %2081 = vmatprep.subr.bf16.mxu0 0
      %2082 = vmatpush1.bf16.msra.mxu0 %v2062
      %2083 = vmatprep.subr.bf16.mxu0 0
      %2084 = vmatpush1.bf16.msra.mxu0 %v2063
      %2085 = vmatprep.subr.bf16.mxu0 0
      %2086 = vmatpush1.bf16.msra.mxu0 %v2064
      %2087 = vmatprep.subr.bf16.mxu0 0
      %2088 = vmatpush1.bf16.msra.mxu0 %v2065
      %2089 = vmatprep.subr.bf16.mxu0 0
      %2090 = vmatpush1.bf16.msra.mxu0 %v2066
      %2091 = vmatprep.subr.bf16.mxu0 0
      %2092 = vmatpush1.bf16.msra.mxu0 0
      %2093 = vmatprep.subr.bf16.mxu0 0
      %2094 = vmatpush1.bf16.msra.mxu0 0
      %2095 = vmatprep.subr.bf16.mxu0 0
      %2096 = vmatpush1.bf16.msra.mxu0 0
      %2097 = vmatprep.subr.bf16.mxu0 0
      %2098 = vmatpush1.bf16.msra.mxu0 0
      %2099 = vmatprep.subr.bf16.mxu0 0
      %2100 = vmatpush1.bf16.msra.mxu0 0
      %2101 = vmatprep.subr.bf16.mxu0 0
      %2102 = vmatpush1.bf16.msra.mxu0 0
      %2103 = vmatprep.subr.bf16.mxu0 0
      %2104 = vmatpush1.bf16.msra.mxu0 0
      %2105 = vmatprep.subr.bf16.mxu0 0
      %2106 = vmatpush1.bf16.msra.mxu0 0
      %2107 = vmatprep.mubr.bf16.mxu0 0
      %2108 = vmatmul.mubr.bf16.gmra.mrb[0].mxu0 %v1995
      %v2109 = vpop.f32.mrb[0].mxu0
      %v2110 = vadd.f32 0.0, %v2109
      %v2111 = vpop.f32.mrb[0].mxu0
      %v2112 = vpop.f32.mrb[0].mxu0
      %v2113 = vadd.f32 0.0, %v2112
      %v2114 = vpop.f32.mrb[0].mxu0
      %2115 = vmatprep.mubr.bf16.mxu0 0
      %2116 = vmatmul.mubr.bf16.gmra.mrb[0].mxu0 %v1996
      %v2117 = vpop.f32.mrb[0].mxu0
      %v2118 = vadd.f32 0.0, %v2117
      %v2119 = vpop.f32.mrb[0].mxu0
      %v2120 = vpop.f32.mrb[0].mxu0
      %v2121 = vadd.f32 0.0, %v2120
      %v2122 = vpop.f32.mrb[0].mxu0
      %2123 = vmatprep.mubr.bf16.mxu0 0
      %2124 = vmatmul.mubr.bf16.gmra.mrb[0].mxu0 %v1997
      %v2125 = vpop.f32.mrb[0].mxu0
      %v2126 = vadd.f32 0.0, %v2125
      %v2127 = vpop.f32.mrb[0].mxu0
      %v2128 = vpop.f32.mrb[0].mxu0
      %v2129 = vadd.f32 0.0, %v2128
      %v2130 = vpop.f32.mrb[0].mxu0
      %2131 = vmatprep.mubr.bf16.mxu0 0
      %2132 = vmatmul.mubr.bf16.gmra.mrb[0].mxu0 %v1998
      %v2133 = vpop.f32.mrb[0].mxu0
      %v2134 = vadd.f32 0.0, %v2133
      %v2135 = vpop.f32.mrb[0].mxu0
      %v2136 = vpop.f32.mrb[0].mxu0
      %v2137 = vadd.f32 0.0, %v2136
      %v2138 = vpop.f32.mrb[0].mxu0
      %2139 = vmatprep.mubr.bf16.mxu0 0
      %2140 = vmatmul.mubr.bf16.gmra.mrb[0].mxu0 %v1999
      %v2141 = vpop.f32.mrb[0].mxu0
      %v2142 = vadd.f32 0.0, %v2141
      %v2143 = vpop.f32.mrb[0].mxu0
      %v2144 = vpop.f32.mrb[0].mxu0
      %v2145 = vadd.f32 0.0, %v2144
      %v2146 = vpop.f32.mrb[0].mxu0
      %2147 = vmatprep.mubr.bf16.mxu0 0
      %2148 = vmatmul.mubr.bf16.gmra.mrb[0].mxu0 %v2000
      %v2149 = vpop.f32.mrb[0].mxu0
      %v2150 = vadd.f32 0.0, %v2149
      %v2151 = vpop.f32.mrb[0].mxu0
      %v2152 = vpop.f32.mrb[0].mxu0
      %v2153 = vadd.f32 0.0, %v2152
      %v2154 = vpop.f32.mrb[0].mxu0
      %2155 = vmatprep.mubr.bf16.mxu0 0
      %2156 = vmatmul.mubr.bf16.gmra.mrb[0].mxu0 %v2001
      %v2157 = vpop.f32.mrb[0].mxu0
      %v2158 = vadd.f32 0.0, %v2157
      %v2159 = vpop.f32.mrb[0].mxu0
      %v2160 = vpop.f32.mrb[0].mxu0
      %v2161 = vadd.f32 0.0, %v2160
      %v2162 = vpop.f32.mrb[0].mxu0
      %2163 = vmatprep.mubr.bf16.mxu0 0
      %2164 = vmatmul.mubr.bf16.gmra.mrb[0].mxu0 %v2002
      %v2165 = vpop.f32.mrb[0].mxu0
      %v2166 = vadd.f32 0.0, %v2165
      %v2167 = vpop.f32.mrb[0].mxu0
      %v2168 = vpop.f32.mrb[0].mxu0
      %v2169 = vadd.f32 0.0, %v2168
      %v2170 = vpop.f32.mrb[0].mxu0
      %2171 = vmatprep.mubr.bf16.mxu0 0
      %2172 = vmatmul.mubr.bf16.gmra.mrb[0].mxu0 %v2003
      %v2173 = vpop.f32.mrb[0].mxu0
      %v2174 = vadd.f32 0.0, %v2173
      %v2175 = vpop.f32.mrb[0].mxu0
      %v2176 = vpop.f32.mrb[0].mxu0
      %v2177 = vadd.f32 0.0, %v2176
      %v2178 = vpop.f32.mrb[0].mxu0
      %2179 = vmatprep.mubr.bf16.mxu0 0
      %2180 = vmatmul.mubr.bf16.gmra.mrb[0].mxu0 %v2004
      %v2181 = vpop.f32.mrb[0].mxu0
      %v2182 = vadd.f32 0.0, %v2181
      %v2183 = vpop.f32.mrb[0].mxu0
      %v2184 = vpop.f32.mrb[0].mxu0
      %v2185 = vadd.f32 0.0, %v2184
      %v2186 = vpop.f32.mrb[0].mxu0
      %2187 = vmatprep.mubr.bf16.mxu0 0
      %2188 = vmatmul.mubr.bf16.gmra.mrb[0].mxu0 %v2005
      %v2189 = vpop.f32.mrb[0].mxu0
      %v2190 = vadd.f32 0.0, %v2189
      %v2191 = vpop.f32.mrb[0].mxu0
      %v2192 = vpop.f32.mrb[0].mxu0
      %v2193 = vadd.f32 0.0, %v2192
      %v2194 = vpop.f32.mrb[0].mxu0
      %2195 = vmatprep.mubr.bf16.mxu0 0
      %2196 = vmatmul.mubr.bf16.gmra.mrb[0].mxu0 %v2006
      %v2197 = vpop.f32.mrb[0].mxu0
      %v2198 = vadd.f32 0.0, %v2197
      %v2199 = vpop.f32.mrb[0].mxu0
      %v2200 = vpop.f32.mrb[0].mxu0
      %v2201 = vadd.f32 0.0, %v2200
      %v2202 = vpop.f32.mrb[0].mxu0
      %2203 = vmatprep.mubr.bf16.mxu0 0
      %2204 = vmatmul.mubr.bf16.gmra.mrb[0].mxu0 %v2007
      %v2205 = vpop.f32.mrb[0].mxu0
      %v2206 = vadd.f32 0.0, %v2205
      %v2207 = vpop.f32.mrb[0].mxu0
      %v2208 = vpop.f32.mrb[0].mxu0
      %v2209 = vadd.f32 0.0, %v2208
      %v2210 = vpop.f32.mrb[0].mxu0
      %2211 = vmatprep.mubr.bf16.mxu0 0
      %2212 = vmatmul.mubr.bf16.gmra.mrb[0].mxu0 %v2008
      %v2213 = vpop.f32.mrb[0].mxu0
      %v2214 = vadd.f32 0.0, %v2213
      %v2215 = vpop.f32.mrb[0].mxu0
      %v2216 = vpop.f32.mrb[0].mxu0
      %v2217 = vadd.f32 0.0, %v2216
      %v2218 = vpop.f32.mrb[0].mxu0
      %2219 = vmatprep.mubr.bf16.mxu0 0
      %2220 = vmatmul.mubr.bf16.gmra.mrb[0].mxu0 %v2009
      %v2221 = vpop.f32.mrb[0].mxu0
      %v2222 = vadd.f32 0.0, %v2221
      %v2223 = vpop.f32.mrb[0].mxu0
      %v2224 = vpop.f32.mrb[0].mxu0
      %v2225 = vadd.f32 0.0, %v2224
      %v2226 = vpop.f32.mrb[0].mxu0
      %2227 = vmatprep.mubr.bf16.mxu0 0
      %2228 = vmatmul.mubr.bf16.gmra.mrb[0].mxu0 %v2010
      %v2229 = vpop.f32.mrb[0].mxu0
      %v2230 = vadd.f32 0.0, %v2229
      %v2231 = vpop.f32.mrb[0].mxu0
      %v2232 = vpop.f32.mrb[0].mxu0
      %v2233 = vadd.f32 0.0, %v2232
      %v2234 = vpop.f32.mrb[0].mxu0
      %2235 = vdwg.mxu0
      %v2236 = vadd.f32 %v1931, %v2110
      %v2237 = vadd.f32 %v1932, %v2113
      %v2238 = vadd.f32 %v1933, %v2118
      %v2239 = vadd.f32 %v1934, %v2121
      %v2240 = vadd.f32 %v1935, %v2126
      %v2241 = vadd.f32 %v1936, %v2129
      %v2242 = vadd.f32 %v1937, %v2134
      %v2243 = vadd.f32 %v1938, %v2137
      %v2244 = vadd.f32 %v1939, %v2142
      %v2245 = vadd.f32 %v1940, %v2145
      %v2246 = vadd.f32 %v1941, %v2150
      %v2247 = vadd.f32 %v1942, %v2153
      %v2248 = vadd.f32 %v1943, %v2158
      %v2249 = vadd.f32 %v1944, %v2161
      %v2250 = vadd.f32 %v1945, %v2166
      %v2251 = vadd.f32 %v1946, %v2169
      %v2252 = vadd.f32 %v1947, %v2174
      %v2253 = vadd.f32 %v1948, %v2177
      %v2254 = vadd.f32 %v1949, %v2182
      %v2255 = vadd.f32 %v1950, %v2185
      %v2256 = vadd.f32 %v1951, %v2190
      %v2257 = vadd.f32 %v1952, %v2193
      %v2258 = vadd.f32 %v1953, %v2198
      %v2259 = vadd.f32 %v1954, %v2201
      %v2260 = vadd.f32 %v1955, %v2206
      %v2261 = vadd.f32 %v1956, %v2209
      %v2262 = vadd.f32 %v1957, %v2214
      %v2263 = vadd.f32 %v1958, %v2217
      %v2264 = vadd.f32 %v1959, %v2222
      %v2265 = vadd.f32 %v1960, %v2225
      %v2266 = vadd.f32 %v1961, %v2230
      %v2267 = vadd.f32 %v1962, %v2233
      %s2268 = scalar_lea.vmem [#allocation2], 48
      %v2269 = vld [vmem:[%s2268] sm:$0xff]
      %v2270 = vld [vmem:[%s2268 + $0x8] sm:$0xff]
      %v2271 = vld [vmem:[%s2268 + $0x18] sm:$0xff]
      %v2272 = vld [vmem:[%s2268 + $0x20] sm:$0xff]
      %v2273 = vld [vmem:[%s2268 + $0x30] sm:$0xff]
      %v2274 = vld [vmem:[%s2268 + $0x38] sm:$0xff]
      %v2275 = vld [vmem:[%s2268 + $0x48] sm:$0xff]
      %v2276 = vld [vmem:[%s2268 + $0x50] sm:$0xff]
      %v2277 = vld [vmem:[%s2268 + $0x60] sm:$0xff]
      %v2278 = vld [vmem:[%s2268 + $0x68] sm:$0xff]
      %v2279 = vld [vmem:[%s2268 + $0x78] sm:$0xff]
      %v2280 = vld [vmem:[%s2268 + $0x80] sm:$0xff]
      %v2281 = vld [vmem:[%s2268 + $0x90] sm:$0xff]
      %v2282 = vld [vmem:[%s2268 + $0x98] sm:$0xff]
      %v2283 = vld [vmem:[%s2268 + $0xa8] sm:$0xff]
      %v2284 = vld [vmem:[%s2268 + $0xb0] sm:$0xff]
      %v2285 = vld [vmem:[%s2268 + $0xc0] sm:$0xff]
      %v2286 = vld [vmem:[%s2268 + $0xc8] sm:$0xff]
      %v2287 = vld [vmem:[%s2268 + $0xd8] sm:$0xff]
      %v2288 = vld [vmem:[%s2268 + $0xe0] sm:$0xff]
      %v2289 = vld [vmem:[%s2268 + $0xf0] sm:$0xff]
      %v2290 = vld [vmem:[%s2268 + $0xf8] sm:$0xff]
      %v2291 = vld [vmem:[%s2268 + $0x108] sm:$0xff]
      %v2292 = vld [vmem:[%s2268 + $0x110] sm:$0xff]
      %v2293 = vld [vmem:[%s2268 + $0x120] sm:$0xff]
      %v2294 = vld [vmem:[%s2268 + $0x128] sm:$0xff]
      %v2295 = vld [vmem:[%s2268 + $0x138] sm:$0xff]
      %v2296 = vld [vmem:[%s2268 + $0x140] sm:$0xff]
      %v2297 = vld [vmem:[%s2268 + $0x150] sm:$0xff]
      %v2298 = vld [vmem:[%s2268 + $0x158] sm:$0xff]
      %v2299 = vld [vmem:[%s2268 + $0x168] sm:$0xff]
      %v2300 = vld [vmem:[%s2268 + $0x170] sm:$0xff]
      %v2301 = vpack.c.bf16 %v2270, %v2269
      %v2302 = vpack.c.bf16 %v2272, %v2271
      %v2303 = vpack.c.bf16 %v2274, %v2273
      %v2304 = vpack.c.bf16 %v2276, %v2275
      %v2305 = vpack.c.bf16 %v2278, %v2277
      %v2306 = vpack.c.bf16 %v2280, %v2279
      %v2307 = vpack.c.bf16 %v2282, %v2281
      %v2308 = vpack.c.bf16 %v2284, %v2283
      %v2309 = vpack.c.bf16 %v2286, %v2285
      %v2310 = vpack.c.bf16 %v2288, %v2287
      %v2311 = vpack.c.bf16 %v2290, %v2289
      %v2312 = vpack.c.bf16 %v2292, %v2291
      %v2313 = vpack.c.bf16 %v2294, %v2293
      %v2314 = vpack.c.bf16 %v2296, %v2295
      %v2315 = vpack.c.bf16 %v2298, %v2297
      %v2316 = vpack.c.bf16 %v2300, %v2299
      %v2317 = vld [vmem:[%s3 + $0x180] sm:$0xf]
      %v2318 = vld [vmem:[%s3 + $0x184] sm:$0xf]
      %v2319 = vld [vmem:[%s3 + $0x188] sm:$0xf]
      %v2320 = vld [vmem:[%s3 + $0x18c] sm:$0xf]
      %v2321 = vld [vmem:[%s3 + $0x190] sm:$0xf]
      %v2322 = vld [vmem:[%s3 + $0x194] sm:$0xf]
      %v2323 = vld [vmem:[%s3 + $0x198] sm:$0xf]
      %v2324 = vld [vmem:[%s3 + $0x19c] sm:$0xf]
      %v2325 = vld [vmem:[%s3 + $0x1a0] sm:$0xf]
      %v2326 = vld [vmem:[%s3 + $0x1a4] sm:$0xf]
      %v2327 = vld [vmem:[%s3 + $0x1a8] sm:$0xf]
      %v2328 = vld [vmem:[%s3 + $0x1ac] sm:$0xf]
      %v2329 = vld [vmem:[%s3 + $0x1b0] sm:$0xf]
      %v2330 = vld [vmem:[%s3 + $0x1b4] sm:$0xf]
      %v2331 = vld [vmem:[%s3 + $0x1b8] sm:$0xf]
      %v2332 = vld [vmem:[%s3 + $0x1bc] sm:$0xf]
      %v2349 = vunpack.c.l.b16 %v2317
      %v2350 = vunpack.c.l.b16 %v2318
      %v2351 = vunpack.c.l.b16 %v2319
      %v2352 = vunpack.c.l.b16 %v2320
      %v2353 = vunpack.c.l.b16 %v2321
      %v2354 = vunpack.c.l.b16 %v2322
      %v2355 = vunpack.c.l.b16 %v2323
      %v2356 = vunpack.c.l.b16 %v2324
      %v2357 = vunpack.c.l.b16 %v2325
      %v2358 = vunpack.c.l.b16 %v2326
      %v2359 = vunpack.c.l.b16 %v2327
      %v2360 = vunpack.c.l.b16 %v2328
      %v2361 = vunpack.c.l.b16 %v2329
      %v2362 = vunpack.c.l.b16 %v2330
      %v2363 = vunpack.c.l.b16 %v2331
      %v2364 = vunpack.c.l.b16 %v2332
      %v2365 = vpack.c.b16 %v2350, %v2349
      %v2366 = vpack.c.b16 %v2352, %v2351
      %v2367 = vpack.c.b16 %v2354, %v2353
      %v2368 = vpack.c.b16 %v2356, %v2355
      %v2369 = vpack.c.b16 %v2358, %v2357
      %v2370 = vpack.c.b16 %v2360, %v2359
      %v2371 = vpack.c.b16 %v2362, %v2361
      %v2372 = vpack.c.b16 %v2364, %v2363
      %2381 = vmatprep.subr.bf16.mxu0 0
      %2382 = vmatpush1.bf16.msra.mxu0 %v2365
      %2383 = vmatprep.subr.bf16.mxu0 0
      %2384 = vmatpush1.bf16.msra.mxu0 %v2366
      %2385 = vmatprep.subr.bf16.mxu0 0
      %2386 = vmatpush1.bf16.msra.mxu0 %v2367
      %2387 = vmatprep.subr.bf16.mxu0 0
      %2388 = vmatpush1.bf16.msra.mxu0 %v2368
      %2389 = vmatprep.subr.bf16.mxu0 0
      %2390 = vmatpush1.bf16.msra.mxu0 %v2369
      %2391 = vmatprep.subr.bf16.mxu0 0
      %2392 = vmatpush1.bf16.msra.mxu0 %v2370
      %2393 = vmatprep.subr.bf16.mxu0 0
      %2394 = vmatpush1.bf16.msra.mxu0 %v2371
      %2395 = vmatprep.subr.bf16.mxu0 0
      %2396 = vmatpush1.bf16.msra.mxu0 %v2372
      %2397 = vmatprep.subr.bf16.mxu0 0
      %2398 = vmatpush1.bf16.msra.mxu0 0
      %2399 = vmatprep.subr.bf16.mxu0 0
      %2400 = vmatpush1.bf16.msra.mxu0 0
      %2401 = vmatprep.subr.bf16.mxu0 0
      %2402 = vmatpush1.bf16.msra.mxu0 0
      %2403 = vmatprep.subr.bf16.mxu0 0
      %2404 = vmatpush1.bf16.msra.mxu0 0
      %2405 = vmatprep.subr.bf16.mxu0 0
      %2406 = vmatpush1.bf16.msra.mxu0 0
      %2407 = vmatprep.subr.bf16.mxu0 0
      %2408 = vmatpush1.bf16.msra.mxu0 0
      %2409 = vmatprep.subr.bf16.mxu0 0
      %2410 = vmatpush1.bf16.msra.mxu0 0
      %2411 = vmatprep.subr.bf16.mxu0 0
      %2412 = vmatpush1.bf16.msra.mxu0 0
      %2413 = vmatprep.mubr.bf16.mxu0 0
      %2414 = vmatmul.mubr.bf16.gmra.mrb[0].mxu0 %v2301
      %v2415 = vpop.f32.mrb[0].mxu0
      %v2416 = vadd.f32 0.0, %v2415
      %v2417 = vpop.f32.mrb[0].mxu0
      %v2418 = vpop.f32.mrb[0].mxu0
      %v2419 = vadd.f32 0.0, %v2418
      %v2420 = vpop.f32.mrb[0].mxu0
      %2421 = vmatprep.mubr.bf16.mxu0 0
      %2422 = vmatmul.mubr.bf16.gmra.mrb[0].mxu0 %v2302
      %v2423 = vpop.f32.mrb[0].mxu0
      %v2424 = vadd.f32 0.0, %v2423
      %v2425 = vpop.f32.mrb[0].mxu0
      %v2426 = vpop.f32.mrb[0].mxu0
      %v2427 = vadd.f32 0.0, %v2426
      %v2428 = vpop.f32.mrb[0].mxu0
      %2429 = vmatprep.mubr.bf16.mxu0 0
      %2430 = vmatmul.mubr.bf16.gmra.mrb[0].mxu0 %v2303
      %v2431 = vpop.f32.mrb[0].mxu0
      %v2432 = vadd.f32 0.0, %v2431
      %v2433 = vpop.f32.mrb[0].mxu0
      %v2434 = vpop.f32.mrb[0].mxu0
      %v2435 = vadd.f32 0.0, %v2434
      %v2436 = vpop.f32.mrb[0].mxu0
      %2437 = vmatprep.mubr.bf16.mxu0 0
      %2438 = vmatmul.mubr.bf16.gmra.mrb[0].mxu0 %v2304
      %v2439 = vpop.f32.mrb[0].mxu0
      %v2440 = vadd.f32 0.0, %v2439
      %v2441 = vpop.f32.mrb[0].mxu0
      %v2442 = vpop.f32.mrb[0].mxu0
      %v2443 = vadd.f32 0.0, %v2442
      %v2444 = vpop.f32.mrb[0].mxu0
      %2445 = vmatprep.mubr.bf16.mxu0 0
      %2446 = vmatmul.mubr.bf16.gmra.mrb[0].mxu0 %v2305
      %v2447 = vpop.f32.mrb[0].mxu0
      %v2448 = vadd.f32 0.0, %v2447
      %v2449 = vpop.f32.mrb[0].mxu0
      %v2450 = vpop.f32.mrb[0].mxu0
      %v2451 = vadd.f32 0.0, %v2450
      %v2452 = vpop.f32.mrb[0].mxu0
      %2453 = vmatprep.mubr.bf16.mxu0 0
      %2454 = vmatmul.mubr.bf16.gmra.mrb[0].mxu0 %v2306
      %v2455 = vpop.f32.mrb[0].mxu0
      %v2456 = vadd.f32 0.0, %v2455
      %v2457 = vpop.f32.mrb[0].mxu0
      %v2458 = vpop.f32.mrb[0].mxu0
      %v2459 = vadd.f32 0.0, %v2458
      %v2460 = vpop.f32.mrb[0].mxu0
      %2461 = vmatprep.mubr.bf16.mxu0 0
      %2462 = vmatmul.mubr.bf16.gmra.mrb[0].mxu0 %v2307
      %v2463 = vpop.f32.mrb[0].mxu0
      %v2464 = vadd.f32 0.0, %v2463
      %v2465 = vpop.f32.mrb[0].mxu0
      %v2466 = vpop.f32.mrb[0].mxu0
      %v2467 = vadd.f32 0.0, %v2466
      %v2468 = vpop.f32.mrb[0].mxu0
      %2469 = vmatprep.mubr.bf16.mxu0 0
      %2470 = vmatmul.mubr.bf16.gmra.mrb[0].mxu0 %v2308
      %v2471 = vpop.f32.mrb[0].mxu0
      %v2472 = vadd.f32 0.0, %v2471
      %v2473 = vpop.f32.mrb[0].mxu0
      %v2474 = vpop.f32.mrb[0].mxu0
      %v2475 = vadd.f32 0.0, %v2474
      %v2476 = vpop.f32.mrb[0].mxu0
      %2477 = vmatprep.mubr.bf16.mxu0 0
      %2478 = vmatmul.mubr.bf16.gmra.mrb[0].mxu0 %v2309
      %v2479 = vpop.f32.mrb[0].mxu0
      %v2480 = vadd.f32 0.0, %v2479
      %v2481 = vpop.f32.mrb[0].mxu0
      %v2482 = vpop.f32.mrb[0].mxu0
      %v2483 = vadd.f32 0.0, %v2482
      %v2484 = vpop.f32.mrb[0].mxu0
      %2485 = vmatprep.mubr.bf16.mxu0 0
      %2486 = vmatmul.mubr.bf16.gmra.mrb[0].mxu0 %v2310
      %v2487 = vpop.f32.mrb[0].mxu0
      %v2488 = vadd.f32 0.0, %v2487
      %v2489 = vpop.f32.mrb[0].mxu0
      %v2490 = vpop.f32.mrb[0].mxu0
      %v2491 = vadd.f32 0.0, %v2490
      %v2492 = vpop.f32.mrb[0].mxu0
      %2493 = vmatprep.mubr.bf16.mxu0 0
      %2494 = vmatmul.mubr.bf16.gmra.mrb[0].mxu0 %v2311
      %v2495 = vpop.f32.mrb[0].mxu0
      %v2496 = vadd.f32 0.0, %v2495
      %v2497 = vpop.f32.mrb[0].mxu0
      %v2498 = vpop.f32.mrb[0].mxu0
      %v2499 = vadd.f32 0.0, %v2498
      %v2500 = vpop.f32.mrb[0].mxu0
      %2501 = vmatprep.mubr.bf16.mxu0 0
      %2502 = vmatmul.mubr.bf16.gmra.mrb[0].mxu0 %v2312
      %v2503 = vpop.f32.mrb[0].mxu0
      %v2504 = vadd.f32 0.0, %v2503
      %v2505 = vpop.f32.mrb[0].mxu0
      %v2506 = vpop.f32.mrb[0].mxu0
      %v2507 = vadd.f32 0.0, %v2506
      %v2508 = vpop.f32.mrb[0].mxu0
      %2509 = vmatprep.mubr.bf16.mxu0 0
      %2510 = vmatmul.mubr.bf16.gmra.mrb[0].mxu0 %v2313
      %v2511 = vpop.f32.mrb[0].mxu0
      %v2512 = vadd.f32 0.0, %v2511
      %v2513 = vpop.f32.mrb[0].mxu0
      %v2514 = vpop.f32.mrb[0].mxu0
      %v2515 = vadd.f32 0.0, %v2514
      %v2516 = vpop.f32.mrb[0].mxu0
      %2517 = vmatprep.mubr.bf16.mxu0 0
      %2518 = vmatmul.mubr.bf16.gmra.mrb[0].mxu0 %v2314
      %v2519 = vpop.f32.mrb[0].mxu0
      %v2520 = vadd.f32 0.0, %v2519
      %v2521 = vpop.f32.mrb[0].mxu0
      %v2522 = vpop.f32.mrb[0].mxu0
      %v2523 = vadd.f32 0.0, %v2522
      %v2524 = vpop.f32.mrb[0].mxu0
      %2525 = vmatprep.mubr.bf16.mxu0 0
      %2526 = vmatmul.mubr.bf16.gmra.mrb[0].mxu0 %v2315
      %v2527 = vpop.f32.mrb[0].mxu0
      %v2528 = vadd.f32 0.0, %v2527
      %v2529 = vpop.f32.mrb[0].mxu0
      %v2530 = vpop.f32.mrb[0].mxu0
      %v2531 = vadd.f32 0.0, %v2530
      %v2532 = vpop.f32.mrb[0].mxu0
      %2533 = vmatprep.mubr.bf16.mxu0 0
      %2534 = vmatmul.mubr.bf16.gmra.mrb[0].mxu0 %v2316
      %v2535 = vpop.f32.mrb[0].mxu0
      %v2536 = vadd.f32 0.0, %v2535
      %v2537 = vpop.f32.mrb[0].mxu0
      %v2538 = vpop.f32.mrb[0].mxu0
      %v2539 = vadd.f32 0.0, %v2538
      %v2540 = vpop.f32.mrb[0].mxu0
      %2541 = vdwg.mxu0
      %v2542 = vadd.f32 %v2236, %v2416
      %v2543 = vadd.f32 %v2237, %v2419
      %v2544 = vadd.f32 %v2238, %v2424
      %v2545 = vadd.f32 %v2239, %v2427
      %v2546 = vadd.f32 %v2240, %v2432
      %v2547 = vadd.f32 %v2241, %v2435
      %v2548 = vadd.f32 %v2242, %v2440
      %v2549 = vadd.f32 %v2243, %v2443
      %v2550 = vadd.f32 %v2244, %v2448
      %v2551 = vadd.f32 %v2245, %v2451
      %v2552 = vadd.f32 %v2246, %v2456
      %v2553 = vadd.f32 %v2247, %v2459
      %v2554 = vadd.f32 %v2248, %v2464
      %v2555 = vadd.f32 %v2249, %v2467
      %v2556 = vadd.f32 %v2250, %v2472
      %v2557 = vadd.f32 %v2251, %v2475
      %v2558 = vadd.f32 %v2252, %v2480
      %v2559 = vadd.f32 %v2253, %v2483
      %v2560 = vadd.f32 %v2254, %v2488
      %v2561 = vadd.f32 %v2255, %v2491
      %v2562 = vadd.f32 %v2256, %v2496
      %v2563 = vadd.f32 %v2257, %v2499
      %v2564 = vadd.f32 %v2258, %v2504
      %v2565 = vadd.f32 %v2259, %v2507
      %v2566 = vadd.f32 %v2260, %v2512
      %v2567 = vadd.f32 %v2261, %v2515
      %v2568 = vadd.f32 %v2262, %v2520
      %v2569 = vadd.f32 %v2263, %v2523
      %v2570 = vadd.f32 %v2264, %v2528
      %v2571 = vadd.f32 %v2265, %v2531
      %v2572 = vadd.f32 %v2266, %v2536
      %v2573 = vadd.f32 %v2267, %v2539
      %v2574 = vld [vmem:[%s2268 + $0x1] sm:$0xff]
      %v2575 = vld [vmem:[%s2268 + $0x9] sm:$0xff]
      %v2576 = vld [vmem:[%s2268 + $0x19] sm:$0xff]
      %v2577 = vld [vmem:[%s2268 + $0x21] sm:$0xff]
      %v2578 = vld [vmem:[%s2268 + $0x31] sm:$0xff]
      %v2579 = vld [vmem:[%s2268 + $0x39] sm:$0xff]
      %v2580 = vld [vmem:[%s2268 + $0x49] sm:$0xff]
      %v2581 = vld [vmem:[%s2268 + $0x51] sm:$0xff]
      %v2582 = vld [vmem:[%s2268 + $0x61] sm:$0xff]
      %v2583 = vld [vmem:[%s2268 + $0x69] sm:$0xff]
      %v2584 = vld [vmem:[%s2268 + $0x79] sm:$0xff]
      %v2585 = vld [vmem:[%s2268 + $0x81] sm:$0xff]
      %v2586 = vld [vmem:[%s2268 + $0x91] sm:$0xff]
      %v2587 = vld [vmem:[%s2268 + $0x99] sm:$0xff]
      %v2588 = vld [vmem:[%s2268 + $0xa9] sm:$0xff]
      %v2589 = vld [vmem:[%s2268 + $0xb1] sm:$0xff]
      %v2590 = vld [vmem:[%s2268 + $0xc1] sm:$0xff]
      %v2591 = vld [vmem:[%s2268 + $0xc9] sm:$0xff]
      %v2592 = vld [vmem:[%s2268 + $0xd9] sm:$0xff]
      %v2593 = vld [vmem:[%s2268 + $0xe1] sm:$0xff]
      %v2594 = vld [vmem:[%s2268 + $0xf1] sm:$0xff]
      %v2595 = vld [vmem:[%s2268 + $0xf9] sm:$0xff]
      %v2596 = vld [vmem:[%s2268 + $0x109] sm:$0xff]
      %v2597 = vld [vmem:[%s2268 + $0x111] sm:$0xff]
      %v2598 = vld [vmem:[%s2268 + $0x121] sm:$0xff]
      %v2599 = vld [vmem:[%s2268 + $0x129] sm:$0xff]
      %v2600 = vld [vmem:[%s2268 + $0x139] sm:$0xff]
      %v2601 = vld [vmem:[%s2268 + $0x141] sm:$0xff]
      %v2602 = vld [vmem:[%s2268 + $0x151] sm:$0xff]
      %v2603 = vld [vmem:[%s2268 + $0x159] sm:$0xff]
      %v2604 = vld [vmem:[%s2268 + $0x169] sm:$0xff]
      %v2605 = vld [vmem:[%s2268 + $0x171] sm:$0xff]
      %v2606 = vpack.c.bf16 %v2575, %v2574
      %v2607 = vpack.c.bf16 %v2577, %v2576
      %v2608 = vpack.c.bf16 %v2579, %v2578
      %v2609 = vpack.c.bf16 %v2581, %v2580
      %v2610 = vpack.c.bf16 %v2583, %v2582
      %v2611 = vpack.c.bf16 %v2585, %v2584
      %v2612 = vpack.c.bf16 %v2587, %v2586
      %v2613 = vpack.c.bf16 %v2589, %v2588
      %v2614 = vpack.c.bf16 %v2591, %v2590
      %v2615 = vpack.c.bf16 %v2593, %v2592
      %v2616 = vpack.c.bf16 %v2595, %v2594
      %v2617 = vpack.c.bf16 %v2597, %v2596
      %v2618 = vpack.c.bf16 %v2599, %v2598
      %v2619 = vpack.c.bf16 %v2601, %v2600
      %v2620 = vpack.c.bf16 %v2603, %v2602
      %v2621 = vpack.c.bf16 %v2605, %v2604
      %v2622 = vld [vmem:[%s3 + $0x1c0] sm:$0xf]
      %v2623 = vld [vmem:[%s3 + $0x1c4] sm:$0xf]
      %v2624 = vld [vmem:[%s3 + $0x1c8] sm:$0xf]
      %v2625 = vld [vmem:[%s3 + $0x1cc] sm:$0xf]
      %v2626 = vld [vmem:[%s3 + $0x1d0] sm:$0xf]
      %v2627 = vld [vmem:[%s3 + $0x1d4] sm:$0xf]
      %v2628 = vld [vmem:[%s3 + $0x1d8] sm:$0xf]
      %v2629 = vld [vmem:[%s3 + $0x1dc] sm:$0xf]
      %v2630 = vld [vmem:[%s3 + $0x1e0] sm:$0xf]
      %v2631 = vld [vmem:[%s3 + $0x1e4] sm:$0xf]
      %v2632 = vld [vmem:[%s3 + $0x1e8] sm:$0xf]
      %v2633 = vld [vmem:[%s3 + $0x1ec] sm:$0xf]
      %v2634 = vld [vmem:[%s3 + $0x1f0] sm:$0xf]
      %v2635 = vld [vmem:[%s3 + $0x1f4] sm:$0xf]
      %v2636 = vld [vmem:[%s3 + $0x1f8] sm:$0xf]
      %v2637 = vld [vmem:[%s3 + $0x1fc] sm:$0xf]
      %v2654 = vunpack.c.l.b16 %v2622
      %v2655 = vunpack.c.l.b16 %v2623
      %v2656 = vunpack.c.l.b16 %v2624
      %v2657 = vunpack.c.l.b16 %v2625
      %v2658 = vunpack.c.l.b16 %v2626
      %v2659 = vunpack.c.l.b16 %v2627
      %v2660 = vunpack.c.l.b16 %v2628
      %v2661 = vunpack.c.l.b16 %v2629
      %v2662 = vunpack.c.l.b16 %v2630
      %v2663 = vunpack.c.l.b16 %v2631
      %v2664 = vunpack.c.l.b16 %v2632
      %v2665 = vunpack.c.l.b16 %v2633
      %v2666 = vunpack.c.l.b16 %v2634
      %v2667 = vunpack.c.l.b16 %v2635
      %v2668 = vunpack.c.l.b16 %v2636
      %v2669 = vunpack.c.l.b16 %v2637
      %v2670 = vpack.c.b16 %v2655, %v2654
      %v2671 = vpack.c.b16 %v2657, %v2656
      %v2672 = vpack.c.b16 %v2659, %v2658
      %v2673 = vpack.c.b16 %v2661, %v2660
      %v2674 = vpack.c.b16 %v2663, %v2662
      %v2675 = vpack.c.b16 %v2665, %v2664
      %v2676 = vpack.c.b16 %v2667, %v2666
      %v2677 = vpack.c.b16 %v2669, %v2668
      %2686 = vmatprep.subr.bf16.mxu0 0
      %2687 = vmatpush1.bf16.msra.mxu0 %v2670
      %2688 = vmatprep.subr.bf16.mxu0 0
      %2689 = vmatpush1.bf16.msra.mxu0 %v2671
      %2690 = vmatprep.subr.bf16.mxu0 0
      %2691 = vmatpush1.bf16.msra.mxu0 %v2672
      %2692 = vmatprep.subr.bf16.mxu0 0
      %2693 = vmatpush1.bf16.msra.mxu0 %v2673
      %2694 = vmatprep.subr.bf16.mxu0 0
      %2695 = vmatpush1.bf16.msra.mxu0 %v2674
      %2696 = vmatprep.subr.bf16.mxu0 0
      %2697 = vmatpush1.bf16.msra.mxu0 %v2675
      %2698 = vmatprep.subr.bf16.mxu0 0
      %2699 = vmatpush1.bf16.msra.mxu0 %v2676
      %2700 = vmatprep.subr.bf16.mxu0 0
      %2701 = vmatpush1.bf16.msra.mxu0 %v2677
      %2702 = vmatprep.subr.bf16.mxu0 0
      %2703 = vmatpush1.bf16.msra.mxu0 0
      %2704 = vmatprep.subr.bf16.mxu0 0
      %2705 = vmatpush1.bf16.msra.mxu0 0
      %2706 = vmatprep.subr.bf16.mxu0 0
      %2707 = vmatpush1.bf16.msra.mxu0 0
      %2708 = vmatprep.subr.bf16.mxu0 0
      %2709 = vmatpush1.bf16.msra.mxu0 0
      %2710 = vmatprep.subr.bf16.mxu0 0
      %2711 = vmatpush1.bf16.msra.mxu0 0
      %2712 = vmatprep.subr.bf16.mxu0 0
      %2713 = vmatpush1.bf16.msra.mxu0 0
      %2714 = vmatprep.subr.bf16.mxu0 0
      %2715 = vmatpush1.bf16.msra.mxu0 0
      %2716 = vmatprep.subr.bf16.mxu0 0
      %2717 = vmatpush1.bf16.msra.mxu0 0
      %2718 = vmatprep.mubr.bf16.mxu0 0
      %2719 = vmatmul.mubr.bf16.gmra.mrb[0].mxu0 %v2606
      %v2720 = vpop.f32.mrb[0].mxu0
      %v2721 = vadd.f32 0.0, %v2720
      %v2722 = vpop.f32.mrb[0].mxu0
      %v2723 = vpop.f32.mrb[0].mxu0
      %v2724 = vadd.f32 0.0, %v2723
      %v2725 = vpop.f32.mrb[0].mxu0
      %2726 = vmatprep.mubr.bf16.mxu0 0
      %2727 = vmatmul.mubr.bf16.gmra.mrb[0].mxu0 %v2607
      %v2728 = vpop.f32.mrb[0].mxu0
      %v2729 = vadd.f32 0.0, %v2728
      %v2730 = vpop.f32.mrb[0].mxu0
      %v2731 = vpop.f32.mrb[0].mxu0
      %v2732 = vadd.f32 0.0, %v2731
      %v2733 = vpop.f32.mrb[0].mxu0
      %2734 = vmatprep.mubr.bf16.mxu0 0
      %2735 = vmatmul.mubr.bf16.gmra.mrb[0].mxu0 %v2608
      %v2736 = vpop.f32.mrb[0].mxu0
      %v2737 = vadd.f32 0.0, %v2736
      %v2738 = vpop.f32.mrb[0].mxu0
      %v2739 = vpop.f32.mrb[0].mxu0
      %v2740 = vadd.f32 0.0, %v2739
      %v2741 = vpop.f32.mrb[0].mxu0
      %2742 = vmatprep.mubr.bf16.mxu0 0
      %2743 = vmatmul.mubr.bf16.gmra.mrb[0].mxu0 %v2609
      %v2744 = vpop.f32.mrb[0].mxu0
      %v2745 = vadd.f32 0.0, %v2744
      %v2746 = vpop.f32.mrb[0].mxu0
      %v2747 = vpop.f32.mrb[0].mxu0
      %v2748 = vadd.f32 0.0, %v2747
      %v2749 = vpop.f32.mrb[0].mxu0
      %2750 = vmatprep.mubr.bf16.mxu0 0
      %2751 = vmatmul.mubr.bf16.gmra.mrb[0].mxu0 %v2610
      %v2752 = vpop.f32.mrb[0].mxu0
      %v2753 = vadd.f32 0.0, %v2752
      %v2754 = vpop.f32.mrb[0].mxu0
      %v2755 = vpop.f32.mrb[0].mxu0
      %v2756 = vadd.f32 0.0, %v2755
      %v2757 = vpop.f32.mrb[0].mxu0
      %2758 = vmatprep.mubr.bf16.mxu0 0
      %2759 = vmatmul.mubr.bf16.gmra.mrb[0].mxu0 %v2611
      %v2760 = vpop.f32.mrb[0].mxu0
      %v2761 = vadd.f32 0.0, %v2760
      %v2762 = vpop.f32.mrb[0].mxu0
      %v2763 = vpop.f32.mrb[0].mxu0
      %v2764 = vadd.f32 0.0, %v2763
      %v2765 = vpop.f32.mrb[0].mxu0
      %2766 = vmatprep.mubr.bf16.mxu0 0
      %2767 = vmatmul.mubr.bf16.gmra.mrb[0].mxu0 %v2612
      %v2768 = vpop.f32.mrb[0].mxu0
      %v2769 = vadd.f32 0.0, %v2768
      %v2770 = vpop.f32.mrb[0].mxu0
      %v2771 = vpop.f32.mrb[0].mxu0
      %v2772 = vadd.f32 0.0, %v2771
      %v2773 = vpop.f32.mrb[0].mxu0
      %2774 = vmatprep.mubr.bf16.mxu0 0
      %2775 = vmatmul.mubr.bf16.gmra.mrb[0].mxu0 %v2613
      %v2776 = vpop.f32.mrb[0].mxu0
      %v2777 = vadd.f32 0.0, %v2776
      %v2778 = vpop.f32.mrb[0].mxu0
      %v2779 = vpop.f32.mrb[0].mxu0
      %v2780 = vadd.f32 0.0, %v2779
      %v2781 = vpop.f32.mrb[0].mxu0
      %2782 = vmatprep.mubr.bf16.mxu0 0
      %2783 = vmatmul.mubr.bf16.gmra.mrb[0].mxu0 %v2614
      %v2784 = vpop.f32.mrb[0].mxu0
      %v2785 = vadd.f32 0.0, %v2784
      %v2786 = vpop.f32.mrb[0].mxu0
      %v2787 = vpop.f32.mrb[0].mxu0
      %v2788 = vadd.f32 0.0, %v2787
      %v2789 = vpop.f32.mrb[0].mxu0
      %2790 = vmatprep.mubr.bf16.mxu0 0
      %2791 = vmatmul.mubr.bf16.gmra.mrb[0].mxu0 %v2615
      %v2792 = vpop.f32.mrb[0].mxu0
      %v2793 = vadd.f32 0.0, %v2792
      %v2794 = vpop.f32.mrb[0].mxu0
      %v2795 = vpop.f32.mrb[0].mxu0
      %v2796 = vadd.f32 0.0, %v2795
      %v2797 = vpop.f32.mrb[0].mxu0
      %2798 = vmatprep.mubr.bf16.mxu0 0
      %2799 = vmatmul.mubr.bf16.gmra.mrb[0].mxu0 %v2616
      %v2800 = vpop.f32.mrb[0].mxu0
      %v2801 = vadd.f32 0.0, %v2800
      %v2802 = vpop.f32.mrb[0].mxu0
      %v2803 = vpop.f32.mrb[0].mxu0
      %v2804 = vadd.f32 0.0, %v2803
      %v2805 = vpop.f32.mrb[0].mxu0
      %2806 = vmatprep.mubr.bf16.mxu0 0
      %2807 = vmatmul.mubr.bf16.gmra.mrb[0].mxu0 %v2617
      %v2808 = vpop.f32.mrb[0].mxu0
      %v2809 = vadd.f32 0.0, %v2808
      %v2810 = vpop.f32.mrb[0].mxu0
      %v2811 = vpop.f32.mrb[0].mxu0
      %v2812 = vadd.f32 0.0, %v2811
      %v2813 = vpop.f32.mrb[0].mxu0
      %2814 = vmatprep.mubr.bf16.mxu0 0
      %2815 = vmatmul.mubr.bf16.gmra.mrb[0].mxu0 %v2618
      %v2816 = vpop.f32.mrb[0].mxu0
      %v2817 = vadd.f32 0.0, %v2816
      %v2818 = vpop.f32.mrb[0].mxu0
      %v2819 = vpop.f32.mrb[0].mxu0
      %v2820 = vadd.f32 0.0, %v2819
      %v2821 = vpop.f32.mrb[0].mxu0
      %2822 = vmatprep.mubr.bf16.mxu0 0
      %2823 = vmatmul.mubr.bf16.gmra.mrb[0].mxu0 %v2619
      %v2824 = vpop.f32.mrb[0].mxu0
      %v2825 = vadd.f32 0.0, %v2824
      %v2826 = vpop.f32.mrb[0].mxu0
      %v2827 = vpop.f32.mrb[0].mxu0
      %v2828 = vadd.f32 0.0, %v2827
      %v2829 = vpop.f32.mrb[0].mxu0
      %2830 = vmatprep.mubr.bf16.mxu0 0
      %2831 = vmatmul.mubr.bf16.gmra.mrb[0].mxu0 %v2620
      %v2832 = vpop.f32.mrb[0].mxu0
      %v2833 = vadd.f32 0.0, %v2832
      %v2834 = vpop.f32.mrb[0].mxu0
      %v2835 = vpop.f32.mrb[0].mxu0
      %v2836 = vadd.f32 0.0, %v2835
      %v2837 = vpop.f32.mrb[0].mxu0
      %2838 = vmatprep.mubr.bf16.mxu0 0
      %2839 = vmatmul.mubr.bf16.gmra.mrb[0].mxu0 %v2621
      %v2840 = vpop.f32.mrb[0].mxu0
      %v2841 = vadd.f32 0.0, %v2840
      %v2842 = vpop.f32.mrb[0].mxu0
      %v2843 = vpop.f32.mrb[0].mxu0
      %v2844 = vadd.f32 0.0, %v2843
      %v2845 = vpop.f32.mrb[0].mxu0
      %2846 = vdwg.mxu0
      %v2847 = vadd.f32 %v2542, %v2721
      %v2848 = vadd.f32 %v2543, %v2724
      %v2849 = vadd.f32 %v2544, %v2729
      %v2850 = vadd.f32 %v2545, %v2732
      %v2851 = vadd.f32 %v2546, %v2737
      %v2852 = vadd.f32 %v2547, %v2740
      %v2853 = vadd.f32 %v2548, %v2745
      %v2854 = vadd.f32 %v2549, %v2748
      %v2855 = vadd.f32 %v2550, %v2753
      %v2856 = vadd.f32 %v2551, %v2756
      %v2857 = vadd.f32 %v2552, %v2761
      %v2858 = vadd.f32 %v2553, %v2764
      %v2859 = vadd.f32 %v2554, %v2769
      %v2860 = vadd.f32 %v2555, %v2772
      %v2861 = vadd.f32 %v2556, %v2777
      %v2862 = vadd.f32 %v2557, %v2780
      %v2863 = vadd.f32 %v2558, %v2785
      %v2864 = vadd.f32 %v2559, %v2788
      %v2865 = vadd.f32 %v2560, %v2793
      %v2866 = vadd.f32 %v2561, %v2796
      %v2867 = vadd.f32 %v2562, %v2801
      %v2868 = vadd.f32 %v2563, %v2804
      %v2869 = vadd.f32 %v2564, %v2809
      %v2870 = vadd.f32 %v2565, %v2812
      %v2871 = vadd.f32 %v2566, %v2817
      %v2872 = vadd.f32 %v2567, %v2820
      %v2873 = vadd.f32 %v2568, %v2825
      %v2874 = vadd.f32 %v2569, %v2828
      %v2875 = vadd.f32 %v2570, %v2833
      %v2876 = vadd.f32 %v2571, %v2836
      %v2877 = vadd.f32 %v2572, %v2841
      %v2878 = vadd.f32 %v2573, %v2844
      %v2879 = vld [vmem:[%s2268 + $0x2] sm:$0xff]
      %v2880 = vld [vmem:[%s2268 + $0xa] sm:$0xff]
      %v2881 = vld [vmem:[%s2268 + $0x1a] sm:$0xff]
      %v2882 = vld [vmem:[%s2268 + $0x22] sm:$0xff]
      %v2883 = vld [vmem:[%s2268 + $0x32] sm:$0xff]
      %v2884 = vld [vmem:[%s2268 + $0x3a] sm:$0xff]
      %v2885 = vld [vmem:[%s2268 + $0x4a] sm:$0xff]
      %v2886 = vld [vmem:[%s2268 + $0x52] sm:$0xff]
      %v2887 = vld [vmem:[%s2268 + $0x62] sm:$0xff]
      %v2888 = vld [vmem:[%s2268 + $0x6a] sm:$0xff]
      %v2889 = vld [vmem:[%s2268 + $0x7a] sm:$0xff]
      %v2890 = vld [vmem:[%s2268 + $0x82] sm:$0xff]
      %v2891 = vld [vmem:[%s2268 + $0x92] sm:$0xff]
      %v2892 = vld [vmem:[%s2268 + $0x9a] sm:$0xff]
      %v2893 = vld [vmem:[%s2268 + $0xaa] sm:$0xff]
      %v2894 = vld [vmem:[%s2268 + $0xb2] sm:$0xff]
      %v2895 = vld [vmem:[%s2268 + $0xc2] sm:$0xff]
      %v2896 = vld [vmem:[%s2268 + $0xca] sm:$0xff]
      %v2897 = vld [vmem:[%s2268 + $0xda] sm:$0xff]
      %v2898 = vld [vmem:[%s2268 + $0xe2] sm:$0xff]
      %v2899 = vld [vmem:[%s2268 + $0xf2] sm:$0xff]
      %v2900 = vld [vmem:[%s2268 + $0xfa] sm:$0xff]
      %v2901 = vld [vmem:[%s2268 + $0x10a] sm:$0xff]
      %v2902 = vld [vmem:[%s2268 + $0x112] sm:$0xff]
      %v2903 = vld [vmem:[%s2268 + $0x122] sm:$0xff]
      %v2904 = vld [vmem:[%s2268 + $0x12a] sm:$0xff]
      %v2905 = vld [vmem:[%s2268 + $0x13a] sm:$0xff]
      %v2906 = vld [vmem:[%s2268 + $0x142] sm:$0xff]
      %v2907 = vld [vmem:[%s2268 + $0x152] sm:$0xff]
      %v2908 = vld [vmem:[%s2268 + $0x15a] sm:$0xff]
      %v2909 = vld [vmem:[%s2268 + $0x16a] sm:$0xff]
      %v2910 = vld [vmem:[%s2268 + $0x172] sm:$0xff]
      %v2911 = vpack.c.bf16 %v2880, %v2879
      %v2912 = vpack.c.bf16 %v2882, %v2881
      %v2913 = vpack.c.bf16 %v2884, %v2883
      %v2914 = vpack.c.bf16 %v2886, %v2885
      %v2915 = vpack.c.bf16 %v2888, %v2887
      %v2916 = vpack.c.bf16 %v2890, %v2889
      %v2917 = vpack.c.bf16 %v2892, %v2891
      %v2918 = vpack.c.bf16 %v2894, %v2893
      %v2919 = vpack.c.bf16 %v2896, %v2895
      %v2920 = vpack.c.bf16 %v2898, %v2897
      %v2921 = vpack.c.bf16 %v2900, %v2899
      %v2922 = vpack.c.bf16 %v2902, %v2901
      %v2923 = vpack.c.bf16 %v2904, %v2903
      %v2924 = vpack.c.bf16 %v2906, %v2905
      %v2925 = vpack.c.bf16 %v2908, %v2907
      %v2926 = vpack.c.bf16 %v2910, %v2909
      %v2927 = vld [vmem:[%s3 + $0x200] sm:$0xf]
      %v2928 = vld [vmem:[%s3 + $0x204] sm:$0xf]
      %v2929 = vld [vmem:[%s3 + $0x208] sm:$0xf]
      %v2930 = vld [vmem:[%s3 + $0x20c] sm:$0xf]
      %v2931 = vld [vmem:[%s3 + $0x210] sm:$0xf]
      %v2932 = vld [vmem:[%s3 + $0x214] sm:$0xf]
      %v2933 = vld [vmem:[%s3 + $0x218] sm:$0xf]
      %v2934 = vld [vmem:[%s3 + $0x21c] sm:$0xf]
      %v2935 = vld [vmem:[%s3 + $0x220] sm:$0xf]
      %v2936 = vld [vmem:[%s3 + $0x224] sm:$0xf]
      %v2937 = vld [vmem:[%s3 + $0x228] sm:$0xf]
      %v2938 = vld [vmem:[%s3 + $0x22c] sm:$0xf]
      %v2939 = vld [vmem:[%s3 + $0x230] sm:$0xf]
      %v2940 = vld [vmem:[%s3 + $0x234] sm:$0xf]
      %v2941 = vld [vmem:[%s3 + $0x238] sm:$0xf]
      %v2942 = vld [vmem:[%s3 + $0x23c] sm:$0xf]
      %v2959 = vunpack.c.l.b16 %v2927
      %v2960 = vunpack.c.l.b16 %v2928
      %v2961 = vunpack.c.l.b16 %v2929
      %v2962 = vunpack.c.l.b16 %v2930
      %v2963 = vunpack.c.l.b16 %v2931
      %v2964 = vunpack.c.l.b16 %v2932
      %v2965 = vunpack.c.l.b16 %v2933
      %v2966 = vunpack.c.l.b16 %v2934
      %v2967 = vunpack.c.l.b16 %v2935
      %v2968 = vunpack.c.l.b16 %v2936
      %v2969 = vunpack.c.l.b16 %v2937
      %v2970 = vunpack.c.l.b16 %v2938
      %v2971 = vunpack.c.l.b16 %v2939
      %v2972 = vunpack.c.l.b16 %v2940
      %v2973 = vunpack.c.l.b16 %v2941
      %v2974 = vunpack.c.l.b16 %v2942
      %v2975 = vpack.c.b16 %v2960, %v2959
      %v2976 = vpack.c.b16 %v2962, %v2961
      %v2977 = vpack.c.b16 %v2964, %v2963
      %v2978 = vpack.c.b16 %v2966, %v2965
      %v2979 = vpack.c.b16 %v2968, %v2967
      %v2980 = vpack.c.b16 %v2970, %v2969
      %v2981 = vpack.c.b16 %v2972, %v2971
      %v2982 = vpack.c.b16 %v2974, %v2973
      %2991 = vmatprep.subr.bf16.mxu0 0
      %2992 = vmatpush1.bf16.msra.mxu0 %v2975
      %2993 = vmatprep.subr.bf16.mxu0 0
      %2994 = vmatpush1.bf16.msra.mxu0 %v2976
      %2995 = vmatprep.subr.bf16.mxu0 0
      %2996 = vmatpush1.bf16.msra.mxu0 %v2977
      %2997 = vmatprep.subr.bf16.mxu0 0
      %2998 = vmatpush1.bf16.msra.mxu0 %v2978
      %2999 = vmatprep.subr.bf16.mxu0 0
      %3000 = vmatpush1.bf16.msra.mxu0 %v2979
      %3001 = vmatprep.subr.bf16.mxu0 0
      %3002 = vmatpush1.bf16.msra.mxu0 %v2980
      %3003 = vmatprep.subr.bf16.mxu0 0
      %3004 = vmatpush1.bf16.msra.mxu0 %v2981
      %3005 = vmatprep.subr.bf16.mxu0 0
      %3006 = vmatpush1.bf16.msra.mxu0 %v2982
      %3007 = vmatprep.subr.bf16.mxu0 0
      %3008 = vmatpush1.bf16.msra.mxu0 0
      %3009 = vmatprep.subr.bf16.mxu0 0
      %3010 = vmatpush1.bf16.msra.mxu0 0
      %3011 = vmatprep.subr.bf16.mxu0 0
      %3012 = vmatpush1.bf16.msra.mxu0 0
      %3013 = vmatprep.subr.bf16.mxu0 0
      %3014 = vmatpush1.bf16.msra.mxu0 0
      %3015 = vmatprep.subr.bf16.mxu0 0
      %3016 = vmatpush1.bf16.msra.mxu0 0
      %3017 = vmatprep.subr.bf16.mxu0 0
      %3018 = vmatpush1.bf16.msra.mxu0 0
      %3019 = vmatprep.subr.bf16.mxu0 0
      %3020 = vmatpush1.bf16.msra.mxu0 0
      %3021 = vmatprep.subr.bf16.mxu0 0
      %3022 = vmatpush1.bf16.msra.mxu0 0
      %3023 = vmatprep.mubr.bf16.mxu0 0
      %3024 = vmatmul.mubr.bf16.gmra.mrb[0].mxu0 %v2911
      %v3025 = vpop.f32.mrb[0].mxu0
      %v3026 = vadd.f32 0.0, %v3025
      %v3027 = vpop.f32.mrb[0].mxu0
      %v3028 = vpop.f32.mrb[0].mxu0
      %v3029 = vadd.f32 0.0, %v3028
      %v3030 = vpop.f32.mrb[0].mxu0
      %3031 = vmatprep.mubr.bf16.mxu0 0
      %3032 = vmatmul.mubr.bf16.gmra.mrb[0].mxu0 %v2912
      %v3033 = vpop.f32.mrb[0].mxu0
      %v3034 = vadd.f32 0.0, %v3033
      %v3035 = vpop.f32.mrb[0].mxu0
      %v3036 = vpop.f32.mrb[0].mxu0
      %v3037 = vadd.f32 0.0, %v3036
      %v3038 = vpop.f32.mrb[0].mxu0
      %3039 = vmatprep.mubr.bf16.mxu0 0
      %3040 = vmatmul.mubr.bf16.gmra.mrb[0].mxu0 %v2913
      %v3041 = vpop.f32.mrb[0].mxu0
      %v3042 = vadd.f32 0.0, %v3041
      %v3043 = vpop.f32.mrb[0].mxu0
      %v3044 = vpop.f32.mrb[0].mxu0
      %v3045 = vadd.f32 0.0, %v3044
      %v3046 = vpop.f32.mrb[0].mxu0
      %3047 = vmatprep.mubr.bf16.mxu0 0
      %3048 = vmatmul.mubr.bf16.gmra.mrb[0].mxu0 %v2914
      %v3049 = vpop.f32.mrb[0].mxu0
      %v3050 = vadd.f32 0.0, %v3049
      %v3051 = vpop.f32.mrb[0].mxu0
      %v3052 = vpop.f32.mrb[0].mxu0
      %v3053 = vadd.f32 0.0, %v3052
      %v3054 = vpop.f32.mrb[0].mxu0
      %3055 = vmatprep.mubr.bf16.mxu0 0
      %3056 = vmatmul.mubr.bf16.gmra.mrb[0].mxu0 %v2915
      %v3057 = vpop.f32.mrb[0].mxu0
      %v3058 = vadd.f32 0.0, %v3057
      %v3059 = vpop.f32.mrb[0].mxu0
      %v3060 = vpop.f32.mrb[0].mxu0
      %v3061 = vadd.f32 0.0, %v3060
      %v3062 = vpop.f32.mrb[0].mxu0
      %3063 = vmatprep.mubr.bf16.mxu0 0
      %3064 = vmatmul.mubr.bf16.gmra.mrb[0].mxu0 %v2916
      %v3065 = vpop.f32.mrb[0].mxu0
      %v3066 = vadd.f32 0.0, %v3065
      %v3067 = vpop.f32.mrb[0].mxu0
      %v3068 = vpop.f32.mrb[0].mxu0
      %v3069 = vadd.f32 0.0, %v3068
      %v3070 = vpop.f32.mrb[0].mxu0
      %3071 = vmatprep.mubr.bf16.mxu0 0
      %3072 = vmatmul.mubr.bf16.gmra.mrb[0].mxu0 %v2917
      %v3073 = vpop.f32.mrb[0].mxu0
      %v3074 = vadd.f32 0.0, %v3073
      %v3075 = vpop.f32.mrb[0].mxu0
      %v3076 = vpop.f32.mrb[0].mxu0
      %v3077 = vadd.f32 0.0, %v3076
      %v3078 = vpop.f32.mrb[0].mxu0
      %3079 = vmatprep.mubr.bf16.mxu0 0
      %3080 = vmatmul.mubr.bf16.gmra.mrb[0].mxu0 %v2918
      %v3081 = vpop.f32.mrb[0].mxu0
      %v3082 = vadd.f32 0.0, %v3081
      %v3083 = vpop.f32.mrb[0].mxu0
      %v3084 = vpop.f32.mrb[0].mxu0
      %v3085 = vadd.f32 0.0, %v3084
      %v3086 = vpop.f32.mrb[0].mxu0
      %3087 = vmatprep.mubr.bf16.mxu0 0
      %3088 = vmatmul.mubr.bf16.gmra.mrb[0].mxu0 %v2919
      %v3089 = vpop.f32.mrb[0].mxu0
      %v3090 = vadd.f32 0.0, %v3089
      %v3091 = vpop.f32.mrb[0].mxu0
      %v3092 = vpop.f32.mrb[0].mxu0
      %v3093 = vadd.f32 0.0, %v3092
      %v3094 = vpop.f32.mrb[0].mxu0
      %3095 = vmatprep.mubr.bf16.mxu0 0
      %3096 = vmatmul.mubr.bf16.gmra.mrb[0].mxu0 %v2920
      %v3097 = vpop.f32.mrb[0].mxu0
      %v3098 = vadd.f32 0.0, %v3097
      %v3099 = vpop.f32.mrb[0].mxu0
      %v3100 = vpop.f32.mrb[0].mxu0
      %v3101 = vadd.f32 0.0, %v3100
      %v3102 = vpop.f32.mrb[0].mxu0
      %3103 = vmatprep.mubr.bf16.mxu0 0
      %3104 = vmatmul.mubr.bf16.gmra.mrb[0].mxu0 %v2921
      %v3105 = vpop.f32.mrb[0].mxu0
      %v3106 = vadd.f32 0.0, %v3105
      %v3107 = vpop.f32.mrb[0].mxu0
      %v3108 = vpop.f32.mrb[0].mxu0
      %v3109 = vadd.f32 0.0, %v3108
      %v3110 = vpop.f32.mrb[0].mxu0
      %3111 = vmatprep.mubr.bf16.mxu0 0
      %3112 = vmatmul.mubr.bf16.gmra.mrb[0].mxu0 %v2922
      %v3113 = vpop.f32.mrb[0].mxu0
      %v3114 = vadd.f32 0.0, %v3113
      %v3115 = vpop.f32.mrb[0].mxu0
      %v3116 = vpop.f32.mrb[0].mxu0
      %v3117 = vadd.f32 0.0, %v3116
      %v3118 = vpop.f32.mrb[0].mxu0
      %3119 = vmatprep.mubr.bf16.mxu0 0
      %3120 = vmatmul.mubr.bf16.gmra.mrb[0].mxu0 %v2923
      %v3121 = vpop.f32.mrb[0].mxu0
      %v3122 = vadd.f32 0.0, %v3121
      %v3123 = vpop.f32.mrb[0].mxu0
      %v3124 = vpop.f32.mrb[0].mxu0
      %v3125 = vadd.f32 0.0, %v3124
      %v3126 = vpop.f32.mrb[0].mxu0
      %3127 = vmatprep.mubr.bf16.mxu0 0
      %3128 = vmatmul.mubr.bf16.gmra.mrb[0].mxu0 %v2924
      %v3129 = vpop.f32.mrb[0].mxu0
      %v3130 = vadd.f32 0.0, %v3129
      %v3131 = vpop.f32.mrb[0].mxu0
      %v3132 = vpop.f32.mrb[0].mxu0
      %v3133 = vadd.f32 0.0, %v3132
      %v3134 = vpop.f32.mrb[0].mxu0
      %3135 = vmatprep.mubr.bf16.mxu0 0
      %3136 = vmatmul.mubr.bf16.gmra.mrb[0].mxu0 %v2925
      %v3137 = vpop.f32.mrb[0].mxu0
      %v3138 = vadd.f32 0.0, %v3137
      %v3139 = vpop.f32.mrb[0].mxu0
      %v3140 = vpop.f32.mrb[0].mxu0
      %v3141 = vadd.f32 0.0, %v3140
      %v3142 = vpop.f32.mrb[0].mxu0
      %3143 = vmatprep.mubr.bf16.mxu0 0
      %3144 = vmatmul.mubr.bf16.gmra.mrb[0].mxu0 %v2926
      %v3145 = vpop.f32.mrb[0].mxu0
      %v3146 = vadd.f32 0.0, %v3145
      %v3147 = vpop.f32.mrb[0].mxu0
      %v3148 = vpop.f32.mrb[0].mxu0
      %v3149 = vadd.f32 0.0, %v3148
      %v3150 = vpop.f32.mrb[0].mxu0
      %3151 = vdwg.mxu0
      %v3152 = vadd.f32 %v2847, %v3026
      %v3153 = vadd.f32 %v2848, %v3029
      %v3154 = vadd.f32 %v2849, %v3034
      %v3155 = vadd.f32 %v2850, %v3037
      %v3156 = vadd.f32 %v2851, %v3042
      %v3157 = vadd.f32 %v2852, %v3045
      %v3158 = vadd.f32 %v2853, %v3050
      %v3159 = vadd.f32 %v2854, %v3053
      %v3160 = vadd.f32 %v2855, %v3058
      %v3161 = vadd.f32 %v2856, %v3061
      %v3162 = vadd.f32 %v2857, %v3066
      %v3163 = vadd.f32 %v2858, %v3069
      %v3164 = vadd.f32 %v2859, %v3074
      %v3165 = vadd.f32 %v2860, %v3077
      %v3166 = vadd.f32 %v2861, %v3082
      %v3167 = vadd.f32 %v2862, %v3085
      %v3168 = vadd.f32 %v2863, %v3090
      %v3169 = vadd.f32 %v2864, %v3093
      %v3170 = vadd.f32 %v2865, %v3098
      %v3171 = vadd.f32 %v2866, %v3101
      %v3172 = vadd.f32 %v2867, %v3106
      %v3173 = vadd.f32 %v2868, %v3109
      %v3174 = vadd.f32 %v2869, %v3114
      %v3175 = vadd.f32 %v2870, %v3117
      %v3176 = vadd.f32 %v2871, %v3122
      %v3177 = vadd.f32 %v2872, %v3125
      %v3178 = vadd.f32 %v2873, %v3130
      %v3179 = vadd.f32 %v2874, %v3133
      %v3180 = vadd.f32 %v2875, %v3138
      %v3181 = vadd.f32 %v2876, %v3141
      %v3182 = vadd.f32 %v2877, %v3146
      %v3183 = vadd.f32 %v2878, %v3149
      %v3184 = vpack.c.bf16 %v3153, %v3152
      %v3185 = vpack.c.bf16 %v3155, %v3154
      %v3186 = vpack.c.bf16 %v3157, %v3156
      %v3187 = vpack.c.bf16 %v3159, %v3158
      %v3188 = vpack.c.bf16 %v3161, %v3160
      %v3189 = vpack.c.bf16 %v3163, %v3162
      %v3190 = vpack.c.bf16 %v3165, %v3164
      %v3191 = vpack.c.bf16 %v3167, %v3166
      %v3192 = vpack.c.bf16 %v3169, %v3168
      %v3193 = vpack.c.bf16 %v3171, %v3170
      %v3194 = vpack.c.bf16 %v3173, %v3172
      %v3195 = vpack.c.bf16 %v3175, %v3174
      %v3196 = vpack.c.bf16 %v3177, %v3176
      %v3197 = vpack.c.bf16 %v3179, %v3178
      %v3198 = vpack.c.bf16 %v3181, %v3180
      %v3199 = vpack.c.bf16 %v3183, %v3182
      %v3216 = vunpack.c.l.b16 %v3184
      %v3217 = vunpack.c.h.b16 %v3184
      %v3218 = vunpack.c.l.b16 %v3185
      %v3219 = vunpack.c.h.b16 %v3185
      %v3220 = vunpack.c.l.b16 %v3186
      %v3221 = vunpack.c.h.b16 %v3186
      %v3222 = vunpack.c.l.b16 %v3187
      %v3223 = vunpack.c.h.b16 %v3187
      %v3224 = vunpack.c.l.b16 %v3188
      %v3225 = vunpack.c.h.b16 %v3188
      %v3226 = vunpack.c.l.b16 %v3189
      %v3227 = vunpack.c.h.b16 %v3189
      %v3228 = vunpack.c.l.b16 %v3190
      %v3229 = vunpack.c.h.b16 %v3190
      %v3230 = vunpack.c.l.b16 %v3191
      %v3231 = vunpack.c.h.b16 %v3191
      %v3232 = vunpack.c.l.b16 %v3192
      %v3233 = vunpack.c.h.b16 %v3192
      %v3234 = vunpack.c.l.b16 %v3193
      %v3235 = vunpack.c.h.b16 %v3193
      %v3236 = vunpack.c.l.b16 %v3194
      %v3237 = vunpack.c.h.b16 %v3194
      %v3238 = vunpack.c.l.b16 %v3195
      %v3239 = vunpack.c.h.b16 %v3195
      %v3240 = vunpack.c.l.b16 %v3196
      %v3241 = vunpack.c.h.b16 %v3196
      %v3242 = vunpack.c.l.b16 %v3197
      %v3243 = vunpack.c.h.b16 %v3197
      %v3244 = vunpack.c.l.b16 %v3198
      %v3245 = vunpack.c.h.b16 %v3198
      %v3246 = vunpack.c.l.b16 %v3199
      %v3247 = vunpack.c.h.b16 %v3199
      %v3248 = vpack.c.b16 %v3216, %v3216
      %v3249 = vpack.c.b16 %v3217, %v3217
      %v3250 = vpack.c.b16 %v3218, %v3218
      %v3251 = vpack.c.b16 %v3219, %v3219
      %v3252 = vpack.c.b16 %v3220, %v3220
      %v3253 = vpack.c.b16 %v3221, %v3221
      %v3254 = vpack.c.b16 %v3222, %v3222
      %v3255 = vpack.c.b16 %v3223, %v3223
      %v3256 = vpack.c.b16 %v3224, %v3224
      %v3257 = vpack.c.b16 %v3225, %v3225
      %v3258 = vpack.c.b16 %v3226, %v3226
      %v3259 = vpack.c.b16 %v3227, %v3227
      %v3260 = vpack.c.b16 %v3228, %v3228
      %v3261 = vpack.c.b16 %v3229, %v3229
      %v3262 = vpack.c.b16 %v3230, %v3230
      %v3263 = vpack.c.b16 %v3231, %v3231
      %v3264 = vpack.c.b16 %v3232, %v3232
      %v3265 = vpack.c.b16 %v3233, %v3233
      %v3266 = vpack.c.b16 %v3234, %v3234
      %v3267 = vpack.c.b16 %v3235, %v3235
      %v3268 = vpack.c.b16 %v3236, %v3236
      %v3269 = vpack.c.b16 %v3237, %v3237
      %v3270 = vpack.c.b16 %v3238, %v3238
      %v3271 = vpack.c.b16 %v3239, %v3239
      %v3272 = vpack.c.b16 %v3240, %v3240
      %v3273 = vpack.c.b16 %v3241, %v3241
      %v3274 = vpack.c.b16 %v3242, %v3242
      %v3275 = vpack.c.b16 %v3243, %v3243
      %v3276 = vpack.c.b16 %v3244, %v3244
      %v3277 = vpack.c.b16 %v3245, %v3245
      %v3278 = vpack.c.b16 %v3246, %v3246
      %v3279 = vpack.c.b16 %v3247, %v3247
      %3312 = vst [vmem:[%s231] sm:$0xf] %v3248
      %3313 = vst [vmem:[%s231 + $0x4] sm:$0xf] %v3249
      %3314 = vst [vmem:[%s231 + $0x8] sm:$0xf] %v3250
      %3315 = vst [vmem:[%s231 + $0xc] sm:$0xf] %v3251
      %3316 = vst [vmem:[%s231 + $0x10] sm:$0xf] %v3252
      %3317 = vst [vmem:[%s231 + $0x14] sm:$0xf] %v3253
      %3318 = vst [vmem:[%s231 + $0x18] sm:$0xf] %v3254
      %3319 = vst [vmem:[%s231 + $0x1c] sm:$0xf] %v3255
      %3320 = vst [vmem:[%s231 + $0x20] sm:$0xf] %v3256
      %3321 = vst [vmem:[%s231 + $0x24] sm:$0xf] %v3257
      %3322 = vst [vmem:[%s231 + $0x28] sm:$0xf] %v3258
      %3323 = vst [vmem:[%s231 + $0x2c] sm:$0xf] %v3259
      %3324 = vst [vmem:[%s231 + $0x30] sm:$0xf] %v3260
      %3325 = vst [vmem:[%s231 + $0x34] sm:$0xf] %v3261
      %3326 = vst [vmem:[%s231 + $0x38] sm:$0xf] %v3262
      %3327 = vst [vmem:[%s231 + $0x3c] sm:$0xf] %v3263
      %3328 = vst [vmem:[%s231 + $0x40] sm:$0xf] %v3264
      %3329 = vst [vmem:[%s231 + $0x44] sm:$0xf] %v3265
      %3330 = vst [vmem:[%s231 + $0x48] sm:$0xf] %v3266
      %3331 = vst [vmem:[%s231 + $0x4c] sm:$0xf] %v3267
      %3332 = vst [vmem:[%s231 + $0x50] sm:$0xf] %v3268
      %3333 = vst [vmem:[%s231 + $0x54] sm:$0xf] %v3269
      %3334 = vst [vmem:[%s231 + $0x58] sm:$0xf] %v3270
      %3335 = vst [vmem:[%s231 + $0x5c] sm:$0xf] %v3271
      %3336 = vst [vmem:[%s231 + $0x60] sm:$0xf] %v3272
      %3337 = vst [vmem:[%s231 + $0x64] sm:$0xf] %v3273
      %3338 = vst [vmem:[%s231 + $0x68] sm:$0xf] %v3274
      %3339 = vst [vmem:[%s231 + $0x6c] sm:$0xf] %v3275
      %3340 = vst [vmem:[%s231 + $0x70] sm:$0xf] %v3276
      %3341 = vst [vmem:[%s231 + $0x74] sm:$0xf] %v3277
      %3342 = vst [vmem:[%s231 + $0x78] sm:$0xf] %v3278
      %3343 = vst [vmem:[%s231 + $0x7c] sm:$0xf] %v3279
      %v3344 = vadd.f32 %v3152, %v3153
      %v3345 = vadd.f32 %v3344, %v3154
      %v3346 = vadd.f32 %v3345, %v3155
      %v3347 = vadd.f32 %v3346, %v3156
      %v3348 = vadd.f32 %v3347, %v3157
      %v3349 = vadd.f32 %v3348, %v3158
      %v3350 = vadd.f32 %v3349, %v3159
      %v3351 = vadd.f32 %v3350, %v3160
      %v3352 = vadd.f32 %v3351, %v3161
      %v3353 = vadd.f32 %v3352, %v3162
      %v3354 = vadd.f32 %v3353, %v3163
      %v3355 = vadd.f32 %v3354, %v3164
      %v3356 = vadd.f32 %v3355, %v3165
      %v3357 = vadd.f32 %v3356, %v3166
      %v3358 = vadd.f32 %v3357, %v3167
      %v3359 = vadd.f32 %v3358, %v3168
      %v3360 = vadd.f32 %v3359, %v3169
      %v3361 = vadd.f32 %v3360, %v3170
      %v3362 = vadd.f32 %v3361, %v3171
      %v3363 = vadd.f32 %v3362, %v3172
      %v3364 = vadd.f32 %v3363, %v3173
      %v3365 = vadd.f32 %v3364, %v3174
      %v3366 = vadd.f32 %v3365, %v3175
      %v3367 = vadd.f32 %v3366, %v3176
      %v3368 = vadd.f32 %v3367, %v3177
      %v3369 = vadd.f32 %v3368, %v3178
      %v3370 = vadd.f32 %v3369, %v3179
      %v3371 = vadd.f32 %v3370, %v3180
      %v3372 = vadd.f32 %v3371, %v3181
      %v3373 = vadd.f32 %v3372, %v3182
      %v3374 = vadd.f32 %v3373, %v3183
      %v3375 = vrot.slane %v3374, 4
      %v3376 = vadd.f32 %v3374, %v3375
      %v3377 = vrot.slane %v3376, 2
      %v3378 = vadd.f32 %v3376, %v3377
      %v3379 = vrot.slane %v3378, 1
      %v3380 = vadd.f32 %v3378, %v3379
      %v3381 = vmul.f32 %v3152, %v3152
      %v3382 = vmul.f32 %v3153, %v3153
      %v3383 = vmul.f32 %v3154, %v3154
      %v3384 = vmul.f32 %v3155, %v3155
      %v3385 = vmul.f32 %v3156, %v3156
      %v3386 = vmul.f32 %v3157, %v3157
      %v3387 = vmul.f32 %v3158, %v3158
      %v3388 = vmul.f32 %v3159, %v3159
      %v3389 = vmul.f32 %v3160, %v3160
      %v3390 = vmul.f32 %v3161, %v3161
      %v3391 = vmul.f32 %v3162, %v3162
      %v3392 = vmul.f32 %v3163, %v3163
      %v3393 = vmul.f32 %v3164, %v3164
      %v3394 = vmul.f32 %v3165, %v3165
      %v3395 = vmul.f32 %v3166, %v3166
      %v3396 = vmul.f32 %v3167, %v3167
      %v3397 = vmul.f32 %v3168, %v3168
      %v3398 = vmul.f32 %v3169, %v3169
      %v3399 = vmul.f32 %v3170, %v3170
      %v3400 = vmul.f32 %v3171, %v3171
      %v3401 = vmul.f32 %v3172, %v3172
      %v3402 = vmul.f32 %v3173, %v3173
      %v3403 = vmul.f32 %v3174, %v3174
      %v3404 = vmul.f32 %v3175, %v3175
      %v3405 = vmul.f32 %v3176, %v3176
      %v3406 = vmul.f32 %v3177, %v3177
      %v3407 = vmul.f32 %v3178, %v3178
      %v3408 = vmul.f32 %v3179, %v3179
      %v3409 = vmul.f32 %v3180, %v3180
      %v3410 = vmul.f32 %v3181, %v3181
      %v3411 = vmul.f32 %v3182, %v3182
      %v3412 = vmul.f32 %v3183, %v3183
      %v3413 = vadd.f32 %v3381, %v3382
      %v3414 = vadd.f32 %v3413, %v3383
      %v3415 = vadd.f32 %v3414, %v3384
      %v3416 = vadd.f32 %v3415, %v3385
      %v3417 = vadd.f32 %v3416, %v3386
      %v3418 = vadd.f32 %v3417, %v3387
      %v3419 = vadd.f32 %v3418, %v3388
      %v3420 = vadd.f32 %v3419, %v3389
      %v3421 = vadd.f32 %v3420, %v3390
      %v3422 = vadd.f32 %v3421, %v3391
      %v3423 = vadd.f32 %v3422, %v3392
      %v3424 = vadd.f32 %v3423, %v3393
      %v3425 = vadd.f32 %v3424, %v3394
      %v3426 = vadd.f32 %v3425, %v3395
      %v3427 = vadd.f32 %v3426, %v3396
      %v3428 = vadd.f32 %v3427, %v3397
      %v3429 = vadd.f32 %v3428, %v3398
      %v3430 = vadd.f32 %v3429, %v3399
      %v3431 = vadd.f32 %v3430, %v3400
      %v3432 = vadd.f32 %v3431, %v3401
      %v3433 = vadd.f32 %v3432, %v3402
      %v3434 = vadd.f32 %v3433, %v3403
      %v3435 = vadd.f32 %v3434, %v3404
      %v3436 = vadd.f32 %v3435, %v3405
      %v3437 = vadd.f32 %v3436, %v3406
      %v3438 = vadd.f32 %v3437, %v3407
      %v3439 = vadd.f32 %v3438, %v3408
      %v3440 = vadd.f32 %v3439, %v3409
      %v3441 = vadd.f32 %v3440, %v3410
      %v3442 = vadd.f32 %v3441, %v3411
      %v3443 = vadd.f32 %v3442, %v3412
      %v3444 = vrot.slane %v3443, 4
      %v3445 = vadd.f32 %v3443, %v3444
      %v3446 = vrot.slane %v3445, 2
      %v3447 = vadd.f32 %v3445, %v3446
      %v3448 = vrot.slane %v3447, 1
      %v3449 = vadd.f32 %v3447, %v3448
      %vm3450 = vcmask 1040384
      %v3451 = vsel %vm3450, %v3380, %v3449
      %3452 = vst [vmem:[%s235] sm:$0x3] %v3451
      %p3453 = scmp.lt.s32.totalorder %s17, 1
      %s3454 = scalar_select %p3453, %s17, 1
      %s3455 = smul.addr %s3454, 32
      %s3456 = smul.addr %s3455, 4
      %s3457 = scalar_lea.vmem %s4, %s3456
      %p3458 = scmp.lt.s32.totalorder %s17, 1
      %s3459 = scalar_select %p3458, %s17, 1
      %s3460 = smul.addr %s3459, 2
      %s3461 = scalar_lea.vmem %s5, %s3460
      // Predicated region
      $region41: #{bottleneck_forward.5} parent=35 // pred_check
        %p3462 = pneg %p124
      $region42: #{bottleneck_forward.5} parent=35 // pred_check_branch
        %3464 = sbr.rel (%p3462) target = $region44
      $region43: #{bottleneck_forward.5} parent=35 // pred_region
        _
      $region44: #{bottleneck_forward.5} parent=35 // pred_fallthru
        _
      // Predicated region
      $region45: #{bottleneck_forward.5} parent=35 // pred_check
        %p3465 = pneg %p150
      $region46: #{bottleneck_forward.5} parent=35 // pred_check_branch
        %3467 = sbr.rel (%p3465) target = $region48
      $region47: #{bottleneck_forward.5} parent=35 // pred_region
        _
      $region48: #{bottleneck_forward.5} parent=35 // pred_fallthru
        _
    $region36: #{bottleneck_forward.5} parent=5 // pred_fallthru
      _
    %p3468 = scmp.le.s32.totalorder 2, %s12
    // Predicated region
    $region49: #{bottleneck_forward.5} parent=5 // pred_check
      %p3469 = pneg %p3468
    $region50: #{bottleneck_forward.5} parent=5 // pred_check_branch
      %3471 = sbr.rel (%p3469) target = $region52
    $region51: #{bottleneck_forward.5} parent=5 // pred_region
      %s3472 = ssub.s32 %s12, 2
      // Predicated region
      $region53: #{bottleneck_forward.5} parent=51 // pred_check
        %p3473 = pneg %p130
      $region54: #{bottleneck_forward.5} parent=51 // pred_check_branch
        %3475 = sbr.rel (%p3473) target = $region56
      $region55: #{bottleneck_forward.5} parent=51 // pred_region
        %p3476 = scmp.lt.s32.totalorder %s18, 1
        %s3477 = scalar_select %p3476, %s18, 1
        %s3478 = smul.addr %s3477, 32
        %s3479 = smul.addr %s3478, 4
        %s3480 = scalar_lea.vmem %s4, %s3479
      $region56: #{bottleneck_forward.5} parent=51 // pred_fallthru
        _
      // Predicated region
      $region57: #{bottleneck_forward.5} parent=51 // pred_check
        %p3481 = pneg %p156
      $region58: #{bottleneck_forward.5} parent=51 // pred_check_branch
        %3483 = sbr.rel (%p3481) target = $region60
      $region59: #{bottleneck_forward.5} parent=51 // pred_region
        %p3484 = scmp.lt.s32.totalorder %s18, 1
        %s3485 = scalar_select %p3484, %s18, 1
        %s3486 = smul.addr %s3485, 2
        %s3487 = scalar_lea.vmem %s5, %s3486
      $region60: #{bottleneck_forward.5} parent=51 // pred_fallthru
        _
    $region52: #{bottleneck_forward.5} parent=5 // pred_fallthru
      _
  $region6: #{bottleneck_forward.5} parent=0 // loop_footer
    %s16 = sadd.s32 1, %s12
  $region7: #{bottleneck_forward.5} parent=0 // loop_footer_branch
    %11 = sbr.rel target = $region3
  $region8: #{bottleneck_forward.5} parent=0 // loop_exit
    _

</llo_original>
